<compile_context>
chip_gen: v7x
topology: tpu7x:2x2x1
jax: 0.10.0
libtpu: 0.0.40
codegen_flags: <defaults>
</compile_context>

<pallas_src>
import jax
import jax.numpy as jnp
from jax.experimental import pallas as pl
from jax.experimental.pallas import tpu as pltpu


def _round_up(x, m):
    return ((x + m - 1) // m) * m


def ftucker_decoder(head, rel, tail, W_e, W_r, G,
                    bn0_scale, bn0_shift, bn1_scale, bn1_shift, *, qt=4):
    """FTuckER decoder (eval) over Q independent query blocks.

    head: [Q, B, entity_dim]  rel: [Q, B, relation_dim]  tail: [Q, B, rank]
    Returns pred: [Q, B].  The einsum 'abc,br,cr,ar->b' requires B == rank (== A == C).
    """
    Q, B, E = head.shape
    Rdim = rel.shape[2]
    A, Bc, C = G.shape
    rank = W_e.shape[1]
    assert Bc == B == C == A == rank, "einsum 'abc,br,cr,ar->b' ties batch to rank"
    assert tail.shape == (Q, B, rank) and rel.shape[:2] == (Q, B)
    assert W_e.shape == (E, rank) and W_r.shape == (Rdim, rank)
    assert bn1_scale.shape[0] == B and bn1_shift.shape[0] == B

    QT = min(qt, Q)                       # query blocks per grid step
    assert Q % QT == 0
    n_step = QT * B                       # lane width per grid step
    assert n_step % 128 == 0 or QT == Q, "pack >=4 blocks/step for lane-dense stores"
    N = Q * B

    # ---- host-side (trace-time) packing / folding -----------------------------------
    f32 = jnp.float32
    off_h, off_r, off_t = 0, E, E + Rdim
    off_one = E + Rdim + rank
    Hp = _round_up(off_one + 1, 8)

    # One packed per-query operand: [head^T ; rel^T ; tail^T ; ones ; zero-pad].
    qdata = jnp.zeros((Hp, N), f32)
    qdata = qdata.at[off_h:off_h + E, :].set(head.reshape(N, E).T.astype(f32))
    qdata = qdata.at[off_r:off_r + Rdim, :].set(rel.reshape(N, Rdim).T.astype(f32))
    qdata = qdata.at[off_t:off_t + rank, :].set(tail.reshape(N, rank).T.astype(f32))
    qdata = qdata.at[off_one, :].set(1.0)                       # bias row

    # BN0 (eval) folded into the entity projection; its shift rides in column `off_one`.
    wpar = jnp.zeros((2 * rank, Hp), f32)
    wpar = wpar.at[0:rank, off_h:off_h + E].set((W_e * bn0_scale[:, None]).T)
    wpar = wpar.at[rank:2 * rank, off_r:off_r + Rdim].set(W_r.T)
    wpar = wpar.at[0:rank, off_one].set(bn0_shift @ W_e)

    # Core tensor, lane-dense for the c-contraction: g_t[c, a*B + b] = G[a, b, c].
    g_t = jnp.transpose(G, (2, 0, 1)).reshape(C, A * B).astype(f32)

    # BN1 (eval) per block-position affine, tiled across the QT blocks of one step.
    bn1 = jnp.stack([jnp.tile(bn1_scale.astype(f32), QT),
                     jnp.tile(bn1_shift.astype(f32), QT)], axis=0)   # [2, n_step]

    def kernel(qdata_ref, wpar_ref, g_ref, bn1_ref, out_ref):
        # Projections: [HT ; RT] = W_aug @ [head^T ; rel^T ; tail^T ; 1]  (bias folded in).
        prj = jnp.dot(wpar_ref[...], qdata_ref[...],
                      preferred_element_type=jnp.float32)        # [2*rank, n_step]
        HT = prj[0:rank, :]                                      # [rank, n_step]
        RT = prj[rank:2 * rank, :]                               # [rank, n_step]
        TT = qdata_ref[off_t:off_t + rank, :]                    # [rank, n_step] (tail^T)
        g = g_ref[...]                                           # [C, A*B] (resident)

        parts = []
        for q in range(QT):                                      # static unroll, QT blocks
            lo, hi = q * B, (q + 1) * B
            # c-contraction: one lane-dense MXU matmul, N = A*B output columns.
            VT_q = jnp.dot(RT[:, lo:hi], g,
                           preferred_element_type=jnp.float32)   # [rank, A*B]
            TT_q = TT[:, lo:hi]                                  # [rank, A]
            # a-fold: accumulator-resident, no [A, B, rank] materialization.
            WT_q = VT_q[:, 0:B] * TT_q[:, 0:1]
            for a in range(1, A):
                WT_q = WT_q + VT_q[:, a * B:(a + 1) * B] * TT_q[:, a:a + 1]
            parts.append(WT_q)                                   # [rank, B]
        WT = parts[0] if QT == 1 else jnp.concatenate(parts, axis=1)   # [rank, n_step]

        # Final r-contraction: sublane reduce -> lane-dense [1, n_step] row.
        core = jnp.sum(HT * WT, axis=0, keepdims=True)
        core = jnp.where(core > 0, core, 0.2 * core)             # LeakyReLU(0.2)
        core = core * bn1_ref[0:1, :] + bn1_ref[1:2, :]          # BN1 (eval, folded)
        out_ref[...] = 1.0 / (1.0 + jnp.exp(-core))              # sigmoid (exact)

    out = pl.pallas_call(
        kernel,
        out_shape=jax.ShapeDtypeStruct((1, N), jnp.float32),
        grid=(Q // QT,),
        in_specs=[
            pl.BlockSpec((Hp, n_step), lambda i: (0, i)),        # per-query data (streamed)
            pl.BlockSpec((2 * rank, Hp), lambda i: (0, 0)),      # folded weights (resident)
            pl.BlockSpec((C, A * B), lambda i: (0, 0)),          # core tensor G (resident)
            pl.BlockSpec((2, n_step), lambda i: (0, 0)),         # BN1 rows (resident)
        ],
        out_specs=pl.BlockSpec((1, n_step), lambda i: (0, i)),
        compiler_params=pltpu.CompilerParams(
            dimension_semantics=("parallel",)),                  # 2x on v7x (2 TCs)
    )(qdata, wpar, g_t, bn1)
    return out.reshape(Q, B)


def ftucker_block_reference(head, rel, tail, W_e, W_r, G,
                            bn0_scale, bn0_shift, bn1_scale, bn1_shift):
    """Pure-JAX reference for ONE query block (the module's forward, eval mode)."""
    hb = head * bn0_scale[None, :] + bn0_shift[None, :]
    H = hb @ W_e
    R = rel @ W_r
    core = jnp.einsum('abc,br,cr,ar->b', G, H, R, tail)
    core = jnp.where(core > 0, core, 0.2 * core)
    core = core * bn1_scale + bn1_shift
    return 1.0 / (1.0 + jnp.exp(-core))


if __name__ == "__main__":
    # Small, einsum-consistent configuration (all feature dims tied to rank).
    rank = 32
    h_dim = entity_dim = relation_dim = rank
    B = rank                  # per-block batch (einsum requires batch == rank)
    Q = 8                     # independent query blocks amortized over one pallas_call
    n_ent, n_rel = 64, 5

    key = jax.random.PRNGKey(0)
    ks = jax.random.split(key, 8)

    # Parameters (shapes per the module __init__).
    ent_emb_w = jax.random.normal(ks[0], (n_ent, h_dim), jnp.float32)          # SE_GNN.ent_emb
    pred_rel_emb = jax.random.normal(ks[1], (2 * n_rel, h_dim), jnp.float32)   # SE_GNN.pred_rel_emb
    core_G = jax.random.uniform(ks[2], (rank, rank, rank), jnp.float32, -1.0, 1.0)
    W_e = jax.random.normal(ks[3], (entity_dim, rank), jnp.float32) * jnp.sqrt(2.0 / (entity_dim + rank))
    W_r = jax.random.normal(ks[4], (relation_dim, rank), jnp.float32) * jnp.sqrt(2.0 / (relation_dim + rank))

    # BatchNorm1d (eval mode, fresh running stats): gamma=1, beta=0, mean=0, var=1.
    eps = 1e-5
    bn0_scale = jnp.ones((entity_dim,), jnp.float32) / jnp.sqrt(1.0 + eps)
    bn0_shift = jnp.zeros((entity_dim,), jnp.float32)
    bn1_scale = jnp.ones((entity_dim,), jnp.float32) / jnp.sqrt(1.0 + eps)
    bn1_shift = jnp.zeros((entity_dim,), jnp.float32)

    # Example query ids (Q independent blocks of B queries each).
    h_id = jax.random.randint(ks[5], (Q, B), 0, n_ent)
    r_id = jax.random.randint(ks[6], (Q, B), 0, 2 * n_rel)
    tail_id = jax.random.randint(ks[7], (Q, B), 0, n_ent)

    # Encoder glue + embedding lookups (dropouts are eval no-ops).
    # TODO(synk): SE_GNN EdgeLayer/NodeLayer/CompLayer aggregation requires a DGL `kg`;
    #             identity aggregation is used here.
    ent_emb = ent_emb_w
    head = ent_emb[h_id]          # [Q, B, h_dim]
    rel = pred_rel_emb[r_id]      # [Q, B, h_dim]
    tail = ent_emb[tail_id]       # [Q, B, h_dim]

    # --- run Pallas kernel ---
    pred = ftucker_decoder(head, rel, tail, W_e, W_r, core_G,
                           bn0_scale, bn0_shift, bn1_scale, bn1_shift, qt=4)
    pred = jax.block_until_ready(pred)

    # --- sanity check against pure-JAX reference ---
    ref = jax.vmap(lambda h, r, t: ftucker_block_reference(
        h, r, t, W_e, W_r, core_G, bn0_scale, bn0_shift, bn1_scale, bn1_shift))(head, rel, tail)
    ref = jax.block_until_ready(ref)

    assert pred.shape == (Q, B)
    err = float(jnp.max(jnp.abs(pred - ref)))
    assert jnp.allclose(pred, ref, atol=2e-3, rtol=2e-3), err

    print("KERNEL_OK")
</pallas_src>

<mosaic_0001>
module attributes {stable_mosaic.version = 11 : i64} {
  func.func @kernel(%arg0: i32, %arg1: memref<104x128xf32, #tpu.memory_space<vmem>>, %arg2: memref<64x104xf32, #tpu.memory_space<vmem>>, %arg3: memref<32x1024xf32, #tpu.memory_space<vmem>>, %arg4: memref<2x128xf32, #tpu.memory_space<vmem>>, %arg5: memref<1x128xf32, #tpu.memory_space<vmem>>) attributes {dimension_semantics = [#tpu.dimension_semantics<parallel>], iteration_bounds = array<i64: 2>, scalar_prefetch = 0 : i64, scratch_operands = 0 : i64, tpu.core_type = #tpu.core_type<tc>, window_params = [{transform_indices = @transform_0, window_bounds = array<i64: 104, 128>}, {pipeline_mode = #tpu.pipeline_mode<synchronous>, transform_indices = @transform_1, window_bounds = array<i64: 64, 104>}, {pipeline_mode = #tpu.pipeline_mode<synchronous>, transform_indices = @transform_2, window_bounds = array<i64: 32, 1024>}, {pipeline_mode = #tpu.pipeline_mode<synchronous>, transform_indices = @transform_3, window_bounds = array<i64: 2, 128>}, {transform_indices = @transform_4, window_bounds = array<i64: 1, 128>}]} {
    %c0 = arith.constant 0 : index
    %c0_0 = arith.constant 0 : index
    %0 = vector.load %arg2[%c0, %c0_0] : memref<64x104xf32, #tpu.memory_space<vmem>>, vector<64x104xf32>
    %c0_1 = arith.constant 0 : index
    %c0_2 = arith.constant 0 : index
    %1 = vector.load %arg1[%c0_1, %c0_2] : memref<104x128xf32, #tpu.memory_space<vmem>>, vector<104x128xf32>
    %cst = arith.constant dense<0.000000e+00> : vector<64x128xf32>
    %2 = tpu.matmul %0, %1, %cst {dimension_numbers = #tpu.dot_dimension_numbers<[1], [0], [0], [1], [0, 0, 1, 1], [], []>} : vector<64x104xf32>, vector<104x128xf32>, vector<64x128xf32> -> vector<64x128xf32>
    %3 = vector.extract_strided_slice %2 {offsets = [0, 0], sizes = [32, 128], strides = [1, 1]} : vector<64x128xf32> to vector<32x128xf32>
    %4 = vector.extract_strided_slice %2 {offsets = [32, 0], sizes = [32, 128], strides = [1, 1]} : vector<64x128xf32> to vector<32x128xf32>
    %c64 = arith.constant 64 : index
    %c0_3 = arith.constant 0 : index
    %5 = vector.load %arg1[%c64, %c0_3] : memref<104x128xf32, #tpu.memory_space<vmem>>, vector<32x128xf32>
    %c0_4 = arith.constant 0 : index
    %c0_5 = arith.constant 0 : index
    %6 = vector.load %arg3[%c0_4, %c0_5] : memref<32x1024xf32, #tpu.memory_space<vmem>>, vector<32x1024xf32>
    %7 = vector.extract_strided_slice %4 {offsets = [0, 0], sizes = [32, 32], strides = [1, 1]} : vector<32x128xf32> to vector<32x32xf32>
    %cst_6 = arith.constant dense<0.000000e+00> : vector<32x1024xf32>
    %8 = tpu.matmul %7, %6, %cst_6 {dimension_numbers = #tpu.dot_dimension_numbers<[1], [0], [0], [1], [0, 0, 1, 1], [], []>} : vector<32x32xf32>, vector<32x1024xf32>, vector<32x1024xf32> -> vector<32x1024xf32>
    %9 = vector.extract_strided_slice %5 {offsets = [0, 0], sizes = [32, 32], strides = [1, 1]} : vector<32x128xf32> to vector<32x32xf32>
    %10 = vector.extract_strided_slice %8 {offsets = [0, 0], sizes = [32, 32], strides = [1, 1]} : vector<32x1024xf32> to vector<32x32xf32>
    %11 = vector.extract_strided_slice %9 {offsets = [0, 0], sizes = [32, 1], strides = [1, 1]} : vector<32x32xf32> to vector<32x1xf32>
    %12 = vector.broadcast %11 : vector<32x1xf32> to vector<32x32xf32>
    %13 = arith.mulf %10, %12 : vector<32x32xf32>
    %14 = vector.extract_strided_slice %8 {offsets = [0, 32], sizes = [32, 32], strides = [1, 1]} : vector<32x1024xf32> to vector<32x32xf32>
    %15 = vector.extract_strided_slice %9 {offsets = [0, 1], sizes = [32, 1], strides = [1, 1]} : vector<32x32xf32> to vector<32x1xf32>
    %16 = vector.broadcast %15 : vector<32x1xf32> to vector<32x32xf32>
    %17 = arith.mulf %14, %16 : vector<32x32xf32>
    %18 = arith.addf %13, %17 : vector<32x32xf32>
    %19 = vector.extract_strided_slice %8 {offsets = [0, 64], sizes = [32, 32], strides = [1, 1]} : vector<32x1024xf32> to vector<32x32xf32>
    %20 = vector.extract_strided_slice %9 {offsets = [0, 2], sizes = [32, 1], strides = [1, 1]} : vector<32x32xf32> to vector<32x1xf32>
    %21 = vector.broadcast %20 : vector<32x1xf32> to vector<32x32xf32>
    %22 = arith.mulf %19, %21 : vector<32x32xf32>
    %23 = arith.addf %18, %22 : vector<32x32xf32>
    %24 = vector.extract_strided_slice %8 {offsets = [0, 96], sizes = [32, 32], strides = [1, 1]} : vector<32x1024xf32> to vector<32x32xf32>
    %25 = vector.extract_strided_slice %9 {offsets = [0, 3], sizes = [32, 1], strides = [1, 1]} : vector<32x32xf32> to vector<32x1xf32>
    %26 = vector.broadcast %25 : vector<32x1xf32> to vector<32x32xf32>
    %27 = arith.mulf %24, %26 : vector<32x32xf32>
    %28 = arith.addf %23, %27 : vector<32x32xf32>
    %29 = vector.extract_strided_slice %8 {offsets = [0, 128], sizes = [32, 32], strides = [1, 1]} : vector<32x1024xf32> to vector<32x32xf32>
    %30 = vector.extract_strided_slice %9 {offsets = [0, 4], sizes = [32, 1], strides = [1, 1]} : vector<32x32xf32> to vector<32x1xf32>
    %31 = vector.broadcast %30 : vector<32x1xf32> to vector<32x32xf32>
    %32 = arith.mulf %29, %31 : vector<32x32xf32>
    %33 = arith.addf %28, %32 : vector<32x32xf32>
    %34 = vector.extract_strided_slice %8 {offsets = [0, 160], sizes = [32, 32], strides = [1, 1]} : vector<32x1024xf32> to vector<32x32xf32>
    %35 = vector.extract_strided_slice %9 {offsets = [0, 5], sizes = [32, 1], strides = [1, 1]} : vector<32x32xf32> to vector<32x1xf32>
    %36 = vector.broadcast %35 : vector<32x1xf32> to vector<32x32xf32>
    %37 = arith.mulf %34, %36 : vector<32x32xf32>
    %38 = arith.addf %33, %37 : vector<32x32xf32>
    %39 = vector.extract_strided_slice %8 {offsets = [0, 192], sizes = [32, 32], strides = [1, 1]} : vector<32x1024xf32> to vector<32x32xf32>
    %40 = vector.extract_strided_slice %9 {offsets = [0, 6], sizes = [32, 1], strides = [1, 1]} : vector<32x32xf32> to vector<32x1xf32>
    %41 = vector.broadcast %40 : vector<32x1xf32> to vector<32x32xf32>
    %42 = arith.mulf %39, %41 : vector<32x32xf32>
    %43 = arith.addf %38, %42 : vector<32x32xf32>
    %44 = vector.extract_strided_slice %8 {offsets = [0, 224], sizes = [32, 32], strides = [1, 1]} : vector<32x1024xf32> to vector<32x32xf32>
    %45 = vector.extract_strided_slice %9 {offsets = [0, 7], sizes = [32, 1], strides = [1, 1]} : vector<32x32xf32> to vector<32x1xf32>
    %46 = vector.broadcast %45 : vector<32x1xf32> to vector<32x32xf32>
    %47 = arith.mulf %44, %46 : vector<32x32xf32>
    %48 = arith.addf %43, %47 : vector<32x32xf32>
    %49 = vector.extract_strided_slice %8 {offsets = [0, 256], sizes = [32, 32], strides = [1, 1]} : vector<32x1024xf32> to vector<32x32xf32>
    %50 = vector.extract_strided_slice %9 {offsets = [0, 8], sizes = [32, 1], strides = [1, 1]} : vector<32x32xf32> to vector<32x1xf32>
    %51 = vector.broadcast %50 : vector<32x1xf32> to vector<32x32xf32>
    %52 = arith.mulf %49, %51 : vector<32x32xf32>
    %53 = arith.addf %48, %52 : vector<32x32xf32>
    %54 = vector.extract_strided_slice %8 {offsets = [0, 288], sizes = [32, 32], strides = [1, 1]} : vector<32x1024xf32> to vector<32x32xf32>
    %55 = vector.extract_strided_slice %9 {offsets = [0, 9], sizes = [32, 1], strides = [1, 1]} : vector<32x32xf32> to vector<32x1xf32>
    %56 = vector.broadcast %55 : vector<32x1xf32> to vector<32x32xf32>
    %57 = arith.mulf %54, %56 : vector<32x32xf32>
    %58 = arith.addf %53, %57 : vector<32x32xf32>
    %59 = vector.extract_strided_slice %8 {offsets = [0, 320], sizes = [32, 32], strides = [1, 1]} : vector<32x1024xf32> to vector<32x32xf32>
    %60 = vector.extract_strided_slice %9 {offsets = [0, 10], sizes = [32, 1], strides = [1, 1]} : vector<32x32xf32> to vector<32x1xf32>
    %61 = vector.broadcast %60 : vector<32x1xf32> to vector<32x32xf32>
    %62 = arith.mulf %59, %61 : vector<32x32xf32>
    %63 = arith.addf %58, %62 : vector<32x32xf32>
    %64 = vector.extract_strided_slice %8 {offsets = [0, 352], sizes = [32, 32], strides = [1, 1]} : vector<32x1024xf32> to vector<32x32xf32>
    %65 = vector.extract_strided_slice %9 {offsets = [0, 11], sizes = [32, 1], strides = [1, 1]} : vector<32x32xf32> to vector<32x1xf32>
    %66 = vector.broadcast %65 : vector<32x1xf32> to vector<32x32xf32>
    %67 = arith.mulf %64, %66 : vector<32x32xf32>
    %68 = arith.addf %63, %67 : vector<32x32xf32>
    %69 = vector.extract_strided_slice %8 {offsets = [0, 384], sizes = [32, 32], strides = [1, 1]} : vector<32x1024xf32> to vector<32x32xf32>
    %70 = vector.extract_strided_slice %9 {offsets = [0, 12], sizes = [32, 1], strides = [1, 1]} : vector<32x32xf32> to vector<32x1xf32>
    %71 = vector.broadcast %70 : vector<32x1xf32> to vector<32x32xf32>
    %72 = arith.mulf %69, %71 : vector<32x32xf32>
    %73 = arith.addf %68, %72 : vector<32x32xf32>
    %74 = vector.extract_strided_slice %8 {offsets = [0, 416], sizes = [32, 32], strides = [1, 1]} : vector<32x1024xf32> to vector<32x32xf32>
    %75 = vector.extract_strided_slice %9 {offsets = [0, 13], sizes = [32, 1], strides = [1, 1]} : vector<32x32xf32> to vector<32x1xf32>
    %76 = vector.broadcast %75 : vector<32x1xf32> to vector<32x32xf32>
    %77 = arith.mulf %74, %76 : vector<32x32xf32>
    %78 = arith.addf %73, %77 : vector<32x32xf32>
    %79 = vector.extract_strided_slice %8 {offsets = [0, 448], sizes = [32, 32], strides = [1, 1]} : vector<32x1024xf32> to vector<32x32xf32>
    %80 = vector.extract_strided_slice %9 {offsets = [0, 14], sizes = [32, 1], strides = [1, 1]} : vector<32x32xf32> to vector<32x1xf32>
    %81 = vector.broadcast %80 : vector<32x1xf32> to vector<32x32xf32>
    %82 = arith.mulf %79, %81 : vector<32x32xf32>
    %83 = arith.addf %78, %82 : vector<32x32xf32>
    %84 = vector.extract_strided_slice %8 {offsets = [0, 480], sizes = [32, 32], strides = [1, 1]} : vector<32x1024xf32> to vector<32x32xf32>
    %85 = vector.extract_strided_slice %9 {offsets = [0, 15], sizes = [32, 1], strides = [1, 1]} : vector<32x32xf32> to vector<32x1xf32>
    %86 = vector.broadcast %85 : vector<32x1xf32> to vector<32x32xf32>
    %87 = arith.mulf %84, %86 : vector<32x32xf32>
    %88 = arith.addf %83, %87 : vector<32x32xf32>
    %89 = vector.extract_strided_slice %8 {offsets = [0, 512], sizes = [32, 32], strides = [1, 1]} : vector<32x1024xf32> to vector<32x32xf32>
    %90 = vector.extract_strided_slice %9 {offsets = [0, 16], sizes = [32, 1], strides = [1, 1]} : vector<32x32xf32> to vector<32x1xf32>
    %91 = vector.broadcast %90 : vector<32x1xf32> to vector<32x32xf32>
    %92 = arith.mulf %89, %91 : vector<32x32xf32>
    %93 = arith.addf %88, %92 : vector<32x32xf32>
    %94 = vector.extract_strided_slice %8 {offsets = [0, 544], sizes = [32, 32], strides = [1, 1]} : vector<32x1024xf32> to vector<32x32xf32>
    %95 = vector.extract_strided_slice %9 {offsets = [0, 17], sizes = [32, 1], strides = [1, 1]} : vector<32x32xf32> to vector<32x1xf32>
    %96 = vector.broadcast %95 : vector<32x1xf32> to vector<32x32xf32>
    %97 = arith.mulf %94, %96 : vector<32x32xf32>
    %98 = arith.addf %93, %97 : vector<32x32xf32>
    %99 = vector.extract_strided_slice %8 {offsets = [0, 576], sizes = [32, 32], strides = [1, 1]} : vector<32x1024xf32> to vector<32x32xf32>
    %100 = vector.extract_strided_slice %9 {offsets = [0, 18], sizes = [32, 1], strides = [1, 1]} : vector<32x32xf32> to vector<32x1xf32>
    %101 = vector.broadcast %100 : vector<32x1xf32> to vector<32x32xf32>
    %102 = arith.mulf %99, %101 : vector<32x32xf32>
    %103 = arith.addf %98, %102 : vector<32x32xf32>
    %104 = vector.extract_strided_slice %8 {offsets = [0, 608], sizes = [32, 32], strides = [1, 1]} : vector<32x1024xf32> to vector<32x32xf32>
    %105 = vector.extract_strided_slice %9 {offsets = [0, 19], sizes = [32, 1], strides = [1, 1]} : vector<32x32xf32> to vector<32x1xf32>
    %106 = vector.broadcast %105 : vector<32x1xf32> to vector<32x32xf32>
    %107 = arith.mulf %104, %106 : vector<32x32xf32>
    %108 = arith.addf %103, %107 : vector<32x32xf32>
    %109 = vector.extract_strided_slice %8 {offsets = [0, 640], sizes = [32, 32], strides = [1, 1]} : vector<32x1024xf32> to vector<32x32xf32>
    %110 = vector.extract_strided_slice %9 {offsets = [0, 20], sizes = [32, 1], strides = [1, 1]} : vector<32x32xf32> to vector<32x1xf32>
    %111 = vector.broadcast %110 : vector<32x1xf32> to vector<32x32xf32>
    %112 = arith.mulf %109, %111 : vector<32x32xf32>
    %113 = arith.addf %108, %112 : vector<32x32xf32>
    %114 = vector.extract_strided_slice %8 {offsets = [0, 672], sizes = [32, 32], strides = [1, 1]} : vector<32x1024xf32> to vector<32x32xf32>
    %115 = vector.extract_strided_slice %9 {offsets = [0, 21], sizes = [32, 1], strides = [1, 1]} : vector<32x32xf32> to vector<32x1xf32>
    %116 = vector.broadcast %115 : vector<32x1xf32> to vector<32x32xf32>
    %117 = arith.mulf %114, %116 : vector<32x32xf32>
    %118 = arith.addf %113, %117 : vector<32x32xf32>
    %119 = vector.extract_strided_slice %8 {offsets = [0, 704], sizes = [32, 32], strides = [1, 1]} : vector<32x1024xf32> to vector<32x32xf32>
    %120 = vector.extract_strided_slice %9 {offsets = [0, 22], sizes = [32, 1], strides = [1, 1]} : vector<32x32xf32> to vector<32x1xf32>
    %121 = vector.broadcast %120 : vector<32x1xf32> to vector<32x32xf32>
    %122 = arith.mulf %119, %121 : vector<32x32xf32>
    %123 = arith.addf %118, %122 : vector<32x32xf32>
    %124 = vector.extract_strided_slice %8 {offsets = [0, 736], sizes = [32, 32], strides = [1, 1]} : vector<32x1024xf32> to vector<32x32xf32>
    %125 = vector.extract_strided_slice %9 {offsets = [0, 23], sizes = [32, 1], strides = [1, 1]} : vector<32x32xf32> to vector<32x1xf32>
    %126 = vector.broadcast %125 : vector<32x1xf32> to vector<32x32xf32>
    %127 = arith.mulf %124, %126 : vector<32x32xf32>
    %128 = arith.addf %123, %127 : vector<32x32xf32>
    %129 = vector.extract_strided_slice %8 {offsets = [0, 768], sizes = [32, 32], strides = [1, 1]} : vector<32x1024xf32> to vector<32x32xf32>
    %130 = vector.extract_strided_slice %9 {offsets = [0, 24], sizes = [32, 1], strides = [1, 1]} : vector<32x32xf32> to vector<32x1xf32>
    %131 = vector.broadcast %130 : vector<32x1xf32> to vector<32x32xf32>
    %132 = arith.mulf %129, %131 : vector<32x32xf32>
    %133 = arith.addf %128, %132 : vector<32x32xf32>
    %134 = vector.extract_strided_slice %8 {offsets = [0, 800], sizes = [32, 32], strides = [1, 1]} : vector<32x1024xf32> to vector<32x32xf32>
    %135 = vector.extract_strided_slice %9 {offsets = [0, 25], sizes = [32, 1], strides = [1, 1]} : vector<32x32xf32> to vector<32x1xf32>
    %136 = vector.broadcast %135 : vector<32x1xf32> to vector<32x32xf32>
    %137 = arith.mulf %134, %136 : vector<32x32xf32>
    %138 = arith.addf %133, %137 : vector<32x32xf32>
    %139 = vector.extract_strided_slice %8 {offsets = [0, 832], sizes = [32, 32], strides = [1, 1]} : vector<32x1024xf32> to vector<32x32xf32>
    %140 = vector.extract_strided_slice %9 {offsets = [0, 26], sizes = [32, 1], strides = [1, 1]} : vector<32x32xf32> to vector<32x1xf32>
    %141 = vector.broadcast %140 : vector<32x1xf32> to vector<32x32xf32>
    %142 = arith.mulf %139, %141 : vector<32x32xf32>
    %143 = arith.addf %138, %142 : vector<32x32xf32>
    %144 = vector.extract_strided_slice %8 {offsets = [0, 864], sizes = [32, 32], strides = [1, 1]} : vector<32x1024xf32> to vector<32x32xf32>
    %145 = vector.extract_strided_slice %9 {offsets = [0, 27], sizes = [32, 1], strides = [1, 1]} : vector<32x32xf32> to vector<32x1xf32>
    %146 = vector.broadcast %145 : vector<32x1xf32> to vector<32x32xf32>
    %147 = arith.mulf %144, %146 : vector<32x32xf32>
    %148 = arith.addf %143, %147 : vector<32x32xf32>
    %149 = vector.extract_strided_slice %8 {offsets = [0, 896], sizes = [32, 32], strides = [1, 1]} : vector<32x1024xf32> to vector<32x32xf32>
    %150 = vector.extract_strided_slice %9 {offsets = [0, 28], sizes = [32, 1], strides = [1, 1]} : vector<32x32xf32> to vector<32x1xf32>
    %151 = vector.broadcast %150 : vector<32x1xf32> to vector<32x32xf32>
    %152 = arith.mulf %149, %151 : vector<32x32xf32>
    %153 = arith.addf %148, %152 : vector<32x32xf32>
    %154 = vector.extract_strided_slice %8 {offsets = [0, 928], sizes = [32, 32], strides = [1, 1]} : vector<32x1024xf32> to vector<32x32xf32>
    %155 = vector.extract_strided_slice %9 {offsets = [0, 29], sizes = [32, 1], strides = [1, 1]} : vector<32x32xf32> to vector<32x1xf32>
    %156 = vector.broadcast %155 : vector<32x1xf32> to vector<32x32xf32>
    %157 = arith.mulf %154, %156 : vector<32x32xf32>
    %158 = arith.addf %153, %157 : vector<32x32xf32>
    %159 = vector.extract_strided_slice %8 {offsets = [0, 960], sizes = [32, 32], strides = [1, 1]} : vector<32x1024xf32> to vector<32x32xf32>
    %160 = vector.extract_strided_slice %9 {offsets = [0, 30], sizes = [32, 1], strides = [1, 1]} : vector<32x32xf32> to vector<32x1xf32>
    %161 = vector.broadcast %160 : vector<32x1xf32> to vector<32x32xf32>
    %162 = arith.mulf %159, %161 : vector<32x32xf32>
    %163 = arith.addf %158, %162 : vector<32x32xf32>
    %164 = vector.extract_strided_slice %8 {offsets = [0, 992], sizes = [32, 32], strides = [1, 1]} : vector<32x1024xf32> to vector<32x32xf32>
    %165 = vector.extract_strided_slice %9 {offsets = [0, 31], sizes = [32, 1], strides = [1, 1]} : vector<32x32xf32> to vector<32x1xf32>
    %166 = vector.broadcast %165 : vector<32x1xf32> to vector<32x32xf32>
    %167 = arith.mulf %164, %166 : vector<32x32xf32>
    %168 = arith.addf %163, %167 : vector<32x32xf32>
    %169 = vector.extract_strided_slice %4 {offsets = [0, 32], sizes = [32, 32], strides = [1, 1]} : vector<32x128xf32> to vector<32x32xf32>
    %cst_7 = arith.constant dense<0.000000e+00> : vector<32x1024xf32>
    %170 = tpu.matmul %169, %6, %cst_7 {dimension_numbers = #tpu.dot_dimension_numbers<[1], [0], [0], [1], [0, 0, 1, 1], [], []>} : vector<32x32xf32>, vector<32x1024xf32>, vector<32x1024xf32> -> vector<32x1024xf32>
    %171 = vector.extract_strided_slice %5 {offsets = [0, 32], sizes = [32, 32], strides = [1, 1]} : vector<32x128xf32> to vector<32x32xf32>
    %172 = vector.extract_strided_slice %170 {offsets = [0, 0], sizes = [32, 32], strides = [1, 1]} : vector<32x1024xf32> to vector<32x32xf32>
    %173 = vector.extract_strided_slice %171 {offsets = [0, 0], sizes = [32, 1], strides = [1, 1]} : vector<32x32xf32> to vector<32x1xf32>
    %174 = vector.broadcast %173 : vector<32x1xf32> to vector<32x32xf32>
    %175 = arith.mulf %172, %174 : vector<32x32xf32>
    %176 = vector.extract_strided_slice %170 {offsets = [0, 32], sizes = [32, 32], strides = [1, 1]} : vector<32x1024xf32> to vector<32x32xf32>
    %177 = vector.extract_strided_slice %171 {offsets = [0, 1], sizes = [32, 1], strides = [1, 1]} : vector<32x32xf32> to vector<32x1xf32>
    %178 = vector.broadcast %177 : vector<32x1xf32> to vector<32x32xf32>
    %179 = arith.mulf %176, %178 : vector<32x32xf32>
    %180 = arith.addf %175, %179 : vector<32x32xf32>
    %181 = vector.extract_strided_slice %170 {offsets = [0, 64], sizes = [32, 32], strides = [1, 1]} : vector<32x1024xf32> to vector<32x32xf32>
    %182 = vector.extract_strided_slice %171 {offsets = [0, 2], sizes = [32, 1], strides = [1, 1]} : vector<32x32xf32> to vector<32x1xf32>
    %183 = vector.broadcast %182 : vector<32x1xf32> to vector<32x32xf32>
    %184 = arith.mulf %181, %183 : vector<32x32xf32>
    %185 = arith.addf %180, %184 : vector<32x32xf32>
    %186 = vector.extract_strided_slice %170 {offsets = [0, 96], sizes = [32, 32], strides = [1, 1]} : vector<32x1024xf32> to vector<32x32xf32>
    %187 = vector.extract_strided_slice %171 {offsets = [0, 3], sizes = [32, 1], strides = [1, 1]} : vector<32x32xf32> to vector<32x1xf32>
    %188 = vector.broadcast %187 : vector<32x1xf32> to vector<32x32xf32>
    %189 = arith.mulf %186, %188 : vector<32x32xf32>
    %190 = arith.addf %185, %189 : vector<32x32xf32>
    %191 = vector.extract_strided_slice %170 {offsets = [0, 128], sizes = [32, 32], strides = [1, 1]} : vector<32x1024xf32> to vector<32x32xf32>
    %192 = vector.extract_strided_slice %171 {offsets = [0, 4], sizes = [32, 1], strides = [1, 1]} : vector<32x32xf32> to vector<32x1xf32>
    %193 = vector.broadcast %192 : vector<32x1xf32> to vector<32x32xf32>
    %194 = arith.mulf %191, %193 : vector<32x32xf32>
    %195 = arith.addf %190, %194 : vector<32x32xf32>
    %196 = vector.extract_strided_slice %170 {offsets = [0, 160], sizes = [32, 32], strides = [1, 1]} : vector<32x1024xf32> to vector<32x32xf32>
    %197 = vector.extract_strided_slice %171 {offsets = [0, 5], sizes = [32, 1], strides = [1, 1]} : vector<32x32xf32> to vector<32x1xf32>
    %198 = vector.broadcast %197 : vector<32x1xf32> to vector<32x32xf32>
    %199 = arith.mulf %196, %198 : vector<32x32xf32>
    %200 = arith.addf %195, %199 : vector<32x32xf32>
    %201 = vector.extract_strided_slice %170 {offsets = [0, 192], sizes = [32, 32], strides = [1, 1]} : vector<32x1024xf32> to vector<32x32xf32>
    %202 = vector.extract_strided_slice %171 {offsets = [0, 6], sizes = [32, 1], strides = [1, 1]} : vector<32x32xf32> to vector<32x1xf32>
    %203 = vector.broadcast %202 : vector<32x1xf32> to vector<32x32xf32>
    %204 = arith.mulf %201, %203 : vector<32x32xf32>
    %205 = arith.addf %200, %204 : vector<32x32xf32>
    %206 = vector.extract_strided_slice %170 {offsets = [0, 224], sizes = [32, 32], strides = [1, 1]} : vector<32x1024xf32> to vector<32x32xf32>
    %207 = vector.extract_strided_slice %171 {offsets = [0, 7], sizes = [32, 1], strides = [1, 1]} : vector<32x32xf32> to vector<32x1xf32>
    %208 = vector.broadcast %207 : vector<32x1xf32> to vector<32x32xf32>
    %209 = arith.mulf %206, %208 : vector<32x32xf32>
    %210 = arith.addf %205, %209 : vector<32x32xf32>
    %211 = vector.extract_strided_slice %170 {offsets = [0, 256], sizes = [32, 32], strides = [1, 1]} : vector<32x1024xf32> to vector<32x32xf32>
    %212 = vector.extract_strided_slice %171 {offsets = [0, 8], sizes = [32, 1], strides = [1, 1]} : vector<32x32xf32> to vector<32x1xf32>
    %213 = vector.broadcast %212 : vector<32x1xf32> to vector<32x32xf32>
    %214 = arith.mulf %211, %213 : vector<32x32xf32>
    %215 = arith.addf %210, %214 : vector<32x32xf32>
    %216 = vector.extract_strided_slice %170 {offsets = [0, 288], sizes = [32, 32], strides = [1, 1]} : vector<32x1024xf32> to vector<32x32xf32>
    %217 = vector.extract_strided_slice %171 {offsets = [0, 9], sizes = [32, 1], strides = [1, 1]} : vector<32x32xf32> to vector<32x1xf32>
    %218 = vector.broadcast %217 : vector<32x1xf32> to vector<32x32xf32>
    %219 = arith.mulf %216, %218 : vector<32x32xf32>
    %220 = arith.addf %215, %219 : vector<32x32xf32>
    %221 = vector.extract_strided_slice %170 {offsets = [0, 320], sizes = [32, 32], strides = [1, 1]} : vector<32x1024xf32> to vector<32x32xf32>
    %222 = vector.extract_strided_slice %171 {offsets = [0, 10], sizes = [32, 1], strides = [1, 1]} : vector<32x32xf32> to vector<32x1xf32>
    %223 = vector.broadcast %222 : vector<32x1xf32> to vector<32x32xf32>
    %224 = arith.mulf %221, %223 : vector<32x32xf32>
    %225 = arith.addf %220, %224 : vector<32x32xf32>
    %226 = vector.extract_strided_slice %170 {offsets = [0, 352], sizes = [32, 32], strides = [1, 1]} : vector<32x1024xf32> to vector<32x32xf32>
    %227 = vector.extract_strided_slice %171 {offsets = [0, 11], sizes = [32, 1], strides = [1, 1]} : vector<32x32xf32> to vector<32x1xf32>
    %228 = vector.broadcast %227 : vector<32x1xf32> to vector<32x32xf32>
    %229 = arith.mulf %226, %228 : vector<32x32xf32>
    %230 = arith.addf %225, %229 : vector<32x32xf32>
    %231 = vector.extract_strided_slice %170 {offsets = [0, 384], sizes = [32, 32], strides = [1, 1]} : vector<32x1024xf32> to vector<32x32xf32>
    %232 = vector.extract_strided_slice %171 {offsets = [0, 12], sizes = [32, 1], strides = [1, 1]} : vector<32x32xf32> to vector<32x1xf32>
    %233 = vector.broadcast %232 : vector<32x1xf32> to vector<32x32xf32>
    %234 = arith.mulf %231, %233 : vector<32x32xf32>
    %235 = arith.addf %230, %234 : vector<32x32xf32>
    %236 = vector.extract_strided_slice %170 {offsets = [0, 416], sizes = [32, 32], strides = [1, 1]} : vector<32x1024xf32> to vector<32x32xf32>
    %237 = vector.extract_strided_slice %171 {offsets = [0, 13], sizes = [32, 1], strides = [1, 1]} : vector<32x32xf32> to vector<32x1xf32>
    %238 = vector.broadcast %237 : vector<32x1xf32> to vector<32x32xf32>
    %239 = arith.mulf %236, %238 : vector<32x32xf32>
    %240 = arith.addf %235, %239 : vector<32x32xf32>
    %241 = vector.extract_strided_slice %170 {offsets = [0, 448], sizes = [32, 32], strides = [1, 1]} : vector<32x1024xf32> to vector<32x32xf32>
    %242 = vector.extract_strided_slice %171 {offsets = [0, 14], sizes = [32, 1], strides = [1, 1]} : vector<32x32xf32> to vector<32x1xf32>
    %243 = vector.broadcast %242 : vector<32x1xf32> to vector<32x32xf32>
    %244 = arith.mulf %241, %243 : vector<32x32xf32>
    %245 = arith.addf %240, %244 : vector<32x32xf32>
    %246 = vector.extract_strided_slice %170 {offsets = [0, 480], sizes = [32, 32], strides = [1, 1]} : vector<32x1024xf32> to vector<32x32xf32>
    %247 = vector.extract_strided_slice %171 {offsets = [0, 15], sizes = [32, 1], strides = [1, 1]} : vector<32x32xf32> to vector<32x1xf32>
    %248 = vector.broadcast %247 : vector<32x1xf32> to vector<32x32xf32>
    %249 = arith.mulf %246, %248 : vector<32x32xf32>
    %250 = arith.addf %245, %249 : vector<32x32xf32>
    %251 = vector.extract_strided_slice %170 {offsets = [0, 512], sizes = [32, 32], strides = [1, 1]} : vector<32x1024xf32> to vector<32x32xf32>
    %252 = vector.extract_strided_slice %171 {offsets = [0, 16], sizes = [32, 1], strides = [1, 1]} : vector<32x32xf32> to vector<32x1xf32>
    %253 = vector.broadcast %252 : vector<32x1xf32> to vector<32x32xf32>
    %254 = arith.mulf %251, %253 : vector<32x32xf32>
    %255 = arith.addf %250, %254 : vector<32x32xf32>
    %256 = vector.extract_strided_slice %170 {offsets = [0, 544], sizes = [32, 32], strides = [1, 1]} : vector<32x1024xf32> to vector<32x32xf32>
    %257 = vector.extract_strided_slice %171 {offsets = [0, 17], sizes = [32, 1], strides = [1, 1]} : vector<32x32xf32> to vector<32x1xf32>
    %258 = vector.broadcast %257 : vector<32x1xf32> to vector<32x32xf32>
    %259 = arith.mulf %256, %258 : vector<32x32xf32>
    %260 = arith.addf %255, %259 : vector<32x32xf32>
    %261 = vector.extract_strided_slice %170 {offsets = [0, 576], sizes = [32, 32], strides = [1, 1]} : vector<32x1024xf32> to vector<32x32xf32>
    %262 = vector.extract_strided_slice %171 {offsets = [0, 18], sizes = [32, 1], strides = [1, 1]} : vector<32x32xf32> to vector<32x1xf32>
    %263 = vector.broadcast %262 : vector<32x1xf32> to vector<32x32xf32>
    %264 = arith.mulf %261, %263 : vector<32x32xf32>
    %265 = arith.addf %260, %264 : vector<32x32xf32>
    %266 = vector.extract_strided_slice %170 {offsets = [0, 608], sizes = [32, 32], strides = [1, 1]} : vector<32x1024xf32> to vector<32x32xf32>
    %267 = vector.extract_strided_slice %171 {offsets = [0, 19], sizes = [32, 1], strides = [1, 1]} : vector<32x32xf32> to vector<32x1xf32>
    %268 = vector.broadcast %267 : vector<32x1xf32> to vector<32x32xf32>
    %269 = arith.mulf %266, %268 : vector<32x32xf32>
    %270 = arith.addf %265, %269 : vector<32x32xf32>
    %271 = vector.extract_strided_slice %170 {offsets = [0, 640], sizes = [32, 32], strides = [1, 1]} : vector<32x1024xf32> to vector<32x32xf32>
    %272 = vector.extract_strided_slice %171 {offsets = [0, 20], sizes = [32, 1], strides = [1, 1]} : vector<32x32xf32> to vector<32x1xf32>
    %273 = vector.broadcast %272 : vector<32x1xf32> to vector<32x32xf32>
    %274 = arith.mulf %271, %273 : vector<32x32xf32>
    %275 = arith.addf %270, %274 : vector<32x32xf32>
    %276 = vector.extract_strided_slice %170 {offsets = [0, 672], sizes = [32, 32], strides = [1, 1]} : vector<32x1024xf32> to vector<32x32xf32>
    %277 = vector.extract_strided_slice %171 {offsets = [0, 21], sizes = [32, 1], strides = [1, 1]} : vector<32x32xf32> to vector<32x1xf32>
    %278 = vector.broadcast %277 : vector<32x1xf32> to vector<32x32xf32>
    %279 = arith.mulf %276, %278 : vector<32x32xf32>
    %280 = arith.addf %275, %279 : vector<32x32xf32>
    %281 = vector.extract_strided_slice %170 {offsets = [0, 704], sizes = [32, 32], strides = [1, 1]} : vector<32x1024xf32> to vector<32x32xf32>
    %282 = vector.extract_strided_slice %171 {offsets = [0, 22], sizes = [32, 1], strides = [1, 1]} : vector<32x32xf32> to vector<32x1xf32>
    %283 = vector.broadcast %282 : vector<32x1xf32> to vector<32x32xf32>
    %284 = arith.mulf %281, %283 : vector<32x32xf32>
    %285 = arith.addf %280, %284 : vector<32x32xf32>
    %286 = vector.extract_strided_slice %170 {offsets = [0, 736], sizes = [32, 32], strides = [1, 1]} : vector<32x1024xf32> to vector<32x32xf32>
    %287 = vector.extract_strided_slice %171 {offsets = [0, 23], sizes = [32, 1], strides = [1, 1]} : vector<32x32xf32> to vector<32x1xf32>
    %288 = vector.broadcast %287 : vector<32x1xf32> to vector<32x32xf32>
    %289 = arith.mulf %286, %288 : vector<32x32xf32>
    %290 = arith.addf %285, %289 : vector<32x32xf32>
    %291 = vector.extract_strided_slice %170 {offsets = [0, 768], sizes = [32, 32], strides = [1, 1]} : vector<32x1024xf32> to vector<32x32xf32>
    %292 = vector.extract_strided_slice %171 {offsets = [0, 24], sizes = [32, 1], strides = [1, 1]} : vector<32x32xf32> to vector<32x1xf32>
    %293 = vector.broadcast %292 : vector<32x1xf32> to vector<32x32xf32>
    %294 = arith.mulf %291, %293 : vector<32x32xf32>
    %295 = arith.addf %290, %294 : vector<32x32xf32>
    %296 = vector.extract_strided_slice %170 {offsets = [0, 800], sizes = [32, 32], strides = [1, 1]} : vector<32x1024xf32> to vector<32x32xf32>
    %297 = vector.extract_strided_slice %171 {offsets = [0, 25], sizes = [32, 1], strides = [1, 1]} : vector<32x32xf32> to vector<32x1xf32>
    %298 = vector.broadcast %297 : vector<32x1xf32> to vector<32x32xf32>
    %299 = arith.mulf %296, %298 : vector<32x32xf32>
    %300 = arith.addf %295, %299 : vector<32x32xf32>
    %301 = vector.extract_strided_slice %170 {offsets = [0, 832], sizes = [32, 32], strides = [1, 1]} : vector<32x1024xf32> to vector<32x32xf32>
    %302 = vector.extract_strided_slice %171 {offsets = [0, 26], sizes = [32, 1], strides = [1, 1]} : vector<32x32xf32> to vector<32x1xf32>
    %303 = vector.broadcast %302 : vector<32x1xf32> to vector<32x32xf32>
    %304 = arith.mulf %301, %303 : vector<32x32xf32>
    %305 = arith.addf %300, %304 : vector<32x32xf32>
    %306 = vector.extract_strided_slice %170 {offsets = [0, 864], sizes = [32, 32], strides = [1, 1]} : vector<32x1024xf32> to vector<32x32xf32>
    %307 = vector.extract_strided_slice %171 {offsets = [0, 27], sizes = [32, 1], strides = [1, 1]} : vector<32x32xf32> to vector<32x1xf32>
    %308 = vector.broadcast %307 : vector<32x1xf32> to vector<32x32xf32>
    %309 = arith.mulf %306, %308 : vector<32x32xf32>
    %310 = arith.addf %305, %309 : vector<32x32xf32>
    %311 = vector.extract_strided_slice %170 {offsets = [0, 896], sizes = [32, 32], strides = [1, 1]} : vector<32x1024xf32> to vector<32x32xf32>
    %312 = vector.extract_strided_slice %171 {offsets = [0, 28], sizes = [32, 1], strides = [1, 1]} : vector<32x32xf32> to vector<32x1xf32>
    %313 = vector.broadcast %312 : vector<32x1xf32> to vector<32x32xf32>
    %314 = arith.mulf %311, %313 : vector<32x32xf32>
    %315 = arith.addf %310, %314 : vector<32x32xf32>
    %316 = vector.extract_strided_slice %170 {offsets = [0, 928], sizes = [32, 32], strides = [1, 1]} : vector<32x1024xf32> to vector<32x32xf32>
    %317 = vector.extract_strided_slice %171 {offsets = [0, 29], sizes = [32, 1], strides = [1, 1]} : vector<32x32xf32> to vector<32x1xf32>
    %318 = vector.broadcast %317 : vector<32x1xf32> to vector<32x32xf32>
    %319 = arith.mulf %316, %318 : vector<32x32xf32>
    %320 = arith.addf %315, %319 : vector<32x32xf32>
    %321 = vector.extract_strided_slice %170 {offsets = [0, 960], sizes = [32, 32], strides = [1, 1]} : vector<32x1024xf32> to vector<32x32xf32>
    %322 = vector.extract_strided_slice %171 {offsets = [0, 30], sizes = [32, 1], strides = [1, 1]} : vector<32x32xf32> to vector<32x1xf32>
    %323 = vector.broadcast %322 : vector<32x1xf32> to vector<32x32xf32>
    %324 = arith.mulf %321, %323 : vector<32x32xf32>
    %325 = arith.addf %320, %324 : vector<32x32xf32>
    %326 = vector.extract_strided_slice %170 {offsets = [0, 992], sizes = [32, 32], strides = [1, 1]} : vector<32x1024xf32> to vector<32x32xf32>
    %327 = vector.extract_strided_slice %171 {offsets = [0, 31], sizes = [32, 1], strides = [1, 1]} : vector<32x32xf32> to vector<32x1xf32>
    %328 = vector.broadcast %327 : vector<32x1xf32> to vector<32x32xf32>
    %329 = arith.mulf %326, %328 : vector<32x32xf32>
    %330 = arith.addf %325, %329 : vector<32x32xf32>
    %331 = vector.extract_strided_slice %4 {offsets = [0, 64], sizes = [32, 32], strides = [1, 1]} : vector<32x128xf32> to vector<32x32xf32>
    %cst_8 = arith.constant dense<0.000000e+00> : vector<32x1024xf32>
    %332 = tpu.matmul %331, %6, %cst_8 {dimension_numbers = #tpu.dot_dimension_numbers<[1], [0], [0], [1], [0, 0, 1, 1], [], []>} : vector<32x32xf32>, vector<32x1024xf32>, vector<32x1024xf32> -> vector<32x1024xf32>
    %333 = vector.extract_strided_slice %5 {offsets = [0, 64], sizes = [32, 32], strides = [1, 1]} : vector<32x128xf32> to vector<32x32xf32>
    %334 = vector.extract_strided_slice %332 {offsets = [0, 0], sizes = [32, 32], strides = [1, 1]} : vector<32x1024xf32> to vector<32x32xf32>
    %335 = vector.extract_strided_slice %333 {offsets = [0, 0], sizes = [32, 1], strides = [1, 1]} : vector<32x32xf32> to vector<32x1xf32>
    %336 = vector.broadcast %335 : vector<32x1xf32> to vector<32x32xf32>
    %337 = arith.mulf %334, %336 : vector<32x32xf32>
    %338 = vector.extract_strided_slice %332 {offsets = [0, 32], sizes = [32, 32], strides = [1, 1]} : vector<32x1024xf32> to vector<32x32xf32>
    %339 = vector.extract_strided_slice %333 {offsets = [0, 1], sizes = [32, 1], strides = [1, 1]} : vector<32x32xf32> to vector<32x1xf32>
    %340 = vector.broadcast %339 : vector<32x1xf32> to vector<32x32xf32>
    %341 = arith.mulf %338, %340 : vector<32x32xf32>
    %342 = arith.addf %337, %341 : vector<32x32xf32>
    %343 = vector.extract_strided_slice %332 {offsets = [0, 64], sizes = [32, 32], strides = [1, 1]} : vector<32x1024xf32> to vector<32x32xf32>
    %344 = vector.extract_strided_slice %333 {offsets = [0, 2], sizes = [32, 1], strides = [1, 1]} : vector<32x32xf32> to vector<32x1xf32>
    %345 = vector.broadcast %344 : vector<32x1xf32> to vector<32x32xf32>
    %346 = arith.mulf %343, %345 : vector<32x32xf32>
    %347 = arith.addf %342, %346 : vector<32x32xf32>
    %348 = vector.extract_strided_slice %332 {offsets = [0, 96], sizes = [32, 32], strides = [1, 1]} : vector<32x1024xf32> to vector<32x32xf32>
    %349 = vector.extract_strided_slice %333 {offsets = [0, 3], sizes = [32, 1], strides = [1, 1]} : vector<32x32xf32> to vector<32x1xf32>
    %350 = vector.broadcast %349 : vector<32x1xf32> to vector<32x32xf32>
    %351 = arith.mulf %348, %350 : vector<32x32xf32>
    %352 = arith.addf %347, %351 : vector<32x32xf32>
    %353 = vector.extract_strided_slice %332 {offsets = [0, 128], sizes = [32, 32], strides = [1, 1]} : vector<32x1024xf32> to vector<32x32xf32>
    %354 = vector.extract_strided_slice %333 {offsets = [0, 4], sizes = [32, 1], strides = [1, 1]} : vector<32x32xf32> to vector<32x1xf32>
    %355 = vector.broadcast %354 : vector<32x1xf32> to vector<32x32xf32>
    %356 = arith.mulf %353, %355 : vector<32x32xf32>
    %357 = arith.addf %352, %356 : vector<32x32xf32>
    %358 = vector.extract_strided_slice %332 {offsets = [0, 160], sizes = [32, 32], strides = [1, 1]} : vector<32x1024xf32> to vector<32x32xf32>
    %359 = vector.extract_strided_slice %333 {offsets = [0, 5], sizes = [32, 1], strides = [1, 1]} : vector<32x32xf32> to vector<32x1xf32>
    %360 = vector.broadcast %359 : vector<32x1xf32> to vector<32x32xf32>
    %361 = arith.mulf %358, %360 : vector<32x32xf32>
    %362 = arith.addf %357, %361 : vector<32x32xf32>
    %363 = vector.extract_strided_slice %332 {offsets = [0, 192], sizes = [32, 32], strides = [1, 1]} : vector<32x1024xf32> to vector<32x32xf32>
    %364 = vector.extract_strided_slice %333 {offsets = [0, 6], sizes = [32, 1], strides = [1, 1]} : vector<32x32xf32> to vector<32x1xf32>
    %365 = vector.broadcast %364 : vector<32x1xf32> to vector<32x32xf32>
    %366 = arith.mulf %363, %365 : vector<32x32xf32>
    %367 = arith.addf %362, %366 : vector<32x32xf32>
    %368 = vector.extract_strided_slice %332 {offsets = [0, 224], sizes = [32, 32], strides = [1, 1]} : vector<32x1024xf32> to vector<32x32xf32>
    %369 = vector.extract_strided_slice %333 {offsets = [0, 7], sizes = [32, 1], strides = [1, 1]} : vector<32x32xf32> to vector<32x1xf32>
    %370 = vector.broadcast %369 : vector<32x1xf32> to vector<32x32xf32>
    %371 = arith.mulf %368, %370 : vector<32x32xf32>
    %372 = arith.addf %367, %371 : vector<32x32xf32>
    %373 = vector.extract_strided_slice %332 {offsets = [0, 256], sizes = [32, 32], strides = [1, 1]} : vector<32x1024xf32> to vector<32x32xf32>
    %374 = vector.extract_strided_slice %333 {offsets = [0, 8], sizes = [32, 1], strides = [1, 1]} : vector<32x32xf32> to vector<32x1xf32>
    %375 = vector.broadcast %374 : vector<32x1xf32> to vector<32x32xf32>
    %376 = arith.mulf %373, %375 : vector<32x32xf32>
    %377 = arith.addf %372, %376 : vector<32x32xf32>
    %378 = vector.extract_strided_slice %332 {offsets = [0, 288], sizes = [32, 32], strides = [1, 1]} : vector<32x1024xf32> to vector<32x32xf32>
    %379 = vector.extract_strided_slice %333 {offsets = [0, 9], sizes = [32, 1], strides = [1, 1]} : vector<32x32xf32> to vector<32x1xf32>
    %380 = vector.broadcast %379 : vector<32x1xf32> to vector<32x32xf32>
    %381 = arith.mulf %378, %380 : vector<32x32xf32>
    %382 = arith.addf %377, %381 : vector<32x32xf32>
    %383 = vector.extract_strided_slice %332 {offsets = [0, 320], sizes = [32, 32], strides = [1, 1]} : vector<32x1024xf32> to vector<32x32xf32>
    %384 = vector.extract_strided_slice %333 {offsets = [0, 10], sizes = [32, 1], strides = [1, 1]} : vector<32x32xf32> to vector<32x1xf32>
    %385 = vector.broadcast %384 : vector<32x1xf32> to vector<32x32xf32>
    %386 = arith.mulf %383, %385 : vector<32x32xf32>
    %387 = arith.addf %382, %386 : vector<32x32xf32>
    %388 = vector.extract_strided_slice %332 {offsets = [0, 352], sizes = [32, 32], strides = [1, 1]} : vector<32x1024xf32> to vector<32x32xf32>
    %389 = vector.extract_strided_slice %333 {offsets = [0, 11], sizes = [32, 1], strides = [1, 1]} : vector<32x32xf32> to vector<32x1xf32>
    %390 = vector.broadcast %389 : vector<32x1xf32> to vector<32x32xf32>
    %391 = arith.mulf %388, %390 : vector<32x32xf32>
    %392 = arith.addf %387, %391 : vector<32x32xf32>
    %393 = vector.extract_strided_slice %332 {offsets = [0, 384], sizes = [32, 32], strides = [1, 1]} : vector<32x1024xf32> to vector<32x32xf32>
    %394 = vector.extract_strided_slice %333 {offsets = [0, 12], sizes = [32, 1], strides = [1, 1]} : vector<32x32xf32> to vector<32x1xf32>
    %395 = vector.broadcast %394 : vector<32x1xf32> to vector<32x32xf32>
    %396 = arith.mulf %393, %395 : vector<32x32xf32>
    %397 = arith.addf %392, %396 : vector<32x32xf32>
    %398 = vector.extract_strided_slice %332 {offsets = [0, 416], sizes = [32, 32], strides = [1, 1]} : vector<32x1024xf32> to vector<32x32xf32>
    %399 = vector.extract_strided_slice %333 {offsets = [0, 13], sizes = [32, 1], strides = [1, 1]} : vector<32x32xf32> to vector<32x1xf32>
    %400 = vector.broadcast %399 : vector<32x1xf32> to vector<32x32xf32>
    %401 = arith.mulf %398, %400 : vector<32x32xf32>
    %402 = arith.addf %397, %401 : vector<32x32xf32>
    %403 = vector.extract_strided_slice %332 {offsets = [0, 448], sizes = [32, 32], strides = [1, 1]} : vector<32x1024xf32> to vector<32x32xf32>
    %404 = vector.extract_strided_slice %333 {offsets = [0, 14], sizes = [32, 1], strides = [1, 1]} : vector<32x32xf32> to vector<32x1xf32>
    %405 = vector.broadcast %404 : vector<32x1xf32> to vector<32x32xf32>
    %406 = arith.mulf %403, %405 : vector<32x32xf32>
    %407 = arith.addf %402, %406 : vector<32x32xf32>
    %408 = vector.extract_strided_slice %332 {offsets = [0, 480], sizes = [32, 32], strides = [1, 1]} : vector<32x1024xf32> to vector<32x32xf32>
    %409 = vector.extract_strided_slice %333 {offsets = [0, 15], sizes = [32, 1], strides = [1, 1]} : vector<32x32xf32> to vector<32x1xf32>
    %410 = vector.broadcast %409 : vector<32x1xf32> to vector<32x32xf32>
    %411 = arith.mulf %408, %410 : vector<32x32xf32>
    %412 = arith.addf %407, %411 : vector<32x32xf32>
    %413 = vector.extract_strided_slice %332 {offsets = [0, 512], sizes = [32, 32], strides = [1, 1]} : vector<32x1024xf32> to vector<32x32xf32>
    %414 = vector.extract_strided_slice %333 {offsets = [0, 16], sizes = [32, 1], strides = [1, 1]} : vector<32x32xf32> to vector<32x1xf32>
    %415 = vector.broadcast %414 : vector<32x1xf32> to vector<32x32xf32>
    %416 = arith.mulf %413, %415 : vector<32x32xf32>
    %417 = arith.addf %412, %416 : vector<32x32xf32>
    %418 = vector.extract_strided_slice %332 {offsets = [0, 544], sizes = [32, 32], strides = [1, 1]} : vector<32x1024xf32> to vector<32x32xf32>
    %419 = vector.extract_strided_slice %333 {offsets = [0, 17], sizes = [32, 1], strides = [1, 1]} : vector<32x32xf32> to vector<32x1xf32>
    %420 = vector.broadcast %419 : vector<32x1xf32> to vector<32x32xf32>
    %421 = arith.mulf %418, %420 : vector<32x32xf32>
    %422 = arith.addf %417, %421 : vector<32x32xf32>
    %423 = vector.extract_strided_slice %332 {offsets = [0, 576], sizes = [32, 32], strides = [1, 1]} : vector<32x1024xf32> to vector<32x32xf32>
    %424 = vector.extract_strided_slice %333 {offsets = [0, 18], sizes = [32, 1], strides = [1, 1]} : vector<32x32xf32> to vector<32x1xf32>
    %425 = vector.broadcast %424 : vector<32x1xf32> to vector<32x32xf32>
    %426 = arith.mulf %423, %425 : vector<32x32xf32>
    %427 = arith.addf %422, %426 : vector<32x32xf32>
    %428 = vector.extract_strided_slice %332 {offsets = [0, 608], sizes = [32, 32], strides = [1, 1]} : vector<32x1024xf32> to vector<32x32xf32>
    %429 = vector.extract_strided_slice %333 {offsets = [0, 19], sizes = [32, 1], strides = [1, 1]} : vector<32x32xf32> to vector<32x1xf32>
    %430 = vector.broadcast %429 : vector<32x1xf32> to vector<32x32xf32>
    %431 = arith.mulf %428, %430 : vector<32x32xf32>
    %432 = arith.addf %427, %431 : vector<32x32xf32>
    %433 = vector.extract_strided_slice %332 {offsets = [0, 640], sizes = [32, 32], strides = [1, 1]} : vector<32x1024xf32> to vector<32x32xf32>
    %434 = vector.extract_strided_slice %333 {offsets = [0, 20], sizes = [32, 1], strides = [1, 1]} : vector<32x32xf32> to vector<32x1xf32>
    %435 = vector.broadcast %434 : vector<32x1xf32> to vector<32x32xf32>
    %436 = arith.mulf %433, %435 : vector<32x32xf32>
    %437 = arith.addf %432, %436 : vector<32x32xf32>
    %438 = vector.extract_strided_slice %332 {offsets = [0, 672], sizes = [32, 32], strides = [1, 1]} : vector<32x1024xf32> to vector<32x32xf32>
    %439 = vector.extract_strided_slice %333 {offsets = [0, 21], sizes = [32, 1], strides = [1, 1]} : vector<32x32xf32> to vector<32x1xf32>
    %440 = vector.broadcast %439 : vector<32x1xf32> to vector<32x32xf32>
    %441 = arith.mulf %438, %440 : vector<32x32xf32>
    %442 = arith.addf %437, %441 : vector<32x32xf32>
    %443 = vector.extract_strided_slice %332 {offsets = [0, 704], sizes = [32, 32], strides = [1, 1]} : vector<32x1024xf32> to vector<32x32xf32>
    %444 = vector.extract_strided_slice %333 {offsets = [0, 22], sizes = [32, 1], strides = [1, 1]} : vector<32x32xf32> to vector<32x1xf32>
    %445 = vector.broadcast %444 : vector<32x1xf32> to vector<32x32xf32>
    %446 = arith.mulf %443, %445 : vector<32x32xf32>
    %447 = arith.addf %442, %446 : vector<32x32xf32>
    %448 = vector.extract_strided_slice %332 {offsets = [0, 736], sizes = [32, 32], strides = [1, 1]} : vector<32x1024xf32> to vector<32x32xf32>
    %449 = vector.extract_strided_slice %333 {offsets = [0, 23], sizes = [32, 1], strides = [1, 1]} : vector<32x32xf32> to vector<32x1xf32>
    %450 = vector.broadcast %449 : vector<32x1xf32> to vector<32x32xf32>
    %451 = arith.mulf %448, %450 : vector<32x32xf32>
    %452 = arith.addf %447, %451 : vector<32x32xf32>
    %453 = vector.extract_strided_slice %332 {offsets = [0, 768], sizes = [32, 32], strides = [1, 1]} : vector<32x1024xf32> to vector<32x32xf32>
    %454 = vector.extract_strided_slice %333 {offsets = [0, 24], sizes = [32, 1], strides = [1, 1]} : vector<32x32xf32> to vector<32x1xf32>
    %455 = vector.broadcast %454 : vector<32x1xf32> to vector<32x32xf32>
    %456 = arith.mulf %453, %455 : vector<32x32xf32>
    %457 = arith.addf %452, %456 : vector<32x32xf32>
    %458 = vector.extract_strided_slice %332 {offsets = [0, 800], sizes = [32, 32], strides = [1, 1]} : vector<32x1024xf32> to vector<32x32xf32>
    %459 = vector.extract_strided_slice %333 {offsets = [0, 25], sizes = [32, 1], strides = [1, 1]} : vector<32x32xf32> to vector<32x1xf32>
    %460 = vector.broadcast %459 : vector<32x1xf32> to vector<32x32xf32>
    %461 = arith.mulf %458, %460 : vector<32x32xf32>
    %462 = arith.addf %457, %461 : vector<32x32xf32>
    %463 = vector.extract_strided_slice %332 {offsets = [0, 832], sizes = [32, 32], strides = [1, 1]} : vector<32x1024xf32> to vector<32x32xf32>
    %464 = vector.extract_strided_slice %333 {offsets = [0, 26], sizes = [32, 1], strides = [1, 1]} : vector<32x32xf32> to vector<32x1xf32>
    %465 = vector.broadcast %464 : vector<32x1xf32> to vector<32x32xf32>
    %466 = arith.mulf %463, %465 : vector<32x32xf32>
    %467 = arith.addf %462, %466 : vector<32x32xf32>
    %468 = vector.extract_strided_slice %332 {offsets = [0, 864], sizes = [32, 32], strides = [1, 1]} : vector<32x1024xf32> to vector<32x32xf32>
    %469 = vector.extract_strided_slice %333 {offsets = [0, 27], sizes = [32, 1], strides = [1, 1]} : vector<32x32xf32> to vector<32x1xf32>
    %470 = vector.broadcast %469 : vector<32x1xf32> to vector<32x32xf32>
    %471 = arith.mulf %468, %470 : vector<32x32xf32>
    %472 = arith.addf %467, %471 : vector<32x32xf32>
    %473 = vector.extract_strided_slice %332 {offsets = [0, 896], sizes = [32, 32], strides = [1, 1]} : vector<32x1024xf32> to vector<32x32xf32>
    %474 = vector.extract_strided_slice %333 {offsets = [0, 28], sizes = [32, 1], strides = [1, 1]} : vector<32x32xf32> to vector<32x1xf32>
    %475 = vector.broadcast %474 : vector<32x1xf32> to vector<32x32xf32>
    %476 = arith.mulf %473, %475 : vector<32x32xf32>
    %477 = arith.addf %472, %476 : vector<32x32xf32>
    %478 = vector.extract_strided_slice %332 {offsets = [0, 928], sizes = [32, 32], strides = [1, 1]} : vector<32x1024xf32> to vector<32x32xf32>
    %479 = vector.extract_strided_slice %333 {offsets = [0, 29], sizes = [32, 1], strides = [1, 1]} : vector<32x32xf32> to vector<32x1xf32>
    %480 = vector.broadcast %479 : vector<32x1xf32> to vector<32x32xf32>
    %481 = arith.mulf %478, %480 : vector<32x32xf32>
    %482 = arith.addf %477, %481 : vector<32x32xf32>
    %483 = vector.extract_strided_slice %332 {offsets = [0, 960], sizes = [32, 32], strides = [1, 1]} : vector<32x1024xf32> to vector<32x32xf32>
    %484 = vector.extract_strided_slice %333 {offsets = [0, 30], sizes = [32, 1], strides = [1, 1]} : vector<32x32xf32> to vector<32x1xf32>
    %485 = vector.broadcast %484 : vector<32x1xf32> to vector<32x32xf32>
    %486 = arith.mulf %483, %485 : vector<32x32xf32>
    %487 = arith.addf %482, %486 : vector<32x32xf32>
    %488 = vector.extract_strided_slice %332 {offsets = [0, 992], sizes = [32, 32], strides = [1, 1]} : vector<32x1024xf32> to vector<32x32xf32>
    %489 = vector.extract_strided_slice %333 {offsets = [0, 31], sizes = [32, 1], strides = [1, 1]} : vector<32x32xf32> to vector<32x1xf32>
    %490 = vector.broadcast %489 : vector<32x1xf32> to vector<32x32xf32>
    %491 = arith.mulf %488, %490 : vector<32x32xf32>
    %492 = arith.addf %487, %491 : vector<32x32xf32>
    %493 = vector.extract_strided_slice %4 {offsets = [0, 96], sizes = [32, 32], strides = [1, 1]} : vector<32x128xf32> to vector<32x32xf32>
    %cst_9 = arith.constant dense<0.000000e+00> : vector<32x1024xf32>
    %494 = tpu.matmul %493, %6, %cst_9 {dimension_numbers = #tpu.dot_dimension_numbers<[1], [0], [0], [1], [0, 0, 1, 1], [], []>} : vector<32x32xf32>, vector<32x1024xf32>, vector<32x1024xf32> -> vector<32x1024xf32>
    %495 = vector.extract_strided_slice %5 {offsets = [0, 96], sizes = [32, 32], strides = [1, 1]} : vector<32x128xf32> to vector<32x32xf32>
    %496 = vector.extract_strided_slice %494 {offsets = [0, 0], sizes = [32, 32], strides = [1, 1]} : vector<32x1024xf32> to vector<32x32xf32>
    %497 = vector.extract_strided_slice %495 {offsets = [0, 0], sizes = [32, 1], strides = [1, 1]} : vector<32x32xf32> to vector<32x1xf32>
    %498 = vector.broadcast %497 : vector<32x1xf32> to vector<32x32xf32>
    %499 = arith.mulf %496, %498 : vector<32x32xf32>
    %500 = vector.extract_strided_slice %494 {offsets = [0, 32], sizes = [32, 32], strides = [1, 1]} : vector<32x1024xf32> to vector<32x32xf32>
    %501 = vector.extract_strided_slice %495 {offsets = [0, 1], sizes = [32, 1], strides = [1, 1]} : vector<32x32xf32> to vector<32x1xf32>
    %502 = vector.broadcast %501 : vector<32x1xf32> to vector<32x32xf32>
    %503 = arith.mulf %500, %502 : vector<32x32xf32>
    %504 = arith.addf %499, %503 : vector<32x32xf32>
    %505 = vector.extract_strided_slice %494 {offsets = [0, 64], sizes = [32, 32], strides = [1, 1]} : vector<32x1024xf32> to vector<32x32xf32>
    %506 = vector.extract_strided_slice %495 {offsets = [0, 2], sizes = [32, 1], strides = [1, 1]} : vector<32x32xf32> to vector<32x1xf32>
    %507 = vector.broadcast %506 : vector<32x1xf32> to vector<32x32xf32>
    %508 = arith.mulf %505, %507 : vector<32x32xf32>
    %509 = arith.addf %504, %508 : vector<32x32xf32>
    %510 = vector.extract_strided_slice %494 {offsets = [0, 96], sizes = [32, 32], strides = [1, 1]} : vector<32x1024xf32> to vector<32x32xf32>
    %511 = vector.extract_strided_slice %495 {offsets = [0, 3], sizes = [32, 1], strides = [1, 1]} : vector<32x32xf32> to vector<32x1xf32>
    %512 = vector.broadcast %511 : vector<32x1xf32> to vector<32x32xf32>
    %513 = arith.mulf %510, %512 : vector<32x32xf32>
    %514 = arith.addf %509, %513 : vector<32x32xf32>
    %515 = vector.extract_strided_slice %494 {offsets = [0, 128], sizes = [32, 32], strides = [1, 1]} : vector<32x1024xf32> to vector<32x32xf32>
    %516 = vector.extract_strided_slice %495 {offsets = [0, 4], sizes = [32, 1], strides = [1, 1]} : vector<32x32xf32> to vector<32x1xf32>
    %517 = vector.broadcast %516 : vector<32x1xf32> to vector<32x32xf32>
    %518 = arith.mulf %515, %517 : vector<32x32xf32>
    %519 = arith.addf %514, %518 : vector<32x32xf32>
    %520 = vector.extract_strided_slice %494 {offsets = [0, 160], sizes = [32, 32], strides = [1, 1]} : vector<32x1024xf32> to vector<32x32xf32>
    %521 = vector.extract_strided_slice %495 {offsets = [0, 5], sizes = [32, 1], strides = [1, 1]} : vector<32x32xf32> to vector<32x1xf32>
    %522 = vector.broadcast %521 : vector<32x1xf32> to vector<32x32xf32>
    %523 = arith.mulf %520, %522 : vector<32x32xf32>
    %524 = arith.addf %519, %523 : vector<32x32xf32>
    %525 = vector.extract_strided_slice %494 {offsets = [0, 192], sizes = [32, 32], strides = [1, 1]} : vector<32x1024xf32> to vector<32x32xf32>
    %526 = vector.extract_strided_slice %495 {offsets = [0, 6], sizes = [32, 1], strides = [1, 1]} : vector<32x32xf32> to vector<32x1xf32>
    %527 = vector.broadcast %526 : vector<32x1xf32> to vector<32x32xf32>
    %528 = arith.mulf %525, %527 : vector<32x32xf32>
    %529 = arith.addf %524, %528 : vector<32x32xf32>
    %530 = vector.extract_strided_slice %494 {offsets = [0, 224], sizes = [32, 32], strides = [1, 1]} : vector<32x1024xf32> to vector<32x32xf32>
    %531 = vector.extract_strided_slice %495 {offsets = [0, 7], sizes = [32, 1], strides = [1, 1]} : vector<32x32xf32> to vector<32x1xf32>
    %532 = vector.broadcast %531 : vector<32x1xf32> to vector<32x32xf32>
    %533 = arith.mulf %530, %532 : vector<32x32xf32>
    %534 = arith.addf %529, %533 : vector<32x32xf32>
    %535 = vector.extract_strided_slice %494 {offsets = [0, 256], sizes = [32, 32], strides = [1, 1]} : vector<32x1024xf32> to vector<32x32xf32>
    %536 = vector.extract_strided_slice %495 {offsets = [0, 8], sizes = [32, 1], strides = [1, 1]} : vector<32x32xf32> to vector<32x1xf32>
    %537 = vector.broadcast %536 : vector<32x1xf32> to vector<32x32xf32>
    %538 = arith.mulf %535, %537 : vector<32x32xf32>
    %539 = arith.addf %534, %538 : vector<32x32xf32>
    %540 = vector.extract_strided_slice %494 {offsets = [0, 288], sizes = [32, 32], strides = [1, 1]} : vector<32x1024xf32> to vector<32x32xf32>
    %541 = vector.extract_strided_slice %495 {offsets = [0, 9], sizes = [32, 1], strides = [1, 1]} : vector<32x32xf32> to vector<32x1xf32>
    %542 = vector.broadcast %541 : vector<32x1xf32> to vector<32x32xf32>
    %543 = arith.mulf %540, %542 : vector<32x32xf32>
    %544 = arith.addf %539, %543 : vector<32x32xf32>
    %545 = vector.extract_strided_slice %494 {offsets = [0, 320], sizes = [32, 32], strides = [1, 1]} : vector<32x1024xf32> to vector<32x32xf32>
    %546 = vector.extract_strided_slice %495 {offsets = [0, 10], sizes = [32, 1], strides = [1, 1]} : vector<32x32xf32> to vector<32x1xf32>
    %547 = vector.broadcast %546 : vector<32x1xf32> to vector<32x32xf32>
    %548 = arith.mulf %545, %547 : vector<32x32xf32>
    %549 = arith.addf %544, %548 : vector<32x32xf32>
    %550 = vector.extract_strided_slice %494 {offsets = [0, 352], sizes = [32, 32], strides = [1, 1]} : vector<32x1024xf32> to vector<32x32xf32>
    %551 = vector.extract_strided_slice %495 {offsets = [0, 11], sizes = [32, 1], strides = [1, 1]} : vector<32x32xf32> to vector<32x1xf32>
    %552 = vector.broadcast %551 : vector<32x1xf32> to vector<32x32xf32>
    %553 = arith.mulf %550, %552 : vector<32x32xf32>
    %554 = arith.addf %549, %553 : vector<32x32xf32>
    %555 = vector.extract_strided_slice %494 {offsets = [0, 384], sizes = [32, 32], strides = [1, 1]} : vector<32x1024xf32> to vector<32x32xf32>
    %556 = vector.extract_strided_slice %495 {offsets = [0, 12], sizes = [32, 1], strides = [1, 1]} : vector<32x32xf32> to vector<32x1xf32>
    %557 = vector.broadcast %556 : vector<32x1xf32> to vector<32x32xf32>
    %558 = arith.mulf %555, %557 : vector<32x32xf32>
    %559 = arith.addf %554, %558 : vector<32x32xf32>
    %560 = vector.extract_strided_slice %494 {offsets = [0, 416], sizes = [32, 32], strides = [1, 1]} : vector<32x1024xf32> to vector<32x32xf32>
    %561 = vector.extract_strided_slice %495 {offsets = [0, 13], sizes = [32, 1], strides = [1, 1]} : vector<32x32xf32> to vector<32x1xf32>
    %562 = vector.broadcast %561 : vector<32x1xf32> to vector<32x32xf32>
    %563 = arith.mulf %560, %562 : vector<32x32xf32>
    %564 = arith.addf %559, %563 : vector<32x32xf32>
    %565 = vector.extract_strided_slice %494 {offsets = [0, 448], sizes = [32, 32], strides = [1, 1]} : vector<32x1024xf32> to vector<32x32xf32>
    %566 = vector.extract_strided_slice %495 {offsets = [0, 14], sizes = [32, 1], strides = [1, 1]} : vector<32x32xf32> to vector<32x1xf32>
    %567 = vector.broadcast %566 : vector<32x1xf32> to vector<32x32xf32>
    %568 = arith.mulf %565, %567 : vector<32x32xf32>
    %569 = arith.addf %564, %568 : vector<32x32xf32>
    %570 = vector.extract_strided_slice %494 {offsets = [0, 480], sizes = [32, 32], strides = [1, 1]} : vector<32x1024xf32> to vector<32x32xf32>
    %571 = vector.extract_strided_slice %495 {offsets = [0, 15], sizes = [32, 1], strides = [1, 1]} : vector<32x32xf32> to vector<32x1xf32>
    %572 = vector.broadcast %571 : vector<32x1xf32> to vector<32x32xf32>
    %573 = arith.mulf %570, %572 : vector<32x32xf32>
    %574 = arith.addf %569, %573 : vector<32x32xf32>
    %575 = vector.extract_strided_slice %494 {offsets = [0, 512], sizes = [32, 32], strides = [1, 1]} : vector<32x1024xf32> to vector<32x32xf32>
    %576 = vector.extract_strided_slice %495 {offsets = [0, 16], sizes = [32, 1], strides = [1, 1]} : vector<32x32xf32> to vector<32x1xf32>
    %577 = vector.broadcast %576 : vector<32x1xf32> to vector<32x32xf32>
    %578 = arith.mulf %575, %577 : vector<32x32xf32>
    %579 = arith.addf %574, %578 : vector<32x32xf32>
    %580 = vector.extract_strided_slice %494 {offsets = [0, 544], sizes = [32, 32], strides = [1, 1]} : vector<32x1024xf32> to vector<32x32xf32>
    %581 = vector.extract_strided_slice %495 {offsets = [0, 17], sizes = [32, 1], strides = [1, 1]} : vector<32x32xf32> to vector<32x1xf32>
    %582 = vector.broadcast %581 : vector<32x1xf32> to vector<32x32xf32>
    %583 = arith.mulf %580, %582 : vector<32x32xf32>
    %584 = arith.addf %579, %583 : vector<32x32xf32>
    %585 = vector.extract_strided_slice %494 {offsets = [0, 576], sizes = [32, 32], strides = [1, 1]} : vector<32x1024xf32> to vector<32x32xf32>
    %586 = vector.extract_strided_slice %495 {offsets = [0, 18], sizes = [32, 1], strides = [1, 1]} : vector<32x32xf32> to vector<32x1xf32>
    %587 = vector.broadcast %586 : vector<32x1xf32> to vector<32x32xf32>
    %588 = arith.mulf %585, %587 : vector<32x32xf32>
    %589 = arith.addf %584, %588 : vector<32x32xf32>
    %590 = vector.extract_strided_slice %494 {offsets = [0, 608], sizes = [32, 32], strides = [1, 1]} : vector<32x1024xf32> to vector<32x32xf32>
    %591 = vector.extract_strided_slice %495 {offsets = [0, 19], sizes = [32, 1], strides = [1, 1]} : vector<32x32xf32> to vector<32x1xf32>
    %592 = vector.broadcast %591 : vector<32x1xf32> to vector<32x32xf32>
    %593 = arith.mulf %590, %592 : vector<32x32xf32>
    %594 = arith.addf %589, %593 : vector<32x32xf32>
    %595 = vector.extract_strided_slice %494 {offsets = [0, 640], sizes = [32, 32], strides = [1, 1]} : vector<32x1024xf32> to vector<32x32xf32>
    %596 = vector.extract_strided_slice %495 {offsets = [0, 20], sizes = [32, 1], strides = [1, 1]} : vector<32x32xf32> to vector<32x1xf32>
    %597 = vector.broadcast %596 : vector<32x1xf32> to vector<32x32xf32>
    %598 = arith.mulf %595, %597 : vector<32x32xf32>
    %599 = arith.addf %594, %598 : vector<32x32xf32>
    %600 = vector.extract_strided_slice %494 {offsets = [0, 672], sizes = [32, 32], strides = [1, 1]} : vector<32x1024xf32> to vector<32x32xf32>
    %601 = vector.extract_strided_slice %495 {offsets = [0, 21], sizes = [32, 1], strides = [1, 1]} : vector<32x32xf32> to vector<32x1xf32>
    %602 = vector.broadcast %601 : vector<32x1xf32> to vector<32x32xf32>
    %603 = arith.mulf %600, %602 : vector<32x32xf32>
    %604 = arith.addf %599, %603 : vector<32x32xf32>
    %605 = vector.extract_strided_slice %494 {offsets = [0, 704], sizes = [32, 32], strides = [1, 1]} : vector<32x1024xf32> to vector<32x32xf32>
    %606 = vector.extract_strided_slice %495 {offsets = [0, 22], sizes = [32, 1], strides = [1, 1]} : vector<32x32xf32> to vector<32x1xf32>
    %607 = vector.broadcast %606 : vector<32x1xf32> to vector<32x32xf32>
    %608 = arith.mulf %605, %607 : vector<32x32xf32>
    %609 = arith.addf %604, %608 : vector<32x32xf32>
    %610 = vector.extract_strided_slice %494 {offsets = [0, 736], sizes = [32, 32], strides = [1, 1]} : vector<32x1024xf32> to vector<32x32xf32>
    %611 = vector.extract_strided_slice %495 {offsets = [0, 23], sizes = [32, 1], strides = [1, 1]} : vector<32x32xf32> to vector<32x1xf32>
    %612 = vector.broadcast %611 : vector<32x1xf32> to vector<32x32xf32>
    %613 = arith.mulf %610, %612 : vector<32x32xf32>
    %614 = arith.addf %609, %613 : vector<32x32xf32>
    %615 = vector.extract_strided_slice %494 {offsets = [0, 768], sizes = [32, 32], strides = [1, 1]} : vector<32x1024xf32> to vector<32x32xf32>
    %616 = vector.extract_strided_slice %495 {offsets = [0, 24], sizes = [32, 1], strides = [1, 1]} : vector<32x32xf32> to vector<32x1xf32>
    %617 = vector.broadcast %616 : vector<32x1xf32> to vector<32x32xf32>
    %618 = arith.mulf %615, %617 : vector<32x32xf32>
    %619 = arith.addf %614, %618 : vector<32x32xf32>
    %620 = vector.extract_strided_slice %494 {offsets = [0, 800], sizes = [32, 32], strides = [1, 1]} : vector<32x1024xf32> to vector<32x32xf32>
    %621 = vector.extract_strided_slice %495 {offsets = [0, 25], sizes = [32, 1], strides = [1, 1]} : vector<32x32xf32> to vector<32x1xf32>
    %622 = vector.broadcast %621 : vector<32x1xf32> to vector<32x32xf32>
    %623 = arith.mulf %620, %622 : vector<32x32xf32>
    %624 = arith.addf %619, %623 : vector<32x32xf32>
    %625 = vector.extract_strided_slice %494 {offsets = [0, 832], sizes = [32, 32], strides = [1, 1]} : vector<32x1024xf32> to vector<32x32xf32>
    %626 = vector.extract_strided_slice %495 {offsets = [0, 26], sizes = [32, 1], strides = [1, 1]} : vector<32x32xf32> to vector<32x1xf32>
    %627 = vector.broadcast %626 : vector<32x1xf32> to vector<32x32xf32>
    %628 = arith.mulf %625, %627 : vector<32x32xf32>
    %629 = arith.addf %624, %628 : vector<32x32xf32>
    %630 = vector.extract_strided_slice %494 {offsets = [0, 864], sizes = [32, 32], strides = [1, 1]} : vector<32x1024xf32> to vector<32x32xf32>
    %631 = vector.extract_strided_slice %495 {offsets = [0, 27], sizes = [32, 1], strides = [1, 1]} : vector<32x32xf32> to vector<32x1xf32>
    %632 = vector.broadcast %631 : vector<32x1xf32> to vector<32x32xf32>
    %633 = arith.mulf %630, %632 : vector<32x32xf32>
    %634 = arith.addf %629, %633 : vector<32x32xf32>
    %635 = vector.extract_strided_slice %494 {offsets = [0, 896], sizes = [32, 32], strides = [1, 1]} : vector<32x1024xf32> to vector<32x32xf32>
    %636 = vector.extract_strided_slice %495 {offsets = [0, 28], sizes = [32, 1], strides = [1, 1]} : vector<32x32xf32> to vector<32x1xf32>
    %637 = vector.broadcast %636 : vector<32x1xf32> to vector<32x32xf32>
    %638 = arith.mulf %635, %637 : vector<32x32xf32>
    %639 = arith.addf %634, %638 : vector<32x32xf32>
    %640 = vector.extract_strided_slice %494 {offsets = [0, 928], sizes = [32, 32], strides = [1, 1]} : vector<32x1024xf32> to vector<32x32xf32>
    %641 = vector.extract_strided_slice %495 {offsets = [0, 29], sizes = [32, 1], strides = [1, 1]} : vector<32x32xf32> to vector<32x1xf32>
    %642 = vector.broadcast %641 : vector<32x1xf32> to vector<32x32xf32>
    %643 = arith.mulf %640, %642 : vector<32x32xf32>
    %644 = arith.addf %639, %643 : vector<32x32xf32>
    %645 = vector.extract_strided_slice %494 {offsets = [0, 960], sizes = [32, 32], strides = [1, 1]} : vector<32x1024xf32> to vector<32x32xf32>
    %646 = vector.extract_strided_slice %495 {offsets = [0, 30], sizes = [32, 1], strides = [1, 1]} : vector<32x32xf32> to vector<32x1xf32>
    %647 = vector.broadcast %646 : vector<32x1xf32> to vector<32x32xf32>
    %648 = arith.mulf %645, %647 : vector<32x32xf32>
    %649 = arith.addf %644, %648 : vector<32x32xf32>
    %650 = vector.extract_strided_slice %494 {offsets = [0, 992], sizes = [32, 32], strides = [1, 1]} : vector<32x1024xf32> to vector<32x32xf32>
    %651 = vector.extract_strided_slice %495 {offsets = [0, 31], sizes = [32, 1], strides = [1, 1]} : vector<32x32xf32> to vector<32x1xf32>
    %652 = vector.broadcast %651 : vector<32x1xf32> to vector<32x32xf32>
    %653 = arith.mulf %650, %652 : vector<32x32xf32>
    %654 = arith.addf %649, %653 : vector<32x32xf32>
    %655 = tpu.concatenate %168, %330, %492, %654 in 1 : vector<32x32xf32>, vector<32x32xf32>, vector<32x32xf32>, vector<32x32xf32> -> vector<32x128xf32>
    %656 = arith.mulf %3, %655 : vector<32x128xf32>
    %cst_10 = arith.constant dense<0.000000e+00> : vector<128xf32>
    %657 = vector.multi_reduction <add>, %656, %cst_10 [0] : vector<32x128xf32> to vector<128xf32>
    %658 = vector.shape_cast %657 : vector<128xf32> to vector<1x128xf32>
    %cst_11 = arith.constant 0.000000e+00 : f32
    %659 = vector.broadcast %cst_11 : f32 to vector<1x128xf32>
    %660 = arith.cmpf ogt, %658, %659 : vector<1x128xf32>
    %cst_12 = arith.constant 2.000000e-01 : f32
    %661 = vector.broadcast %cst_12 : f32 to vector<1x128xf32>
    %662 = arith.mulf %661, %658 : vector<1x128xf32>
    %663 = arith.select %660, %658, %662 : vector<1x128xi1>, vector<1x128xf32>
    %c0_13 = arith.constant 0 : index
    %c0_14 = arith.constant 0 : index
    %664 = vector.load %arg4[%c0_13, %c0_14] : memref<2x128xf32, #tpu.memory_space<vmem>>, vector<1x128xf32>
    %665 = arith.mulf %663, %664 : vector<1x128xf32>
    %c1 = arith.constant 1 : index
    %c0_15 = arith.constant 0 : index
    %666 = vector.load %arg4[%c1, %c0_15] : memref<2x128xf32, #tpu.memory_space<vmem>>, vector<1x128xf32>
    %667 = arith.addf %665, %666 : vector<1x128xf32>
    %cst_16 = arith.constant 0.000000e+00 : f32
    %668 = vector.broadcast %cst_16 : f32 to vector<1x128xf32>
    %669 = arith.subf %668, %667 : vector<1x128xf32>
    %670 = math.exp %669 : vector<1x128xf32>
    %cst_17 = arith.constant 1.000000e+00 : f32
    %671 = vector.broadcast %cst_17 : f32 to vector<1x128xf32>
    %672 = arith.addf %671, %670 : vector<1x128xf32>
    %cst_18 = arith.constant 1.000000e+00 : f32
    %673 = vector.broadcast %cst_18 : f32 to vector<1x128xf32>
    %674 = arith.divf %673, %672 : vector<1x128xf32>
    %c0_19 = arith.constant 0 : index
    %c0_20 = arith.constant 0 : index
    %675 = vector.load %arg5[%c0_19, %c0_20] : memref<1x128xf32, #tpu.memory_space<vmem>>, vector<1x128xf32>
    tpu.vector_store %arg5[%c0_19, %c0_20], %674 {strides = array<i32>} : memref<1x128xf32, #tpu.memory_space<vmem>>, vector<1x128xf32>,
    return
  }
  func.func @transform_0(%arg0: i32) -> (i32, i32) {
    %c0_i32 = arith.constant 0 : i32
    %c0_i32_0 = arith.constant 0 : i32
    return %c0_i32, %arg0 : i32, i32
  }
  func.func @transform_1(%arg0: i32) -> (i32, i32) {
    %c0_i32 = arith.constant 0 : i32
    %c0_i32_0 = arith.constant 0 : i32
    %c0_i32_1 = arith.constant 0 : i32
    return %c0_i32, %c0_i32_0 : i32, i32
  }
  func.func @transform_2(%arg0: i32) -> (i32, i32) {
    %c0_i32 = arith.constant 0 : i32
    %c0_i32_0 = arith.constant 0 : i32
    %c0_i32_1 = arith.constant 0 : i32
    return %c0_i32, %c0_i32_0 : i32, i32
  }
  func.func @transform_3(%arg0: i32) -> (i32, i32) {
    %c0_i32 = arith.constant 0 : i32
    %c0_i32_0 = arith.constant 0 : i32
    %c0_i32_1 = arith.constant 0 : i32
    return %c0_i32, %c0_i32_0 : i32, i32
  }
  func.func @transform_4(%arg0: i32) -> (i32, i32) {
    %c0_i32 = arith.constant 0 : i32
    %c0_i32_0 = arith.constant 0 : i32
    return %c0_i32, %arg0 : i32, i32
  }
}

</mosaic_0001>

<llo_original>
// kernel: tpu_custom_call.1
$region0: #{tpu_custom_call.1}
  #allocation0 [shape = 'u32[]', space=smem, size = 0x4, offset = 0x4, fixed_abs, tag = 'smem constant byte address 0x4 - core index']
  #allocation1 [shape = 'u32[144,128]{1,0:T(1,128)}', space=vmem, size = 0x12000, scoped, tag = 'internal scratch']
  %s0 = inlined_call_operand.hbm [shape: f32[104,256], index: 0, kind: input, shape index: {}]
  %s1 = inlined_call_operand.hbm [shape: f32[64,104], index: 1, kind: input, shape index: {}]
  %s2 = inlined_call_operand.hbm [shape: f32[32,1024], index: 2, kind: input, shape index: {}]
  %s3 = inlined_call_operand.vmem [shape: f32[2,128], index: 3, kind: input, shape index: {}]
  %s4 = inlined_call_operand.hbm [shape: f32[1,256], index: 4, kind: output, shape index: {}]
  %s5 = sld [smem:[#allocation0]]
  $region61: #{tpu_custom_call.1} parent=0
    _
  %s7 = ssub.s32 1, %s5
  %s8 = scalar_select 0, %s7, %s5
  $region1: #{tpu_custom_call.1} parent=0
    #allocation2 [shape = 'u8[106496]{0}', space=vmem, size = 0x1a000, scoped, tag = 'input window, operand 0']
    #allocation3 [shape = 's32[2]{0}', space=sflag, size = 0x8, scoped, tag = 'scoped memory for tpu_custom_call.1']
    #allocation4 [shape = 's32[2]{0}', space=sflag, size = 0x8, scoped, tag = 'scoped memory for tpu_custom_call.1']
    #allocation5 [shape = 'u8[32768]{0}', space=vmem, size = 0x8000, scoped, tag = 'input window, operand 1, single buffered']
    #allocation6 [shape = 's32[1]{0}', space=sflag, size = 0x4, scoped, tag = 'scoped memory for tpu_custom_call.1']
    #allocation7 [shape = 'u8[131072]{0}', space=vmem, size = 0x20000, scoped, tag = 'input window, operand 2, single buffered']
    #allocation8 [shape = 'u8[1024]{0}', space=vmem, size = 0x400, scoped, tag = 'output window, operand 0']
    %9 = vsyncpa [#allocation3], 0
    %s10 = scalar_lea.sflag [#allocation3], 1
    %11 = vsyncpa %s10, 0
    %12 = vsyncpa [#allocation6], 0
    %13 = vsyncpa [#allocation4], 0
    %s14 = scalar_lea.sflag [#allocation4], 1
    %15 = vsyncpa %s14, 0
    loop: start=0, step=1, limit=4
    $region2: #{tpu_custom_call.1} parent=1 // loop_pre_header
      _
    $region3: #{tpu_custom_call.1} parent=1 // loop_header
      %s17 = sphi 0, %s21
      %p18 = scmp.ge.s32.totalorder %s17, 4
      %s27 = sphi 0, %s29
      %s30 = sphi 0, %s27
      %s31 = sphi 0, %s30
      %s47 = sphi 0, %s31
      %s51 = sphi 0, %s51
      %s53 = sphi 0, %s51
      %s54 = sphi 0, %s53
      %s68 = sphi 0, %s54
      %s72 = sphi 0, %s72
      %s74 = sphi 0, %s72
      %s75 = sphi 0, %s74
      %s89 = sphi 0, %s75
      %s93 = sphi 0, %s93
      %s95 = sphi 0, %s93
      %s96 = sphi 0, %s95
      %s110 = sphi 0, %s96
      %s116 = sphi 0, %s118
      %s119 = sphi 0, %s116
      %s120 = sphi 0, %s119
      %s136 = sphi 0, %s120
    $region4: #{tpu_custom_call.1} parent=1 // loop_header_branch
      %20 = sbr.rel (%p18) target = $region8
    $region5: #{tpu_custom_call.1} parent=1 // loop_body
      %s22 = ssub.s32 %s17, 1
      %s23 = ssub.s32 %s17, 2
      %s24 = sadd.s32 %s17, 1
      %s25 = ssub.s32 %s17, %s24
      %p26 = scmp.eq.s32.totalorder %s25, 0
      %s28 = sadd.s32 %s27, 1
      %s29 = scalar_select %p26, %s27, %s28
      %p32 = pneg %p26
      %p33 = scmp.eq.s32.totalorder %s17, 1
      %p34 = por %p32, %p33
      %p35 = scmp.ne.s32.totalorder %s27, %s30
      %p36 = scmp.eq.s32.totalorder %s17, 0
      %p37 = por %p35, %p36
      %p38 = scmp.ne.s32.totalorder %s27, %s30
      %p39 = scmp.eq.s32.totalorder %s22, 1
      %p40 = por %p38, %p39
      %p41 = scmp.ne.s32.totalorder %s30, %s31
      %p42 = scmp.eq.s32.totalorder %s22, 0
      %p43 = por %p41, %p42
      %p44 = scmp.ne.s32.totalorder %s30, %s31
      %p45 = scmp.eq.s32.totalorder %s23, 1
      %p46 = por %p44, %p45
      %p48 = scmp.ne.s32.totalorder %s31, %s47
      %p49 = scmp.eq.s32.totalorder %s23, 0
      %p50 = por %p48, %p49
      %s52 = sadd.s32 %s51, 1
      %p55 = scmp.eq.s32.totalorder %s17, 1
      %p56 = scmp.ne.s32.totalorder %s51, %s53
      %p57 = scmp.eq.s32.totalorder %s17, 0
      %p58 = por %p56, %p57
      %p59 = scmp.ne.s32.totalorder %s51, %s53
      %p60 = scmp.eq.s32.totalorder %s22, 1
      %p61 = por %p59, %p60
      %p62 = scmp.ne.s32.totalorder %s53, %s54
      %p63 = scmp.eq.s32.totalorder %s22, 0
      %p64 = por %p62, %p63
      %p65 = scmp.ne.s32.totalorder %s53, %s54
      %p66 = scmp.eq.s32.totalorder %s23, 1
      %p67 = por %p65, %p66
      %p69 = scmp.ne.s32.totalorder %s54, %s68
      %p70 = scmp.eq.s32.totalorder %s23, 0
      %p71 = por %p69, %p70
      %s73 = sadd.s32 %s72, 1
      %p76 = scmp.eq.s32.totalorder %s17, 1
      %p77 = scmp.ne.s32.totalorder %s72, %s74
      %p78 = scmp.eq.s32.totalorder %s17, 0
      %p79 = por %p77, %p78
      %p80 = scmp.ne.s32.totalorder %s72, %s74
      %p81 = scmp.eq.s32.totalorder %s22, 1
      %p82 = por %p80, %p81
      %p83 = scmp.ne.s32.totalorder %s74, %s75
      %p84 = scmp.eq.s32.totalorder %s22, 0
      %p85 = por %p83, %p84
      %p86 = scmp.ne.s32.totalorder %s74, %s75
      %p87 = scmp.eq.s32.totalorder %s23, 1
      %p88 = por %p86, %p87
      %p90 = scmp.ne.s32.totalorder %s75, %s89
      %p91 = scmp.eq.s32.totalorder %s23, 0
      %p92 = por %p90, %p91
      %s94 = sadd.s32 %s93, 1
      %p97 = scmp.eq.s32.totalorder %s17, 1
      %p98 = scmp.ne.s32.totalorder %s93, %s95
      %p99 = scmp.eq.s32.totalorder %s17, 0
      %p100 = por %p98, %p99
      %p101 = scmp.ne.s32.totalorder %s93, %s95
      %p102 = scmp.eq.s32.totalorder %s22, 1
      %p103 = por %p101, %p102
      %p104 = scmp.ne.s32.totalorder %s95, %s96
      %p105 = scmp.eq.s32.totalorder %s22, 0
      %p106 = por %p104, %p105
      %p107 = scmp.ne.s32.totalorder %s95, %s96
      %p108 = scmp.eq.s32.totalorder %s23, 1
      %p109 = por %p107, %p108
      %p111 = scmp.ne.s32.totalorder %s96, %s110
      %p112 = scmp.eq.s32.totalorder %s23, 0
      %p113 = por %p111, %p112
      %s114 = ssub.s32 %s17, %s24
      %p115 = scmp.eq.s32.totalorder %s114, 0
      %s117 = sadd.s32 %s116, 1
      %s118 = scalar_select %p115, %s116, %s117
      %p121 = pneg %p115
      %p122 = scmp.eq.s32.totalorder %s17, 1
      %p123 = por %p121, %p122
      %p124 = scmp.ne.s32.totalorder %s116, %s119
      %p125 = scmp.eq.s32.totalorder %s17, 0
      %p126 = por %p124, %p125
      %p127 = scmp.ne.s32.totalorder %s116, %s119
      %p128 = scmp.eq.s32.totalorder %s22, 1
      %p129 = por %p127, %p128
      %p130 = scmp.ne.s32.totalorder %s119, %s120
      %p131 = scmp.eq.s32.totalorder %s22, 0
      %p132 = por %p130, %p131
      %p133 = scmp.ne.s32.totalorder %s119, %s120
      %p134 = scmp.eq.s32.totalorder %s23, 1
      %p135 = por %p133, %p134
      %p137 = scmp.ne.s32.totalorder %s120, %s136
      %p138 = scmp.eq.s32.totalorder %s23, 0
      %p139 = por %p137, %p138
      %p140 = scmp.le.s32.totalorder 1, %s17
      %p141 = scmp.lt.s32.totalorder %s17, 3
      %p142 = pnand %p140, %p141
      %p143 = pneg %p142
      // Predicated region
      $region9: #{tpu_custom_call.1} parent=5 // pred_check
        _
      $region10: #{tpu_custom_call.1} parent=5 // pred_check_branch
        %145 = sbr.rel (%p142) target = $region12
      $region11: #{tpu_custom_call.1} parent=5 // pred_region
        %s146 = ssub.s32 %s17, 1
        // Predicated region
        $region13: #{tpu_custom_call.1} parent=11 // pred_check
          %p147 = pneg %p64
        $region14: #{tpu_custom_call.1} parent=11 // pred_check_branch
          %149 = sbr.rel (%p147) target = $region16
        $region15: #{tpu_custom_call.1} parent=11 // pred_region
          %s151 = ssub.s32 1024, 1024
          %152 = vsyncadd [#allocation6], %s151
          %s153 = sshll.u32 [#allocation5], 4
          %s154 = int_to_ptr.vmem [resolvable:$true] %s153
          %159 = dma.hbm_to_vmem [thread:$0]  %s1, 1024, %s154, [#allocation6], 128, 128, 8
        $region16: #{tpu_custom_call.1} parent=11 // pred_fallthru
          _
        // Predicated region
        $region17: #{tpu_custom_call.1} parent=11 // pred_check
          %p160 = pneg %p85
        $region18: #{tpu_custom_call.1} parent=11 // pred_check_branch
          %162 = sbr.rel (%p160) target = $region20
        $region19: #{tpu_custom_call.1} parent=11 // pred_region
          %s164 = ssub.s32 4096, 4096
          %165 = vsyncadd [#allocation6], %s164
          %s166 = sshll.u32 [#allocation7], 4
          %s167 = int_to_ptr.vmem [resolvable:$true] %s166
          %172 = dma.hbm_to_vmem [thread:$0]  %s2, 4096, %s167, [#allocation6], 1024, 1024, 64
        $region20: #{tpu_custom_call.1} parent=11 // pred_fallthru
          _
        // Predicated region
        $region21: #{tpu_custom_call.1} parent=11 // pred_check
          %p173 = pneg %p106
        $region22: #{tpu_custom_call.1} parent=11 // pred_check_branch
          %175 = sbr.rel (%p173) target = $region24
        $region23: #{tpu_custom_call.1} parent=11 // pred_region
          _
        $region24: #{tpu_custom_call.1} parent=11 // pred_fallthru
          _
      $region12: #{tpu_custom_call.1} parent=5 // pred_fallthru
        _
      %p176 = scmp.lt.s32.totalorder %s17, 2
      // Predicated region
      $region25: #{tpu_custom_call.1} parent=5 // pred_check
        %p177 = pneg %p176
      $region26: #{tpu_custom_call.1} parent=5 // pred_check_branch
        %179 = sbr.rel (%p177) target = $region28
      $region27: #{tpu_custom_call.1} parent=5 // pred_region
        // Predicated region
        $region29: #{tpu_custom_call.1} parent=27 // pred_check
          %p180 = pneg %p37
        $region30: #{tpu_custom_call.1} parent=27 // pred_check_branch
          %182 = sbr.rel (%p180) target = $region32
        $region31: #{tpu_custom_call.1} parent=27 // pred_region
          %s183 = sand.u32 %s27, 1
          %s184 = scalar_lea.sflag [#allocation3], %s183
          %s185 = sand.u32 %s27, 1
          %s186 = smul.addr %s185, 104
          %s187 = scalar_lea.vmem [#allocation2], %s186
          %s189 = ssub.s32 1664, 1664
          %190 = vsyncadd %s184, %s189
          %s191 = smul.addr %s17, 128
          %s192 = scalar_lea.hbm %s0, %s191
          %s193 = sshll.u32 %s187, 4
          %s194 = int_to_ptr.vmem [resolvable:$true] %s193
          %199 = dma.hbm_to_vmem [thread:$0]  %s192, 1664, %s194, %s184, 256, 128, 8
        $region32: #{tpu_custom_call.1} parent=27 // pred_fallthru
          _
      $region28: #{tpu_custom_call.1} parent=5 // pred_fallthru
        _
      %p200 = scmp.le.s32.totalorder 1, %s17
      %p201 = scmp.lt.s32.totalorder %s17, 3
      %p202 = pnand %p200, %p201
      %p203 = pneg %p202
      // Predicated region
      $region33: #{tpu_custom_call.1} parent=5 // pred_check
        _
      $region34: #{tpu_custom_call.1} parent=5 // pred_check_branch
        %205 = sbr.rel (%p202) target = $region36
      $region35: #{tpu_custom_call.1} parent=5 // pred_region
        %s206 = ssub.s32 %s17, 1
        %s207 = sand.u32 %s30, 1
        %s208 = scalar_lea.sflag [#allocation3], %s207
        %s209 = sand.u32 %s30, 1
        %s210 = smul.addr %s209, 104
        %s211 = scalar_lea.vmem [#allocation2], %s210
        // Predicated region
        $region37: #{tpu_custom_call.1} parent=35 // pred_check
          %p212 = pneg %p43
        $region38: #{tpu_custom_call.1} parent=35 // pred_check_branch
          %214 = sbr.rel (%p212) target = $region40
        $region39: #{tpu_custom_call.1} parent=35 // pred_region
          %215 = dma.done %s208, 1664
        $region40: #{tpu_custom_call.1} parent=35 // pred_fallthru
          _
        // Predicated region
        $region41: #{tpu_custom_call.1} parent=35 // pred_check
          %p216 = pneg %p64
        $region42: #{tpu_custom_call.1} parent=35 // pred_check_branch
          %218 = sbr.rel (%p216) target = $region44
        $region43: #{tpu_custom_call.1} parent=35 // pred_region
          %219 = dma.done [#allocation6], 1024
        $region44: #{tpu_custom_call.1} parent=35 // pred_fallthru
          _
        // Predicated region
        $region45: #{tpu_custom_call.1} parent=35 // pred_check
          %p220 = pneg %p85
        $region46: #{tpu_custom_call.1} parent=35 // pred_check_branch
          %222 = sbr.rel (%p220) target = $region48
        $region47: #{tpu_custom_call.1} parent=35 // pred_region
          %223 = dma.done [#allocation6], 4096
        $region48: #{tpu_custom_call.1} parent=35 // pred_fallthru
          _
        %s224 = sand.u32 %s30, 1
        %s225 = scalar_lea.sflag [#allocation3], %s224
        %s226 = sand.u32 %s30, 1
        %s227 = smul.addr %s226, 104
        %s228 = scalar_lea.vmem [#allocation2], %s227
        %p229 = pneg %p43
        %p230 = pneg %p40
        %p231 = pneg %p64
        %p232 = pneg %p61
        %p233 = pneg %p85
        %p234 = pneg %p82
        %p235 = pneg %p106
        %p236 = pneg %p103
        %p237 = pneg %p132
        %p238 = pneg %p129
        %s239 = sand.u32 %s119, 1
        %s240 = scalar_lea.sflag [#allocation4], %s239
        %s241 = sand.u32 %s119, 1
        %s242 = scalar_lea.vmem [#allocation8], %s241
        %v243 = vld [vmem:[#allocation5] sm:$0xff]
        %v244 = vld [vmem:[#allocation5 + $0x8] sm:$0xff]
        %v245 = vld [vmem:[#allocation5 + $0x10] sm:$0xff]
        %v246 = vld [vmem:[#allocation5 + $0x18] sm:$0xff]
        %v247 = vld [vmem:[#allocation5 + $0x20] sm:$0xff]
        %v248 = vld [vmem:[#allocation5 + $0x28] sm:$0xff]
        %v249 = vld [vmem:[#allocation5 + $0x30] sm:$0xff]
        %v250 = vld [vmem:[#allocation5 + $0x38] sm:$0xff]
        %v251 = vld [vmem:[%s211] sm:$0xff]
        %v252 = vld [vmem:[%s211 + $0x8] sm:$0xff]
        %v253 = vld [vmem:[%s211 + $0x10] sm:$0xff]
        %v254 = vld [vmem:[%s211 + $0x18] sm:$0xff]
        %v255 = vld [vmem:[%s211 + $0x20] sm:$0xff]
        %v256 = vld [vmem:[%s211 + $0x28] sm:$0xff]
        %v257 = vld [vmem:[%s211 + $0x30] sm:$0xff]
        %v258 = vld [vmem:[%s211 + $0x38] sm:$0xff]
        %v259 = vld [vmem:[%s211 + $0x40] sm:$0xff]
        %v260 = vld [vmem:[%s211 + $0x48] sm:$0xff]
        %v261 = vld [vmem:[%s211 + $0x50] sm:$0xff]
        %v262 = vld [vmem:[%s211 + $0x58] sm:$0xff]
        %v263 = vld [vmem:[%s211 + $0x60] sm:$0xff]
        %vm264 = vcmask 850944
        %v266 = vsel %vm264, %v243, 0
        %v269 = vsel %vm264, %v244, 0
        %v272 = vsel %vm264, %v245, 0
        %v275 = vsel %vm264, %v246, 0
        %v278 = vsel %vm264, %v247, 0
        %v281 = vsel %vm264, %v248, 0
        %v284 = vsel %vm264, %v249, 0
        %v287 = vsel %vm264, %v250, 0
        %289 = vmatprep.subr.mxu0 0.0
        %290 = vmatpush1.msra.mxu0 %v251
        %291 = vmatprep.subr.mxu0 0.0
        %292 = vmatpush1.msra.mxu0 %v252
        %293 = vmatprep.subr.mxu0 0.0
        %294 = vmatpush1.msra.mxu0 %v253
        %295 = vmatprep.subr.mxu0 0.0
        %296 = vmatpush1.msra.mxu0 %v254
        %297 = vmatprep.subr.mxu0 0.0
        %298 = vmatpush1.msra.mxu0 %v255
        %299 = vmatprep.subr.mxu0 0.0
        %300 = vmatpush1.msra.mxu0 %v256
        %301 = vmatprep.subr.mxu0 0.0
        %302 = vmatpush1.msra.mxu0 %v257
        %303 = vmatprep.subr.mxu0 0.0
        %304 = vmatpush1.msra.mxu0 %v258
        %305 = vmatprep.subr.mxu0 0.0
        %306 = vmatpush1.msra.mxu0 %v259
        %307 = vmatprep.subr.mxu0 0.0
        %308 = vmatpush1.msra.mxu0 %v260
        %309 = vmatprep.subr.mxu0 0.0
        %310 = vmatpush1.msra.mxu0 %v261
        %311 = vmatprep.subr.mxu0 0.0
        %312 = vmatpush1.msra.mxu0 %v262
        %313 = vmatprep.subr.mxu0 0.0
        %314 = vmatpush1.msra.mxu0 %v263
        %315 = vmatprep.subr.mxu0 0.0
        %316 = vmatpush1.msra.mxu0 0.0
        %317 = vmatprep.subr.mxu0 0.0
        %318 = vmatpush1.msra.mxu0 0.0
        %319 = vmatprep.subr.mxu0 0.0
        %320 = vmatpush1.msra.mxu0 0.0
        %321 = vmatprep.subr.mxu0 0.0
        %322 = vmatpush1.msra.mxu0 0.0
        %323 = vmatprep.subr.mxu0 0.0
        %324 = vmatpush1.msra.mxu0 0.0
        %325 = vmatprep.subr.mxu0 0.0
        %326 = vmatpush1.msra.mxu0 0.0
        %327 = vmatprep.subr.mxu0 0.0
        %328 = vmatpush1.msra.mxu0 0.0
        %329 = vmatprep.subr.mxu0 0.0
        %330 = vmatpush1.msra.mxu0 0.0
        %331 = vmatprep.subr.mxu0 0.0
        %332 = vmatpush1.msra.mxu0 0.0
        %333 = vmatprep.subr.mxu0 0.0
        %334 = vmatpush1.msra.mxu0 0.0
        %335 = vmatprep.subr.mxu0 0.0
        %336 = vmatpush1.msra.mxu0 0.0
        %337 = vmatprep.subr.mxu0 0.0
        %338 = vmatpush1.msra.mxu0 0.0
        %339 = vmatprep.subr.mxu0 0.0
        %340 = vmatpush1.msra.mxu0 0.0
        %341 = vmatprep.subr.mxu0 0.0
        %342 = vmatpush1.msra.mxu0 0.0
        %343 = vmatprep.subr.mxu0 0.0
        %344 = vmatpush1.msra.mxu0 0.0
        %345 = vmatprep.subr.mxu0 0.0
        %346 = vmatpush1.msra.mxu0 0.0
        %347 = vmatprep.subr.mxu0 0.0
        %348 = vmatpush1.msra.mxu0 0.0
        %349 = vmatprep.subr.mxu0 0.0
        %350 = vmatpush1.msra.mxu0 0.0
        %351 = vmatprep.subr.mxu0 0.0
        %352 = vmatpush1.msra.mxu0 0.0
        %353 = vmatprep.mubr.f32.mxu0 0.0
        %354 = vmatmul.mubr.f32.gmra.mrb[0].mxu0 %v266
        %v355 = vpop.f32.mrb[0].mxu0
        %v356 = vadd.f32 0.0, %v355
        %v357 = vpop.f32.mrb[0].mxu0
        %358 = vmatprep.mubr.f32.mxu0 0.0
        %359 = vmatmul.mubr.f32.gmra.mrb[0].mxu0 %v269
        %v360 = vpop.f32.mrb[0].mxu0
        %v361 = vadd.f32 0.0, %v360
        %v362 = vpop.f32.mrb[0].mxu0
        %363 = vmatprep.mubr.f32.mxu0 0.0
        %364 = vmatmul.mubr.f32.gmra.mrb[0].mxu0 %v272
        %v365 = vpop.f32.mrb[0].mxu0
        %v366 = vadd.f32 0.0, %v365
        %v367 = vpop.f32.mrb[0].mxu0
        %368 = vmatprep.mubr.f32.mxu0 0.0
        %369 = vmatmul.mubr.f32.gmra.mrb[0].mxu0 %v275
        %v370 = vpop.f32.mrb[0].mxu0
        %v371 = vadd.f32 0.0, %v370
        %v372 = vpop.f32.mrb[0].mxu0
        %373 = vmatprep.mubr.f32.mxu0 0.0
        %374 = vmatmul.mubr.f32.gmra.mrb[0].mxu0 %v278
        %v375 = vpop.f32.mrb[0].mxu0
        %v376 = vadd.f32 0.0, %v375
        %v377 = vpop.f32.mrb[0].mxu0
        %378 = vmatprep.mubr.f32.mxu0 0.0
        %379 = vmatmul.mubr.f32.gmra.mrb[0].mxu0 %v281
        %v380 = vpop.f32.mrb[0].mxu0
        %v381 = vadd.f32 0.0, %v380
        %v382 = vpop.f32.mrb[0].mxu0
        %383 = vmatprep.mubr.f32.mxu0 0.0
        %384 = vmatmul.mubr.f32.gmra.mrb[0].mxu0 %v284
        %v385 = vpop.f32.mrb[0].mxu0
        %v386 = vadd.f32 0.0, %v385
        %v387 = vpop.f32.mrb[0].mxu0
        %388 = vmatprep.mubr.f32.mxu0 0.0
        %389 = vmatmul.mubr.f32.gmra.mrb[0].mxu0 %v287
        %v390 = vpop.f32.mrb[0].mxu0
        %v391 = vadd.f32 0.0, %v390
        %v392 = vpop.f32.mrb[0].mxu0
        %393 = vdwg.mxu0
        %v394 = vld [vmem:[%s211 + $0x40] sm:$0xff]
        %v395 = vld [vmem:[%s211 + $0x48] sm:$0xff]
        %v396 = vld [vmem:[%s211 + $0x50] sm:$0xff]
        %v397 = vld [vmem:[%s211 + $0x58] sm:$0xff]
        %v398 = vld [vmem:[#allocation7] sm:$0xff]
        %v399 = vld [vmem:[#allocation7 + $0x8] sm:$0xff]
        %v400 = vld [vmem:[#allocation7 + $0x10] sm:$0xff]
        %v401 = vld [vmem:[#allocation7 + $0x18] sm:$0xff]
        %v402 = vld [vmem:[#allocation7 + $0x20] sm:$0xff]
        %v403 = vld [vmem:[#allocation7 + $0x28] sm:$0xff]
        %v404 = vld [vmem:[#allocation7 + $0x30] sm:$0xff]
        %v405 = vld [vmem:[#allocation7 + $0x38] sm:$0xff]
        %v406 = vld [vmem:[#allocation7 + $0x40] sm:$0xff]
        %v407 = vld [vmem:[#allocation7 + $0x48] sm:$0xff]
        %v408 = vld [vmem:[#allocation7 + $0x50] sm:$0xff]
        %v409 = vld [vmem:[#allocation7 + $0x58] sm:$0xff]
        %v410 = vld [vmem:[#allocation7 + $0x60] sm:$0xff]
        %v411 = vld [vmem:[#allocation7 + $0x68] sm:$0xff]
        %v412 = vld [vmem:[#allocation7 + $0x70] sm:$0xff]
        %v413 = vld [vmem:[#allocation7 + $0x78] sm:$0xff]
        %v414 = vld [vmem:[#allocation7 + $0x80] sm:$0xff]
        %v415 = vld [vmem:[#allocation7 + $0x88] sm:$0xff]
        %v416 = vld [vmem:[#allocation7 + $0x90] sm:$0xff]
        %v417 = vld [vmem:[#allocation7 + $0x98] sm:$0xff]
        %v418 = vld [vmem:[#allocation7 + $0xa0] sm:$0xff]
        %v419 = vld [vmem:[#allocation7 + $0xa8] sm:$0xff]
        %v420 = vld [vmem:[#allocation7 + $0xb0] sm:$0xff]
        %v421 = vld [vmem:[#allocation7 + $0xb8] sm:$0xff]
        %v422 = vld [vmem:[#allocation7 + $0xc0] sm:$0xff]
        %v423 = vld [vmem:[#allocation7 + $0xc8] sm:$0xff]
        %v424 = vld [vmem:[#allocation7 + $0xd0] sm:$0xff]
        %v425 = vld [vmem:[#allocation7 + $0xd8] sm:$0xff]
        %v426 = vld [vmem:[#allocation7 + $0xe0] sm:$0xff]
        %v427 = vld [vmem:[#allocation7 + $0xe8] sm:$0xff]
        %v428 = vld [vmem:[#allocation7 + $0xf0] sm:$0xff]
        %v429 = vld [vmem:[#allocation7 + $0xf8] sm:$0xff]
        %vm430 = vcmask 261120
        %v432 = vsel %vm430, %v376, 0
        %v435 = vsel %vm430, %v381, 0
        %v438 = vsel %vm430, %v386, 0
        %v441 = vsel %vm430, %v391, 0
        %443 = vmatprep.subr.mxu0 %v399
        %444 = vmatpush1.msra.mxu0 %v398
        %445 = vmatprep.subr.mxu0 %v407
        %446 = vmatpush1.msra.mxu0 %v406
        %447 = vmatprep.subr.mxu0 %v415
        %448 = vmatpush1.msra.mxu0 %v414
        %449 = vmatprep.subr.mxu0 %v423
        %450 = vmatpush1.msra.mxu0 %v422
        %451 = vmatprep.subr.mxu0 0.0
        %452 = vmatpush1.msra.mxu0 0.0
        %453 = vmatprep.subr.mxu0 0.0
        %454 = vmatpush1.msra.mxu0 0.0
        %455 = vmatprep.subr.mxu0 0.0
        %456 = vmatpush1.msra.mxu0 0.0
        %457 = vmatprep.subr.mxu0 0.0
        %458 = vmatpush1.msra.mxu0 0.0
        %459 = vmatprep.subr.mxu0 0.0
        %460 = vmatpush1.msra.mxu0 0.0
        %461 = vmatprep.subr.mxu0 0.0
        %462 = vmatpush1.msra.mxu0 0.0
        %463 = vmatprep.subr.mxu0 0.0
        %464 = vmatpush1.msra.mxu0 0.0
        %465 = vmatprep.subr.mxu0 0.0
        %466 = vmatpush1.msra.mxu0 0.0
        %467 = vmatprep.subr.mxu0 0.0
        %468 = vmatpush1.msra.mxu0 0.0
        %469 = vmatprep.subr.mxu0 0.0
        %470 = vmatpush1.msra.mxu0 0.0
        %471 = vmatprep.subr.mxu0 0.0
        %472 = vmatpush1.msra.mxu0 0.0
        %473 = vmatprep.subr.mxu0 0.0
        %474 = vmatpush1.msra.mxu0 0.0
        %475 = vmatprep.subr.mxu0 0.0
        %476 = vmatpush1.msra.mxu0 0.0
        %477 = vmatprep.subr.mxu0 0.0
        %478 = vmatpush1.msra.mxu0 0.0
        %479 = vmatprep.subr.mxu0 0.0
        %480 = vmatpush1.msra.mxu0 0.0
        %481 = vmatprep.subr.mxu0 0.0
        %482 = vmatpush1.msra.mxu0 0.0
        %483 = vmatprep.subr.mxu0 0.0
        %484 = vmatpush1.msra.mxu0 0.0
        %485 = vmatprep.subr.mxu0 0.0
        %486 = vmatpush1.msra.mxu0 0.0
        %487 = vmatprep.subr.mxu0 0.0
        %488 = vmatpush1.msra.mxu0 0.0
        %489 = vmatprep.subr.mxu0 0.0
        %490 = vmatpush1.msra.mxu0 0.0
        %491 = vmatprep.subr.mxu0 0.0
        %492 = vmatpush1.msra.mxu0 0.0
        %493 = vmatprep.subr.mxu0 0.0
        %494 = vmatpush1.msra.mxu0 0.0
        %495 = vmatprep.subr.mxu0 0.0
        %496 = vmatpush1.msra.mxu0 0.0
        %497 = vmatprep.subr.mxu0 0.0
        %498 = vmatpush1.msra.mxu0 0.0
        %499 = vmatprep.subr.mxu0 0.0
        %500 = vmatpush1.msra.mxu0 0.0
        %501 = vmatprep.subr.mxu0 0.0
        %502 = vmatpush1.msra.mxu0 0.0
        %503 = vmatprep.subr.mxu0 0.0
        %504 = vmatpush1.msra.mxu0 0.0
        %505 = vmatprep.subr.mxu0 0.0
        %506 = vmatpush1.msra.mxu0 0.0
        %507 = vmatprep.mubr.f32.mxu0 0.0
        %508 = vmatmul.mubr.f32.gmra.mrb[0].mxu0 %v432
        %v509 = vpop.f32.mrb[0].mxu0
        %v510 = vadd.f32 0.0, %v509
        %v511 = vpop.f32.mrb[0].mxu0
        %v512 = vadd.f32 0.0, %v511
        %513 = vmatprep.mubr.f32.mxu0 0.0
        %514 = vmatmul.mubr.f32.gmra.mrb[0].mxu0 %v435
        %v515 = vpop.f32.mrb[0].mxu0
        %v516 = vadd.f32 0.0, %v515
        %v517 = vpop.f32.mrb[0].mxu0
        %v518 = vadd.f32 0.0, %v517
        %519 = vmatprep.mubr.f32.mxu0 0.0
        %520 = vmatmul.mubr.f32.gmra.mrb[0].mxu0 %v438
        %v521 = vpop.f32.mrb[0].mxu0
        %v522 = vadd.f32 0.0, %v521
        %v523 = vpop.f32.mrb[0].mxu0
        %v524 = vadd.f32 0.0, %v523
        %525 = vmatprep.mubr.f32.mxu0 0.0
        %526 = vmatmul.mubr.f32.gmra.mrb[0].mxu0 %v441
        %v527 = vpop.f32.mrb[0].mxu0
        %v528 = vadd.f32 0.0, %v527
        %v529 = vpop.f32.mrb[0].mxu0
        %v530 = vadd.f32 0.0, %v529
        %531 = vdwg.mxu0
        %532 = vmatprep.subr.mxu0 %v401
        %533 = vmatpush1.msra.mxu0 %v400
        %534 = vmatprep.subr.mxu0 %v409
        %535 = vmatpush1.msra.mxu0 %v408
        %536 = vmatprep.subr.mxu0 %v417
        %537 = vmatpush1.msra.mxu0 %v416
        %538 = vmatprep.subr.mxu0 %v425
        %539 = vmatpush1.msra.mxu0 %v424
        %540 = vmatprep.subr.mxu0 0.0
        %541 = vmatpush1.msra.mxu0 0.0
        %542 = vmatprep.subr.mxu0 0.0
        %543 = vmatpush1.msra.mxu0 0.0
        %544 = vmatprep.subr.mxu0 0.0
        %545 = vmatpush1.msra.mxu0 0.0
        %546 = vmatprep.subr.mxu0 0.0
        %547 = vmatpush1.msra.mxu0 0.0
        %548 = vmatprep.subr.mxu0 0.0
        %549 = vmatpush1.msra.mxu0 0.0
        %550 = vmatprep.subr.mxu0 0.0
        %551 = vmatpush1.msra.mxu0 0.0
        %552 = vmatprep.subr.mxu0 0.0
        %553 = vmatpush1.msra.mxu0 0.0
        %554 = vmatprep.subr.mxu0 0.0
        %555 = vmatpush1.msra.mxu0 0.0
        %556 = vmatprep.subr.mxu0 0.0
        %557 = vmatpush1.msra.mxu0 0.0
        %558 = vmatprep.subr.mxu0 0.0
        %559 = vmatpush1.msra.mxu0 0.0
        %560 = vmatprep.subr.mxu0 0.0
        %561 = vmatpush1.msra.mxu0 0.0
        %562 = vmatprep.subr.mxu0 0.0
        %563 = vmatpush1.msra.mxu0 0.0
        %564 = vmatprep.subr.mxu0 0.0
        %565 = vmatpush1.msra.mxu0 0.0
        %566 = vmatprep.subr.mxu0 0.0
        %567 = vmatpush1.msra.mxu0 0.0
        %568 = vmatprep.subr.mxu0 0.0
        %569 = vmatpush1.msra.mxu0 0.0
        %570 = vmatprep.subr.mxu0 0.0
        %571 = vmatpush1.msra.mxu0 0.0
        %572 = vmatprep.subr.mxu0 0.0
        %573 = vmatpush1.msra.mxu0 0.0
        %574 = vmatprep.subr.mxu0 0.0
        %575 = vmatpush1.msra.mxu0 0.0
        %576 = vmatprep.subr.mxu0 0.0
        %577 = vmatpush1.msra.mxu0 0.0
        %578 = vmatprep.subr.mxu0 0.0
        %579 = vmatpush1.msra.mxu0 0.0
        %580 = vmatprep.subr.mxu0 0.0
        %581 = vmatpush1.msra.mxu0 0.0
        %582 = vmatprep.subr.mxu0 0.0
        %583 = vmatpush1.msra.mxu0 0.0
        %584 = vmatprep.subr.mxu0 0.0
        %585 = vmatpush1.msra.mxu0 0.0
        %586 = vmatprep.subr.mxu0 0.0
        %587 = vmatpush1.msra.mxu0 0.0
        %588 = vmatprep.subr.mxu0 0.0
        %589 = vmatpush1.msra.mxu0 0.0
        %590 = vmatprep.subr.mxu0 0.0
        %591 = vmatpush1.msra.mxu0 0.0
        %592 = vmatprep.subr.mxu0 0.0
        %593 = vmatpush1.msra.mxu0 0.0
        %594 = vmatprep.subr.mxu0 0.0
        %595 = vmatpush1.msra.mxu0 0.0
        %596 = vmatprep.mubr.f32.mxu0 0.0
        %597 = vmatmul.mubr.f32.gmra.mrb[0].mxu0 %v432
        %v598 = vpop.f32.mrb[0].mxu0
        %v599 = vadd.f32 0.0, %v598
        %v600 = vpop.f32.mrb[0].mxu0
        %v601 = vadd.f32 0.0, %v600
        %602 = vmatprep.mubr.f32.mxu0 0.0
        %603 = vmatmul.mubr.f32.gmra.mrb[0].mxu0 %v435
        %v604 = vpop.f32.mrb[0].mxu0
        %v605 = vadd.f32 0.0, %v604
        %v606 = vpop.f32.mrb[0].mxu0
        %v607 = vadd.f32 0.0, %v606
        %608 = vmatprep.mubr.f32.mxu0 0.0
        %609 = vmatmul.mubr.f32.gmra.mrb[0].mxu0 %v438
        %v610 = vpop.f32.mrb[0].mxu0
        %v611 = vadd.f32 0.0, %v610
        %v612 = vpop.f32.mrb[0].mxu0
        %v613 = vadd.f32 0.0, %v612
        %614 = vmatprep.mubr.f32.mxu0 0.0
        %615 = vmatmul.mubr.f32.gmra.mrb[0].mxu0 %v441
        %v616 = vpop.f32.mrb[0].mxu0
        %v617 = vadd.f32 0.0, %v616
        %v618 = vpop.f32.mrb[0].mxu0
        %v619 = vadd.f32 0.0, %v618
        %620 = vdwg.mxu0
        %621 = vmatprep.subr.mxu0 %v403
        %622 = vmatpush1.msra.mxu0 %v402
        %623 = vmatprep.subr.mxu0 %v411
        %624 = vmatpush1.msra.mxu0 %v410
        %625 = vmatprep.subr.mxu0 %v419
        %626 = vmatpush1.msra.mxu0 %v418
        %627 = vmatprep.subr.mxu0 %v427
        %628 = vmatpush1.msra.mxu0 %v426
        %629 = vmatprep.subr.mxu0 0.0
        %630 = vmatpush1.msra.mxu0 0.0
        %631 = vmatprep.subr.mxu0 0.0
        %632 = vmatpush1.msra.mxu0 0.0
        %633 = vmatprep.subr.mxu0 0.0
        %634 = vmatpush1.msra.mxu0 0.0
        %635 = vmatprep.subr.mxu0 0.0
        %636 = vmatpush1.msra.mxu0 0.0
        %637 = vmatprep.subr.mxu0 0.0
        %638 = vmatpush1.msra.mxu0 0.0
        %639 = vmatprep.subr.mxu0 0.0
        %640 = vmatpush1.msra.mxu0 0.0
        %641 = vmatprep.subr.mxu0 0.0
        %642 = vmatpush1.msra.mxu0 0.0
        %643 = vmatprep.subr.mxu0 0.0
        %644 = vmatpush1.msra.mxu0 0.0
        %645 = vmatprep.subr.mxu0 0.0
        %646 = vmatpush1.msra.mxu0 0.0
        %647 = vmatprep.subr.mxu0 0.0
        %648 = vmatpush1.msra.mxu0 0.0
        %649 = vmatprep.subr.mxu0 0.0
        %650 = vmatpush1.msra.mxu0 0.0
        %651 = vmatprep.subr.mxu0 0.0
        %652 = vmatpush1.msra.mxu0 0.0
        %653 = vmatprep.subr.mxu0 0.0
        %654 = vmatpush1.msra.mxu0 0.0
        %655 = vmatprep.subr.mxu0 0.0
        %656 = vmatpush1.msra.mxu0 0.0
        %657 = vmatprep.subr.mxu0 0.0
        %658 = vmatpush1.msra.mxu0 0.0
        %659 = vmatprep.subr.mxu0 0.0
        %660 = vmatpush1.msra.mxu0 0.0
        %661 = vmatprep.subr.mxu0 0.0
        %662 = vmatpush1.msra.mxu0 0.0
        %663 = vmatprep.subr.mxu0 0.0
        %664 = vmatpush1.msra.mxu0 0.0
        %665 = vmatprep.subr.mxu0 0.0
        %666 = vmatpush1.msra.mxu0 0.0
        %667 = vmatprep.subr.mxu0 0.0
        %668 = vmatpush1.msra.mxu0 0.0
        %669 = vmatprep.subr.mxu0 0.0
        %670 = vmatpush1.msra.mxu0 0.0
        %671 = vmatprep.subr.mxu0 0.0
        %672 = vmatpush1.msra.mxu0 0.0
        %673 = vmatprep.subr.mxu0 0.0
        %674 = vmatpush1.msra.mxu0 0.0
        %675 = vmatprep.subr.mxu0 0.0
        %676 = vmatpush1.msra.mxu0 0.0
        %677 = vmatprep.subr.mxu0 0.0
        %678 = vmatpush1.msra.mxu0 0.0
        %679 = vmatprep.subr.mxu0 0.0
        %680 = vmatpush1.msra.mxu0 0.0
        %681 = vmatprep.subr.mxu0 0.0
        %682 = vmatpush1.msra.mxu0 0.0
        %683 = vmatprep.subr.mxu0 0.0
        %684 = vmatpush1.msra.mxu0 0.0
        %685 = vmatprep.mubr.f32.mxu0 0.0
        %686 = vmatmul.mubr.f32.gmra.mrb[0].mxu0 %v432
        %v687 = vpop.f32.mrb[0].mxu0
        %v688 = vadd.f32 0.0, %v687
        %v689 = vpop.f32.mrb[0].mxu0
        %v690 = vadd.f32 0.0, %v689
        %691 = vmatprep.mubr.f32.mxu0 0.0
        %692 = vmatmul.mubr.f32.gmra.mrb[0].mxu0 %v435
        %v693 = vpop.f32.mrb[0].mxu0
        %v694 = vadd.f32 0.0, %v693
        %v695 = vpop.f32.mrb[0].mxu0
        %v696 = vadd.f32 0.0, %v695
        %697 = vmatprep.mubr.f32.mxu0 0.0
        %698 = vmatmul.mubr.f32.gmra.mrb[0].mxu0 %v438
        %v699 = vpop.f32.mrb[0].mxu0
        %v700 = vadd.f32 0.0, %v699
        %v701 = vpop.f32.mrb[0].mxu0
        %v702 = vadd.f32 0.0, %v701
        %703 = vmatprep.mubr.f32.mxu0 0.0
        %704 = vmatmul.mubr.f32.gmra.mrb[0].mxu0 %v441
        %v705 = vpop.f32.mrb[0].mxu0
        %v706 = vadd.f32 0.0, %v705
        %v707 = vpop.f32.mrb[0].mxu0
        %v708 = vadd.f32 0.0, %v707
        %709 = vdwg.mxu0
        %710 = vmatprep.subr.mxu0 %v405
        %711 = vmatpush1.msra.mxu0 %v404
        %712 = vmatprep.subr.mxu0 %v413
        %713 = vmatpush1.msra.mxu0 %v412
        %714 = vmatprep.subr.mxu0 %v421
        %715 = vmatpush1.msra.mxu0 %v420
        %716 = vmatprep.subr.mxu0 %v429
        %717 = vmatpush1.msra.mxu0 %v428
        %718 = vmatprep.subr.mxu0 0.0
        %719 = vmatpush1.msra.mxu0 0.0
        %720 = vmatprep.subr.mxu0 0.0
        %721 = vmatpush1.msra.mxu0 0.0
        %722 = vmatprep.subr.mxu0 0.0
        %723 = vmatpush1.msra.mxu0 0.0
        %724 = vmatprep.subr.mxu0 0.0
        %725 = vmatpush1.msra.mxu0 0.0
        %726 = vmatprep.subr.mxu0 0.0
        %727 = vmatpush1.msra.mxu0 0.0
        %728 = vmatprep.subr.mxu0 0.0
        %729 = vmatpush1.msra.mxu0 0.0
        %730 = vmatprep.subr.mxu0 0.0
        %731 = vmatpush1.msra.mxu0 0.0
        %732 = vmatprep.subr.mxu0 0.0
        %733 = vmatpush1.msra.mxu0 0.0
        %734 = vmatprep.subr.mxu0 0.0
        %735 = vmatpush1.msra.mxu0 0.0
        %736 = vmatprep.subr.mxu0 0.0
        %737 = vmatpush1.msra.mxu0 0.0
        %738 = vmatprep.subr.mxu0 0.0
        %739 = vmatpush1.msra.mxu0 0.0
        %740 = vmatprep.subr.mxu0 0.0
        %741 = vmatpush1.msra.mxu0 0.0
        %742 = vmatprep.subr.mxu0 0.0
        %743 = vmatpush1.msra.mxu0 0.0
        %744 = vmatprep.subr.mxu0 0.0
        %745 = vmatpush1.msra.mxu0 0.0
        %746 = vmatprep.subr.mxu0 0.0
        %747 = vmatpush1.msra.mxu0 0.0
        %748 = vmatprep.subr.mxu0 0.0
        %749 = vmatpush1.msra.mxu0 0.0
        %750 = vmatprep.subr.mxu0 0.0
        %751 = vmatpush1.msra.mxu0 0.0
        %752 = vmatprep.subr.mxu0 0.0
        %753 = vmatpush1.msra.mxu0 0.0
        %754 = vmatprep.subr.mxu0 0.0
        %755 = vmatpush1.msra.mxu0 0.0
        %756 = vmatprep.subr.mxu0 0.0
        %757 = vmatpush1.msra.mxu0 0.0
        %758 = vmatprep.subr.mxu0 0.0
        %759 = vmatpush1.msra.mxu0 0.0
        %760 = vmatprep.subr.mxu0 0.0
        %761 = vmatpush1.msra.mxu0 0.0
        %762 = vmatprep.subr.mxu0 0.0
        %763 = vmatpush1.msra.mxu0 0.0
        %764 = vmatprep.subr.mxu0 0.0
        %765 = vmatpush1.msra.mxu0 0.0
        %766 = vmatprep.subr.mxu0 0.0
        %767 = vmatpush1.msra.mxu0 0.0
        %768 = vmatprep.subr.mxu0 0.0
        %769 = vmatpush1.msra.mxu0 0.0
        %770 = vmatprep.subr.mxu0 0.0
        %771 = vmatpush1.msra.mxu0 0.0
        %772 = vmatprep.subr.mxu0 0.0
        %773 = vmatpush1.msra.mxu0 0.0
        %774 = vmatprep.mubr.f32.mxu0 0.0
        %775 = vmatmul.mubr.f32.gmra.mrb[0].mxu0 %v432
        %v776 = vpop.f32.mrb[0].mxu0
        %v777 = vadd.f32 0.0, %v776
        %v778 = vpop.f32.mrb[0].mxu0
        %v779 = vadd.f32 0.0, %v778
        %780 = vmatprep.mubr.f32.mxu0 0.0
        %781 = vmatmul.mubr.f32.gmra.mrb[0].mxu0 %v435
        %v782 = vpop.f32.mrb[0].mxu0
        %v783 = vadd.f32 0.0, %v782
        %v784 = vpop.f32.mrb[0].mxu0
        %v785 = vadd.f32 0.0, %v784
        %786 = vmatprep.mubr.f32.mxu0 0.0
        %787 = vmatmul.mubr.f32.gmra.mrb[0].mxu0 %v438
        %v788 = vpop.f32.mrb[0].mxu0
        %v789 = vadd.f32 0.0, %v788
        %v790 = vpop.f32.mrb[0].mxu0
        %v791 = vadd.f32 0.0, %v790
        %792 = vmatprep.mubr.f32.mxu0 0.0
        %793 = vmatmul.mubr.f32.gmra.mrb[0].mxu0 %v441
        %v794 = vpop.f32.mrb[0].mxu0
        %v795 = vadd.f32 0.0, %v794
        %v796 = vpop.f32.mrb[0].mxu0
        %v797 = vadd.f32 0.0, %v796
        %798 = vdwg.mxu0
        %800 = vset.pattern.permute.xlu0 0
        %801 = vperm.xlu0 %800, %v394
        %v802 = vpop.permute.xlu0 %801
        %805 = vset.pattern.permute.xlu0 0
        %806 = vperm.xlu0 %805, %v395
        %v807 = vpop.permute.xlu0 %806
        %810 = vset.pattern.permute.xlu0 0
        %811 = vperm.xlu0 %810, %v396
        %v812 = vpop.permute.xlu0 %811
        %815 = vset.pattern.permute.xlu0 0
        %816 = vperm.xlu0 %815, %v397
        %v817 = vpop.permute.xlu0 %816
        %v819 = vmul.f32 %v510, %v802
        %v820 = vmul.f32 %v516, %v807
        %v821 = vmul.f32 %v522, %v812
        %v822 = vmul.f32 %v528, %v817
        %823 = vset.pattern.permute.xlu0 1
        %824 = vperm.xlu0 %823, %v394
        %v825 = vpop.permute.xlu0 %824
        %827 = vset.pattern.permute.xlu0 1
        %828 = vperm.xlu0 %827, %v395
        %v829 = vpop.permute.xlu0 %828
        %831 = vset.pattern.permute.xlu0 1
        %832 = vperm.xlu0 %831, %v396
        %v833 = vpop.permute.xlu0 %832
        %835 = vset.pattern.permute.xlu0 1
        %836 = vperm.xlu0 %835, %v397
        %v837 = vpop.permute.xlu0 %836
        %v839 = vmul.f32 %v510, %v825
        %v840 = vmul.f32 %v516, %v829
        %v841 = vmul.f32 %v522, %v833
        %v842 = vmul.f32 %v528, %v837
        %847 = vrot.lane.b32.xlu0 %v839, 96
        %v848 = vpop.permute.xlu0 %847
        %849 = vrot.lane.b32.xlu0 %v840, 96
        %v850 = vpop.permute.xlu0 %849
        %851 = vrot.lane.b32.xlu0 %v841, 96
        %v852 = vpop.permute.xlu0 %851
        %853 = vrot.lane.b32.xlu0 %v842, 96
        %v854 = vpop.permute.xlu0 %853
        %v859 = vadd.f32 %v819, %v848
        %v860 = vadd.f32 %v820, %v850
        %v861 = vadd.f32 %v821, %v852
        %v862 = vadd.f32 %v822, %v854
        %863 = vset.pattern.permute.xlu0 2
        %864 = vperm.xlu0 %863, %v394
        %v865 = vpop.permute.xlu0 %864
        %867 = vset.pattern.permute.xlu0 2
        %868 = vperm.xlu0 %867, %v395
        %v869 = vpop.permute.xlu0 %868
        %871 = vset.pattern.permute.xlu0 2
        %872 = vperm.xlu0 %871, %v396
        %v873 = vpop.permute.xlu0 %872
        %875 = vset.pattern.permute.xlu0 2
        %876 = vperm.xlu0 %875, %v397
        %v877 = vpop.permute.xlu0 %876
        %v879 = vmul.f32 %v510, %v865
        %v880 = vmul.f32 %v516, %v869
        %v881 = vmul.f32 %v522, %v873
        %v882 = vmul.f32 %v528, %v877
        %887 = vrot.lane.b32.xlu0 %v879, 64
        %v888 = vpop.permute.xlu0 %887
        %889 = vrot.lane.b32.xlu0 %v880, 64
        %v890 = vpop.permute.xlu0 %889
        %891 = vrot.lane.b32.xlu0 %v881, 64
        %v892 = vpop.permute.xlu0 %891
        %893 = vrot.lane.b32.xlu0 %v882, 64
        %v894 = vpop.permute.xlu0 %893
        %v899 = vadd.f32 %v859, %v888
        %v900 = vadd.f32 %v860, %v890
        %v901 = vadd.f32 %v861, %v892
        %v902 = vadd.f32 %v862, %v894
        %903 = vset.pattern.permute.xlu0 3
        %904 = vperm.xlu0 %903, %v394
        %v905 = vpop.permute.xlu0 %904
        %907 = vset.pattern.permute.xlu0 3
        %908 = vperm.xlu0 %907, %v395
        %v909 = vpop.permute.xlu0 %908
        %911 = vset.pattern.permute.xlu0 3
        %912 = vperm.xlu0 %911, %v396
        %v913 = vpop.permute.xlu0 %912
        %915 = vset.pattern.permute.xlu0 3
        %916 = vperm.xlu0 %915, %v397
        %v917 = vpop.permute.xlu0 %916
        %v919 = vmul.f32 %v510, %v905
        %v920 = vmul.f32 %v516, %v909
        %v921 = vmul.f32 %v522, %v913
        %v922 = vmul.f32 %v528, %v917
        %927 = vrot.lane.b32.xlu0 %v919, 32
        %v928 = vpop.permute.xlu0 %927
        %929 = vrot.lane.b32.xlu0 %v920, 32
        %v930 = vpop.permute.xlu0 %929
        %931 = vrot.lane.b32.xlu0 %v921, 32
        %v932 = vpop.permute.xlu0 %931
        %933 = vrot.lane.b32.xlu0 %v922, 32
        %v934 = vpop.permute.xlu0 %933
        %v939 = vadd.f32 %v899, %v928
        %v940 = vadd.f32 %v900, %v930
        %v941 = vadd.f32 %v901, %v932
        %v942 = vadd.f32 %v902, %v934
        %943 = vset.pattern.permute.xlu0 4
        %944 = vperm.xlu0 %943, %v394
        %v945 = vpop.permute.xlu0 %944
        %947 = vset.pattern.permute.xlu0 4
        %948 = vperm.xlu0 %947, %v395
        %v949 = vpop.permute.xlu0 %948
        %951 = vset.pattern.permute.xlu0 4
        %952 = vperm.xlu0 %951, %v396
        %v953 = vpop.permute.xlu0 %952
        %955 = vset.pattern.permute.xlu0 4
        %956 = vperm.xlu0 %955, %v397
        %v957 = vpop.permute.xlu0 %956
        %v959 = vmul.f32 %v512, %v945
        %v960 = vmul.f32 %v518, %v949
        %v961 = vmul.f32 %v524, %v953
        %v962 = vmul.f32 %v530, %v957
        %v963 = vadd.f32 %v939, %v959
        %v964 = vadd.f32 %v940, %v960
        %v965 = vadd.f32 %v941, %v961
        %v966 = vadd.f32 %v942, %v962
        %967 = vset.pattern.permute.xlu0 5
        %968 = vperm.xlu0 %967, %v394
        %v969 = vpop.permute.xlu0 %968
        %971 = vset.pattern.permute.xlu0 5
        %972 = vperm.xlu0 %971, %v395
        %v973 = vpop.permute.xlu0 %972
        %975 = vset.pattern.permute.xlu0 5
        %976 = vperm.xlu0 %975, %v396
        %v977 = vpop.permute.xlu0 %976
        %979 = vset.pattern.permute.xlu0 5
        %980 = vperm.xlu0 %979, %v397
        %v981 = vpop.permute.xlu0 %980
        %v983 = vmul.f32 %v512, %v969
        %v984 = vmul.f32 %v518, %v973
        %v985 = vmul.f32 %v524, %v977
        %v986 = vmul.f32 %v530, %v981
        %991 = vrot.lane.b32.xlu0 %v983, 96
        %v992 = vpop.permute.xlu0 %991
        %993 = vrot.lane.b32.xlu0 %v984, 96
        %v994 = vpop.permute.xlu0 %993
        %995 = vrot.lane.b32.xlu0 %v985, 96
        %v996 = vpop.permute.xlu0 %995
        %997 = vrot.lane.b32.xlu0 %v986, 96
        %v998 = vpop.permute.xlu0 %997
        %v1003 = vadd.f32 %v963, %v992
        %v1004 = vadd.f32 %v964, %v994
        %v1005 = vadd.f32 %v965, %v996
        %v1006 = vadd.f32 %v966, %v998
        %1007 = vset.pattern.permute.xlu0 6
        %1008 = vperm.xlu0 %1007, %v394
        %v1009 = vpop.permute.xlu0 %1008
        %1011 = vset.pattern.permute.xlu0 6
        %1012 = vperm.xlu0 %1011, %v395
        %v1013 = vpop.permute.xlu0 %1012
        %1015 = vset.pattern.permute.xlu0 6
        %1016 = vperm.xlu0 %1015, %v396
        %v1017 = vpop.permute.xlu0 %1016
        %1019 = vset.pattern.permute.xlu0 6
        %1020 = vperm.xlu0 %1019, %v397
        %v1021 = vpop.permute.xlu0 %1020
        %v1023 = vmul.f32 %v512, %v1009
        %v1024 = vmul.f32 %v518, %v1013
        %v1025 = vmul.f32 %v524, %v1017
        %v1026 = vmul.f32 %v530, %v1021
        %1031 = vrot.lane.b32.xlu0 %v1023, 64
        %v1032 = vpop.permute.xlu0 %1031
        %1033 = vrot.lane.b32.xlu0 %v1024, 64
        %v1034 = vpop.permute.xlu0 %1033
        %1035 = vrot.lane.b32.xlu0 %v1025, 64
        %v1036 = vpop.permute.xlu0 %1035
        %1037 = vrot.lane.b32.xlu0 %v1026, 64
        %v1038 = vpop.permute.xlu0 %1037
        %v1043 = vadd.f32 %v1003, %v1032
        %v1044 = vadd.f32 %v1004, %v1034
        %v1045 = vadd.f32 %v1005, %v1036
        %v1046 = vadd.f32 %v1006, %v1038
        %1047 = vset.pattern.permute.xlu0 7
        %1048 = vperm.xlu0 %1047, %v394
        %v1049 = vpop.permute.xlu0 %1048
        %1051 = vset.pattern.permute.xlu0 7
        %1052 = vperm.xlu0 %1051, %v395
        %v1053 = vpop.permute.xlu0 %1052
        %1055 = vset.pattern.permute.xlu0 7
        %1056 = vperm.xlu0 %1055, %v396
        %v1057 = vpop.permute.xlu0 %1056
        %1059 = vset.pattern.permute.xlu0 7
        %1060 = vperm.xlu0 %1059, %v397
        %v1061 = vpop.permute.xlu0 %1060
        %v1063 = vmul.f32 %v512, %v1049
        %v1064 = vmul.f32 %v518, %v1053
        %v1065 = vmul.f32 %v524, %v1057
        %v1066 = vmul.f32 %v530, %v1061
        %1071 = vrot.lane.b32.xlu0 %v1063, 32
        %v1072 = vpop.permute.xlu0 %1071
        %1073 = vrot.lane.b32.xlu0 %v1064, 32
        %v1074 = vpop.permute.xlu0 %1073
        %1075 = vrot.lane.b32.xlu0 %v1065, 32
        %v1076 = vpop.permute.xlu0 %1075
        %1077 = vrot.lane.b32.xlu0 %v1066, 32
        %v1078 = vpop.permute.xlu0 %1077
        %v1083 = vadd.f32 %v1043, %v1072
        %v1084 = vadd.f32 %v1044, %v1074
        %v1085 = vadd.f32 %v1045, %v1076
        %v1086 = vadd.f32 %v1046, %v1078
        %1087 = vset.pattern.permute.xlu0 8
        %1088 = vperm.xlu0 %1087, %v394
        %v1089 = vpop.permute.xlu0 %1088
        %1091 = vset.pattern.permute.xlu0 8
        %1092 = vperm.xlu0 %1091, %v395
        %v1093 = vpop.permute.xlu0 %1092
        %1095 = vset.pattern.permute.xlu0 8
        %1096 = vperm.xlu0 %1095, %v396
        %v1097 = vpop.permute.xlu0 %1096
        %1099 = vset.pattern.permute.xlu0 8
        %1100 = vperm.xlu0 %1099, %v397
        %v1101 = vpop.permute.xlu0 %1100
        %v1103 = vmul.f32 %v599, %v1089
        %v1104 = vmul.f32 %v605, %v1093
        %v1105 = vmul.f32 %v611, %v1097
        %v1106 = vmul.f32 %v617, %v1101
        %v1107 = vadd.f32 %v1083, %v1103
        %v1108 = vadd.f32 %v1084, %v1104
        %v1109 = vadd.f32 %v1085, %v1105
        %v1110 = vadd.f32 %v1086, %v1106
        %1111 = vset.pattern.permute.xlu0 9
        %1112 = vperm.xlu0 %1111, %v394
        %v1113 = vpop.permute.xlu0 %1112
        %1115 = vset.pattern.permute.xlu0 9
        %1116 = vperm.xlu0 %1115, %v395
        %v1117 = vpop.permute.xlu0 %1116
        %1119 = vset.pattern.permute.xlu0 9
        %1120 = vperm.xlu0 %1119, %v396
        %v1121 = vpop.permute.xlu0 %1120
        %1123 = vset.pattern.permute.xlu0 9
        %1124 = vperm.xlu0 %1123, %v397
        %v1125 = vpop.permute.xlu0 %1124
        %v1127 = vmul.f32 %v599, %v1113
        %v1128 = vmul.f32 %v605, %v1117
        %v1129 = vmul.f32 %v611, %v1121
        %v1130 = vmul.f32 %v617, %v1125
        %1135 = vrot.lane.b32.xlu0 %v1127, 96
        %v1136 = vpop.permute.xlu0 %1135
        %1137 = vrot.lane.b32.xlu0 %v1128, 96
        %v1138 = vpop.permute.xlu0 %1137
        %1139 = vrot.lane.b32.xlu0 %v1129, 96
        %v1140 = vpop.permute.xlu0 %1139
        %1141 = vrot.lane.b32.xlu0 %v1130, 96
        %v1142 = vpop.permute.xlu0 %1141
        %v1147 = vadd.f32 %v1107, %v1136
        %v1148 = vadd.f32 %v1108, %v1138
        %v1149 = vadd.f32 %v1109, %v1140
        %v1150 = vadd.f32 %v1110, %v1142
        %1151 = vset.pattern.permute.xlu0 10
        %1152 = vperm.xlu0 %1151, %v394
        %v1153 = vpop.permute.xlu0 %1152
        %1155 = vset.pattern.permute.xlu0 10
        %1156 = vperm.xlu0 %1155, %v395
        %v1157 = vpop.permute.xlu0 %1156
        %1159 = vset.pattern.permute.xlu0 10
        %1160 = vperm.xlu0 %1159, %v396
        %v1161 = vpop.permute.xlu0 %1160
        %1163 = vset.pattern.permute.xlu0 10
        %1164 = vperm.xlu0 %1163, %v397
        %v1165 = vpop.permute.xlu0 %1164
        %v1167 = vmul.f32 %v599, %v1153
        %v1168 = vmul.f32 %v605, %v1157
        %v1169 = vmul.f32 %v611, %v1161
        %v1170 = vmul.f32 %v617, %v1165
        %1175 = vrot.lane.b32.xlu0 %v1167, 64
        %v1176 = vpop.permute.xlu0 %1175
        %1177 = vrot.lane.b32.xlu0 %v1168, 64
        %v1178 = vpop.permute.xlu0 %1177
        %1179 = vrot.lane.b32.xlu0 %v1169, 64
        %v1180 = vpop.permute.xlu0 %1179
        %1181 = vrot.lane.b32.xlu0 %v1170, 64
        %v1182 = vpop.permute.xlu0 %1181
        %v1187 = vadd.f32 %v1147, %v1176
        %v1188 = vadd.f32 %v1148, %v1178
        %v1189 = vadd.f32 %v1149, %v1180
        %v1190 = vadd.f32 %v1150, %v1182
        %1191 = vset.pattern.permute.xlu0 11
        %1192 = vperm.xlu0 %1191, %v394
        %v1193 = vpop.permute.xlu0 %1192
        %1195 = vset.pattern.permute.xlu0 11
        %1196 = vperm.xlu0 %1195, %v395
        %v1197 = vpop.permute.xlu0 %1196
        %1199 = vset.pattern.permute.xlu0 11
        %1200 = vperm.xlu0 %1199, %v396
        %v1201 = vpop.permute.xlu0 %1200
        %1203 = vset.pattern.permute.xlu0 11
        %1204 = vperm.xlu0 %1203, %v397
        %v1205 = vpop.permute.xlu0 %1204
        %v1207 = vmul.f32 %v599, %v1193
        %v1208 = vmul.f32 %v605, %v1197
        %v1209 = vmul.f32 %v611, %v1201
        %v1210 = vmul.f32 %v617, %v1205
        %1215 = vrot.lane.b32.xlu0 %v1207, 32
        %v1216 = vpop.permute.xlu0 %1215
        %1217 = vrot.lane.b32.xlu0 %v1208, 32
        %v1218 = vpop.permute.xlu0 %1217
        %1219 = vrot.lane.b32.xlu0 %v1209, 32
        %v1220 = vpop.permute.xlu0 %1219
        %1221 = vrot.lane.b32.xlu0 %v1210, 32
        %v1222 = vpop.permute.xlu0 %1221
        %v1227 = vadd.f32 %v1187, %v1216
        %v1228 = vadd.f32 %v1188, %v1218
        %v1229 = vadd.f32 %v1189, %v1220
        %v1230 = vadd.f32 %v1190, %v1222
        %1231 = vset.pattern.permute.xlu0 12
        %1232 = vperm.xlu0 %1231, %v394
        %v1233 = vpop.permute.xlu0 %1232
        %1235 = vset.pattern.permute.xlu0 12
        %1236 = vperm.xlu0 %1235, %v395
        %v1237 = vpop.permute.xlu0 %1236
        %1239 = vset.pattern.permute.xlu0 12
        %1240 = vperm.xlu0 %1239, %v396
        %v1241 = vpop.permute.xlu0 %1240
        %1243 = vset.pattern.permute.xlu0 12
        %1244 = vperm.xlu0 %1243, %v397
        %v1245 = vpop.permute.xlu0 %1244
        %v1247 = vmul.f32 %v601, %v1233
        %v1248 = vmul.f32 %v607, %v1237
        %v1249 = vmul.f32 %v613, %v1241
        %v1250 = vmul.f32 %v619, %v1245
        %v1251 = vadd.f32 %v1227, %v1247
        %v1252 = vadd.f32 %v1228, %v1248
        %v1253 = vadd.f32 %v1229, %v1249
        %v1254 = vadd.f32 %v1230, %v1250
        %1255 = vset.pattern.permute.xlu0 13
        %1256 = vperm.xlu0 %1255, %v394
        %v1257 = vpop.permute.xlu0 %1256
        %1259 = vset.pattern.permute.xlu0 13
        %1260 = vperm.xlu0 %1259, %v395
        %v1261 = vpop.permute.xlu0 %1260
        %1263 = vset.pattern.permute.xlu0 13
        %1264 = vperm.xlu0 %1263, %v396
        %v1265 = vpop.permute.xlu0 %1264
        %1267 = vset.pattern.permute.xlu0 13
        %1268 = vperm.xlu0 %1267, %v397
        %v1269 = vpop.permute.xlu0 %1268
        %v1271 = vmul.f32 %v601, %v1257
        %v1272 = vmul.f32 %v607, %v1261
        %v1273 = vmul.f32 %v613, %v1265
        %v1274 = vmul.f32 %v619, %v1269
        %1279 = vrot.lane.b32.xlu0 %v1271, 96
        %v1280 = vpop.permute.xlu0 %1279
        %1281 = vrot.lane.b32.xlu0 %v1272, 96
        %v1282 = vpop.permute.xlu0 %1281
        %1283 = vrot.lane.b32.xlu0 %v1273, 96
        %v1284 = vpop.permute.xlu0 %1283
        %1285 = vrot.lane.b32.xlu0 %v1274, 96
        %v1286 = vpop.permute.xlu0 %1285
        %v1291 = vadd.f32 %v1251, %v1280
        %v1292 = vadd.f32 %v1252, %v1282
        %v1293 = vadd.f32 %v1253, %v1284
        %v1294 = vadd.f32 %v1254, %v1286
        %1295 = vset.pattern.permute.xlu0 14
        %1296 = vperm.xlu0 %1295, %v394
        %v1297 = vpop.permute.xlu0 %1296
        %1299 = vset.pattern.permute.xlu0 14
        %1300 = vperm.xlu0 %1299, %v395
        %v1301 = vpop.permute.xlu0 %1300
        %1303 = vset.pattern.permute.xlu0 14
        %1304 = vperm.xlu0 %1303, %v396
        %v1305 = vpop.permute.xlu0 %1304
        %1307 = vset.pattern.permute.xlu0 14
        %1308 = vperm.xlu0 %1307, %v397
        %v1309 = vpop.permute.xlu0 %1308
        %v1311 = vmul.f32 %v601, %v1297
        %v1312 = vmul.f32 %v607, %v1301
        %v1313 = vmul.f32 %v613, %v1305
        %v1314 = vmul.f32 %v619, %v1309
        %1319 = vrot.lane.b32.xlu0 %v1311, 64
        %v1320 = vpop.permute.xlu0 %1319
        %1321 = vrot.lane.b32.xlu0 %v1312, 64
        %v1322 = vpop.permute.xlu0 %1321
        %1323 = vrot.lane.b32.xlu0 %v1313, 64
        %v1324 = vpop.permute.xlu0 %1323
        %1325 = vrot.lane.b32.xlu0 %v1314, 64
        %v1326 = vpop.permute.xlu0 %1325
        %v1331 = vadd.f32 %v1291, %v1320
        %v1332 = vadd.f32 %v1292, %v1322
        %v1333 = vadd.f32 %v1293, %v1324
        %v1334 = vadd.f32 %v1294, %v1326
        %1335 = vset.pattern.permute.xlu0 15
        %1336 = vperm.xlu0 %1335, %v394
        %v1337 = vpop.permute.xlu0 %1336
        %1339 = vset.pattern.permute.xlu0 15
        %1340 = vperm.xlu0 %1339, %v395
        %v1341 = vpop.permute.xlu0 %1340
        %1343 = vset.pattern.permute.xlu0 15
        %1344 = vperm.xlu0 %1343, %v396
        %v1345 = vpop.permute.xlu0 %1344
        %1347 = vset.pattern.permute.xlu0 15
        %1348 = vperm.xlu0 %1347, %v397
        %v1349 = vpop.permute.xlu0 %1348
        %v1351 = vmul.f32 %v601, %v1337
        %v1352 = vmul.f32 %v607, %v1341
        %v1353 = vmul.f32 %v613, %v1345
        %v1354 = vmul.f32 %v619, %v1349
        %1359 = vrot.lane.b32.xlu0 %v1351, 32
        %v1360 = vpop.permute.xlu0 %1359
        %1361 = vrot.lane.b32.xlu0 %v1352, 32
        %v1362 = vpop.permute.xlu0 %1361
        %1363 = vrot.lane.b32.xlu0 %v1353, 32
        %v1364 = vpop.permute.xlu0 %1363
        %1365 = vrot.lane.b32.xlu0 %v1354, 32
        %v1366 = vpop.permute.xlu0 %1365
        %v1371 = vadd.f32 %v1331, %v1360
        %v1372 = vadd.f32 %v1332, %v1362
        %v1373 = vadd.f32 %v1333, %v1364
        %v1374 = vadd.f32 %v1334, %v1366
        %1375 = vset.pattern.permute.xlu0 16
        %1376 = vperm.xlu0 %1375, %v394
        %v1377 = vpop.permute.xlu0 %1376
        %1379 = vset.pattern.permute.xlu0 16
        %1380 = vperm.xlu0 %1379, %v395
        %v1381 = vpop.permute.xlu0 %1380
        %1383 = vset.pattern.permute.xlu0 16
        %1384 = vperm.xlu0 %1383, %v396
        %v1385 = vpop.permute.xlu0 %1384
        %1387 = vset.pattern.permute.xlu0 16
        %1388 = vperm.xlu0 %1387, %v397
        %v1389 = vpop.permute.xlu0 %1388
        %v1391 = vmul.f32 %v688, %v1377
        %v1392 = vmul.f32 %v694, %v1381
        %v1393 = vmul.f32 %v700, %v1385
        %v1394 = vmul.f32 %v706, %v1389
        %v1395 = vadd.f32 %v1371, %v1391
        %v1396 = vadd.f32 %v1372, %v1392
        %v1397 = vadd.f32 %v1373, %v1393
        %v1398 = vadd.f32 %v1374, %v1394
        %1399 = vset.pattern.permute.xlu0 17
        %1400 = vperm.xlu0 %1399, %v394
        %v1401 = vpop.permute.xlu0 %1400
        %1403 = vset.pattern.permute.xlu0 17
        %1404 = vperm.xlu0 %1403, %v395
        %v1405 = vpop.permute.xlu0 %1404
        %1407 = vset.pattern.permute.xlu0 17
        %1408 = vperm.xlu0 %1407, %v396
        %v1409 = vpop.permute.xlu0 %1408
        %1411 = vset.pattern.permute.xlu0 17
        %1412 = vperm.xlu0 %1411, %v397
        %v1413 = vpop.permute.xlu0 %1412
        %v1415 = vmul.f32 %v688, %v1401
        %v1416 = vmul.f32 %v694, %v1405
        %v1417 = vmul.f32 %v700, %v1409
        %v1418 = vmul.f32 %v706, %v1413
        %1423 = vrot.lane.b32.xlu0 %v1415, 96
        %v1424 = vpop.permute.xlu0 %1423
        %1425 = vrot.lane.b32.xlu0 %v1416, 96
        %v1426 = vpop.permute.xlu0 %1425
        %1427 = vrot.lane.b32.xlu0 %v1417, 96
        %v1428 = vpop.permute.xlu0 %1427
        %1429 = vrot.lane.b32.xlu0 %v1418, 96
        %v1430 = vpop.permute.xlu0 %1429
        %v1435 = vadd.f32 %v1395, %v1424
        %v1436 = vadd.f32 %v1396, %v1426
        %v1437 = vadd.f32 %v1397, %v1428
        %v1438 = vadd.f32 %v1398, %v1430
        %1439 = vset.pattern.permute.xlu0 18
        %1440 = vperm.xlu0 %1439, %v394
        %v1441 = vpop.permute.xlu0 %1440
        %1443 = vset.pattern.permute.xlu0 18
        %1444 = vperm.xlu0 %1443, %v395
        %v1445 = vpop.permute.xlu0 %1444
        %1447 = vset.pattern.permute.xlu0 18
        %1448 = vperm.xlu0 %1447, %v396
        %v1449 = vpop.permute.xlu0 %1448
        %1451 = vset.pattern.permute.xlu0 18
        %1452 = vperm.xlu0 %1451, %v397
        %v1453 = vpop.permute.xlu0 %1452
        %v1455 = vmul.f32 %v688, %v1441
        %v1456 = vmul.f32 %v694, %v1445
        %v1457 = vmul.f32 %v700, %v1449
        %v1458 = vmul.f32 %v706, %v1453
        %1463 = vrot.lane.b32.xlu0 %v1455, 64
        %v1464 = vpop.permute.xlu0 %1463
        %1465 = vrot.lane.b32.xlu0 %v1456, 64
        %v1466 = vpop.permute.xlu0 %1465
        %1467 = vrot.lane.b32.xlu0 %v1457, 64
        %v1468 = vpop.permute.xlu0 %1467
        %1469 = vrot.lane.b32.xlu0 %v1458, 64
        %v1470 = vpop.permute.xlu0 %1469
        %v1475 = vadd.f32 %v1435, %v1464
        %v1476 = vadd.f32 %v1436, %v1466
        %v1477 = vadd.f32 %v1437, %v1468
        %v1478 = vadd.f32 %v1438, %v1470
        %1479 = vset.pattern.permute.xlu0 19
        %1480 = vperm.xlu0 %1479, %v394
        %v1481 = vpop.permute.xlu0 %1480
        %1483 = vset.pattern.permute.xlu0 19
        %1484 = vperm.xlu0 %1483, %v395
        %v1485 = vpop.permute.xlu0 %1484
        %1487 = vset.pattern.permute.xlu0 19
        %1488 = vperm.xlu0 %1487, %v396
        %v1489 = vpop.permute.xlu0 %1488
        %1491 = vset.pattern.permute.xlu0 19
        %1492 = vperm.xlu0 %1491, %v397
        %v1493 = vpop.permute.xlu0 %1492
        %v1495 = vmul.f32 %v688, %v1481
        %v1496 = vmul.f32 %v694, %v1485
        %v1497 = vmul.f32 %v700, %v1489
        %v1498 = vmul.f32 %v706, %v1493
        %1503 = vrot.lane.b32.xlu0 %v1495, 32
        %v1504 = vpop.permute.xlu0 %1503
        %1505 = vrot.lane.b32.xlu0 %v1496, 32
        %v1506 = vpop.permute.xlu0 %1505
        %1507 = vrot.lane.b32.xlu0 %v1497, 32
        %v1508 = vpop.permute.xlu0 %1507
        %1509 = vrot.lane.b32.xlu0 %v1498, 32
        %v1510 = vpop.permute.xlu0 %1509
        %v1515 = vadd.f32 %v1475, %v1504
        %v1516 = vadd.f32 %v1476, %v1506
        %v1517 = vadd.f32 %v1477, %v1508
        %v1518 = vadd.f32 %v1478, %v1510
        %1519 = vset.pattern.permute.xlu0 20
        %1520 = vperm.xlu0 %1519, %v394
        %v1521 = vpop.permute.xlu0 %1520
        %1523 = vset.pattern.permute.xlu0 20
        %1524 = vperm.xlu0 %1523, %v395
        %v1525 = vpop.permute.xlu0 %1524
        %1527 = vset.pattern.permute.xlu0 20
        %1528 = vperm.xlu0 %1527, %v396
        %v1529 = vpop.permute.xlu0 %1528
        %1531 = vset.pattern.permute.xlu0 20
        %1532 = vperm.xlu0 %1531, %v397
        %v1533 = vpop.permute.xlu0 %1532
        %v1535 = vmul.f32 %v690, %v1521
        %v1536 = vmul.f32 %v696, %v1525
        %v1537 = vmul.f32 %v702, %v1529
        %v1538 = vmul.f32 %v708, %v1533
        %v1539 = vadd.f32 %v1515, %v1535
        %v1540 = vadd.f32 %v1516, %v1536
        %v1541 = vadd.f32 %v1517, %v1537
        %v1542 = vadd.f32 %v1518, %v1538
        %1543 = vset.pattern.permute.xlu0 21
        %1544 = vperm.xlu0 %1543, %v394
        %v1545 = vpop.permute.xlu0 %1544
        %1547 = vset.pattern.permute.xlu0 21
        %1548 = vperm.xlu0 %1547, %v395
        %v1549 = vpop.permute.xlu0 %1548
        %1551 = vset.pattern.permute.xlu0 21
        %1552 = vperm.xlu0 %1551, %v396
        %v1553 = vpop.permute.xlu0 %1552
        %1555 = vset.pattern.permute.xlu0 21
        %1556 = vperm.xlu0 %1555, %v397
        %v1557 = vpop.permute.xlu0 %1556
        %v1559 = vmul.f32 %v690, %v1545
        %v1560 = vmul.f32 %v696, %v1549
        %v1561 = vmul.f32 %v702, %v1553
        %v1562 = vmul.f32 %v708, %v1557
        %1567 = vrot.lane.b32.xlu0 %v1559, 96
        %v1568 = vpop.permute.xlu0 %1567
        %1569 = vrot.lane.b32.xlu0 %v1560, 96
        %v1570 = vpop.permute.xlu0 %1569
        %1571 = vrot.lane.b32.xlu0 %v1561, 96
        %v1572 = vpop.permute.xlu0 %1571
        %1573 = vrot.lane.b32.xlu0 %v1562, 96
        %v1574 = vpop.permute.xlu0 %1573
        %v1579 = vadd.f32 %v1539, %v1568
        %v1580 = vadd.f32 %v1540, %v1570
        %v1581 = vadd.f32 %v1541, %v1572
        %v1582 = vadd.f32 %v1542, %v1574
        %1583 = vset.pattern.permute.xlu0 22
        %1584 = vperm.xlu0 %1583, %v394
        %v1585 = vpop.permute.xlu0 %1584
        %1587 = vset.pattern.permute.xlu0 22
        %1588 = vperm.xlu0 %1587, %v395
        %v1589 = vpop.permute.xlu0 %1588
        %1591 = vset.pattern.permute.xlu0 22
        %1592 = vperm.xlu0 %1591, %v396
        %v1593 = vpop.permute.xlu0 %1592
        %1595 = vset.pattern.permute.xlu0 22
        %1596 = vperm.xlu0 %1595, %v397
        %v1597 = vpop.permute.xlu0 %1596
        %v1599 = vmul.f32 %v690, %v1585
        %v1600 = vmul.f32 %v696, %v1589
        %v1601 = vmul.f32 %v702, %v1593
        %v1602 = vmul.f32 %v708, %v1597
        %1607 = vrot.lane.b32.xlu0 %v1599, 64
        %v1608 = vpop.permute.xlu0 %1607
        %1609 = vrot.lane.b32.xlu0 %v1600, 64
        %v1610 = vpop.permute.xlu0 %1609
        %1611 = vrot.lane.b32.xlu0 %v1601, 64
        %v1612 = vpop.permute.xlu0 %1611
        %1613 = vrot.lane.b32.xlu0 %v1602, 64
        %v1614 = vpop.permute.xlu0 %1613
        %v1619 = vadd.f32 %v1579, %v1608
        %v1620 = vadd.f32 %v1580, %v1610
        %v1621 = vadd.f32 %v1581, %v1612
        %v1622 = vadd.f32 %v1582, %v1614
        %1623 = vset.pattern.permute.xlu0 23
        %1624 = vperm.xlu0 %1623, %v394
        %v1625 = vpop.permute.xlu0 %1624
        %1627 = vset.pattern.permute.xlu0 23
        %1628 = vperm.xlu0 %1627, %v395
        %v1629 = vpop.permute.xlu0 %1628
        %1631 = vset.pattern.permute.xlu0 23
        %1632 = vperm.xlu0 %1631, %v396
        %v1633 = vpop.permute.xlu0 %1632
        %1635 = vset.pattern.permute.xlu0 23
        %1636 = vperm.xlu0 %1635, %v397
        %v1637 = vpop.permute.xlu0 %1636
        %v1639 = vmul.f32 %v690, %v1625
        %v1640 = vmul.f32 %v696, %v1629
        %v1641 = vmul.f32 %v702, %v1633
        %v1642 = vmul.f32 %v708, %v1637
        %1647 = vrot.lane.b32.xlu0 %v1639, 32
        %v1648 = vpop.permute.xlu0 %1647
        %1649 = vrot.lane.b32.xlu0 %v1640, 32
        %v1650 = vpop.permute.xlu0 %1649
        %1651 = vrot.lane.b32.xlu0 %v1641, 32
        %v1652 = vpop.permute.xlu0 %1651
        %1653 = vrot.lane.b32.xlu0 %v1642, 32
        %v1654 = vpop.permute.xlu0 %1653
        %v1659 = vadd.f32 %v1619, %v1648
        %v1660 = vadd.f32 %v1620, %v1650
        %v1661 = vadd.f32 %v1621, %v1652
        %v1662 = vadd.f32 %v1622, %v1654
        %1663 = vset.pattern.permute.xlu0 24
        %1664 = vperm.xlu0 %1663, %v394
        %v1665 = vpop.permute.xlu0 %1664
        %1667 = vset.pattern.permute.xlu0 24
        %1668 = vperm.xlu0 %1667, %v395
        %v1669 = vpop.permute.xlu0 %1668
        %1671 = vset.pattern.permute.xlu0 24
        %1672 = vperm.xlu0 %1671, %v396
        %v1673 = vpop.permute.xlu0 %1672
        %1675 = vset.pattern.permute.xlu0 24
        %1676 = vperm.xlu0 %1675, %v397
        %v1677 = vpop.permute.xlu0 %1676
        %v1679 = vmul.f32 %v777, %v1665
        %v1680 = vmul.f32 %v783, %v1669
        %v1681 = vmul.f32 %v789, %v1673
        %v1682 = vmul.f32 %v795, %v1677
        %v1683 = vadd.f32 %v1659, %v1679
        %v1684 = vadd.f32 %v1660, %v1680
        %v1685 = vadd.f32 %v1661, %v1681
        %v1686 = vadd.f32 %v1662, %v1682
        %1687 = vset.pattern.permute.xlu0 25
        %1688 = vperm.xlu0 %1687, %v394
        %v1689 = vpop.permute.xlu0 %1688
        %1691 = vset.pattern.permute.xlu0 25
        %1692 = vperm.xlu0 %1691, %v395
        %v1693 = vpop.permute.xlu0 %1692
        %1695 = vset.pattern.permute.xlu0 25
        %1696 = vperm.xlu0 %1695, %v396
        %v1697 = vpop.permute.xlu0 %1696
        %1699 = vset.pattern.permute.xlu0 25
        %1700 = vperm.xlu0 %1699, %v397
        %v1701 = vpop.permute.xlu0 %1700
        %v1703 = vmul.f32 %v777, %v1689
        %v1704 = vmul.f32 %v783, %v1693
        %v1705 = vmul.f32 %v789, %v1697
        %v1706 = vmul.f32 %v795, %v1701
        %1711 = vrot.lane.b32.xlu0 %v1703, 96
        %v1712 = vpop.permute.xlu0 %1711
        %1713 = vrot.lane.b32.xlu0 %v1704, 96
        %v1714 = vpop.permute.xlu0 %1713
        %1715 = vrot.lane.b32.xlu0 %v1705, 96
        %v1716 = vpop.permute.xlu0 %1715
        %1717 = vrot.lane.b32.xlu0 %v1706, 96
        %v1718 = vpop.permute.xlu0 %1717
        %v1723 = vadd.f32 %v1683, %v1712
        %v1724 = vadd.f32 %v1684, %v1714
        %v1725 = vadd.f32 %v1685, %v1716
        %v1726 = vadd.f32 %v1686, %v1718
        %1727 = vset.pattern.permute.xlu0 26
        %1728 = vperm.xlu0 %1727, %v394
        %v1729 = vpop.permute.xlu0 %1728
        %1731 = vset.pattern.permute.xlu0 26
        %1732 = vperm.xlu0 %1731, %v395
        %v1733 = vpop.permute.xlu0 %1732
        %1735 = vset.pattern.permute.xlu0 26
        %1736 = vperm.xlu0 %1735, %v396
        %v1737 = vpop.permute.xlu0 %1736
        %1739 = vset.pattern.permute.xlu0 26
        %1740 = vperm.xlu0 %1739, %v397
        %v1741 = vpop.permute.xlu0 %1740
        %v1743 = vmul.f32 %v777, %v1729
        %v1744 = vmul.f32 %v783, %v1733
        %v1745 = vmul.f32 %v789, %v1737
        %v1746 = vmul.f32 %v795, %v1741
        %1751 = vrot.lane.b32.xlu0 %v1743, 64
        %v1752 = vpop.permute.xlu0 %1751
        %1753 = vrot.lane.b32.xlu0 %v1744, 64
        %v1754 = vpop.permute.xlu0 %1753
        %1755 = vrot.lane.b32.xlu0 %v1745, 64
        %v1756 = vpop.permute.xlu0 %1755
        %1757 = vrot.lane.b32.xlu0 %v1746, 64
        %v1758 = vpop.permute.xlu0 %1757
        %v1763 = vadd.f32 %v1723, %v1752
        %v1764 = vadd.f32 %v1724, %v1754
        %v1765 = vadd.f32 %v1725, %v1756
        %v1766 = vadd.f32 %v1726, %v1758
        %1767 = vset.pattern.permute.xlu0 27
        %1768 = vperm.xlu0 %1767, %v394
        %v1769 = vpop.permute.xlu0 %1768
        %1771 = vset.pattern.permute.xlu0 27
        %1772 = vperm.xlu0 %1771, %v395
        %v1773 = vpop.permute.xlu0 %1772
        %1775 = vset.pattern.permute.xlu0 27
        %1776 = vperm.xlu0 %1775, %v396
        %v1777 = vpop.permute.xlu0 %1776
        %1779 = vset.pattern.permute.xlu0 27
        %1780 = vperm.xlu0 %1779, %v397
        %v1781 = vpop.permute.xlu0 %1780
        %v1783 = vmul.f32 %v777, %v1769
        %v1784 = vmul.f32 %v783, %v1773
        %v1785 = vmul.f32 %v789, %v1777
        %v1786 = vmul.f32 %v795, %v1781
        %1791 = vrot.lane.b32.xlu0 %v1783, 32
        %v1792 = vpop.permute.xlu0 %1791
        %1793 = vrot.lane.b32.xlu0 %v1784, 32
        %v1794 = vpop.permute.xlu0 %1793
        %1795 = vrot.lane.b32.xlu0 %v1785, 32
        %v1796 = vpop.permute.xlu0 %1795
        %1797 = vrot.lane.b32.xlu0 %v1786, 32
        %v1798 = vpop.permute.xlu0 %1797
        %v1803 = vadd.f32 %v1763, %v1792
        %v1804 = vadd.f32 %v1764, %v1794
        %v1805 = vadd.f32 %v1765, %v1796
        %v1806 = vadd.f32 %v1766, %v1798
        %1807 = vset.pattern.permute.xlu0 28
        %1808 = vperm.xlu0 %1807, %v394
        %v1809 = vpop.permute.xlu0 %1808
        %1811 = vset.pattern.permute.xlu0 28
        %1812 = vperm.xlu0 %1811, %v395
        %v1813 = vpop.permute.xlu0 %1812
        %1815 = vset.pattern.permute.xlu0 28
        %1816 = vperm.xlu0 %1815, %v396
        %v1817 = vpop.permute.xlu0 %1816
        %1819 = vset.pattern.permute.xlu0 28
        %1820 = vperm.xlu0 %1819, %v397
        %v1821 = vpop.permute.xlu0 %1820
        %v1823 = vmul.f32 %v779, %v1809
        %v1824 = vmul.f32 %v785, %v1813
        %v1825 = vmul.f32 %v791, %v1817
        %v1826 = vmul.f32 %v797, %v1821
        %v1827 = vadd.f32 %v1803, %v1823
        %v1828 = vadd.f32 %v1804, %v1824
        %v1829 = vadd.f32 %v1805, %v1825
        %v1830 = vadd.f32 %v1806, %v1826
        %1831 = vset.pattern.permute.xlu0 29
        %1832 = vperm.xlu0 %1831, %v394
        %v1833 = vpop.permute.xlu0 %1832
        %1835 = vset.pattern.permute.xlu0 29
        %1836 = vperm.xlu0 %1835, %v395
        %v1837 = vpop.permute.xlu0 %1836
        %1839 = vset.pattern.permute.xlu0 29
        %1840 = vperm.xlu0 %1839, %v396
        %v1841 = vpop.permute.xlu0 %1840
        %1843 = vset.pattern.permute.xlu0 29
        %1844 = vperm.xlu0 %1843, %v397
        %v1845 = vpop.permute.xlu0 %1844
        %v1847 = vmul.f32 %v779, %v1833
        %v1848 = vmul.f32 %v785, %v1837
        %v1849 = vmul.f32 %v791, %v1841
        %v1850 = vmul.f32 %v797, %v1845
        %1855 = vrot.lane.b32.xlu0 %v1847, 96
        %v1856 = vpop.permute.xlu0 %1855
        %1857 = vrot.lane.b32.xlu0 %v1848, 96
        %v1858 = vpop.permute.xlu0 %1857
        %1859 = vrot.lane.b32.xlu0 %v1849, 96
        %v1860 = vpop.permute.xlu0 %1859
        %1861 = vrot.lane.b32.xlu0 %v1850, 96
        %v1862 = vpop.permute.xlu0 %1861
        %v1867 = vadd.f32 %v1827, %v1856
        %v1868 = vadd.f32 %v1828, %v1858
        %v1869 = vadd.f32 %v1829, %v1860
        %v1870 = vadd.f32 %v1830, %v1862
        %1871 = vset.pattern.permute.xlu0 30
        %1872 = vperm.xlu0 %1871, %v394
        %v1873 = vpop.permute.xlu0 %1872
        %1875 = vset.pattern.permute.xlu0 30
        %1876 = vperm.xlu0 %1875, %v395
        %v1877 = vpop.permute.xlu0 %1876
        %1879 = vset.pattern.permute.xlu0 30
        %1880 = vperm.xlu0 %1879, %v396
        %v1881 = vpop.permute.xlu0 %1880
        %1883 = vset.pattern.permute.xlu0 30
        %1884 = vperm.xlu0 %1883, %v397
        %v1885 = vpop.permute.xlu0 %1884
        %v1887 = vmul.f32 %v779, %v1873
        %v1888 = vmul.f32 %v785, %v1877
        %v1889 = vmul.f32 %v791, %v1881
        %v1890 = vmul.f32 %v797, %v1885
        %1895 = vrot.lane.b32.xlu0 %v1887, 64
        %v1896 = vpop.permute.xlu0 %1895
        %1897 = vrot.lane.b32.xlu0 %v1888, 64
        %v1898 = vpop.permute.xlu0 %1897
        %1899 = vrot.lane.b32.xlu0 %v1889, 64
        %v1900 = vpop.permute.xlu0 %1899
        %1901 = vrot.lane.b32.xlu0 %v1890, 64
        %v1902 = vpop.permute.xlu0 %1901
        %v1907 = vadd.f32 %v1867, %v1896
        %v1908 = vadd.f32 %v1868, %v1898
        %v1909 = vadd.f32 %v1869, %v1900
        %v1910 = vadd.f32 %v1870, %v1902
        %1911 = vset.pattern.permute.xlu0 31
        %1912 = vperm.xlu0 %1911, %v394
        %v1913 = vpop.permute.xlu0 %1912
        %1915 = vset.pattern.permute.xlu0 31
        %1916 = vperm.xlu0 %1915, %v395
        %v1917 = vpop.permute.xlu0 %1916
        %1919 = vset.pattern.permute.xlu0 31
        %1920 = vperm.xlu0 %1919, %v396
        %v1921 = vpop.permute.xlu0 %1920
        %1923 = vset.pattern.permute.xlu0 31
        %1924 = vperm.xlu0 %1923, %v397
        %v1925 = vpop.permute.xlu0 %1924
        %v1927 = vmul.f32 %v779, %v1913
        %v1928 = vmul.f32 %v785, %v1917
        %v1929 = vmul.f32 %v791, %v1921
        %v1930 = vmul.f32 %v797, %v1925
        %1935 = vrot.lane.b32.xlu0 %v1927, 32
        %v1936 = vpop.permute.xlu0 %1935
        %1937 = vrot.lane.b32.xlu0 %v1928, 32
        %v1938 = vpop.permute.xlu0 %1937
        %1939 = vrot.lane.b32.xlu0 %v1929, 32
        %v1940 = vpop.permute.xlu0 %1939
        %1941 = vrot.lane.b32.xlu0 %v1930, 32
        %v1942 = vpop.permute.xlu0 %1941
        %v1947 = vadd.f32 %v1907, %v1936
        %v1948 = vadd.f32 %v1908, %v1938
        %v1949 = vadd.f32 %v1909, %v1940
        %v1950 = vadd.f32 %v1910, %v1942
        %1951 = vrot.lane.b32.xlu0 %v376, 96
        %v1952 = vpop.permute.xlu0 %1951
        %1953 = vrot.lane.b32.xlu0 %v381, 96
        %v1954 = vpop.permute.xlu0 %1953
        %1955 = vrot.lane.b32.xlu0 %v386, 96
        %v1956 = vpop.permute.xlu0 %1955
        %1957 = vrot.lane.b32.xlu0 %v391, 96
        %v1958 = vpop.permute.xlu0 %1957
        %v1959 = vsel %vm430, %v1952, 0
        %v1961 = vsel %vm430, %v1954, 0
        %v1963 = vsel %vm430, %v1956, 0
        %v1965 = vsel %vm430, %v1958, 0
        %1967 = vmatprep.subr.mxu0 %v399
        %1968 = vmatpush1.msra.mxu0 %v398
        %1969 = vmatprep.subr.mxu0 %v407
        %1970 = vmatpush1.msra.mxu0 %v406
        %1971 = vmatprep.subr.mxu0 %v415
        %1972 = vmatpush1.msra.mxu0 %v414
        %1973 = vmatprep.subr.mxu0 %v423
        %1974 = vmatpush1.msra.mxu0 %v422
        %1975 = vmatprep.subr.mxu0 0.0
        %1976 = vmatpush1.msra.mxu0 0.0
        %1977 = vmatprep.subr.mxu0 0.0
        %1978 = vmatpush1.msra.mxu0 0.0
        %1979 = vmatprep.subr.mxu0 0.0
        %1980 = vmatpush1.msra.mxu0 0.0
        %1981 = vmatprep.subr.mxu0 0.0
        %1982 = vmatpush1.msra.mxu0 0.0
        %1983 = vmatprep.subr.mxu0 0.0
        %1984 = vmatpush1.msra.mxu0 0.0
        %1985 = vmatprep.subr.mxu0 0.0
        %1986 = vmatpush1.msra.mxu0 0.0
        %1987 = vmatprep.subr.mxu0 0.0
        %1988 = vmatpush1.msra.mxu0 0.0
        %1989 = vmatprep.subr.mxu0 0.0
        %1990 = vmatpush1.msra.mxu0 0.0
        %1991 = vmatprep.subr.mxu0 0.0
        %1992 = vmatpush1.msra.mxu0 0.0
        %1993 = vmatprep.subr.mxu0 0.0
        %1994 = vmatpush1.msra.mxu0 0.0
        %1995 = vmatprep.subr.mxu0 0.0
        %1996 = vmatpush1.msra.mxu0 0.0
        %1997 = vmatprep.subr.mxu0 0.0
        %1998 = vmatpush1.msra.mxu0 0.0
        %1999 = vmatprep.subr.mxu0 0.0
        %2000 = vmatpush1.msra.mxu0 0.0
        %2001 = vmatprep.subr.mxu0 0.0
        %2002 = vmatpush1.msra.mxu0 0.0
        %2003 = vmatprep.subr.mxu0 0.0
        %2004 = vmatpush1.msra.mxu0 0.0
        %2005 = vmatprep.subr.mxu0 0.0
        %2006 = vmatpush1.msra.mxu0 0.0
        %2007 = vmatprep.subr.mxu0 0.0
        %2008 = vmatpush1.msra.mxu0 0.0
        %2009 = vmatprep.subr.mxu0 0.0
        %2010 = vmatpush1.msra.mxu0 0.0
        %2011 = vmatprep.subr.mxu0 0.0
        %2012 = vmatpush1.msra.mxu0 0.0
        %2013 = vmatprep.subr.mxu0 0.0
        %2014 = vmatpush1.msra.mxu0 0.0
        %2015 = vmatprep.subr.mxu0 0.0
        %2016 = vmatpush1.msra.mxu0 0.0
        %2017 = vmatprep.subr.mxu0 0.0
        %2018 = vmatpush1.msra.mxu0 0.0
        %2019 = vmatprep.subr.mxu0 0.0
        %2020 = vmatpush1.msra.mxu0 0.0
        %2021 = vmatprep.subr.mxu0 0.0
        %2022 = vmatpush1.msra.mxu0 0.0
        %2023 = vmatprep.subr.mxu0 0.0
        %2024 = vmatpush1.msra.mxu0 0.0
        %2025 = vmatprep.subr.mxu0 0.0
        %2026 = vmatpush1.msra.mxu0 0.0
        %2027 = vmatprep.subr.mxu0 0.0
        %2028 = vmatpush1.msra.mxu0 0.0
        %2029 = vmatprep.subr.mxu0 0.0
        %2030 = vmatpush1.msra.mxu0 0.0
        %2031 = vmatprep.mubr.f32.mxu0 0.0
        %2032 = vmatmul.mubr.f32.gmra.mrb[0].mxu0 %v1959
        %v2033 = vpop.f32.mrb[0].mxu0
        %v2034 = vadd.f32 0.0, %v2033
        %v2035 = vpop.f32.mrb[0].mxu0
        %v2036 = vadd.f32 0.0, %v2035
        %2037 = vmatprep.mubr.f32.mxu0 0.0
        %2038 = vmatmul.mubr.f32.gmra.mrb[0].mxu0 %v1961
        %v2039 = vpop.f32.mrb[0].mxu0
        %v2040 = vadd.f32 0.0, %v2039
        %v2041 = vpop.f32.mrb[0].mxu0
        %v2042 = vadd.f32 0.0, %v2041
        %2043 = vmatprep.mubr.f32.mxu0 0.0
        %2044 = vmatmul.mubr.f32.gmra.mrb[0].mxu0 %v1963
        %v2045 = vpop.f32.mrb[0].mxu0
        %v2046 = vadd.f32 0.0, %v2045
        %v2047 = vpop.f32.mrb[0].mxu0
        %v2048 = vadd.f32 0.0, %v2047
        %2049 = vmatprep.mubr.f32.mxu0 0.0
        %2050 = vmatmul.mubr.f32.gmra.mrb[0].mxu0 %v1965
        %v2051 = vpop.f32.mrb[0].mxu0
        %v2052 = vadd.f32 0.0, %v2051
        %v2053 = vpop.f32.mrb[0].mxu0
        %v2054 = vadd.f32 0.0, %v2053
        %2055 = vdwg.mxu0
        %2056 = vmatprep.subr.mxu0 %v401
        %2057 = vmatpush1.msra.mxu0 %v400
        %2058 = vmatprep.subr.mxu0 %v409
        %2059 = vmatpush1.msra.mxu0 %v408
        %2060 = vmatprep.subr.mxu0 %v417
        %2061 = vmatpush1.msra.mxu0 %v416
        %2062 = vmatprep.subr.mxu0 %v425
        %2063 = vmatpush1.msra.mxu0 %v424
        %2064 = vmatprep.subr.mxu0 0.0
        %2065 = vmatpush1.msra.mxu0 0.0
        %2066 = vmatprep.subr.mxu0 0.0
        %2067 = vmatpush1.msra.mxu0 0.0
        %2068 = vmatprep.subr.mxu0 0.0
        %2069 = vmatpush1.msra.mxu0 0.0
        %2070 = vmatprep.subr.mxu0 0.0
        %2071 = vmatpush1.msra.mxu0 0.0
        %2072 = vmatprep.subr.mxu0 0.0
        %2073 = vmatpush1.msra.mxu0 0.0
        %2074 = vmatprep.subr.mxu0 0.0
        %2075 = vmatpush1.msra.mxu0 0.0
        %2076 = vmatprep.subr.mxu0 0.0
        %2077 = vmatpush1.msra.mxu0 0.0
        %2078 = vmatprep.subr.mxu0 0.0
        %2079 = vmatpush1.msra.mxu0 0.0
        %2080 = vmatprep.subr.mxu0 0.0
        %2081 = vmatpush1.msra.mxu0 0.0
        %2082 = vmatprep.subr.mxu0 0.0
        %2083 = vmatpush1.msra.mxu0 0.0
        %2084 = vmatprep.subr.mxu0 0.0
        %2085 = vmatpush1.msra.mxu0 0.0
        %2086 = vmatprep.subr.mxu0 0.0
        %2087 = vmatpush1.msra.mxu0 0.0
        %2088 = vmatprep.subr.mxu0 0.0
        %2089 = vmatpush1.msra.mxu0 0.0
        %2090 = vmatprep.subr.mxu0 0.0
        %2091 = vmatpush1.msra.mxu0 0.0
        %2092 = vmatprep.subr.mxu0 0.0
        %2093 = vmatpush1.msra.mxu0 0.0
        %2094 = vmatprep.subr.mxu0 0.0
        %2095 = vmatpush1.msra.mxu0 0.0
        %2096 = vmatprep.subr.mxu0 0.0
        %2097 = vmatpush1.msra.mxu0 0.0
        %2098 = vmatprep.subr.mxu0 0.0
        %2099 = vmatpush1.msra.mxu0 0.0
        %2100 = vmatprep.subr.mxu0 0.0
        %2101 = vmatpush1.msra.mxu0 0.0
        %2102 = vmatprep.subr.mxu0 0.0
        %2103 = vmatpush1.msra.mxu0 0.0
        %2104 = vmatprep.subr.mxu0 0.0
        %2105 = vmatpush1.msra.mxu0 0.0
        %2106 = vmatprep.subr.mxu0 0.0
        %2107 = vmatpush1.msra.mxu0 0.0
        %2108 = vmatprep.subr.mxu0 0.0
        %2109 = vmatpush1.msra.mxu0 0.0
        %2110 = vmatprep.subr.mxu0 0.0
        %2111 = vmatpush1.msra.mxu0 0.0
        %2112 = vmatprep.subr.mxu0 0.0
        %2113 = vmatpush1.msra.mxu0 0.0
        %2114 = vmatprep.subr.mxu0 0.0
        %2115 = vmatpush1.msra.mxu0 0.0
        %2116 = vmatprep.subr.mxu0 0.0
        %2117 = vmatpush1.msra.mxu0 0.0
        %2118 = vmatprep.subr.mxu0 0.0
        %2119 = vmatpush1.msra.mxu0 0.0
        %2120 = vmatprep.mubr.f32.mxu0 0.0
        %2121 = vmatmul.mubr.f32.gmra.mrb[0].mxu0 %v1959
        %v2122 = vpop.f32.mrb[0].mxu0
        %v2123 = vadd.f32 0.0, %v2122
        %v2124 = vpop.f32.mrb[0].mxu0
        %v2125 = vadd.f32 0.0, %v2124
        %2126 = vmatprep.mubr.f32.mxu0 0.0
        %2127 = vmatmul.mubr.f32.gmra.mrb[0].mxu0 %v1961
        %v2128 = vpop.f32.mrb[0].mxu0
        %v2129 = vadd.f32 0.0, %v2128
        %v2130 = vpop.f32.mrb[0].mxu0
        %v2131 = vadd.f32 0.0, %v2130
        %2132 = vmatprep.mubr.f32.mxu0 0.0
        %2133 = vmatmul.mubr.f32.gmra.mrb[0].mxu0 %v1963
        %v2134 = vpop.f32.mrb[0].mxu0
        %v2135 = vadd.f32 0.0, %v2134
        %v2136 = vpop.f32.mrb[0].mxu0
        %v2137 = vadd.f32 0.0, %v2136
        %2138 = vmatprep.mubr.f32.mxu0 0.0
        %2139 = vmatmul.mubr.f32.gmra.mrb[0].mxu0 %v1965
        %v2140 = vpop.f32.mrb[0].mxu0
        %v2141 = vadd.f32 0.0, %v2140
        %v2142 = vpop.f32.mrb[0].mxu0
        %v2143 = vadd.f32 0.0, %v2142
        %2144 = vdwg.mxu0
        %2145 = vmatprep.subr.mxu0 %v403
        %2146 = vmatpush1.msra.mxu0 %v402
        %2147 = vmatprep.subr.mxu0 %v411
        %2148 = vmatpush1.msra.mxu0 %v410
        %2149 = vmatprep.subr.mxu0 %v419
        %2150 = vmatpush1.msra.mxu0 %v418
        %2151 = vmatprep.subr.mxu0 %v427
        %2152 = vmatpush1.msra.mxu0 %v426
        %2153 = vmatprep.subr.mxu0 0.0
        %2154 = vmatpush1.msra.mxu0 0.0
        %2155 = vmatprep.subr.mxu0 0.0
        %2156 = vmatpush1.msra.mxu0 0.0
        %2157 = vmatprep.subr.mxu0 0.0
        %2158 = vmatpush1.msra.mxu0 0.0
        %2159 = vmatprep.subr.mxu0 0.0
        %2160 = vmatpush1.msra.mxu0 0.0
        %2161 = vmatprep.subr.mxu0 0.0
        %2162 = vmatpush1.msra.mxu0 0.0
        %2163 = vmatprep.subr.mxu0 0.0
        %2164 = vmatpush1.msra.mxu0 0.0
        %2165 = vmatprep.subr.mxu0 0.0
        %2166 = vmatpush1.msra.mxu0 0.0
        %2167 = vmatprep.subr.mxu0 0.0
        %2168 = vmatpush1.msra.mxu0 0.0
        %2169 = vmatprep.subr.mxu0 0.0
        %2170 = vmatpush1.msra.mxu0 0.0
        %2171 = vmatprep.subr.mxu0 0.0
        %2172 = vmatpush1.msra.mxu0 0.0
        %2173 = vmatprep.subr.mxu0 0.0
        %2174 = vmatpush1.msra.mxu0 0.0
        %2175 = vmatprep.subr.mxu0 0.0
        %2176 = vmatpush1.msra.mxu0 0.0
        %2177 = vmatprep.subr.mxu0 0.0
        %2178 = vmatpush1.msra.mxu0 0.0
        %2179 = vmatprep.subr.mxu0 0.0
        %2180 = vmatpush1.msra.mxu0 0.0
        %2181 = vmatprep.subr.mxu0 0.0
        %2182 = vmatpush1.msra.mxu0 0.0
        %2183 = vmatprep.subr.mxu0 0.0
        %2184 = vmatpush1.msra.mxu0 0.0
        %2185 = vmatprep.subr.mxu0 0.0
        %2186 = vmatpush1.msra.mxu0 0.0
        %2187 = vmatprep.subr.mxu0 0.0
        %2188 = vmatpush1.msra.mxu0 0.0
        %2189 = vmatprep.subr.mxu0 0.0
        %2190 = vmatpush1.msra.mxu0 0.0
        %2191 = vmatprep.subr.mxu0 0.0
        %2192 = vmatpush1.msra.mxu0 0.0
        %2193 = vmatprep.subr.mxu0 0.0
        %2194 = vmatpush1.msra.mxu0 0.0
        %2195 = vmatprep.subr.mxu0 0.0
        %2196 = vmatpush1.msra.mxu0 0.0
        %2197 = vmatprep.subr.mxu0 0.0
        %2198 = vmatpush1.msra.mxu0 0.0
        %2199 = vmatprep.subr.mxu0 0.0
        %2200 = vmatpush1.msra.mxu0 0.0
        %2201 = vmatprep.subr.mxu0 0.0
        %2202 = vmatpush1.msra.mxu0 0.0
        %2203 = vmatprep.subr.mxu0 0.0
        %2204 = vmatpush1.msra.mxu0 0.0
        %2205 = vmatprep.subr.mxu0 0.0
        %2206 = vmatpush1.msra.mxu0 0.0
        %2207 = vmatprep.subr.mxu0 0.0
        %2208 = vmatpush1.msra.mxu0 0.0
        %2209 = vmatprep.mubr.f32.mxu0 0.0
        %2210 = vmatmul.mubr.f32.gmra.mrb[0].mxu0 %v1959
        %v2211 = vpop.f32.mrb[0].mxu0
        %v2212 = vadd.f32 0.0, %v2211
        %v2213 = vpop.f32.mrb[0].mxu0
        %v2214 = vadd.f32 0.0, %v2213
        %2215 = vmatprep.mubr.f32.mxu0 0.0
        %2216 = vmatmul.mubr.f32.gmra.mrb[0].mxu0 %v1961
        %v2217 = vpop.f32.mrb[0].mxu0
        %v2218 = vadd.f32 0.0, %v2217
        %v2219 = vpop.f32.mrb[0].mxu0
        %v2220 = vadd.f32 0.0, %v2219
        %2221 = vmatprep.mubr.f32.mxu0 0.0
        %2222 = vmatmul.mubr.f32.gmra.mrb[0].mxu0 %v1963
        %v2223 = vpop.f32.mrb[0].mxu0
        %v2224 = vadd.f32 0.0, %v2223
        %v2225 = vpop.f32.mrb[0].mxu0
        %v2226 = vadd.f32 0.0, %v2225
        %2227 = vmatprep.mubr.f32.mxu0 0.0
        %2228 = vmatmul.mubr.f32.gmra.mrb[0].mxu0 %v1965
        %v2229 = vpop.f32.mrb[0].mxu0
        %v2230 = vadd.f32 0.0, %v2229
        %v2231 = vpop.f32.mrb[0].mxu0
        %v2232 = vadd.f32 0.0, %v2231
        %2233 = vdwg.mxu0
        %2234 = vmatprep.subr.mxu0 %v405
        %2235 = vmatpush1.msra.mxu0 %v404
        %2236 = vmatprep.subr.mxu0 %v413
        %2237 = vmatpush1.msra.mxu0 %v412
        %2238 = vmatprep.subr.mxu0 %v421
        %2239 = vmatpush1.msra.mxu0 %v420
        %2240 = vmatprep.subr.mxu0 %v429
        %2241 = vmatpush1.msra.mxu0 %v428
        %2242 = vmatprep.subr.mxu0 0.0
        %2243 = vmatpush1.msra.mxu0 0.0
        %2244 = vmatprep.subr.mxu0 0.0
        %2245 = vmatpush1.msra.mxu0 0.0
        %2246 = vmatprep.subr.mxu0 0.0
        %2247 = vmatpush1.msra.mxu0 0.0
        %2248 = vmatprep.subr.mxu0 0.0
        %2249 = vmatpush1.msra.mxu0 0.0
        %2250 = vmatprep.subr.mxu0 0.0
        %2251 = vmatpush1.msra.mxu0 0.0
        %2252 = vmatprep.subr.mxu0 0.0
        %2253 = vmatpush1.msra.mxu0 0.0
        %2254 = vmatprep.subr.mxu0 0.0
        %2255 = vmatpush1.msra.mxu0 0.0
        %2256 = vmatprep.subr.mxu0 0.0
        %2257 = vmatpush1.msra.mxu0 0.0
        %2258 = vmatprep.subr.mxu0 0.0
        %2259 = vmatpush1.msra.mxu0 0.0
        %2260 = vmatprep.subr.mxu0 0.0
        %2261 = vmatpush1.msra.mxu0 0.0
        %2262 = vmatprep.subr.mxu0 0.0
        %2263 = vmatpush1.msra.mxu0 0.0
        %2264 = vmatprep.subr.mxu0 0.0
        %2265 = vmatpush1.msra.mxu0 0.0
        %2266 = vmatprep.subr.mxu0 0.0
        %2267 = vmatpush1.msra.mxu0 0.0
        %2268 = vmatprep.subr.mxu0 0.0
        %2269 = vmatpush1.msra.mxu0 0.0
        %2270 = vmatprep.subr.mxu0 0.0
        %2271 = vmatpush1.msra.mxu0 0.0
        %2272 = vmatprep.subr.mxu0 0.0
        %2273 = vmatpush1.msra.mxu0 0.0
        %2274 = vmatprep.subr.mxu0 0.0
        %2275 = vmatpush1.msra.mxu0 0.0
        %2276 = vmatprep.subr.mxu0 0.0
        %2277 = vmatpush1.msra.mxu0 0.0
        %2278 = vmatprep.subr.mxu0 0.0
        %2279 = vmatpush1.msra.mxu0 0.0
        %2280 = vmatprep.subr.mxu0 0.0
        %2281 = vmatpush1.msra.mxu0 0.0
        %2282 = vmatprep.subr.mxu0 0.0
        %2283 = vmatpush1.msra.mxu0 0.0
        %2284 = vmatprep.subr.mxu0 0.0
        %2285 = vmatpush1.msra.mxu0 0.0
        %2286 = vmatprep.subr.mxu0 0.0
        %2287 = vmatpush1.msra.mxu0 0.0
        %2288 = vmatprep.subr.mxu0 0.0
        %2289 = vmatpush1.msra.mxu0 0.0
        %2290 = vmatprep.subr.mxu0 0.0
        %2291 = vmatpush1.msra.mxu0 0.0
        %2292 = vmatprep.subr.mxu0 0.0
        %2293 = vmatpush1.msra.mxu0 0.0
        %2294 = vmatprep.subr.mxu0 0.0
        %2295 = vmatpush1.msra.mxu0 0.0
        %2296 = vmatprep.subr.mxu0 0.0
        %2297 = vmatpush1.msra.mxu0 0.0
        %2298 = vmatprep.mubr.f32.mxu0 0.0
        %2299 = vmatmul.mubr.f32.gmra.mrb[0].mxu0 %v1959
        %v2300 = vpop.f32.mrb[0].mxu0
        %v2301 = vadd.f32 0.0, %v2300
        %v2302 = vpop.f32.mrb[0].mxu0
        %v2303 = vadd.f32 0.0, %v2302
        %2304 = vmatprep.mubr.f32.mxu0 0.0
        %2305 = vmatmul.mubr.f32.gmra.mrb[0].mxu0 %v1961
        %v2306 = vpop.f32.mrb[0].mxu0
        %v2307 = vadd.f32 0.0, %v2306
        %v2308 = vpop.f32.mrb[0].mxu0
        %v2309 = vadd.f32 0.0, %v2308
        %2310 = vmatprep.mubr.f32.mxu0 0.0
        %2311 = vmatmul.mubr.f32.gmra.mrb[0].mxu0 %v1963
        %v2312 = vpop.f32.mrb[0].mxu0
        %v2313 = vadd.f32 0.0, %v2312
        %v2314 = vpop.f32.mrb[0].mxu0
        %v2315 = vadd.f32 0.0, %v2314
        %2316 = vmatprep.mubr.f32.mxu0 0.0
        %2317 = vmatmul.mubr.f32.gmra.mrb[0].mxu0 %v1965
        %v2318 = vpop.f32.mrb[0].mxu0
        %v2319 = vadd.f32 0.0, %v2318
        %v2320 = vpop.f32.mrb[0].mxu0
        %v2321 = vadd.f32 0.0, %v2320
        %2322 = vdwg.mxu0
        %2323 = vset.pattern.permute.xlu0 32
        %2324 = vperm.xlu0 %2323, %v394
        %v2325 = vpop.permute.xlu0 %2324
        %2327 = vset.pattern.permute.xlu0 32
        %2328 = vperm.xlu0 %2327, %v395
        %v2329 = vpop.permute.xlu0 %2328
        %2331 = vset.pattern.permute.xlu0 32
        %2332 = vperm.xlu0 %2331, %v396
        %v2333 = vpop.permute.xlu0 %2332
        %2335 = vset.pattern.permute.xlu0 32
        %2336 = vperm.xlu0 %2335, %v397
        %v2337 = vpop.permute.xlu0 %2336
        %v2339 = vmul.f32 %v2034, %v2325
        %v2340 = vmul.f32 %v2040, %v2329
        %v2341 = vmul.f32 %v2046, %v2333
        %v2342 = vmul.f32 %v2052, %v2337
        %2343 = vset.pattern.permute.xlu0 33
        %2344 = vperm.xlu0 %2343, %v394
        %v2345 = vpop.permute.xlu0 %2344
        %2347 = vset.pattern.permute.xlu0 33
        %2348 = vperm.xlu0 %2347, %v395
        %v2349 = vpop.permute.xlu0 %2348
        %2351 = vset.pattern.permute.xlu0 33
        %2352 = vperm.xlu0 %2351, %v396
        %v2353 = vpop.permute.xlu0 %2352
        %2355 = vset.pattern.permute.xlu0 33
        %2356 = vperm.xlu0 %2355, %v397
        %v2357 = vpop.permute.xlu0 %2356
        %v2359 = vmul.f32 %v2034, %v2345
        %v2360 = vmul.f32 %v2040, %v2349
        %v2361 = vmul.f32 %v2046, %v2353
        %v2362 = vmul.f32 %v2052, %v2357
        %2367 = vrot.lane.b32.xlu0 %v2359, 96
        %v2368 = vpop.permute.xlu0 %2367
        %2369 = vrot.lane.b32.xlu0 %v2360, 96
        %v2370 = vpop.permute.xlu0 %2369
        %2371 = vrot.lane.b32.xlu0 %v2361, 96
        %v2372 = vpop.permute.xlu0 %2371
        %2373 = vrot.lane.b32.xlu0 %v2362, 96
        %v2374 = vpop.permute.xlu0 %2373
        %v2379 = vadd.f32 %v2339, %v2368
        %v2380 = vadd.f32 %v2340, %v2370
        %v2381 = vadd.f32 %v2341, %v2372
        %v2382 = vadd.f32 %v2342, %v2374
        %2383 = vset.pattern.permute.xlu0 34
        %2384 = vperm.xlu0 %2383, %v394
        %v2385 = vpop.permute.xlu0 %2384
        %2387 = vset.pattern.permute.xlu0 34
        %2388 = vperm.xlu0 %2387, %v395
        %v2389 = vpop.permute.xlu0 %2388
        %2391 = vset.pattern.permute.xlu0 34
        %2392 = vperm.xlu0 %2391, %v396
        %v2393 = vpop.permute.xlu0 %2392
        %2395 = vset.pattern.permute.xlu0 34
        %2396 = vperm.xlu0 %2395, %v397
        %v2397 = vpop.permute.xlu0 %2396
        %v2399 = vmul.f32 %v2034, %v2385
        %v2400 = vmul.f32 %v2040, %v2389
        %v2401 = vmul.f32 %v2046, %v2393
        %v2402 = vmul.f32 %v2052, %v2397
        %2407 = vrot.lane.b32.xlu0 %v2399, 64
        %v2408 = vpop.permute.xlu0 %2407
        %2409 = vrot.lane.b32.xlu0 %v2400, 64
        %v2410 = vpop.permute.xlu0 %2409
        %2411 = vrot.lane.b32.xlu0 %v2401, 64
        %v2412 = vpop.permute.xlu0 %2411
        %2413 = vrot.lane.b32.xlu0 %v2402, 64
        %v2414 = vpop.permute.xlu0 %2413
        %v2419 = vadd.f32 %v2379, %v2408
        %v2420 = vadd.f32 %v2380, %v2410
        %v2421 = vadd.f32 %v2381, %v2412
        %v2422 = vadd.f32 %v2382, %v2414
        %2423 = vset.pattern.permute.xlu0 35
        %2424 = vperm.xlu0 %2423, %v394
        %v2425 = vpop.permute.xlu0 %2424
        %2427 = vset.pattern.permute.xlu0 35
        %2428 = vperm.xlu0 %2427, %v395
        %v2429 = vpop.permute.xlu0 %2428
        %2431 = vset.pattern.permute.xlu0 35
        %2432 = vperm.xlu0 %2431, %v396
        %v2433 = vpop.permute.xlu0 %2432
        %2435 = vset.pattern.permute.xlu0 35
        %2436 = vperm.xlu0 %2435, %v397
        %v2437 = vpop.permute.xlu0 %2436
        %v2439 = vmul.f32 %v2034, %v2425
        %v2440 = vmul.f32 %v2040, %v2429
        %v2441 = vmul.f32 %v2046, %v2433
        %v2442 = vmul.f32 %v2052, %v2437
        %2447 = vrot.lane.b32.xlu0 %v2439, 32
        %v2448 = vpop.permute.xlu0 %2447
        %2449 = vrot.lane.b32.xlu0 %v2440, 32
        %v2450 = vpop.permute.xlu0 %2449
        %2451 = vrot.lane.b32.xlu0 %v2441, 32
        %v2452 = vpop.permute.xlu0 %2451
        %2453 = vrot.lane.b32.xlu0 %v2442, 32
        %v2454 = vpop.permute.xlu0 %2453
        %v2459 = vadd.f32 %v2419, %v2448
        %v2460 = vadd.f32 %v2420, %v2450
        %v2461 = vadd.f32 %v2421, %v2452
        %v2462 = vadd.f32 %v2422, %v2454
        %2463 = vset.pattern.permute.xlu0 36
        %2464 = vperm.xlu0 %2463, %v394
        %v2465 = vpop.permute.xlu0 %2464
        %2467 = vset.pattern.permute.xlu0 36
        %2468 = vperm.xlu0 %2467, %v395
        %v2469 = vpop.permute.xlu0 %2468
        %2471 = vset.pattern.permute.xlu0 36
        %2472 = vperm.xlu0 %2471, %v396
        %v2473 = vpop.permute.xlu0 %2472
        %2475 = vset.pattern.permute.xlu0 36
        %2476 = vperm.xlu0 %2475, %v397
        %v2477 = vpop.permute.xlu0 %2476
        %v2479 = vmul.f32 %v2036, %v2465
        %v2480 = vmul.f32 %v2042, %v2469
        %v2481 = vmul.f32 %v2048, %v2473
        %v2482 = vmul.f32 %v2054, %v2477
        %v2483 = vadd.f32 %v2459, %v2479
        %v2484 = vadd.f32 %v2460, %v2480
        %v2485 = vadd.f32 %v2461, %v2481
        %v2486 = vadd.f32 %v2462, %v2482
        %2487 = vset.pattern.permute.xlu0 37
        %2488 = vperm.xlu0 %2487, %v394
        %v2489 = vpop.permute.xlu0 %2488
        %2491 = vset.pattern.permute.xlu0 37
        %2492 = vperm.xlu0 %2491, %v395
        %v2493 = vpop.permute.xlu0 %2492
        %2495 = vset.pattern.permute.xlu0 37
        %2496 = vperm.xlu0 %2495, %v396
        %v2497 = vpop.permute.xlu0 %2496
        %2499 = vset.pattern.permute.xlu0 37
        %2500 = vperm.xlu0 %2499, %v397
        %v2501 = vpop.permute.xlu0 %2500
        %v2503 = vmul.f32 %v2036, %v2489
        %v2504 = vmul.f32 %v2042, %v2493
        %v2505 = vmul.f32 %v2048, %v2497
        %v2506 = vmul.f32 %v2054, %v2501
        %2511 = vrot.lane.b32.xlu0 %v2503, 96
        %v2512 = vpop.permute.xlu0 %2511
        %2513 = vrot.lane.b32.xlu0 %v2504, 96
        %v2514 = vpop.permute.xlu0 %2513
        %2515 = vrot.lane.b32.xlu0 %v2505, 96
        %v2516 = vpop.permute.xlu0 %2515
        %2517 = vrot.lane.b32.xlu0 %v2506, 96
        %v2518 = vpop.permute.xlu0 %2517
        %v2523 = vadd.f32 %v2483, %v2512
        %v2524 = vadd.f32 %v2484, %v2514
        %v2525 = vadd.f32 %v2485, %v2516
        %v2526 = vadd.f32 %v2486, %v2518
        %2527 = vset.pattern.permute.xlu0 38
        %2528 = vperm.xlu0 %2527, %v394
        %v2529 = vpop.permute.xlu0 %2528
        %2531 = vset.pattern.permute.xlu0 38
        %2532 = vperm.xlu0 %2531, %v395
        %v2533 = vpop.permute.xlu0 %2532
        %2535 = vset.pattern.permute.xlu0 38
        %2536 = vperm.xlu0 %2535, %v396
        %v2537 = vpop.permute.xlu0 %2536
        %2539 = vset.pattern.permute.xlu0 38
        %2540 = vperm.xlu0 %2539, %v397
        %v2541 = vpop.permute.xlu0 %2540
        %v2543 = vmul.f32 %v2036, %v2529
        %v2544 = vmul.f32 %v2042, %v2533
        %v2545 = vmul.f32 %v2048, %v2537
        %v2546 = vmul.f32 %v2054, %v2541
        %2551 = vrot.lane.b32.xlu0 %v2543, 64
        %v2552 = vpop.permute.xlu0 %2551
        %2553 = vrot.lane.b32.xlu0 %v2544, 64
        %v2554 = vpop.permute.xlu0 %2553
        %2555 = vrot.lane.b32.xlu0 %v2545, 64
        %v2556 = vpop.permute.xlu0 %2555
        %2557 = vrot.lane.b32.xlu0 %v2546, 64
        %v2558 = vpop.permute.xlu0 %2557
        %v2563 = vadd.f32 %v2523, %v2552
        %v2564 = vadd.f32 %v2524, %v2554
        %v2565 = vadd.f32 %v2525, %v2556
        %v2566 = vadd.f32 %v2526, %v2558
        %2567 = vset.pattern.permute.xlu0 39
        %2568 = vperm.xlu0 %2567, %v394
        %v2569 = vpop.permute.xlu0 %2568
        %2571 = vset.pattern.permute.xlu0 39
        %2572 = vperm.xlu0 %2571, %v395
        %v2573 = vpop.permute.xlu0 %2572
        %2575 = vset.pattern.permute.xlu0 39
        %2576 = vperm.xlu0 %2575, %v396
        %v2577 = vpop.permute.xlu0 %2576
        %2579 = vset.pattern.permute.xlu0 39
        %2580 = vperm.xlu0 %2579, %v397
        %v2581 = vpop.permute.xlu0 %2580
        %v2583 = vmul.f32 %v2036, %v2569
        %v2584 = vmul.f32 %v2042, %v2573
        %v2585 = vmul.f32 %v2048, %v2577
        %v2586 = vmul.f32 %v2054, %v2581
        %2591 = vrot.lane.b32.xlu0 %v2583, 32
        %v2592 = vpop.permute.xlu0 %2591
        %2593 = vrot.lane.b32.xlu0 %v2584, 32
        %v2594 = vpop.permute.xlu0 %2593
        %2595 = vrot.lane.b32.xlu0 %v2585, 32
        %v2596 = vpop.permute.xlu0 %2595
        %2597 = vrot.lane.b32.xlu0 %v2586, 32
        %v2598 = vpop.permute.xlu0 %2597
        %v2603 = vadd.f32 %v2563, %v2592
        %v2604 = vadd.f32 %v2564, %v2594
        %v2605 = vadd.f32 %v2565, %v2596
        %v2606 = vadd.f32 %v2566, %v2598
        %2607 = vset.pattern.permute.xlu0 40
        %2608 = vperm.xlu0 %2607, %v394
        %v2609 = vpop.permute.xlu0 %2608
        %2611 = vset.pattern.permute.xlu0 40
        %2612 = vperm.xlu0 %2611, %v395
        %v2613 = vpop.permute.xlu0 %2612
        %2615 = vset.pattern.permute.xlu0 40
        %2616 = vperm.xlu0 %2615, %v396
        %v2617 = vpop.permute.xlu0 %2616
        %2619 = vset.pattern.permute.xlu0 40
        %2620 = vperm.xlu0 %2619, %v397
        %v2621 = vpop.permute.xlu0 %2620
        %v2623 = vmul.f32 %v2123, %v2609
        %v2624 = vmul.f32 %v2129, %v2613
        %v2625 = vmul.f32 %v2135, %v2617
        %v2626 = vmul.f32 %v2141, %v2621
        %v2627 = vadd.f32 %v2603, %v2623
        %v2628 = vadd.f32 %v2604, %v2624
        %v2629 = vadd.f32 %v2605, %v2625
        %v2630 = vadd.f32 %v2606, %v2626
        %2631 = vset.pattern.permute.xlu0 41
        %2632 = vperm.xlu0 %2631, %v394
        %v2633 = vpop.permute.xlu0 %2632
        %2635 = vset.pattern.permute.xlu0 41
        %2636 = vperm.xlu0 %2635, %v395
        %v2637 = vpop.permute.xlu0 %2636
        %2639 = vset.pattern.permute.xlu0 41
        %2640 = vperm.xlu0 %2639, %v396
        %v2641 = vpop.permute.xlu0 %2640
        %2643 = vset.pattern.permute.xlu0 41
        %2644 = vperm.xlu0 %2643, %v397
        %v2645 = vpop.permute.xlu0 %2644
        %v2647 = vmul.f32 %v2123, %v2633
        %v2648 = vmul.f32 %v2129, %v2637
        %v2649 = vmul.f32 %v2135, %v2641
        %v2650 = vmul.f32 %v2141, %v2645
        %2655 = vrot.lane.b32.xlu0 %v2647, 96
        %v2656 = vpop.permute.xlu0 %2655
        %2657 = vrot.lane.b32.xlu0 %v2648, 96
        %v2658 = vpop.permute.xlu0 %2657
        %2659 = vrot.lane.b32.xlu0 %v2649, 96
        %v2660 = vpop.permute.xlu0 %2659
        %2661 = vrot.lane.b32.xlu0 %v2650, 96
        %v2662 = vpop.permute.xlu0 %2661
        %v2667 = vadd.f32 %v2627, %v2656
        %v2668 = vadd.f32 %v2628, %v2658
        %v2669 = vadd.f32 %v2629, %v2660
        %v2670 = vadd.f32 %v2630, %v2662
        %2671 = vset.pattern.permute.xlu0 42
        %2672 = vperm.xlu0 %2671, %v394
        %v2673 = vpop.permute.xlu0 %2672
        %2675 = vset.pattern.permute.xlu0 42
        %2676 = vperm.xlu0 %2675, %v395
        %v2677 = vpop.permute.xlu0 %2676
        %2679 = vset.pattern.permute.xlu0 42
        %2680 = vperm.xlu0 %2679, %v396
        %v2681 = vpop.permute.xlu0 %2680
        %2683 = vset.pattern.permute.xlu0 42
        %2684 = vperm.xlu0 %2683, %v397
        %v2685 = vpop.permute.xlu0 %2684
        %v2687 = vmul.f32 %v2123, %v2673
        %v2688 = vmul.f32 %v2129, %v2677
        %v2689 = vmul.f32 %v2135, %v2681
        %v2690 = vmul.f32 %v2141, %v2685
        %2695 = vrot.lane.b32.xlu0 %v2687, 64
        %v2696 = vpop.permute.xlu0 %2695
        %2697 = vrot.lane.b32.xlu0 %v2688, 64
        %v2698 = vpop.permute.xlu0 %2697
        %2699 = vrot.lane.b32.xlu0 %v2689, 64
        %v2700 = vpop.permute.xlu0 %2699
        %2701 = vrot.lane.b32.xlu0 %v2690, 64
        %v2702 = vpop.permute.xlu0 %2701
        %v2707 = vadd.f32 %v2667, %v2696
        %v2708 = vadd.f32 %v2668, %v2698
        %v2709 = vadd.f32 %v2669, %v2700
        %v2710 = vadd.f32 %v2670, %v2702
        %2711 = vset.pattern.permute.xlu0 43
        %2712 = vperm.xlu0 %2711, %v394
        %v2713 = vpop.permute.xlu0 %2712
        %2715 = vset.pattern.permute.xlu0 43
        %2716 = vperm.xlu0 %2715, %v395
        %v2717 = vpop.permute.xlu0 %2716
        %2719 = vset.pattern.permute.xlu0 43
        %2720 = vperm.xlu0 %2719, %v396
        %v2721 = vpop.permute.xlu0 %2720
        %2723 = vset.pattern.permute.xlu0 43
        %2724 = vperm.xlu0 %2723, %v397
        %v2725 = vpop.permute.xlu0 %2724
        %v2727 = vmul.f32 %v2123, %v2713
        %v2728 = vmul.f32 %v2129, %v2717
        %v2729 = vmul.f32 %v2135, %v2721
        %v2730 = vmul.f32 %v2141, %v2725
        %2735 = vrot.lane.b32.xlu0 %v2727, 32
        %v2736 = vpop.permute.xlu0 %2735
        %2737 = vrot.lane.b32.xlu0 %v2728, 32
        %v2738 = vpop.permute.xlu0 %2737
        %2739 = vrot.lane.b32.xlu0 %v2729, 32
        %v2740 = vpop.permute.xlu0 %2739
        %2741 = vrot.lane.b32.xlu0 %v2730, 32
        %v2742 = vpop.permute.xlu0 %2741
        %v2747 = vadd.f32 %v2707, %v2736
        %v2748 = vadd.f32 %v2708, %v2738
        %v2749 = vadd.f32 %v2709, %v2740
        %v2750 = vadd.f32 %v2710, %v2742
        %2751 = vset.pattern.permute.xlu0 44
        %2752 = vperm.xlu0 %2751, %v394
        %v2753 = vpop.permute.xlu0 %2752
        %2755 = vset.pattern.permute.xlu0 44
        %2756 = vperm.xlu0 %2755, %v395
        %v2757 = vpop.permute.xlu0 %2756
        %2759 = vset.pattern.permute.xlu0 44
        %2760 = vperm.xlu0 %2759, %v396
        %v2761 = vpop.permute.xlu0 %2760
        %2763 = vset.pattern.permute.xlu0 44
        %2764 = vperm.xlu0 %2763, %v397
        %v2765 = vpop.permute.xlu0 %2764
        %v2767 = vmul.f32 %v2125, %v2753
        %v2768 = vmul.f32 %v2131, %v2757
        %v2769 = vmul.f32 %v2137, %v2761
        %v2770 = vmul.f32 %v2143, %v2765
        %v2771 = vadd.f32 %v2747, %v2767
        %v2772 = vadd.f32 %v2748, %v2768
        %v2773 = vadd.f32 %v2749, %v2769
        %v2774 = vadd.f32 %v2750, %v2770
        %2775 = vset.pattern.permute.xlu0 45
        %2776 = vperm.xlu0 %2775, %v394
        %v2777 = vpop.permute.xlu0 %2776
        %2779 = vset.pattern.permute.xlu0 45
        %2780 = vperm.xlu0 %2779, %v395
        %v2781 = vpop.permute.xlu0 %2780
        %2783 = vset.pattern.permute.xlu0 45
        %2784 = vperm.xlu0 %2783, %v396
        %v2785 = vpop.permute.xlu0 %2784
        %2787 = vset.pattern.permute.xlu0 45
        %2788 = vperm.xlu0 %2787, %v397
        %v2789 = vpop.permute.xlu0 %2788
        %v2791 = vmul.f32 %v2125, %v2777
        %v2792 = vmul.f32 %v2131, %v2781
        %v2793 = vmul.f32 %v2137, %v2785
        %v2794 = vmul.f32 %v2143, %v2789
        %2799 = vrot.lane.b32.xlu0 %v2791, 96
        %v2800 = vpop.permute.xlu0 %2799
        %2801 = vrot.lane.b32.xlu0 %v2792, 96
        %v2802 = vpop.permute.xlu0 %2801
        %2803 = vrot.lane.b32.xlu0 %v2793, 96
        %v2804 = vpop.permute.xlu0 %2803
        %2805 = vrot.lane.b32.xlu0 %v2794, 96
        %v2806 = vpop.permute.xlu0 %2805
        %v2811 = vadd.f32 %v2771, %v2800
        %v2812 = vadd.f32 %v2772, %v2802
        %v2813 = vadd.f32 %v2773, %v2804
        %v2814 = vadd.f32 %v2774, %v2806
        %2815 = vset.pattern.permute.xlu0 46
        %2816 = vperm.xlu0 %2815, %v394
        %v2817 = vpop.permute.xlu0 %2816
        %2819 = vset.pattern.permute.xlu0 46
        %2820 = vperm.xlu0 %2819, %v395
        %v2821 = vpop.permute.xlu0 %2820
        %2823 = vset.pattern.permute.xlu0 46
        %2824 = vperm.xlu0 %2823, %v396
        %v2825 = vpop.permute.xlu0 %2824
        %2827 = vset.pattern.permute.xlu0 46
        %2828 = vperm.xlu0 %2827, %v397
        %v2829 = vpop.permute.xlu0 %2828
        %v2831 = vmul.f32 %v2125, %v2817
        %v2832 = vmul.f32 %v2131, %v2821
        %v2833 = vmul.f32 %v2137, %v2825
        %v2834 = vmul.f32 %v2143, %v2829
        %2839 = vrot.lane.b32.xlu0 %v2831, 64
        %v2840 = vpop.permute.xlu0 %2839
        %2841 = vrot.lane.b32.xlu0 %v2832, 64
        %v2842 = vpop.permute.xlu0 %2841
        %2843 = vrot.lane.b32.xlu0 %v2833, 64
        %v2844 = vpop.permute.xlu0 %2843
        %2845 = vrot.lane.b32.xlu0 %v2834, 64
        %v2846 = vpop.permute.xlu0 %2845
        %v2851 = vadd.f32 %v2811, %v2840
        %v2852 = vadd.f32 %v2812, %v2842
        %v2853 = vadd.f32 %v2813, %v2844
        %v2854 = vadd.f32 %v2814, %v2846
        %2855 = vset.pattern.permute.xlu0 47
        %2856 = vperm.xlu0 %2855, %v394
        %v2857 = vpop.permute.xlu0 %2856
        %2859 = vset.pattern.permute.xlu0 47
        %2860 = vperm.xlu0 %2859, %v395
        %v2861 = vpop.permute.xlu0 %2860
        %2863 = vset.pattern.permute.xlu0 47
        %2864 = vperm.xlu0 %2863, %v396
        %v2865 = vpop.permute.xlu0 %2864
        %2867 = vset.pattern.permute.xlu0 47
        %2868 = vperm.xlu0 %2867, %v397
        %v2869 = vpop.permute.xlu0 %2868
        %v2871 = vmul.f32 %v2125, %v2857
        %v2872 = vmul.f32 %v2131, %v2861
        %v2873 = vmul.f32 %v2137, %v2865
        %v2874 = vmul.f32 %v2143, %v2869
        %2879 = vrot.lane.b32.xlu0 %v2871, 32
        %v2880 = vpop.permute.xlu0 %2879
        %2881 = vrot.lane.b32.xlu0 %v2872, 32
        %v2882 = vpop.permute.xlu0 %2881
        %2883 = vrot.lane.b32.xlu0 %v2873, 32
        %v2884 = vpop.permute.xlu0 %2883
        %2885 = vrot.lane.b32.xlu0 %v2874, 32
        %v2886 = vpop.permute.xlu0 %2885
        %v2891 = vadd.f32 %v2851, %v2880
        %v2892 = vadd.f32 %v2852, %v2882
        %v2893 = vadd.f32 %v2853, %v2884
        %v2894 = vadd.f32 %v2854, %v2886
        %2895 = vset.pattern.permute.xlu0 48
        %2896 = vperm.xlu0 %2895, %v394
        %v2897 = vpop.permute.xlu0 %2896
        %2899 = vset.pattern.permute.xlu0 48
        %2900 = vperm.xlu0 %2899, %v395
        %v2901 = vpop.permute.xlu0 %2900
        %2903 = vset.pattern.permute.xlu0 48
        %2904 = vperm.xlu0 %2903, %v396
        %v2905 = vpop.permute.xlu0 %2904
        %2907 = vset.pattern.permute.xlu0 48
        %2908 = vperm.xlu0 %2907, %v397
        %v2909 = vpop.permute.xlu0 %2908
        %v2911 = vmul.f32 %v2212, %v2897
        %v2912 = vmul.f32 %v2218, %v2901
        %v2913 = vmul.f32 %v2224, %v2905
        %v2914 = vmul.f32 %v2230, %v2909
        %v2915 = vadd.f32 %v2891, %v2911
        %v2916 = vadd.f32 %v2892, %v2912
        %v2917 = vadd.f32 %v2893, %v2913
        %v2918 = vadd.f32 %v2894, %v2914
        %2919 = vset.pattern.permute.xlu0 49
        %2920 = vperm.xlu0 %2919, %v394
        %v2921 = vpop.permute.xlu0 %2920
        %2923 = vset.pattern.permute.xlu0 49
        %2924 = vperm.xlu0 %2923, %v395
        %v2925 = vpop.permute.xlu0 %2924
        %2927 = vset.pattern.permute.xlu0 49
        %2928 = vperm.xlu0 %2927, %v396
        %v2929 = vpop.permute.xlu0 %2928
        %2931 = vset.pattern.permute.xlu0 49
        %2932 = vperm.xlu0 %2931, %v397
        %v2933 = vpop.permute.xlu0 %2932
        %v2935 = vmul.f32 %v2212, %v2921
        %v2936 = vmul.f32 %v2218, %v2925
        %v2937 = vmul.f32 %v2224, %v2929
        %v2938 = vmul.f32 %v2230, %v2933
        %2943 = vrot.lane.b32.xlu0 %v2935, 96
        %v2944 = vpop.permute.xlu0 %2943
        %2945 = vrot.lane.b32.xlu0 %v2936, 96
        %v2946 = vpop.permute.xlu0 %2945
        %2947 = vrot.lane.b32.xlu0 %v2937, 96
        %v2948 = vpop.permute.xlu0 %2947
        %2949 = vrot.lane.b32.xlu0 %v2938, 96
        %v2950 = vpop.permute.xlu0 %2949
        %v2955 = vadd.f32 %v2915, %v2944
        %v2956 = vadd.f32 %v2916, %v2946
        %v2957 = vadd.f32 %v2917, %v2948
        %v2958 = vadd.f32 %v2918, %v2950
        %2959 = vset.pattern.permute.xlu0 50
        %2960 = vperm.xlu0 %2959, %v394
        %v2961 = vpop.permute.xlu0 %2960
        %2963 = vset.pattern.permute.xlu0 50
        %2964 = vperm.xlu0 %2963, %v395
        %v2965 = vpop.permute.xlu0 %2964
        %2967 = vset.pattern.permute.xlu0 50
        %2968 = vperm.xlu0 %2967, %v396
        %v2969 = vpop.permute.xlu0 %2968
        %2971 = vset.pattern.permute.xlu0 50
        %2972 = vperm.xlu0 %2971, %v397
        %v2973 = vpop.permute.xlu0 %2972
        %v2975 = vmul.f32 %v2212, %v2961
        %v2976 = vmul.f32 %v2218, %v2965
        %v2977 = vmul.f32 %v2224, %v2969
        %v2978 = vmul.f32 %v2230, %v2973
        %2983 = vrot.lane.b32.xlu0 %v2975, 64
        %v2984 = vpop.permute.xlu0 %2983
        %2985 = vrot.lane.b32.xlu0 %v2976, 64
        %v2986 = vpop.permute.xlu0 %2985
        %2987 = vrot.lane.b32.xlu0 %v2977, 64
        %v2988 = vpop.permute.xlu0 %2987
        %2989 = vrot.lane.b32.xlu0 %v2978, 64
        %v2990 = vpop.permute.xlu0 %2989
        %v2995 = vadd.f32 %v2955, %v2984
        %v2996 = vadd.f32 %v2956, %v2986
        %v2997 = vadd.f32 %v2957, %v2988
        %v2998 = vadd.f32 %v2958, %v2990
        %2999 = vset.pattern.permute.xlu0 51
        %3000 = vperm.xlu0 %2999, %v394
        %v3001 = vpop.permute.xlu0 %3000
        %3003 = vset.pattern.permute.xlu0 51
        %3004 = vperm.xlu0 %3003, %v395
        %v3005 = vpop.permute.xlu0 %3004
        %3007 = vset.pattern.permute.xlu0 51
        %3008 = vperm.xlu0 %3007, %v396
        %v3009 = vpop.permute.xlu0 %3008
        %3011 = vset.pattern.permute.xlu0 51
        %3012 = vperm.xlu0 %3011, %v397
        %v3013 = vpop.permute.xlu0 %3012
        %v3015 = vmul.f32 %v2212, %v3001
        %v3016 = vmul.f32 %v2218, %v3005
        %v3017 = vmul.f32 %v2224, %v3009
        %v3018 = vmul.f32 %v2230, %v3013
        %3023 = vrot.lane.b32.xlu0 %v3015, 32
        %v3024 = vpop.permute.xlu0 %3023
        %3025 = vrot.lane.b32.xlu0 %v3016, 32
        %v3026 = vpop.permute.xlu0 %3025
        %3027 = vrot.lane.b32.xlu0 %v3017, 32
        %v3028 = vpop.permute.xlu0 %3027
        %3029 = vrot.lane.b32.xlu0 %v3018, 32
        %v3030 = vpop.permute.xlu0 %3029
        %v3035 = vadd.f32 %v2995, %v3024
        %v3036 = vadd.f32 %v2996, %v3026
        %v3037 = vadd.f32 %v2997, %v3028
        %v3038 = vadd.f32 %v2998, %v3030
        %3039 = vset.pattern.permute.xlu0 52
        %3040 = vperm.xlu0 %3039, %v394
        %v3041 = vpop.permute.xlu0 %3040
        %3043 = vset.pattern.permute.xlu0 52
        %3044 = vperm.xlu0 %3043, %v395
        %v3045 = vpop.permute.xlu0 %3044
        %3047 = vset.pattern.permute.xlu0 52
        %3048 = vperm.xlu0 %3047, %v396
        %v3049 = vpop.permute.xlu0 %3048
        %3051 = vset.pattern.permute.xlu0 52
        %3052 = vperm.xlu0 %3051, %v397
        %v3053 = vpop.permute.xlu0 %3052
        %v3055 = vmul.f32 %v2214, %v3041
        %v3056 = vmul.f32 %v2220, %v3045
        %v3057 = vmul.f32 %v2226, %v3049
        %v3058 = vmul.f32 %v2232, %v3053
        %v3059 = vadd.f32 %v3035, %v3055
        %v3060 = vadd.f32 %v3036, %v3056
        %v3061 = vadd.f32 %v3037, %v3057
        %v3062 = vadd.f32 %v3038, %v3058
        %3063 = vset.pattern.permute.xlu0 53
        %3064 = vperm.xlu0 %3063, %v394
        %v3065 = vpop.permute.xlu0 %3064
        %3067 = vset.pattern.permute.xlu0 53
        %3068 = vperm.xlu0 %3067, %v395
        %v3069 = vpop.permute.xlu0 %3068
        %3071 = vset.pattern.permute.xlu0 53
        %3072 = vperm.xlu0 %3071, %v396
        %v3073 = vpop.permute.xlu0 %3072
        %3075 = vset.pattern.permute.xlu0 53
        %3076 = vperm.xlu0 %3075, %v397
        %v3077 = vpop.permute.xlu0 %3076
        %v3079 = vmul.f32 %v2214, %v3065
        %v3080 = vmul.f32 %v2220, %v3069
        %v3081 = vmul.f32 %v2226, %v3073
        %v3082 = vmul.f32 %v2232, %v3077
        %3087 = vrot.lane.b32.xlu0 %v3079, 96
        %v3088 = vpop.permute.xlu0 %3087
        %3089 = vrot.lane.b32.xlu0 %v3080, 96
        %v3090 = vpop.permute.xlu0 %3089
        %3091 = vrot.lane.b32.xlu0 %v3081, 96
        %v3092 = vpop.permute.xlu0 %3091
        %3093 = vrot.lane.b32.xlu0 %v3082, 96
        %v3094 = vpop.permute.xlu0 %3093
        %v3099 = vadd.f32 %v3059, %v3088
        %v3100 = vadd.f32 %v3060, %v3090
        %v3101 = vadd.f32 %v3061, %v3092
        %v3102 = vadd.f32 %v3062, %v3094
        %3103 = vset.pattern.permute.xlu0 54
        %3104 = vperm.xlu0 %3103, %v394
        %v3105 = vpop.permute.xlu0 %3104
        %3107 = vset.pattern.permute.xlu0 54
        %3108 = vperm.xlu0 %3107, %v395
        %v3109 = vpop.permute.xlu0 %3108
        %3111 = vset.pattern.permute.xlu0 54
        %3112 = vperm.xlu0 %3111, %v396
        %v3113 = vpop.permute.xlu0 %3112
        %3115 = vset.pattern.permute.xlu0 54
        %3116 = vperm.xlu0 %3115, %v397
        %v3117 = vpop.permute.xlu0 %3116
        %v3119 = vmul.f32 %v2214, %v3105
        %v3120 = vmul.f32 %v2220, %v3109
        %v3121 = vmul.f32 %v2226, %v3113
        %v3122 = vmul.f32 %v2232, %v3117
        %3127 = vrot.lane.b32.xlu0 %v3119, 64
        %v3128 = vpop.permute.xlu0 %3127
        %3129 = vrot.lane.b32.xlu0 %v3120, 64
        %v3130 = vpop.permute.xlu0 %3129
        %3131 = vrot.lane.b32.xlu0 %v3121, 64
        %v3132 = vpop.permute.xlu0 %3131
        %3133 = vrot.lane.b32.xlu0 %v3122, 64
        %v3134 = vpop.permute.xlu0 %3133
        %v3139 = vadd.f32 %v3099, %v3128
        %v3140 = vadd.f32 %v3100, %v3130
        %v3141 = vadd.f32 %v3101, %v3132
        %v3142 = vadd.f32 %v3102, %v3134
        %3143 = vset.pattern.permute.xlu0 55
        %3144 = vperm.xlu0 %3143, %v394
        %v3145 = vpop.permute.xlu0 %3144
        %3147 = vset.pattern.permute.xlu0 55
        %3148 = vperm.xlu0 %3147, %v395
        %v3149 = vpop.permute.xlu0 %3148
        %3151 = vset.pattern.permute.xlu0 55
        %3152 = vperm.xlu0 %3151, %v396
        %v3153 = vpop.permute.xlu0 %3152
        %3155 = vset.pattern.permute.xlu0 55
        %3156 = vperm.xlu0 %3155, %v397
        %v3157 = vpop.permute.xlu0 %3156
        %v3159 = vmul.f32 %v2214, %v3145
        %v3160 = vmul.f32 %v2220, %v3149
        %v3161 = vmul.f32 %v2226, %v3153
        %v3162 = vmul.f32 %v2232, %v3157
        %3167 = vrot.lane.b32.xlu0 %v3159, 32
        %v3168 = vpop.permute.xlu0 %3167
        %3169 = vrot.lane.b32.xlu0 %v3160, 32
        %v3170 = vpop.permute.xlu0 %3169
        %3171 = vrot.lane.b32.xlu0 %v3161, 32
        %v3172 = vpop.permute.xlu0 %3171
        %3173 = vrot.lane.b32.xlu0 %v3162, 32
        %v3174 = vpop.permute.xlu0 %3173
        %v3179 = vadd.f32 %v3139, %v3168
        %v3180 = vadd.f32 %v3140, %v3170
        %v3181 = vadd.f32 %v3141, %v3172
        %v3182 = vadd.f32 %v3142, %v3174
        %3183 = vset.pattern.permute.xlu0 56
        %3184 = vperm.xlu0 %3183, %v394
        %v3185 = vpop.permute.xlu0 %3184
        %3187 = vset.pattern.permute.xlu0 56
        %3188 = vperm.xlu0 %3187, %v395
        %v3189 = vpop.permute.xlu0 %3188
        %3191 = vset.pattern.permute.xlu0 56
        %3192 = vperm.xlu0 %3191, %v396
        %v3193 = vpop.permute.xlu0 %3192
        %3195 = vset.pattern.permute.xlu0 56
        %3196 = vperm.xlu0 %3195, %v397
        %v3197 = vpop.permute.xlu0 %3196
        %v3199 = vmul.f32 %v2301, %v3185
        %v3200 = vmul.f32 %v2307, %v3189
        %v3201 = vmul.f32 %v2313, %v3193
        %v3202 = vmul.f32 %v2319, %v3197
        %v3203 = vadd.f32 %v3179, %v3199
        %v3204 = vadd.f32 %v3180, %v3200
        %v3205 = vadd.f32 %v3181, %v3201
        %v3206 = vadd.f32 %v3182, %v3202
        %3207 = vset.pattern.permute.xlu0 57
        %3208 = vperm.xlu0 %3207, %v394
        %v3209 = vpop.permute.xlu0 %3208
        %3211 = vset.pattern.permute.xlu0 57
        %3212 = vperm.xlu0 %3211, %v395
        %v3213 = vpop.permute.xlu0 %3212
        %3215 = vset.pattern.permute.xlu0 57
        %3216 = vperm.xlu0 %3215, %v396
        %v3217 = vpop.permute.xlu0 %3216
        %3219 = vset.pattern.permute.xlu0 57
        %3220 = vperm.xlu0 %3219, %v397
        %v3221 = vpop.permute.xlu0 %3220
        %v3223 = vmul.f32 %v2301, %v3209
        %v3224 = vmul.f32 %v2307, %v3213
        %v3225 = vmul.f32 %v2313, %v3217
        %v3226 = vmul.f32 %v2319, %v3221
        %3231 = vrot.lane.b32.xlu0 %v3223, 96
        %v3232 = vpop.permute.xlu0 %3231
        %3233 = vrot.lane.b32.xlu0 %v3224, 96
        %v3234 = vpop.permute.xlu0 %3233
        %3235 = vrot.lane.b32.xlu0 %v3225, 96
        %v3236 = vpop.permute.xlu0 %3235
        %3237 = vrot.lane.b32.xlu0 %v3226, 96
        %v3238 = vpop.permute.xlu0 %3237
        %v3243 = vadd.f32 %v3203, %v3232
        %v3244 = vadd.f32 %v3204, %v3234
        %v3245 = vadd.f32 %v3205, %v3236
        %v3246 = vadd.f32 %v3206, %v3238
        %3247 = vset.pattern.permute.xlu0 58
        %3248 = vperm.xlu0 %3247, %v394
        %v3249 = vpop.permute.xlu0 %3248
        %3251 = vset.pattern.permute.xlu0 58
        %3252 = vperm.xlu0 %3251, %v395
        %v3253 = vpop.permute.xlu0 %3252
        %3255 = vset.pattern.permute.xlu0 58
        %3256 = vperm.xlu0 %3255, %v396
        %v3257 = vpop.permute.xlu0 %3256
        %3259 = vset.pattern.permute.xlu0 58
        %3260 = vperm.xlu0 %3259, %v397
        %v3261 = vpop.permute.xlu0 %3260
        %v3263 = vmul.f32 %v2301, %v3249
        %v3264 = vmul.f32 %v2307, %v3253
        %v3265 = vmul.f32 %v2313, %v3257
        %v3266 = vmul.f32 %v2319, %v3261
        %3271 = vrot.lane.b32.xlu0 %v3263, 64
        %v3272 = vpop.permute.xlu0 %3271
        %3273 = vrot.lane.b32.xlu0 %v3264, 64
        %v3274 = vpop.permute.xlu0 %3273
        %3275 = vrot.lane.b32.xlu0 %v3265, 64
        %v3276 = vpop.permute.xlu0 %3275
        %3277 = vrot.lane.b32.xlu0 %v3266, 64
        %v3278 = vpop.permute.xlu0 %3277
        %v3283 = vadd.f32 %v3243, %v3272
        %v3284 = vadd.f32 %v3244, %v3274
        %v3285 = vadd.f32 %v3245, %v3276
        %v3286 = vadd.f32 %v3246, %v3278
        %3287 = vset.pattern.permute.xlu0 59
        %3288 = vperm.xlu0 %3287, %v394
        %v3289 = vpop.permute.xlu0 %3288
        %3291 = vset.pattern.permute.xlu0 59
        %3292 = vperm.xlu0 %3291, %v395
        %v3293 = vpop.permute.xlu0 %3292
        %3295 = vset.pattern.permute.xlu0 59
        %3296 = vperm.xlu0 %3295, %v396
        %v3297 = vpop.permute.xlu0 %3296
        %3299 = vset.pattern.permute.xlu0 59
        %3300 = vperm.xlu0 %3299, %v397
        %v3301 = vpop.permute.xlu0 %3300
        %v3303 = vmul.f32 %v2301, %v3289
        %v3304 = vmul.f32 %v2307, %v3293
        %v3305 = vmul.f32 %v2313, %v3297
        %v3306 = vmul.f32 %v2319, %v3301
        %3311 = vrot.lane.b32.xlu0 %v3303, 32
        %v3312 = vpop.permute.xlu0 %3311
        %3313 = vrot.lane.b32.xlu0 %v3304, 32
        %v3314 = vpop.permute.xlu0 %3313
        %3315 = vrot.lane.b32.xlu0 %v3305, 32
        %v3316 = vpop.permute.xlu0 %3315
        %3317 = vrot.lane.b32.xlu0 %v3306, 32
        %v3318 = vpop.permute.xlu0 %3317
        %v3323 = vadd.f32 %v3283, %v3312
        %v3324 = vadd.f32 %v3284, %v3314
        %v3325 = vadd.f32 %v3285, %v3316
        %v3326 = vadd.f32 %v3286, %v3318
        %3327 = vset.pattern.permute.xlu0 60
        %3328 = vperm.xlu0 %3327, %v394
        %v3329 = vpop.permute.xlu0 %3328
        %3331 = vset.pattern.permute.xlu0 60
        %3332 = vperm.xlu0 %3331, %v395
        %v3333 = vpop.permute.xlu0 %3332
        %3335 = vset.pattern.permute.xlu0 60
        %3336 = vperm.xlu0 %3335, %v396
        %v3337 = vpop.permute.xlu0 %3336
        %3339 = vset.pattern.permute.xlu0 60
        %3340 = vperm.xlu0 %3339, %v397
        %v3341 = vpop.permute.xlu0 %3340
        %v3343 = vmul.f32 %v2303, %v3329
        %v3344 = vmul.f32 %v2309, %v3333
        %v3345 = vmul.f32 %v2315, %v3337
        %v3346 = vmul.f32 %v2321, %v3341
        %v3347 = vadd.f32 %v3323, %v3343
        %v3348 = vadd.f32 %v3324, %v3344
        %v3349 = vadd.f32 %v3325, %v3345
        %v3350 = vadd.f32 %v3326, %v3346
        %3351 = vset.pattern.permute.xlu0 61
        %3352 = vperm.xlu0 %3351, %v394
        %v3353 = vpop.permute.xlu0 %3352
        %3355 = vset.pattern.permute.xlu0 61
        %3356 = vperm.xlu0 %3355, %v395
        %v3357 = vpop.permute.xlu0 %3356
        %3359 = vset.pattern.permute.xlu0 61
        %3360 = vperm.xlu0 %3359, %v396
        %v3361 = vpop.permute.xlu0 %3360
        %3363 = vset.pattern.permute.xlu0 61
        %3364 = vperm.xlu0 %3363, %v397
        %v3365 = vpop.permute.xlu0 %3364
        %v3367 = vmul.f32 %v2303, %v3353
        %v3368 = vmul.f32 %v2309, %v3357
        %v3369 = vmul.f32 %v2315, %v3361
        %v3370 = vmul.f32 %v2321, %v3365
        %3375 = vrot.lane.b32.xlu0 %v3367, 96
        %v3376 = vpop.permute.xlu0 %3375
        %3377 = vrot.lane.b32.xlu0 %v3368, 96
        %v3378 = vpop.permute.xlu0 %3377
        %3379 = vrot.lane.b32.xlu0 %v3369, 96
        %v3380 = vpop.permute.xlu0 %3379
        %3381 = vrot.lane.b32.xlu0 %v3370, 96
        %v3382 = vpop.permute.xlu0 %3381
        %v3387 = vadd.f32 %v3347, %v3376
        %v3388 = vadd.f32 %v3348, %v3378
        %v3389 = vadd.f32 %v3349, %v3380
        %v3390 = vadd.f32 %v3350, %v3382
        %3391 = vset.pattern.permute.xlu0 62
        %3392 = vperm.xlu0 %3391, %v394
        %v3393 = vpop.permute.xlu0 %3392
        %3395 = vset.pattern.permute.xlu0 62
        %3396 = vperm.xlu0 %3395, %v395
        %v3397 = vpop.permute.xlu0 %3396
        %3399 = vset.pattern.permute.xlu0 62
        %3400 = vperm.xlu0 %3399, %v396
        %v3401 = vpop.permute.xlu0 %3400
        %3403 = vset.pattern.permute.xlu0 62
        %3404 = vperm.xlu0 %3403, %v397
        %v3405 = vpop.permute.xlu0 %3404
        %v3407 = vmul.f32 %v2303, %v3393
        %v3408 = vmul.f32 %v2309, %v3397
        %v3409 = vmul.f32 %v2315, %v3401
        %v3410 = vmul.f32 %v2321, %v3405
        %3415 = vrot.lane.b32.xlu0 %v3407, 64
        %v3416 = vpop.permute.xlu0 %3415
        %3417 = vrot.lane.b32.xlu0 %v3408, 64
        %v3418 = vpop.permute.xlu0 %3417
        %3419 = vrot.lane.b32.xlu0 %v3409, 64
        %v3420 = vpop.permute.xlu0 %3419
        %3421 = vrot.lane.b32.xlu0 %v3410, 64
        %v3422 = vpop.permute.xlu0 %3421
        %v3427 = vadd.f32 %v3387, %v3416
        %v3428 = vadd.f32 %v3388, %v3418
        %v3429 = vadd.f32 %v3389, %v3420
        %v3430 = vadd.f32 %v3390, %v3422
        %3431 = vset.pattern.permute.xlu0 63
        %3432 = vperm.xlu0 %3431, %v394
        %v3433 = vpop.permute.xlu0 %3432
        %3435 = vset.pattern.permute.xlu0 63
        %3436 = vperm.xlu0 %3435, %v395
        %v3437 = vpop.permute.xlu0 %3436
        %3439 = vset.pattern.permute.xlu0 63
        %3440 = vperm.xlu0 %3439, %v396
        %v3441 = vpop.permute.xlu0 %3440
        %3443 = vset.pattern.permute.xlu0 63
        %3444 = vperm.xlu0 %3443, %v397
        %v3445 = vpop.permute.xlu0 %3444
        %v3447 = vmul.f32 %v2303, %v3433
        %v3448 = vmul.f32 %v2309, %v3437
        %v3449 = vmul.f32 %v2315, %v3441
        %v3450 = vmul.f32 %v2321, %v3445
        %3455 = vrot.lane.b32.xlu0 %v3447, 32
        %v3456 = vpop.permute.xlu0 %3455
        %3457 = vrot.lane.b32.xlu0 %v3448, 32
        %v3458 = vpop.permute.xlu0 %3457
        %3459 = vrot.lane.b32.xlu0 %v3449, 32
        %v3460 = vpop.permute.xlu0 %3459
        %3461 = vrot.lane.b32.xlu0 %v3450, 32
        %v3462 = vpop.permute.xlu0 %3461
        %v3467 = vadd.f32 %v3427, %v3456
        %v3468 = vadd.f32 %v3428, %v3458
        %v3469 = vadd.f32 %v3429, %v3460
        %v3470 = vadd.f32 %v3430, %v3462
        %3471 = vrot.lane.b32.xlu0 %v376, 64
        %v3472 = vpop.permute.xlu0 %3471
        %3473 = vrot.lane.b32.xlu0 %v381, 64
        %v3474 = vpop.permute.xlu0 %3473
        %3475 = vrot.lane.b32.xlu0 %v386, 64
        %v3476 = vpop.permute.xlu0 %3475
        %3477 = vrot.lane.b32.xlu0 %v391, 64
        %v3478 = vpop.permute.xlu0 %3477
        %v3479 = vsel %vm430, %v3472, 0
        %v3481 = vsel %vm430, %v3474, 0
        %v3483 = vsel %vm430, %v3476, 0
        %v3485 = vsel %vm430, %v3478, 0
        %3487 = vmatprep.subr.mxu0 %v399
        %3488 = vmatpush1.msra.mxu0 %v398
        %3489 = vmatprep.subr.mxu0 %v407
        %3490 = vmatpush1.msra.mxu0 %v406
        %3491 = vmatprep.subr.mxu0 %v415
        %3492 = vmatpush1.msra.mxu0 %v414
        %3493 = vmatprep.subr.mxu0 %v423
        %3494 = vmatpush1.msra.mxu0 %v422
        %3495 = vmatprep.subr.mxu0 0.0
        %3496 = vmatpush1.msra.mxu0 0.0
        %3497 = vmatprep.subr.mxu0 0.0
        %3498 = vmatpush1.msra.mxu0 0.0
        %3499 = vmatprep.subr.mxu0 0.0
        %3500 = vmatpush1.msra.mxu0 0.0
        %3501 = vmatprep.subr.mxu0 0.0
        %3502 = vmatpush1.msra.mxu0 0.0
        %3503 = vmatprep.subr.mxu0 0.0
        %3504 = vmatpush1.msra.mxu0 0.0
        %3505 = vmatprep.subr.mxu0 0.0
        %3506 = vmatpush1.msra.mxu0 0.0
        %3507 = vmatprep.subr.mxu0 0.0
        %3508 = vmatpush1.msra.mxu0 0.0
        %3509 = vmatprep.subr.mxu0 0.0
        %3510 = vmatpush1.msra.mxu0 0.0
        %3511 = vmatprep.subr.mxu0 0.0
        %3512 = vmatpush1.msra.mxu0 0.0
        %3513 = vmatprep.subr.mxu0 0.0
        %3514 = vmatpush1.msra.mxu0 0.0
        %3515 = vmatprep.subr.mxu0 0.0
        %3516 = vmatpush1.msra.mxu0 0.0
        %3517 = vmatprep.subr.mxu0 0.0
        %3518 = vmatpush1.msra.mxu0 0.0
        %3519 = vmatprep.subr.mxu0 0.0
        %3520 = vmatpush1.msra.mxu0 0.0
        %3521 = vmatprep.subr.mxu0 0.0
        %3522 = vmatpush1.msra.mxu0 0.0
        %3523 = vmatprep.subr.mxu0 0.0
        %3524 = vmatpush1.msra.mxu0 0.0
        %3525 = vmatprep.subr.mxu0 0.0
        %3526 = vmatpush1.msra.mxu0 0.0
        %3527 = vmatprep.subr.mxu0 0.0
        %3528 = vmatpush1.msra.mxu0 0.0
        %3529 = vmatprep.subr.mxu0 0.0
        %3530 = vmatpush1.msra.mxu0 0.0
        %3531 = vmatprep.subr.mxu0 0.0
        %3532 = vmatpush1.msra.mxu0 0.0
        %3533 = vmatprep.subr.mxu0 0.0
        %3534 = vmatpush1.msra.mxu0 0.0
        %3535 = vmatprep.subr.mxu0 0.0
        %3536 = vmatpush1.msra.mxu0 0.0
        %3537 = vmatprep.subr.mxu0 0.0
        %3538 = vmatpush1.msra.mxu0 0.0
        %3539 = vmatprep.subr.mxu0 0.0
        %3540 = vmatpush1.msra.mxu0 0.0
        %3541 = vmatprep.subr.mxu0 0.0
        %3542 = vmatpush1.msra.mxu0 0.0
        %3543 = vmatprep.subr.mxu0 0.0
        %3544 = vmatpush1.msra.mxu0 0.0
        %3545 = vmatprep.subr.mxu0 0.0
        %3546 = vmatpush1.msra.mxu0 0.0
        %3547 = vmatprep.subr.mxu0 0.0
        %3548 = vmatpush1.msra.mxu0 0.0
        %3549 = vmatprep.subr.mxu0 0.0
        %3550 = vmatpush1.msra.mxu0 0.0
        %3551 = vmatprep.mubr.f32.mxu0 0.0
        %3552 = vmatmul.mubr.f32.gmra.mrb[0].mxu0 %v3479
        %v3553 = vpop.f32.mrb[0].mxu0
        %v3554 = vadd.f32 0.0, %v3553
        %v3555 = vpop.f32.mrb[0].mxu0
        %v3556 = vadd.f32 0.0, %v3555
        %3557 = vmatprep.mubr.f32.mxu0 0.0
        %3558 = vmatmul.mubr.f32.gmra.mrb[0].mxu0 %v3481
        %v3559 = vpop.f32.mrb[0].mxu0
        %v3560 = vadd.f32 0.0, %v3559
        %v3561 = vpop.f32.mrb[0].mxu0
        %v3562 = vadd.f32 0.0, %v3561
        %3563 = vmatprep.mubr.f32.mxu0 0.0
        %3564 = vmatmul.mubr.f32.gmra.mrb[0].mxu0 %v3483
        %v3565 = vpop.f32.mrb[0].mxu0
        %v3566 = vadd.f32 0.0, %v3565
        %v3567 = vpop.f32.mrb[0].mxu0
        %v3568 = vadd.f32 0.0, %v3567
        %3569 = vmatprep.mubr.f32.mxu0 0.0
        %3570 = vmatmul.mubr.f32.gmra.mrb[0].mxu0 %v3485
        %v3571 = vpop.f32.mrb[0].mxu0
        %v3572 = vadd.f32 0.0, %v3571
        %v3573 = vpop.f32.mrb[0].mxu0
        %v3574 = vadd.f32 0.0, %v3573
        %3575 = vdwg.mxu0
        %3576 = vmatprep.subr.mxu0 %v401
        %3577 = vmatpush1.msra.mxu0 %v400
        %3578 = vmatprep.subr.mxu0 %v409
        %3579 = vmatpush1.msra.mxu0 %v408
        %3580 = vmatprep.subr.mxu0 %v417
        %3581 = vmatpush1.msra.mxu0 %v416
        %3582 = vmatprep.subr.mxu0 %v425
        %3583 = vmatpush1.msra.mxu0 %v424
        %3584 = vmatprep.subr.mxu0 0.0
        %3585 = vmatpush1.msra.mxu0 0.0
        %3586 = vmatprep.subr.mxu0 0.0
        %3587 = vmatpush1.msra.mxu0 0.0
        %3588 = vmatprep.subr.mxu0 0.0
        %3589 = vmatpush1.msra.mxu0 0.0
        %3590 = vmatprep.subr.mxu0 0.0
        %3591 = vmatpush1.msra.mxu0 0.0
        %3592 = vmatprep.subr.mxu0 0.0
        %3593 = vmatpush1.msra.mxu0 0.0
        %3594 = vmatprep.subr.mxu0 0.0
        %3595 = vmatpush1.msra.mxu0 0.0
        %3596 = vmatprep.subr.mxu0 0.0
        %3597 = vmatpush1.msra.mxu0 0.0
        %3598 = vmatprep.subr.mxu0 0.0
        %3599 = vmatpush1.msra.mxu0 0.0
        %3600 = vmatprep.subr.mxu0 0.0
        %3601 = vmatpush1.msra.mxu0 0.0
        %3602 = vmatprep.subr.mxu0 0.0
        %3603 = vmatpush1.msra.mxu0 0.0
        %3604 = vmatprep.subr.mxu0 0.0
        %3605 = vmatpush1.msra.mxu0 0.0
        %3606 = vmatprep.subr.mxu0 0.0
        %3607 = vmatpush1.msra.mxu0 0.0
        %3608 = vmatprep.subr.mxu0 0.0
        %3609 = vmatpush1.msra.mxu0 0.0
        %3610 = vmatprep.subr.mxu0 0.0
        %3611 = vmatpush1.msra.mxu0 0.0
        %3612 = vmatprep.subr.mxu0 0.0
        %3613 = vmatpush1.msra.mxu0 0.0
        %3614 = vmatprep.subr.mxu0 0.0
        %3615 = vmatpush1.msra.mxu0 0.0
        %3616 = vmatprep.subr.mxu0 0.0
        %3617 = vmatpush1.msra.mxu0 0.0
        %3618 = vmatprep.subr.mxu0 0.0
        %3619 = vmatpush1.msra.mxu0 0.0
        %3620 = vmatprep.subr.mxu0 0.0
        %3621 = vmatpush1.msra.mxu0 0.0
        %3622 = vmatprep.subr.mxu0 0.0
        %3623 = vmatpush1.msra.mxu0 0.0
        %3624 = vmatprep.subr.mxu0 0.0
        %3625 = vmatpush1.msra.mxu0 0.0
        %3626 = vmatprep.subr.mxu0 0.0
        %3627 = vmatpush1.msra.mxu0 0.0
        %3628 = vmatprep.subr.mxu0 0.0
        %3629 = vmatpush1.msra.mxu0 0.0
        %3630 = vmatprep.subr.mxu0 0.0
        %3631 = vmatpush1.msra.mxu0 0.0
        %3632 = vmatprep.subr.mxu0 0.0
        %3633 = vmatpush1.msra.mxu0 0.0
        %3634 = vmatprep.subr.mxu0 0.0
        %3635 = vmatpush1.msra.mxu0 0.0
        %3636 = vmatprep.subr.mxu0 0.0
        %3637 = vmatpush1.msra.mxu0 0.0
        %3638 = vmatprep.subr.mxu0 0.0
        %3639 = vmatpush1.msra.mxu0 0.0
        %3640 = vmatprep.mubr.f32.mxu0 0.0
        %3641 = vmatmul.mubr.f32.gmra.mrb[0].mxu0 %v3479
        %v3642 = vpop.f32.mrb[0].mxu0
        %v3643 = vadd.f32 0.0, %v3642
        %v3644 = vpop.f32.mrb[0].mxu0
        %v3645 = vadd.f32 0.0, %v3644
        %3646 = vmatprep.mubr.f32.mxu0 0.0
        %3647 = vmatmul.mubr.f32.gmra.mrb[0].mxu0 %v3481
        %v3648 = vpop.f32.mrb[0].mxu0
        %v3649 = vadd.f32 0.0, %v3648
        %v3650 = vpop.f32.mrb[0].mxu0
        %v3651 = vadd.f32 0.0, %v3650
        %3652 = vmatprep.mubr.f32.mxu0 0.0
        %3653 = vmatmul.mubr.f32.gmra.mrb[0].mxu0 %v3483
        %v3654 = vpop.f32.mrb[0].mxu0
        %v3655 = vadd.f32 0.0, %v3654
        %v3656 = vpop.f32.mrb[0].mxu0
        %v3657 = vadd.f32 0.0, %v3656
        %3658 = vmatprep.mubr.f32.mxu0 0.0
        %3659 = vmatmul.mubr.f32.gmra.mrb[0].mxu0 %v3485
        %v3660 = vpop.f32.mrb[0].mxu0
        %v3661 = vadd.f32 0.0, %v3660
        %v3662 = vpop.f32.mrb[0].mxu0
        %v3663 = vadd.f32 0.0, %v3662
        %3664 = vdwg.mxu0
        %3665 = vmatprep.subr.mxu0 %v403
        %3666 = vmatpush1.msra.mxu0 %v402
        %3667 = vmatprep.subr.mxu0 %v411
        %3668 = vmatpush1.msra.mxu0 %v410
        %3669 = vmatprep.subr.mxu0 %v419
        %3670 = vmatpush1.msra.mxu0 %v418
        %3671 = vmatprep.subr.mxu0 %v427
        %3672 = vmatpush1.msra.mxu0 %v426
        %3673 = vmatprep.subr.mxu0 0.0
        %3674 = vmatpush1.msra.mxu0 0.0
        %3675 = vmatprep.subr.mxu0 0.0
        %3676 = vmatpush1.msra.mxu0 0.0
        %3677 = vmatprep.subr.mxu0 0.0
        %3678 = vmatpush1.msra.mxu0 0.0
        %3679 = vmatprep.subr.mxu0 0.0
        %3680 = vmatpush1.msra.mxu0 0.0
        %3681 = vmatprep.subr.mxu0 0.0
        %3682 = vmatpush1.msra.mxu0 0.0
        %3683 = vmatprep.subr.mxu0 0.0
        %3684 = vmatpush1.msra.mxu0 0.0
        %3685 = vmatprep.subr.mxu0 0.0
        %3686 = vmatpush1.msra.mxu0 0.0
        %3687 = vmatprep.subr.mxu0 0.0
        %3688 = vmatpush1.msra.mxu0 0.0
        %3689 = vmatprep.subr.mxu0 0.0
        %3690 = vmatpush1.msra.mxu0 0.0
        %3691 = vmatprep.subr.mxu0 0.0
        %3692 = vmatpush1.msra.mxu0 0.0
        %3693 = vmatprep.subr.mxu0 0.0
        %3694 = vmatpush1.msra.mxu0 0.0
        %3695 = vmatprep.subr.mxu0 0.0
        %3696 = vmatpush1.msra.mxu0 0.0
        %3697 = vmatprep.subr.mxu0 0.0
        %3698 = vmatpush1.msra.mxu0 0.0
        %3699 = vmatprep.subr.mxu0 0.0
        %3700 = vmatpush1.msra.mxu0 0.0
        %3701 = vmatprep.subr.mxu0 0.0
        %3702 = vmatpush1.msra.mxu0 0.0
        %3703 = vmatprep.subr.mxu0 0.0
        %3704 = vmatpush1.msra.mxu0 0.0
        %3705 = vmatprep.subr.mxu0 0.0
        %3706 = vmatpush1.msra.mxu0 0.0
        %3707 = vmatprep.subr.mxu0 0.0
        %3708 = vmatpush1.msra.mxu0 0.0
        %3709 = vmatprep.subr.mxu0 0.0
        %3710 = vmatpush1.msra.mxu0 0.0
        %3711 = vmatprep.subr.mxu0 0.0
        %3712 = vmatpush1.msra.mxu0 0.0
        %3713 = vmatprep.subr.mxu0 0.0
        %3714 = vmatpush1.msra.mxu0 0.0
        %3715 = vmatprep.subr.mxu0 0.0
        %3716 = vmatpush1.msra.mxu0 0.0
        %3717 = vmatprep.subr.mxu0 0.0
        %3718 = vmatpush1.msra.mxu0 0.0
        %3719 = vmatprep.subr.mxu0 0.0
        %3720 = vmatpush1.msra.mxu0 0.0
        %3721 = vmatprep.subr.mxu0 0.0
        %3722 = vmatpush1.msra.mxu0 0.0
        %3723 = vmatprep.subr.mxu0 0.0
        %3724 = vmatpush1.msra.mxu0 0.0
        %3725 = vmatprep.subr.mxu0 0.0
        %3726 = vmatpush1.msra.mxu0 0.0
        %3727 = vmatprep.subr.mxu0 0.0
        %3728 = vmatpush1.msra.mxu0 0.0
        %3729 = vmatprep.mubr.f32.mxu0 0.0
        %3730 = vmatmul.mubr.f32.gmra.mrb[0].mxu0 %v3479
        %v3731 = vpop.f32.mrb[0].mxu0
        %v3732 = vadd.f32 0.0, %v3731
        %v3733 = vpop.f32.mrb[0].mxu0
        %v3734 = vadd.f32 0.0, %v3733
        %3735 = vmatprep.mubr.f32.mxu0 0.0
        %3736 = vmatmul.mubr.f32.gmra.mrb[0].mxu0 %v3481
        %v3737 = vpop.f32.mrb[0].mxu0
        %v3738 = vadd.f32 0.0, %v3737
        %v3739 = vpop.f32.mrb[0].mxu0
        %v3740 = vadd.f32 0.0, %v3739
        %3741 = vmatprep.mubr.f32.mxu0 0.0
        %3742 = vmatmul.mubr.f32.gmra.mrb[0].mxu0 %v3483
        %v3743 = vpop.f32.mrb[0].mxu0
        %v3744 = vadd.f32 0.0, %v3743
        %v3745 = vpop.f32.mrb[0].mxu0
        %v3746 = vadd.f32 0.0, %v3745
        %3747 = vmatprep.mubr.f32.mxu0 0.0
        %3748 = vmatmul.mubr.f32.gmra.mrb[0].mxu0 %v3485
        %v3749 = vpop.f32.mrb[0].mxu0
        %v3750 = vadd.f32 0.0, %v3749
        %v3751 = vpop.f32.mrb[0].mxu0
        %v3752 = vadd.f32 0.0, %v3751
        %3753 = vdwg.mxu0
        %3754 = vmatprep.subr.mxu0 %v405
        %3755 = vmatpush1.msra.mxu0 %v404
        %3756 = vmatprep.subr.mxu0 %v413
        %3757 = vmatpush1.msra.mxu0 %v412
        %3758 = vmatprep.subr.mxu0 %v421
        %3759 = vmatpush1.msra.mxu0 %v420
        %3760 = vmatprep.subr.mxu0 %v429
        %3761 = vmatpush1.msra.mxu0 %v428
        %3762 = vmatprep.subr.mxu0 0.0
        %3763 = vmatpush1.msra.mxu0 0.0
        %3764 = vmatprep.subr.mxu0 0.0
        %3765 = vmatpush1.msra.mxu0 0.0
        %3766 = vmatprep.subr.mxu0 0.0
        %3767 = vmatpush1.msra.mxu0 0.0
        %3768 = vmatprep.subr.mxu0 0.0
        %3769 = vmatpush1.msra.mxu0 0.0
        %3770 = vmatprep.subr.mxu0 0.0
        %3771 = vmatpush1.msra.mxu0 0.0
        %3772 = vmatprep.subr.mxu0 0.0
        %3773 = vmatpush1.msra.mxu0 0.0
        %3774 = vmatprep.subr.mxu0 0.0
        %3775 = vmatpush1.msra.mxu0 0.0
        %3776 = vmatprep.subr.mxu0 0.0
        %3777 = vmatpush1.msra.mxu0 0.0
        %3778 = vmatprep.subr.mxu0 0.0
        %3779 = vmatpush1.msra.mxu0 0.0
        %3780 = vmatprep.subr.mxu0 0.0
        %3781 = vmatpush1.msra.mxu0 0.0
        %3782 = vmatprep.subr.mxu0 0.0
        %3783 = vmatpush1.msra.mxu0 0.0
        %3784 = vmatprep.subr.mxu0 0.0
        %3785 = vmatpush1.msra.mxu0 0.0
        %3786 = vmatprep.subr.mxu0 0.0
        %3787 = vmatpush1.msra.mxu0 0.0
        %3788 = vmatprep.subr.mxu0 0.0
        %3789 = vmatpush1.msra.mxu0 0.0
        %3790 = vmatprep.subr.mxu0 0.0
        %3791 = vmatpush1.msra.mxu0 0.0
        %3792 = vmatprep.subr.mxu0 0.0
        %3793 = vmatpush1.msra.mxu0 0.0
        %3794 = vmatprep.subr.mxu0 0.0
        %3795 = vmatpush1.msra.mxu0 0.0
        %3796 = vmatprep.subr.mxu0 0.0
        %3797 = vmatpush1.msra.mxu0 0.0
        %3798 = vmatprep.subr.mxu0 0.0
        %3799 = vmatpush1.msra.mxu0 0.0
        %3800 = vmatprep.subr.mxu0 0.0
        %3801 = vmatpush1.msra.mxu0 0.0
        %3802 = vmatprep.subr.mxu0 0.0
        %3803 = vmatpush1.msra.mxu0 0.0
        %3804 = vmatprep.subr.mxu0 0.0
        %3805 = vmatpush1.msra.mxu0 0.0
        %3806 = vmatprep.subr.mxu0 0.0
        %3807 = vmatpush1.msra.mxu0 0.0
        %3808 = vmatprep.subr.mxu0 0.0
        %3809 = vmatpush1.msra.mxu0 0.0
        %3810 = vmatprep.subr.mxu0 0.0
        %3811 = vmatpush1.msra.mxu0 0.0
        %3812 = vmatprep.subr.mxu0 0.0
        %3813 = vmatpush1.msra.mxu0 0.0
        %3814 = vmatprep.subr.mxu0 0.0
        %3815 = vmatpush1.msra.mxu0 0.0
        %3816 = vmatprep.subr.mxu0 0.0
        %3817 = vmatpush1.msra.mxu0 0.0
        %3818 = vmatprep.mubr.f32.mxu0 0.0
        %3819 = vmatmul.mubr.f32.gmra.mrb[0].mxu0 %v3479
        %v3820 = vpop.f32.mrb[0].mxu0
        %v3821 = vadd.f32 0.0, %v3820
        %v3822 = vpop.f32.mrb[0].mxu0
        %v3823 = vadd.f32 0.0, %v3822
        %3824 = vmatprep.mubr.f32.mxu0 0.0
        %3825 = vmatmul.mubr.f32.gmra.mrb[0].mxu0 %v3481
        %v3826 = vpop.f32.mrb[0].mxu0
        %v3827 = vadd.f32 0.0, %v3826
        %v3828 = vpop.f32.mrb[0].mxu0
        %v3829 = vadd.f32 0.0, %v3828
        %3830 = vmatprep.mubr.f32.mxu0 0.0
        %3831 = vmatmul.mubr.f32.gmra.mrb[0].mxu0 %v3483
        %v3832 = vpop.f32.mrb[0].mxu0
        %v3833 = vadd.f32 0.0, %v3832
        %v3834 = vpop.f32.mrb[0].mxu0
        %v3835 = vadd.f32 0.0, %v3834
        %3836 = vmatprep.mubr.f32.mxu0 0.0
        %3837 = vmatmul.mubr.f32.gmra.mrb[0].mxu0 %v3485
        %v3838 = vpop.f32.mrb[0].mxu0
        %v3839 = vadd.f32 0.0, %v3838
        %v3840 = vpop.f32.mrb[0].mxu0
        %v3841 = vadd.f32 0.0, %v3840
        %3842 = vdwg.mxu0
        %3843 = vset.pattern.permute.xlu0 64
        %3844 = vperm.xlu0 %3843, %v394
        %v3845 = vpop.permute.xlu0 %3844
        %3847 = vset.pattern.permute.xlu0 64
        %3848 = vperm.xlu0 %3847, %v395
        %v3849 = vpop.permute.xlu0 %3848
        %3851 = vset.pattern.permute.xlu0 64
        %3852 = vperm.xlu0 %3851, %v396
        %v3853 = vpop.permute.xlu0 %3852
        %3855 = vset.pattern.permute.xlu0 64
        %3856 = vperm.xlu0 %3855, %v397
        %v3857 = vpop.permute.xlu0 %3856
        %v3859 = vmul.f32 %v3554, %v3845
        %v3860 = vmul.f32 %v3560, %v3849
        %v3861 = vmul.f32 %v3566, %v3853
        %v3862 = vmul.f32 %v3572, %v3857
        %3863 = vset.pattern.permute.xlu0 65
        %3864 = vperm.xlu0 %3863, %v394
        %v3865 = vpop.permute.xlu0 %3864
        %3867 = vset.pattern.permute.xlu0 65
        %3868 = vperm.xlu0 %3867, %v395
        %v3869 = vpop.permute.xlu0 %3868
        %3871 = vset.pattern.permute.xlu0 65
        %3872 = vperm.xlu0 %3871, %v396
        %v3873 = vpop.permute.xlu0 %3872
        %3875 = vset.pattern.permute.xlu0 65
        %3876 = vperm.xlu0 %3875, %v397
        %v3877 = vpop.permute.xlu0 %3876
        %v3879 = vmul.f32 %v3554, %v3865
        %v3880 = vmul.f32 %v3560, %v3869
        %v3881 = vmul.f32 %v3566, %v3873
        %v3882 = vmul.f32 %v3572, %v3877
        %3887 = vrot.lane.b32.xlu0 %v3879, 96
        %v3888 = vpop.permute.xlu0 %3887
        %3889 = vrot.lane.b32.xlu0 %v3880, 96
        %v3890 = vpop.permute.xlu0 %3889
        %3891 = vrot.lane.b32.xlu0 %v3881, 96
        %v3892 = vpop.permute.xlu0 %3891
        %3893 = vrot.lane.b32.xlu0 %v3882, 96
        %v3894 = vpop.permute.xlu0 %3893
        %v3899 = vadd.f32 %v3859, %v3888
        %v3900 = vadd.f32 %v3860, %v3890
        %v3901 = vadd.f32 %v3861, %v3892
        %v3902 = vadd.f32 %v3862, %v3894
        %3903 = vset.pattern.permute.xlu0 66
        %3904 = vperm.xlu0 %3903, %v394
        %v3905 = vpop.permute.xlu0 %3904
        %3907 = vset.pattern.permute.xlu0 66
        %3908 = vperm.xlu0 %3907, %v395
        %v3909 = vpop.permute.xlu0 %3908
        %3911 = vset.pattern.permute.xlu0 66
        %3912 = vperm.xlu0 %3911, %v396
        %v3913 = vpop.permute.xlu0 %3912
        %3915 = vset.pattern.permute.xlu0 66
        %3916 = vperm.xlu0 %3915, %v397
        %v3917 = vpop.permute.xlu0 %3916
        %v3919 = vmul.f32 %v3554, %v3905
        %v3920 = vmul.f32 %v3560, %v3909
        %v3921 = vmul.f32 %v3566, %v3913
        %v3922 = vmul.f32 %v3572, %v3917
        %3927 = vrot.lane.b32.xlu0 %v3919, 64
        %v3928 = vpop.permute.xlu0 %3927
        %3929 = vrot.lane.b32.xlu0 %v3920, 64
        %v3930 = vpop.permute.xlu0 %3929
        %3931 = vrot.lane.b32.xlu0 %v3921, 64
        %v3932 = vpop.permute.xlu0 %3931
        %3933 = vrot.lane.b32.xlu0 %v3922, 64
        %v3934 = vpop.permute.xlu0 %3933
        %v3939 = vadd.f32 %v3899, %v3928
        %v3940 = vadd.f32 %v3900, %v3930
        %v3941 = vadd.f32 %v3901, %v3932
        %v3942 = vadd.f32 %v3902, %v3934
        %3943 = vset.pattern.permute.xlu0 67
        %3944 = vperm.xlu0 %3943, %v394
        %v3945 = vpop.permute.xlu0 %3944
        %3947 = vset.pattern.permute.xlu0 67
        %3948 = vperm.xlu0 %3947, %v395
        %v3949 = vpop.permute.xlu0 %3948
        %3951 = vset.pattern.permute.xlu0 67
        %3952 = vperm.xlu0 %3951, %v396
        %v3953 = vpop.permute.xlu0 %3952
        %3955 = vset.pattern.permute.xlu0 67
        %3956 = vperm.xlu0 %3955, %v397
        %v3957 = vpop.permute.xlu0 %3956
        %v3959 = vmul.f32 %v3554, %v3945
        %v3960 = vmul.f32 %v3560, %v3949
        %v3961 = vmul.f32 %v3566, %v3953
        %v3962 = vmul.f32 %v3572, %v3957
        %3967 = vrot.lane.b32.xlu0 %v3959, 32
        %v3968 = vpop.permute.xlu0 %3967
        %3969 = vrot.lane.b32.xlu0 %v3960, 32
        %v3970 = vpop.permute.xlu0 %3969
        %3971 = vrot.lane.b32.xlu0 %v3961, 32
        %v3972 = vpop.permute.xlu0 %3971
        %3973 = vrot.lane.b32.xlu0 %v3962, 32
        %v3974 = vpop.permute.xlu0 %3973
        %v3979 = vadd.f32 %v3939, %v3968
        %v3980 = vadd.f32 %v3940, %v3970
        %v3981 = vadd.f32 %v3941, %v3972
        %v3982 = vadd.f32 %v3942, %v3974
        %3983 = vset.pattern.permute.xlu0 68
        %3984 = vperm.xlu0 %3983, %v394
        %v3985 = vpop.permute.xlu0 %3984
        %3987 = vset.pattern.permute.xlu0 68
        %3988 = vperm.xlu0 %3987, %v395
        %v3989 = vpop.permute.xlu0 %3988
        %3991 = vset.pattern.permute.xlu0 68
        %3992 = vperm.xlu0 %3991, %v396
        %v3993 = vpop.permute.xlu0 %3992
        %3995 = vset.pattern.permute.xlu0 68
        %3996 = vperm.xlu0 %3995, %v397
        %v3997 = vpop.permute.xlu0 %3996
        %v3999 = vmul.f32 %v3556, %v3985
        %v4000 = vmul.f32 %v3562, %v3989
        %v4001 = vmul.f32 %v3568, %v3993
        %v4002 = vmul.f32 %v3574, %v3997
        %v4003 = vadd.f32 %v3979, %v3999
        %v4004 = vadd.f32 %v3980, %v4000
        %v4005 = vadd.f32 %v3981, %v4001
        %v4006 = vadd.f32 %v3982, %v4002
        %4007 = vset.pattern.permute.xlu0 69
        %4008 = vperm.xlu0 %4007, %v394
        %v4009 = vpop.permute.xlu0 %4008
        %4011 = vset.pattern.permute.xlu0 69
        %4012 = vperm.xlu0 %4011, %v395
        %v4013 = vpop.permute.xlu0 %4012
        %4015 = vset.pattern.permute.xlu0 69
        %4016 = vperm.xlu0 %4015, %v396
        %v4017 = vpop.permute.xlu0 %4016
        %4019 = vset.pattern.permute.xlu0 69
        %4020 = vperm.xlu0 %4019, %v397
        %v4021 = vpop.permute.xlu0 %4020
        %v4023 = vmul.f32 %v3556, %v4009
        %v4024 = vmul.f32 %v3562, %v4013
        %v4025 = vmul.f32 %v3568, %v4017
        %v4026 = vmul.f32 %v3574, %v4021
        %4031 = vrot.lane.b32.xlu0 %v4023, 96
        %v4032 = vpop.permute.xlu0 %4031
        %4033 = vrot.lane.b32.xlu0 %v4024, 96
        %v4034 = vpop.permute.xlu0 %4033
        %4035 = vrot.lane.b32.xlu0 %v4025, 96
        %v4036 = vpop.permute.xlu0 %4035
        %4037 = vrot.lane.b32.xlu0 %v4026, 96
        %v4038 = vpop.permute.xlu0 %4037
        %v4043 = vadd.f32 %v4003, %v4032
        %v4044 = vadd.f32 %v4004, %v4034
        %v4045 = vadd.f32 %v4005, %v4036
        %v4046 = vadd.f32 %v4006, %v4038
        %4047 = vset.pattern.permute.xlu0 70
        %4048 = vperm.xlu0 %4047, %v394
        %v4049 = vpop.permute.xlu0 %4048
        %4051 = vset.pattern.permute.xlu0 70
        %4052 = vperm.xlu0 %4051, %v395
        %v4053 = vpop.permute.xlu0 %4052
        %4055 = vset.pattern.permute.xlu0 70
        %4056 = vperm.xlu0 %4055, %v396
        %v4057 = vpop.permute.xlu0 %4056
        %4059 = vset.pattern.permute.xlu0 70
        %4060 = vperm.xlu0 %4059, %v397
        %v4061 = vpop.permute.xlu0 %4060
        %v4063 = vmul.f32 %v3556, %v4049
        %v4064 = vmul.f32 %v3562, %v4053
        %v4065 = vmul.f32 %v3568, %v4057
        %v4066 = vmul.f32 %v3574, %v4061
        %4071 = vrot.lane.b32.xlu0 %v4063, 64
        %v4072 = vpop.permute.xlu0 %4071
        %4073 = vrot.lane.b32.xlu0 %v4064, 64
        %v4074 = vpop.permute.xlu0 %4073
        %4075 = vrot.lane.b32.xlu0 %v4065, 64
        %v4076 = vpop.permute.xlu0 %4075
        %4077 = vrot.lane.b32.xlu0 %v4066, 64
        %v4078 = vpop.permute.xlu0 %4077
        %v4083 = vadd.f32 %v4043, %v4072
        %v4084 = vadd.f32 %v4044, %v4074
        %v4085 = vadd.f32 %v4045, %v4076
        %v4086 = vadd.f32 %v4046, %v4078
        %4087 = vset.pattern.permute.xlu0 71
        %4088 = vperm.xlu0 %4087, %v394
        %v4089 = vpop.permute.xlu0 %4088
        %4091 = vset.pattern.permute.xlu0 71
        %4092 = vperm.xlu0 %4091, %v395
        %v4093 = vpop.permute.xlu0 %4092
        %4095 = vset.pattern.permute.xlu0 71
        %4096 = vperm.xlu0 %4095, %v396
        %v4097 = vpop.permute.xlu0 %4096
        %4099 = vset.pattern.permute.xlu0 71
        %4100 = vperm.xlu0 %4099, %v397
        %v4101 = vpop.permute.xlu0 %4100
        %v4103 = vmul.f32 %v3556, %v4089
        %v4104 = vmul.f32 %v3562, %v4093
        %v4105 = vmul.f32 %v3568, %v4097
        %v4106 = vmul.f32 %v3574, %v4101
        %4111 = vrot.lane.b32.xlu0 %v4103, 32
        %v4112 = vpop.permute.xlu0 %4111
        %4113 = vrot.lane.b32.xlu0 %v4104, 32
        %v4114 = vpop.permute.xlu0 %4113
        %4115 = vrot.lane.b32.xlu0 %v4105, 32
        %v4116 = vpop.permute.xlu0 %4115
        %4117 = vrot.lane.b32.xlu0 %v4106, 32
        %v4118 = vpop.permute.xlu0 %4117
        %v4123 = vadd.f32 %v4083, %v4112
        %v4124 = vadd.f32 %v4084, %v4114
        %v4125 = vadd.f32 %v4085, %v4116
        %v4126 = vadd.f32 %v4086, %v4118
        %4127 = vset.pattern.permute.xlu0 72
        %4128 = vperm.xlu0 %4127, %v394
        %v4129 = vpop.permute.xlu0 %4128
        %4131 = vset.pattern.permute.xlu0 72
        %4132 = vperm.xlu0 %4131, %v395
        %v4133 = vpop.permute.xlu0 %4132
        %4135 = vset.pattern.permute.xlu0 72
        %4136 = vperm.xlu0 %4135, %v396
        %v4137 = vpop.permute.xlu0 %4136
        %4139 = vset.pattern.permute.xlu0 72
        %4140 = vperm.xlu0 %4139, %v397
        %v4141 = vpop.permute.xlu0 %4140
        %v4143 = vmul.f32 %v3643, %v4129
        %v4144 = vmul.f32 %v3649, %v4133
        %v4145 = vmul.f32 %v3655, %v4137
        %v4146 = vmul.f32 %v3661, %v4141
        %v4147 = vadd.f32 %v4123, %v4143
        %v4148 = vadd.f32 %v4124, %v4144
        %v4149 = vadd.f32 %v4125, %v4145
        %v4150 = vadd.f32 %v4126, %v4146
        %4151 = vset.pattern.permute.xlu0 73
        %4152 = vperm.xlu0 %4151, %v394
        %v4153 = vpop.permute.xlu0 %4152
        %4155 = vset.pattern.permute.xlu0 73
        %4156 = vperm.xlu0 %4155, %v395
        %v4157 = vpop.permute.xlu0 %4156
        %4159 = vset.pattern.permute.xlu0 73
        %4160 = vperm.xlu0 %4159, %v396
        %v4161 = vpop.permute.xlu0 %4160
        %4163 = vset.pattern.permute.xlu0 73
        %4164 = vperm.xlu0 %4163, %v397
        %v4165 = vpop.permute.xlu0 %4164
        %v4167 = vmul.f32 %v3643, %v4153
        %v4168 = vmul.f32 %v3649, %v4157
        %v4169 = vmul.f32 %v3655, %v4161
        %v4170 = vmul.f32 %v3661, %v4165
        %4175 = vrot.lane.b32.xlu0 %v4167, 96
        %v4176 = vpop.permute.xlu0 %4175
        %4177 = vrot.lane.b32.xlu0 %v4168, 96
        %v4178 = vpop.permute.xlu0 %4177
        %4179 = vrot.lane.b32.xlu0 %v4169, 96
        %v4180 = vpop.permute.xlu0 %4179
        %4181 = vrot.lane.b32.xlu0 %v4170, 96
        %v4182 = vpop.permute.xlu0 %4181
        %v4187 = vadd.f32 %v4147, %v4176
        %v4188 = vadd.f32 %v4148, %v4178
        %v4189 = vadd.f32 %v4149, %v4180
        %v4190 = vadd.f32 %v4150, %v4182
        %4191 = vset.pattern.permute.xlu0 74
        %4192 = vperm.xlu0 %4191, %v394
        %v4193 = vpop.permute.xlu0 %4192
        %4195 = vset.pattern.permute.xlu0 74
        %4196 = vperm.xlu0 %4195, %v395
        %v4197 = vpop.permute.xlu0 %4196
        %4199 = vset.pattern.permute.xlu0 74
        %4200 = vperm.xlu0 %4199, %v396
        %v4201 = vpop.permute.xlu0 %4200
        %4203 = vset.pattern.permute.xlu0 74
        %4204 = vperm.xlu0 %4203, %v397
        %v4205 = vpop.permute.xlu0 %4204
        %v4207 = vmul.f32 %v3643, %v4193
        %v4208 = vmul.f32 %v3649, %v4197
        %v4209 = vmul.f32 %v3655, %v4201
        %v4210 = vmul.f32 %v3661, %v4205
        %4215 = vrot.lane.b32.xlu0 %v4207, 64
        %v4216 = vpop.permute.xlu0 %4215
        %4217 = vrot.lane.b32.xlu0 %v4208, 64
        %v4218 = vpop.permute.xlu0 %4217
        %4219 = vrot.lane.b32.xlu0 %v4209, 64
        %v4220 = vpop.permute.xlu0 %4219
        %4221 = vrot.lane.b32.xlu0 %v4210, 64
        %v4222 = vpop.permute.xlu0 %4221
        %v4227 = vadd.f32 %v4187, %v4216
        %v4228 = vadd.f32 %v4188, %v4218
        %v4229 = vadd.f32 %v4189, %v4220
        %v4230 = vadd.f32 %v4190, %v4222
        %4231 = vset.pattern.permute.xlu0 75
        %4232 = vperm.xlu0 %4231, %v394
        %v4233 = vpop.permute.xlu0 %4232
        %4235 = vset.pattern.permute.xlu0 75
        %4236 = vperm.xlu0 %4235, %v395
        %v4237 = vpop.permute.xlu0 %4236
        %4239 = vset.pattern.permute.xlu0 75
        %4240 = vperm.xlu0 %4239, %v396
        %v4241 = vpop.permute.xlu0 %4240
        %4243 = vset.pattern.permute.xlu0 75
        %4244 = vperm.xlu0 %4243, %v397
        %v4245 = vpop.permute.xlu0 %4244
        %v4247 = vmul.f32 %v3643, %v4233
        %v4248 = vmul.f32 %v3649, %v4237
        %v4249 = vmul.f32 %v3655, %v4241
        %v4250 = vmul.f32 %v3661, %v4245
        %4255 = vrot.lane.b32.xlu0 %v4247, 32
        %v4256 = vpop.permute.xlu0 %4255
        %4257 = vrot.lane.b32.xlu0 %v4248, 32
        %v4258 = vpop.permute.xlu0 %4257
        %4259 = vrot.lane.b32.xlu0 %v4249, 32
        %v4260 = vpop.permute.xlu0 %4259
        %4261 = vrot.lane.b32.xlu0 %v4250, 32
        %v4262 = vpop.permute.xlu0 %4261
        %v4267 = vadd.f32 %v4227, %v4256
        %v4268 = vadd.f32 %v4228, %v4258
        %v4269 = vadd.f32 %v4229, %v4260
        %v4270 = vadd.f32 %v4230, %v4262
        %4271 = vset.pattern.permute.xlu0 76
        %4272 = vperm.xlu0 %4271, %v394
        %v4273 = vpop.permute.xlu0 %4272
        %4275 = vset.pattern.permute.xlu0 76
        %4276 = vperm.xlu0 %4275, %v395
        %v4277 = vpop.permute.xlu0 %4276
        %4279 = vset.pattern.permute.xlu0 76
        %4280 = vperm.xlu0 %4279, %v396
        %v4281 = vpop.permute.xlu0 %4280
        %4283 = vset.pattern.permute.xlu0 76
        %4284 = vperm.xlu0 %4283, %v397
        %v4285 = vpop.permute.xlu0 %4284
        %v4287 = vmul.f32 %v3645, %v4273
        %v4288 = vmul.f32 %v3651, %v4277
        %v4289 = vmul.f32 %v3657, %v4281
        %v4290 = vmul.f32 %v3663, %v4285
        %v4291 = vadd.f32 %v4267, %v4287
        %v4292 = vadd.f32 %v4268, %v4288
        %v4293 = vadd.f32 %v4269, %v4289
        %v4294 = vadd.f32 %v4270, %v4290
        %4295 = vset.pattern.permute.xlu0 77
        %4296 = vperm.xlu0 %4295, %v394
        %v4297 = vpop.permute.xlu0 %4296
        %4299 = vset.pattern.permute.xlu0 77
        %4300 = vperm.xlu0 %4299, %v395
        %v4301 = vpop.permute.xlu0 %4300
        %4303 = vset.pattern.permute.xlu0 77
        %4304 = vperm.xlu0 %4303, %v396
        %v4305 = vpop.permute.xlu0 %4304
        %4307 = vset.pattern.permute.xlu0 77
        %4308 = vperm.xlu0 %4307, %v397
        %v4309 = vpop.permute.xlu0 %4308
        %v4311 = vmul.f32 %v3645, %v4297
        %v4312 = vmul.f32 %v3651, %v4301
        %v4313 = vmul.f32 %v3657, %v4305
        %v4314 = vmul.f32 %v3663, %v4309
        %4319 = vrot.lane.b32.xlu0 %v4311, 96
        %v4320 = vpop.permute.xlu0 %4319
        %4321 = vrot.lane.b32.xlu0 %v4312, 96
        %v4322 = vpop.permute.xlu0 %4321
        %4323 = vrot.lane.b32.xlu0 %v4313, 96
        %v4324 = vpop.permute.xlu0 %4323
        %4325 = vrot.lane.b32.xlu0 %v4314, 96
        %v4326 = vpop.permute.xlu0 %4325
        %v4331 = vadd.f32 %v4291, %v4320
        %v4332 = vadd.f32 %v4292, %v4322
        %v4333 = vadd.f32 %v4293, %v4324
        %v4334 = vadd.f32 %v4294, %v4326
        %4335 = vset.pattern.permute.xlu0 78
        %4336 = vperm.xlu0 %4335, %v394
        %v4337 = vpop.permute.xlu0 %4336
        %4339 = vset.pattern.permute.xlu0 78
        %4340 = vperm.xlu0 %4339, %v395
        %v4341 = vpop.permute.xlu0 %4340
        %4343 = vset.pattern.permute.xlu0 78
        %4344 = vperm.xlu0 %4343, %v396
        %v4345 = vpop.permute.xlu0 %4344
        %4347 = vset.pattern.permute.xlu0 78
        %4348 = vperm.xlu0 %4347, %v397
        %v4349 = vpop.permute.xlu0 %4348
        %v4351 = vmul.f32 %v3645, %v4337
        %v4352 = vmul.f32 %v3651, %v4341
        %v4353 = vmul.f32 %v3657, %v4345
        %v4354 = vmul.f32 %v3663, %v4349
        %4359 = vrot.lane.b32.xlu0 %v4351, 64
        %v4360 = vpop.permute.xlu0 %4359
        %4361 = vrot.lane.b32.xlu0 %v4352, 64
        %v4362 = vpop.permute.xlu0 %4361
        %4363 = vrot.lane.b32.xlu0 %v4353, 64
        %v4364 = vpop.permute.xlu0 %4363
        %4365 = vrot.lane.b32.xlu0 %v4354, 64
        %v4366 = vpop.permute.xlu0 %4365
        %v4371 = vadd.f32 %v4331, %v4360
        %v4372 = vadd.f32 %v4332, %v4362
        %v4373 = vadd.f32 %v4333, %v4364
        %v4374 = vadd.f32 %v4334, %v4366
        %4375 = vset.pattern.permute.xlu0 79
        %4376 = vperm.xlu0 %4375, %v394
        %v4377 = vpop.permute.xlu0 %4376
        %4379 = vset.pattern.permute.xlu0 79
        %4380 = vperm.xlu0 %4379, %v395
        %v4381 = vpop.permute.xlu0 %4380
        %4383 = vset.pattern.permute.xlu0 79
        %4384 = vperm.xlu0 %4383, %v396
        %v4385 = vpop.permute.xlu0 %4384
        %4387 = vset.pattern.permute.xlu0 79
        %4388 = vperm.xlu0 %4387, %v397
        %v4389 = vpop.permute.xlu0 %4388
        %v4391 = vmul.f32 %v3645, %v4377
        %v4392 = vmul.f32 %v3651, %v4381
        %v4393 = vmul.f32 %v3657, %v4385
        %v4394 = vmul.f32 %v3663, %v4389
        %4399 = vrot.lane.b32.xlu0 %v4391, 32
        %v4400 = vpop.permute.xlu0 %4399
        %4401 = vrot.lane.b32.xlu0 %v4392, 32
        %v4402 = vpop.permute.xlu0 %4401
        %4403 = vrot.lane.b32.xlu0 %v4393, 32
        %v4404 = vpop.permute.xlu0 %4403
        %4405 = vrot.lane.b32.xlu0 %v4394, 32
        %v4406 = vpop.permute.xlu0 %4405
        %v4411 = vadd.f32 %v4371, %v4400
        %v4412 = vadd.f32 %v4372, %v4402
        %v4413 = vadd.f32 %v4373, %v4404
        %v4414 = vadd.f32 %v4374, %v4406
        %4415 = vset.pattern.permute.xlu0 80
        %4416 = vperm.xlu0 %4415, %v394
        %v4417 = vpop.permute.xlu0 %4416
        %4419 = vset.pattern.permute.xlu0 80
        %4420 = vperm.xlu0 %4419, %v395
        %v4421 = vpop.permute.xlu0 %4420
        %4423 = vset.pattern.permute.xlu0 80
        %4424 = vperm.xlu0 %4423, %v396
        %v4425 = vpop.permute.xlu0 %4424
        %4427 = vset.pattern.permute.xlu0 80
        %4428 = vperm.xlu0 %4427, %v397
        %v4429 = vpop.permute.xlu0 %4428
        %v4431 = vmul.f32 %v3732, %v4417
        %v4432 = vmul.f32 %v3738, %v4421
        %v4433 = vmul.f32 %v3744, %v4425
        %v4434 = vmul.f32 %v3750, %v4429
        %v4435 = vadd.f32 %v4411, %v4431
        %v4436 = vadd.f32 %v4412, %v4432
        %v4437 = vadd.f32 %v4413, %v4433
        %v4438 = vadd.f32 %v4414, %v4434
        %4439 = vset.pattern.permute.xlu0 81
        %4440 = vperm.xlu0 %4439, %v394
        %v4441 = vpop.permute.xlu0 %4440
        %4443 = vset.pattern.permute.xlu0 81
        %4444 = vperm.xlu0 %4443, %v395
        %v4445 = vpop.permute.xlu0 %4444
        %4447 = vset.pattern.permute.xlu0 81
        %4448 = vperm.xlu0 %4447, %v396
        %v4449 = vpop.permute.xlu0 %4448
        %4451 = vset.pattern.permute.xlu0 81
        %4452 = vperm.xlu0 %4451, %v397
        %v4453 = vpop.permute.xlu0 %4452
        %v4455 = vmul.f32 %v3732, %v4441
        %v4456 = vmul.f32 %v3738, %v4445
        %v4457 = vmul.f32 %v3744, %v4449
        %v4458 = vmul.f32 %v3750, %v4453
        %4463 = vrot.lane.b32.xlu0 %v4455, 96
        %v4464 = vpop.permute.xlu0 %4463
        %4465 = vrot.lane.b32.xlu0 %v4456, 96
        %v4466 = vpop.permute.xlu0 %4465
        %4467 = vrot.lane.b32.xlu0 %v4457, 96
        %v4468 = vpop.permute.xlu0 %4467
        %4469 = vrot.lane.b32.xlu0 %v4458, 96
        %v4470 = vpop.permute.xlu0 %4469
        %v4475 = vadd.f32 %v4435, %v4464
        %v4476 = vadd.f32 %v4436, %v4466
        %v4477 = vadd.f32 %v4437, %v4468
        %v4478 = vadd.f32 %v4438, %v4470
        %4479 = vset.pattern.permute.xlu0 82
        %4480 = vperm.xlu0 %4479, %v394
        %v4481 = vpop.permute.xlu0 %4480
        %4483 = vset.pattern.permute.xlu0 82
        %4484 = vperm.xlu0 %4483, %v395
        %v4485 = vpop.permute.xlu0 %4484
        %4487 = vset.pattern.permute.xlu0 82
        %4488 = vperm.xlu0 %4487, %v396
        %v4489 = vpop.permute.xlu0 %4488
        %4491 = vset.pattern.permute.xlu0 82
        %4492 = vperm.xlu0 %4491, %v397
        %v4493 = vpop.permute.xlu0 %4492
        %v4495 = vmul.f32 %v3732, %v4481
        %v4496 = vmul.f32 %v3738, %v4485
        %v4497 = vmul.f32 %v3744, %v4489
        %v4498 = vmul.f32 %v3750, %v4493
        %4503 = vrot.lane.b32.xlu0 %v4495, 64
        %v4504 = vpop.permute.xlu0 %4503
        %4505 = vrot.lane.b32.xlu0 %v4496, 64
        %v4506 = vpop.permute.xlu0 %4505
        %4507 = vrot.lane.b32.xlu0 %v4497, 64
        %v4508 = vpop.permute.xlu0 %4507
        %4509 = vrot.lane.b32.xlu0 %v4498, 64
        %v4510 = vpop.permute.xlu0 %4509
        %v4515 = vadd.f32 %v4475, %v4504
        %v4516 = vadd.f32 %v4476, %v4506
        %v4517 = vadd.f32 %v4477, %v4508
        %v4518 = vadd.f32 %v4478, %v4510
        %4519 = vset.pattern.permute.xlu0 83
        %4520 = vperm.xlu0 %4519, %v394
        %v4521 = vpop.permute.xlu0 %4520
        %4523 = vset.pattern.permute.xlu0 83
        %4524 = vperm.xlu0 %4523, %v395
        %v4525 = vpop.permute.xlu0 %4524
        %4527 = vset.pattern.permute.xlu0 83
        %4528 = vperm.xlu0 %4527, %v396
        %v4529 = vpop.permute.xlu0 %4528
        %4531 = vset.pattern.permute.xlu0 83
        %4532 = vperm.xlu0 %4531, %v397
        %v4533 = vpop.permute.xlu0 %4532
        %v4535 = vmul.f32 %v3732, %v4521
        %v4536 = vmul.f32 %v3738, %v4525
        %v4537 = vmul.f32 %v3744, %v4529
        %v4538 = vmul.f32 %v3750, %v4533
        %4543 = vrot.lane.b32.xlu0 %v4535, 32
        %v4544 = vpop.permute.xlu0 %4543
        %4545 = vrot.lane.b32.xlu0 %v4536, 32
        %v4546 = vpop.permute.xlu0 %4545
        %4547 = vrot.lane.b32.xlu0 %v4537, 32
        %v4548 = vpop.permute.xlu0 %4547
        %4549 = vrot.lane.b32.xlu0 %v4538, 32
        %v4550 = vpop.permute.xlu0 %4549
        %v4555 = vadd.f32 %v4515, %v4544
        %v4556 = vadd.f32 %v4516, %v4546
        %v4557 = vadd.f32 %v4517, %v4548
        %v4558 = vadd.f32 %v4518, %v4550
        %4559 = vset.pattern.permute.xlu0 84
        %4560 = vperm.xlu0 %4559, %v394
        %v4561 = vpop.permute.xlu0 %4560
        %4563 = vset.pattern.permute.xlu0 84
        %4564 = vperm.xlu0 %4563, %v395
        %v4565 = vpop.permute.xlu0 %4564
        %4567 = vset.pattern.permute.xlu0 84
        %4568 = vperm.xlu0 %4567, %v396
        %v4569 = vpop.permute.xlu0 %4568
        %4571 = vset.pattern.permute.xlu0 84
        %4572 = vperm.xlu0 %4571, %v397
        %v4573 = vpop.permute.xlu0 %4572
        %v4575 = vmul.f32 %v3734, %v4561
        %v4576 = vmul.f32 %v3740, %v4565
        %v4577 = vmul.f32 %v3746, %v4569
        %v4578 = vmul.f32 %v3752, %v4573
        %v4579 = vadd.f32 %v4555, %v4575
        %v4580 = vadd.f32 %v4556, %v4576
        %v4581 = vadd.f32 %v4557, %v4577
        %v4582 = vadd.f32 %v4558, %v4578
        %4583 = vset.pattern.permute.xlu0 85
        %4584 = vperm.xlu0 %4583, %v394
        %v4585 = vpop.permute.xlu0 %4584
        %4587 = vset.pattern.permute.xlu0 85
        %4588 = vperm.xlu0 %4587, %v395
        %v4589 = vpop.permute.xlu0 %4588
        %4591 = vset.pattern.permute.xlu0 85
        %4592 = vperm.xlu0 %4591, %v396
        %v4593 = vpop.permute.xlu0 %4592
        %4595 = vset.pattern.permute.xlu0 85
        %4596 = vperm.xlu0 %4595, %v397
        %v4597 = vpop.permute.xlu0 %4596
        %v4599 = vmul.f32 %v3734, %v4585
        %v4600 = vmul.f32 %v3740, %v4589
        %v4601 = vmul.f32 %v3746, %v4593
        %v4602 = vmul.f32 %v3752, %v4597
        %4607 = vrot.lane.b32.xlu0 %v4599, 96
        %v4608 = vpop.permute.xlu0 %4607
        %4609 = vrot.lane.b32.xlu0 %v4600, 96
        %v4610 = vpop.permute.xlu0 %4609
        %4611 = vrot.lane.b32.xlu0 %v4601, 96
        %v4612 = vpop.permute.xlu0 %4611
        %4613 = vrot.lane.b32.xlu0 %v4602, 96
        %v4614 = vpop.permute.xlu0 %4613
        %v4619 = vadd.f32 %v4579, %v4608
        %v4620 = vadd.f32 %v4580, %v4610
        %v4621 = vadd.f32 %v4581, %v4612
        %v4622 = vadd.f32 %v4582, %v4614
        %4623 = vset.pattern.permute.xlu0 86
        %4624 = vperm.xlu0 %4623, %v394
        %v4625 = vpop.permute.xlu0 %4624
        %4627 = vset.pattern.permute.xlu0 86
        %4628 = vperm.xlu0 %4627, %v395
        %v4629 = vpop.permute.xlu0 %4628
        %4631 = vset.pattern.permute.xlu0 86
        %4632 = vperm.xlu0 %4631, %v396
        %v4633 = vpop.permute.xlu0 %4632
        %4635 = vset.pattern.permute.xlu0 86
        %4636 = vperm.xlu0 %4635, %v397
        %v4637 = vpop.permute.xlu0 %4636
        %v4639 = vmul.f32 %v3734, %v4625
        %v4640 = vmul.f32 %v3740, %v4629
        %v4641 = vmul.f32 %v3746, %v4633
        %v4642 = vmul.f32 %v3752, %v4637
        %4647 = vrot.lane.b32.xlu0 %v4639, 64
        %v4648 = vpop.permute.xlu0 %4647
        %4649 = vrot.lane.b32.xlu0 %v4640, 64
        %v4650 = vpop.permute.xlu0 %4649
        %4651 = vrot.lane.b32.xlu0 %v4641, 64
        %v4652 = vpop.permute.xlu0 %4651
        %4653 = vrot.lane.b32.xlu0 %v4642, 64
        %v4654 = vpop.permute.xlu0 %4653
        %v4659 = vadd.f32 %v4619, %v4648
        %v4660 = vadd.f32 %v4620, %v4650
        %v4661 = vadd.f32 %v4621, %v4652
        %v4662 = vadd.f32 %v4622, %v4654
        %4663 = vset.pattern.permute.xlu0 87
        %4664 = vperm.xlu0 %4663, %v394
        %v4665 = vpop.permute.xlu0 %4664
        %4667 = vset.pattern.permute.xlu0 87
        %4668 = vperm.xlu0 %4667, %v395
        %v4669 = vpop.permute.xlu0 %4668
        %4671 = vset.pattern.permute.xlu0 87
        %4672 = vperm.xlu0 %4671, %v396
        %v4673 = vpop.permute.xlu0 %4672
        %4675 = vset.pattern.permute.xlu0 87
        %4676 = vperm.xlu0 %4675, %v397
        %v4677 = vpop.permute.xlu0 %4676
        %v4679 = vmul.f32 %v3734, %v4665
        %v4680 = vmul.f32 %v3740, %v4669
        %v4681 = vmul.f32 %v3746, %v4673
        %v4682 = vmul.f32 %v3752, %v4677
        %4687 = vrot.lane.b32.xlu0 %v4679, 32
        %v4688 = vpop.permute.xlu0 %4687
        %4689 = vrot.lane.b32.xlu0 %v4680, 32
        %v4690 = vpop.permute.xlu0 %4689
        %4691 = vrot.lane.b32.xlu0 %v4681, 32
        %v4692 = vpop.permute.xlu0 %4691
        %4693 = vrot.lane.b32.xlu0 %v4682, 32
        %v4694 = vpop.permute.xlu0 %4693
        %v4699 = vadd.f32 %v4659, %v4688
        %v4700 = vadd.f32 %v4660, %v4690
        %v4701 = vadd.f32 %v4661, %v4692
        %v4702 = vadd.f32 %v4662, %v4694
        %4703 = vset.pattern.permute.xlu0 88
        %4704 = vperm.xlu0 %4703, %v394
        %v4705 = vpop.permute.xlu0 %4704
        %4707 = vset.pattern.permute.xlu0 88
        %4708 = vperm.xlu0 %4707, %v395
        %v4709 = vpop.permute.xlu0 %4708
        %4711 = vset.pattern.permute.xlu0 88
        %4712 = vperm.xlu0 %4711, %v396
        %v4713 = vpop.permute.xlu0 %4712
        %4715 = vset.pattern.permute.xlu0 88
        %4716 = vperm.xlu0 %4715, %v397
        %v4717 = vpop.permute.xlu0 %4716
        %v4719 = vmul.f32 %v3821, %v4705
        %v4720 = vmul.f32 %v3827, %v4709
        %v4721 = vmul.f32 %v3833, %v4713
        %v4722 = vmul.f32 %v3839, %v4717
        %v4723 = vadd.f32 %v4699, %v4719
        %v4724 = vadd.f32 %v4700, %v4720
        %v4725 = vadd.f32 %v4701, %v4721
        %v4726 = vadd.f32 %v4702, %v4722
        %4727 = vset.pattern.permute.xlu0 89
        %4728 = vperm.xlu0 %4727, %v394
        %v4729 = vpop.permute.xlu0 %4728
        %4731 = vset.pattern.permute.xlu0 89
        %4732 = vperm.xlu0 %4731, %v395
        %v4733 = vpop.permute.xlu0 %4732
        %4735 = vset.pattern.permute.xlu0 89
        %4736 = vperm.xlu0 %4735, %v396
        %v4737 = vpop.permute.xlu0 %4736
        %4739 = vset.pattern.permute.xlu0 89
        %4740 = vperm.xlu0 %4739, %v397
        %v4741 = vpop.permute.xlu0 %4740
        %v4743 = vmul.f32 %v3821, %v4729
        %v4744 = vmul.f32 %v3827, %v4733
        %v4745 = vmul.f32 %v3833, %v4737
        %v4746 = vmul.f32 %v3839, %v4741
        %4751 = vrot.lane.b32.xlu0 %v4743, 96
        %v4752 = vpop.permute.xlu0 %4751
        %4753 = vrot.lane.b32.xlu0 %v4744, 96
        %v4754 = vpop.permute.xlu0 %4753
        %4755 = vrot.lane.b32.xlu0 %v4745, 96
        %v4756 = vpop.permute.xlu0 %4755
        %4757 = vrot.lane.b32.xlu0 %v4746, 96
        %v4758 = vpop.permute.xlu0 %4757
        %v4763 = vadd.f32 %v4723, %v4752
        %v4764 = vadd.f32 %v4724, %v4754
        %v4765 = vadd.f32 %v4725, %v4756
        %v4766 = vadd.f32 %v4726, %v4758
        %4767 = vset.pattern.permute.xlu0 90
        %4768 = vperm.xlu0 %4767, %v394
        %v4769 = vpop.permute.xlu0 %4768
        %4771 = vset.pattern.permute.xlu0 90
        %4772 = vperm.xlu0 %4771, %v395
        %v4773 = vpop.permute.xlu0 %4772
        %4775 = vset.pattern.permute.xlu0 90
        %4776 = vperm.xlu0 %4775, %v396
        %v4777 = vpop.permute.xlu0 %4776
        %4779 = vset.pattern.permute.xlu0 90
        %4780 = vperm.xlu0 %4779, %v397
        %v4781 = vpop.permute.xlu0 %4780
        %v4783 = vmul.f32 %v3821, %v4769
        %v4784 = vmul.f32 %v3827, %v4773
        %v4785 = vmul.f32 %v3833, %v4777
        %v4786 = vmul.f32 %v3839, %v4781
        %4791 = vrot.lane.b32.xlu0 %v4783, 64
        %v4792 = vpop.permute.xlu0 %4791
        %4793 = vrot.lane.b32.xlu0 %v4784, 64
        %v4794 = vpop.permute.xlu0 %4793
        %4795 = vrot.lane.b32.xlu0 %v4785, 64
        %v4796 = vpop.permute.xlu0 %4795
        %4797 = vrot.lane.b32.xlu0 %v4786, 64
        %v4798 = vpop.permute.xlu0 %4797
        %v4803 = vadd.f32 %v4763, %v4792
        %v4804 = vadd.f32 %v4764, %v4794
        %v4805 = vadd.f32 %v4765, %v4796
        %v4806 = vadd.f32 %v4766, %v4798
        %4807 = vset.pattern.permute.xlu0 91
        %4808 = vperm.xlu0 %4807, %v394
        %v4809 = vpop.permute.xlu0 %4808
        %4811 = vset.pattern.permute.xlu0 91
        %4812 = vperm.xlu0 %4811, %v395
        %v4813 = vpop.permute.xlu0 %4812
        %4815 = vset.pattern.permute.xlu0 91
        %4816 = vperm.xlu0 %4815, %v396
        %v4817 = vpop.permute.xlu0 %4816
        %4819 = vset.pattern.permute.xlu0 91
        %4820 = vperm.xlu0 %4819, %v397
        %v4821 = vpop.permute.xlu0 %4820
        %v4823 = vmul.f32 %v3821, %v4809
        %v4824 = vmul.f32 %v3827, %v4813
        %v4825 = vmul.f32 %v3833, %v4817
        %v4826 = vmul.f32 %v3839, %v4821
        %4831 = vrot.lane.b32.xlu0 %v4823, 32
        %v4832 = vpop.permute.xlu0 %4831
        %4833 = vrot.lane.b32.xlu0 %v4824, 32
        %v4834 = vpop.permute.xlu0 %4833
        %4835 = vrot.lane.b32.xlu0 %v4825, 32
        %v4836 = vpop.permute.xlu0 %4835
        %4837 = vrot.lane.b32.xlu0 %v4826, 32
        %v4838 = vpop.permute.xlu0 %4837
        %v4843 = vadd.f32 %v4803, %v4832
        %v4844 = vadd.f32 %v4804, %v4834
        %v4845 = vadd.f32 %v4805, %v4836
        %v4846 = vadd.f32 %v4806, %v4838
        %4847 = vset.pattern.permute.xlu0 92
        %4848 = vperm.xlu0 %4847, %v394
        %v4849 = vpop.permute.xlu0 %4848
        %4851 = vset.pattern.permute.xlu0 92
        %4852 = vperm.xlu0 %4851, %v395
        %v4853 = vpop.permute.xlu0 %4852
        %4855 = vset.pattern.permute.xlu0 92
        %4856 = vperm.xlu0 %4855, %v396
        %v4857 = vpop.permute.xlu0 %4856
        %4859 = vset.pattern.permute.xlu0 92
        %4860 = vperm.xlu0 %4859, %v397
        %v4861 = vpop.permute.xlu0 %4860
        %v4863 = vmul.f32 %v3823, %v4849
        %v4864 = vmul.f32 %v3829, %v4853
        %v4865 = vmul.f32 %v3835, %v4857
        %v4866 = vmul.f32 %v3841, %v4861
        %v4867 = vadd.f32 %v4843, %v4863
        %v4868 = vadd.f32 %v4844, %v4864
        %v4869 = vadd.f32 %v4845, %v4865
        %v4870 = vadd.f32 %v4846, %v4866
        %4871 = vset.pattern.permute.xlu0 93
        %4872 = vperm.xlu0 %4871, %v394
        %v4873 = vpop.permute.xlu0 %4872
        %4875 = vset.pattern.permute.xlu0 93
        %4876 = vperm.xlu0 %4875, %v395
        %v4877 = vpop.permute.xlu0 %4876
        %4879 = vset.pattern.permute.xlu0 93
        %4880 = vperm.xlu0 %4879, %v396
        %v4881 = vpop.permute.xlu0 %4880
        %4883 = vset.pattern.permute.xlu0 93
        %4884 = vperm.xlu0 %4883, %v397
        %v4885 = vpop.permute.xlu0 %4884
        %v4887 = vmul.f32 %v3823, %v4873
        %v4888 = vmul.f32 %v3829, %v4877
        %v4889 = vmul.f32 %v3835, %v4881
        %v4890 = vmul.f32 %v3841, %v4885
        %4895 = vrot.lane.b32.xlu0 %v4887, 96
        %v4896 = vpop.permute.xlu0 %4895
        %4897 = vrot.lane.b32.xlu0 %v4888, 96
        %v4898 = vpop.permute.xlu0 %4897
        %4899 = vrot.lane.b32.xlu0 %v4889, 96
        %v4900 = vpop.permute.xlu0 %4899
        %4901 = vrot.lane.b32.xlu0 %v4890, 96
        %v4902 = vpop.permute.xlu0 %4901
        %v4907 = vadd.f32 %v4867, %v4896
        %v4908 = vadd.f32 %v4868, %v4898
        %v4909 = vadd.f32 %v4869, %v4900
        %v4910 = vadd.f32 %v4870, %v4902
        %4911 = vset.pattern.permute.xlu0 94
        %4912 = vperm.xlu0 %4911, %v394
        %v4913 = vpop.permute.xlu0 %4912
        %4915 = vset.pattern.permute.xlu0 94
        %4916 = vperm.xlu0 %4915, %v395
        %v4917 = vpop.permute.xlu0 %4916
        %4919 = vset.pattern.permute.xlu0 94
        %4920 = vperm.xlu0 %4919, %v396
        %v4921 = vpop.permute.xlu0 %4920
        %4923 = vset.pattern.permute.xlu0 94
        %4924 = vperm.xlu0 %4923, %v397
        %v4925 = vpop.permute.xlu0 %4924
        %v4927 = vmul.f32 %v3823, %v4913
        %v4928 = vmul.f32 %v3829, %v4917
        %v4929 = vmul.f32 %v3835, %v4921
        %v4930 = vmul.f32 %v3841, %v4925
        %4935 = vrot.lane.b32.xlu0 %v4927, 64
        %v4936 = vpop.permute.xlu0 %4935
        %4937 = vrot.lane.b32.xlu0 %v4928, 64
        %v4938 = vpop.permute.xlu0 %4937
        %4939 = vrot.lane.b32.xlu0 %v4929, 64
        %v4940 = vpop.permute.xlu0 %4939
        %4941 = vrot.lane.b32.xlu0 %v4930, 64
        %v4942 = vpop.permute.xlu0 %4941
        %v4947 = vadd.f32 %v4907, %v4936
        %v4948 = vadd.f32 %v4908, %v4938
        %v4949 = vadd.f32 %v4909, %v4940
        %v4950 = vadd.f32 %v4910, %v4942
        %4951 = vset.pattern.permute.xlu0 95
        %4952 = vperm.xlu0 %4951, %v394
        %v4953 = vpop.permute.xlu0 %4952
        %4955 = vset.pattern.permute.xlu0 95
        %4956 = vperm.xlu0 %4955, %v395
        %v4957 = vpop.permute.xlu0 %4956
        %4959 = vset.pattern.permute.xlu0 95
        %4960 = vperm.xlu0 %4959, %v396
        %v4961 = vpop.permute.xlu0 %4960
        %4963 = vset.pattern.permute.xlu0 95
        %4964 = vperm.xlu0 %4963, %v397
        %v4965 = vpop.permute.xlu0 %4964
        %v4967 = vmul.f32 %v3823, %v4953
        %v4968 = vmul.f32 %v3829, %v4957
        %v4969 = vmul.f32 %v3835, %v4961
        %v4970 = vmul.f32 %v3841, %v4965
        %4975 = vrot.lane.b32.xlu0 %v4967, 32
        %v4976 = vpop.permute.xlu0 %4975
        %4977 = vrot.lane.b32.xlu0 %v4968, 32
        %v4978 = vpop.permute.xlu0 %4977
        %4979 = vrot.lane.b32.xlu0 %v4969, 32
        %v4980 = vpop.permute.xlu0 %4979
        %4981 = vrot.lane.b32.xlu0 %v4970, 32
        %v4982 = vpop.permute.xlu0 %4981
        %v4987 = vadd.f32 %v4947, %v4976
        %v4988 = vadd.f32 %v4948, %v4978
        %v4989 = vadd.f32 %v4949, %v4980
        %v4990 = vadd.f32 %v4950, %v4982
        %4991 = vrot.lane.b32.xlu0 %v376, 32
        %v4992 = vpop.permute.xlu0 %4991
        %4993 = vrot.lane.b32.xlu0 %v381, 32
        %v4994 = vpop.permute.xlu0 %4993
        %4995 = vrot.lane.b32.xlu0 %v386, 32
        %v4996 = vpop.permute.xlu0 %4995
        %4997 = vrot.lane.b32.xlu0 %v391, 32
        %v4998 = vpop.permute.xlu0 %4997
        %v4999 = vsel %vm430, %v4992, 0
        %v5001 = vsel %vm430, %v4994, 0
        %v5003 = vsel %vm430, %v4996, 0
        %v5005 = vsel %vm430, %v4998, 0
        %5007 = vmatprep.subr.mxu0 %v399
        %5008 = vmatpush1.msra.mxu0 %v398
        %5009 = vmatprep.subr.mxu0 %v407
        %5010 = vmatpush1.msra.mxu0 %v406
        %5011 = vmatprep.subr.mxu0 %v415
        %5012 = vmatpush1.msra.mxu0 %v414
        %5013 = vmatprep.subr.mxu0 %v423
        %5014 = vmatpush1.msra.mxu0 %v422
        %5015 = vmatprep.subr.mxu0 0.0
        %5016 = vmatpush1.msra.mxu0 0.0
        %5017 = vmatprep.subr.mxu0 0.0
        %5018 = vmatpush1.msra.mxu0 0.0
        %5019 = vmatprep.subr.mxu0 0.0
        %5020 = vmatpush1.msra.mxu0 0.0
        %5021 = vmatprep.subr.mxu0 0.0
        %5022 = vmatpush1.msra.mxu0 0.0
        %5023 = vmatprep.subr.mxu0 0.0
        %5024 = vmatpush1.msra.mxu0 0.0
        %5025 = vmatprep.subr.mxu0 0.0
        %5026 = vmatpush1.msra.mxu0 0.0
        %5027 = vmatprep.subr.mxu0 0.0
        %5028 = vmatpush1.msra.mxu0 0.0
        %5029 = vmatprep.subr.mxu0 0.0
        %5030 = vmatpush1.msra.mxu0 0.0
        %5031 = vmatprep.subr.mxu0 0.0
        %5032 = vmatpush1.msra.mxu0 0.0
        %5033 = vmatprep.subr.mxu0 0.0
        %5034 = vmatpush1.msra.mxu0 0.0
        %5035 = vmatprep.subr.mxu0 0.0
        %5036 = vmatpush1.msra.mxu0 0.0
        %5037 = vmatprep.subr.mxu0 0.0
        %5038 = vmatpush1.msra.mxu0 0.0
        %5039 = vmatprep.subr.mxu0 0.0
        %5040 = vmatpush1.msra.mxu0 0.0
        %5041 = vmatprep.subr.mxu0 0.0
        %5042 = vmatpush1.msra.mxu0 0.0
        %5043 = vmatprep.subr.mxu0 0.0
        %5044 = vmatpush1.msra.mxu0 0.0
        %5045 = vmatprep.subr.mxu0 0.0
        %5046 = vmatpush1.msra.mxu0 0.0
        %5047 = vmatprep.subr.mxu0 0.0
        %5048 = vmatpush1.msra.mxu0 0.0
        %5049 = vmatprep.subr.mxu0 0.0
        %5050 = vmatpush1.msra.mxu0 0.0
        %5051 = vmatprep.subr.mxu0 0.0
        %5052 = vmatpush1.msra.mxu0 0.0
        %5053 = vmatprep.subr.mxu0 0.0
        %5054 = vmatpush1.msra.mxu0 0.0
        %5055 = vmatprep.subr.mxu0 0.0
        %5056 = vmatpush1.msra.mxu0 0.0
        %5057 = vmatprep.subr.mxu0 0.0
        %5058 = vmatpush1.msra.mxu0 0.0
        %5059 = vmatprep.subr.mxu0 0.0
        %5060 = vmatpush1.msra.mxu0 0.0
        %5061 = vmatprep.subr.mxu0 0.0
        %5062 = vmatpush1.msra.mxu0 0.0
        %5063 = vmatprep.subr.mxu0 0.0
        %5064 = vmatpush1.msra.mxu0 0.0
        %5065 = vmatprep.subr.mxu0 0.0
        %5066 = vmatpush1.msra.mxu0 0.0
        %5067 = vmatprep.subr.mxu0 0.0
        %5068 = vmatpush1.msra.mxu0 0.0
        %5069 = vmatprep.subr.mxu0 0.0
        %5070 = vmatpush1.msra.mxu0 0.0
        %5071 = vmatprep.mubr.f32.mxu0 0.0
        %5072 = vmatmul.mubr.f32.gmra.mrb[0].mxu0 %v4999
        %v5073 = vpop.f32.mrb[0].mxu0
        %v5074 = vadd.f32 0.0, %v5073
        %v5075 = vpop.f32.mrb[0].mxu0
        %v5076 = vadd.f32 0.0, %v5075
        %5077 = vmatprep.mubr.f32.mxu0 0.0
        %5078 = vmatmul.mubr.f32.gmra.mrb[0].mxu0 %v5001
        %v5079 = vpop.f32.mrb[0].mxu0
        %v5080 = vadd.f32 0.0, %v5079
        %v5081 = vpop.f32.mrb[0].mxu0
        %v5082 = vadd.f32 0.0, %v5081
        %5083 = vmatprep.mubr.f32.mxu0 0.0
        %5084 = vmatmul.mubr.f32.gmra.mrb[0].mxu0 %v5003
        %v5085 = vpop.f32.mrb[0].mxu0
        %v5086 = vadd.f32 0.0, %v5085
        %v5087 = vpop.f32.mrb[0].mxu0
        %v5088 = vadd.f32 0.0, %v5087
        %5089 = vmatprep.mubr.f32.mxu0 0.0
        %5090 = vmatmul.mubr.f32.gmra.mrb[0].mxu0 %v5005
        %v5091 = vpop.f32.mrb[0].mxu0
        %v5092 = vadd.f32 0.0, %v5091
        %v5093 = vpop.f32.mrb[0].mxu0
        %v5094 = vadd.f32 0.0, %v5093
        %5095 = vdwg.mxu0
        %5096 = vmatprep.subr.mxu0 %v401
        %5097 = vmatpush1.msra.mxu0 %v400
        %5098 = vmatprep.subr.mxu0 %v409
        %5099 = vmatpush1.msra.mxu0 %v408
        %5100 = vmatprep.subr.mxu0 %v417
        %5101 = vmatpush1.msra.mxu0 %v416
        %5102 = vmatprep.subr.mxu0 %v425
        %5103 = vmatpush1.msra.mxu0 %v424
        %5104 = vmatprep.subr.mxu0 0.0
        %5105 = vmatpush1.msra.mxu0 0.0
        %5106 = vmatprep.subr.mxu0 0.0
        %5107 = vmatpush1.msra.mxu0 0.0
        %5108 = vmatprep.subr.mxu0 0.0
        %5109 = vmatpush1.msra.mxu0 0.0
        %5110 = vmatprep.subr.mxu0 0.0
        %5111 = vmatpush1.msra.mxu0 0.0
        %5112 = vmatprep.subr.mxu0 0.0
        %5113 = vmatpush1.msra.mxu0 0.0
        %5114 = vmatprep.subr.mxu0 0.0
        %5115 = vmatpush1.msra.mxu0 0.0
        %5116 = vmatprep.subr.mxu0 0.0
        %5117 = vmatpush1.msra.mxu0 0.0
        %5118 = vmatprep.subr.mxu0 0.0
        %5119 = vmatpush1.msra.mxu0 0.0
        %5120 = vmatprep.subr.mxu0 0.0
        %5121 = vmatpush1.msra.mxu0 0.0
        %5122 = vmatprep.subr.mxu0 0.0
        %5123 = vmatpush1.msra.mxu0 0.0
        %5124 = vmatprep.subr.mxu0 0.0
        %5125 = vmatpush1.msra.mxu0 0.0
        %5126 = vmatprep.subr.mxu0 0.0
        %5127 = vmatpush1.msra.mxu0 0.0
        %5128 = vmatprep.subr.mxu0 0.0
        %5129 = vmatpush1.msra.mxu0 0.0
        %5130 = vmatprep.subr.mxu0 0.0
        %5131 = vmatpush1.msra.mxu0 0.0
        %5132 = vmatprep.subr.mxu0 0.0
        %5133 = vmatpush1.msra.mxu0 0.0
        %5134 = vmatprep.subr.mxu0 0.0
        %5135 = vmatpush1.msra.mxu0 0.0
        %5136 = vmatprep.subr.mxu0 0.0
        %5137 = vmatpush1.msra.mxu0 0.0
        %5138 = vmatprep.subr.mxu0 0.0
        %5139 = vmatpush1.msra.mxu0 0.0
        %5140 = vmatprep.subr.mxu0 0.0
        %5141 = vmatpush1.msra.mxu0 0.0
        %5142 = vmatprep.subr.mxu0 0.0
        %5143 = vmatpush1.msra.mxu0 0.0
        %5144 = vmatprep.subr.mxu0 0.0
        %5145 = vmatpush1.msra.mxu0 0.0
        %5146 = vmatprep.subr.mxu0 0.0
        %5147 = vmatpush1.msra.mxu0 0.0
        %5148 = vmatprep.subr.mxu0 0.0
        %5149 = vmatpush1.msra.mxu0 0.0
        %5150 = vmatprep.subr.mxu0 0.0
        %5151 = vmatpush1.msra.mxu0 0.0
        %5152 = vmatprep.subr.mxu0 0.0
        %5153 = vmatpush1.msra.mxu0 0.0
        %5154 = vmatprep.subr.mxu0 0.0
        %5155 = vmatpush1.msra.mxu0 0.0
        %5156 = vmatprep.subr.mxu0 0.0
        %5157 = vmatpush1.msra.mxu0 0.0
        %5158 = vmatprep.subr.mxu0 0.0
        %5159 = vmatpush1.msra.mxu0 0.0
        %5160 = vmatprep.mubr.f32.mxu0 0.0
        %5161 = vmatmul.mubr.f32.gmra.mrb[0].mxu0 %v4999
        %v5162 = vpop.f32.mrb[0].mxu0
        %v5163 = vadd.f32 0.0, %v5162
        %v5164 = vpop.f32.mrb[0].mxu0
        %v5165 = vadd.f32 0.0, %v5164
        %5166 = vmatprep.mubr.f32.mxu0 0.0
        %5167 = vmatmul.mubr.f32.gmra.mrb[0].mxu0 %v5001
        %v5168 = vpop.f32.mrb[0].mxu0
        %v5169 = vadd.f32 0.0, %v5168
        %v5170 = vpop.f32.mrb[0].mxu0
        %v5171 = vadd.f32 0.0, %v5170
        %5172 = vmatprep.mubr.f32.mxu0 0.0
        %5173 = vmatmul.mubr.f32.gmra.mrb[0].mxu0 %v5003
        %v5174 = vpop.f32.mrb[0].mxu0
        %v5175 = vadd.f32 0.0, %v5174
        %v5176 = vpop.f32.mrb[0].mxu0
        %v5177 = vadd.f32 0.0, %v5176
        %5178 = vmatprep.mubr.f32.mxu0 0.0
        %5179 = vmatmul.mubr.f32.gmra.mrb[0].mxu0 %v5005
        %v5180 = vpop.f32.mrb[0].mxu0
        %v5181 = vadd.f32 0.0, %v5180
        %v5182 = vpop.f32.mrb[0].mxu0
        %v5183 = vadd.f32 0.0, %v5182
        %5184 = vdwg.mxu0
        %5185 = vmatprep.subr.mxu0 %v403
        %5186 = vmatpush1.msra.mxu0 %v402
        %5187 = vmatprep.subr.mxu0 %v411
        %5188 = vmatpush1.msra.mxu0 %v410
        %5189 = vmatprep.subr.mxu0 %v419
        %5190 = vmatpush1.msra.mxu0 %v418
        %5191 = vmatprep.subr.mxu0 %v427
        %5192 = vmatpush1.msra.mxu0 %v426
        %5193 = vmatprep.subr.mxu0 0.0
        %5194 = vmatpush1.msra.mxu0 0.0
        %5195 = vmatprep.subr.mxu0 0.0
        %5196 = vmatpush1.msra.mxu0 0.0
        %5197 = vmatprep.subr.mxu0 0.0
        %5198 = vmatpush1.msra.mxu0 0.0
        %5199 = vmatprep.subr.mxu0 0.0
        %5200 = vmatpush1.msra.mxu0 0.0
        %5201 = vmatprep.subr.mxu0 0.0
        %5202 = vmatpush1.msra.mxu0 0.0
        %5203 = vmatprep.subr.mxu0 0.0
        %5204 = vmatpush1.msra.mxu0 0.0
        %5205 = vmatprep.subr.mxu0 0.0
        %5206 = vmatpush1.msra.mxu0 0.0
        %5207 = vmatprep.subr.mxu0 0.0
        %5208 = vmatpush1.msra.mxu0 0.0
        %5209 = vmatprep.subr.mxu0 0.0
        %5210 = vmatpush1.msra.mxu0 0.0
        %5211 = vmatprep.subr.mxu0 0.0
        %5212 = vmatpush1.msra.mxu0 0.0
        %5213 = vmatprep.subr.mxu0 0.0
        %5214 = vmatpush1.msra.mxu0 0.0
        %5215 = vmatprep.subr.mxu0 0.0
        %5216 = vmatpush1.msra.mxu0 0.0
        %5217 = vmatprep.subr.mxu0 0.0
        %5218 = vmatpush1.msra.mxu0 0.0
        %5219 = vmatprep.subr.mxu0 0.0
        %5220 = vmatpush1.msra.mxu0 0.0
        %5221 = vmatprep.subr.mxu0 0.0
        %5222 = vmatpush1.msra.mxu0 0.0
        %5223 = vmatprep.subr.mxu0 0.0
        %5224 = vmatpush1.msra.mxu0 0.0
        %5225 = vmatprep.subr.mxu0 0.0
        %5226 = vmatpush1.msra.mxu0 0.0
        %5227 = vmatprep.subr.mxu0 0.0
        %5228 = vmatpush1.msra.mxu0 0.0
        %5229 = vmatprep.subr.mxu0 0.0
        %5230 = vmatpush1.msra.mxu0 0.0
        %5231 = vmatprep.subr.mxu0 0.0
        %5232 = vmatpush1.msra.mxu0 0.0
        %5233 = vmatprep.subr.mxu0 0.0
        %5234 = vmatpush1.msra.mxu0 0.0
        %5235 = vmatprep.subr.mxu0 0.0
        %5236 = vmatpush1.msra.mxu0 0.0
        %5237 = vmatprep.subr.mxu0 0.0
        %5238 = vmatpush1.msra.mxu0 0.0
        %5239 = vmatprep.subr.mxu0 0.0
        %5240 = vmatpush1.msra.mxu0 0.0
        %5241 = vmatprep.subr.mxu0 0.0
        %5242 = vmatpush1.msra.mxu0 0.0
        %5243 = vmatprep.subr.mxu0 0.0
        %5244 = vmatpush1.msra.mxu0 0.0
        %5245 = vmatprep.subr.mxu0 0.0
        %5246 = vmatpush1.msra.mxu0 0.0
        %5247 = vmatprep.subr.mxu0 0.0
        %5248 = vmatpush1.msra.mxu0 0.0
        %5249 = vmatprep.mubr.f32.mxu0 0.0
        %5250 = vmatmul.mubr.f32.gmra.mrb[0].mxu0 %v4999
        %v5251 = vpop.f32.mrb[0].mxu0
        %v5252 = vadd.f32 0.0, %v5251
        %v5253 = vpop.f32.mrb[0].mxu0
        %v5254 = vadd.f32 0.0, %v5253
        %5255 = vmatprep.mubr.f32.mxu0 0.0
        %5256 = vmatmul.mubr.f32.gmra.mrb[0].mxu0 %v5001
        %v5257 = vpop.f32.mrb[0].mxu0
        %v5258 = vadd.f32 0.0, %v5257
        %v5259 = vpop.f32.mrb[0].mxu0
        %v5260 = vadd.f32 0.0, %v5259
        %5261 = vmatprep.mubr.f32.mxu0 0.0
        %5262 = vmatmul.mubr.f32.gmra.mrb[0].mxu0 %v5003
        %v5263 = vpop.f32.mrb[0].mxu0
        %v5264 = vadd.f32 0.0, %v5263
        %v5265 = vpop.f32.mrb[0].mxu0
        %v5266 = vadd.f32 0.0, %v5265
        %5267 = vmatprep.mubr.f32.mxu0 0.0
        %5268 = vmatmul.mubr.f32.gmra.mrb[0].mxu0 %v5005
        %v5269 = vpop.f32.mrb[0].mxu0
        %v5270 = vadd.f32 0.0, %v5269
        %v5271 = vpop.f32.mrb[0].mxu0
        %v5272 = vadd.f32 0.0, %v5271
        %5273 = vdwg.mxu0
        %5274 = vmatprep.subr.mxu0 %v405
        %5275 = vmatpush1.msra.mxu0 %v404
        %5276 = vmatprep.subr.mxu0 %v413
        %5277 = vmatpush1.msra.mxu0 %v412
        %5278 = vmatprep.subr.mxu0 %v421
        %5279 = vmatpush1.msra.mxu0 %v420
        %5280 = vmatprep.subr.mxu0 %v429
        %5281 = vmatpush1.msra.mxu0 %v428
        %5282 = vmatprep.subr.mxu0 0.0
        %5283 = vmatpush1.msra.mxu0 0.0
        %5284 = vmatprep.subr.mxu0 0.0
        %5285 = vmatpush1.msra.mxu0 0.0
        %5286 = vmatprep.subr.mxu0 0.0
        %5287 = vmatpush1.msra.mxu0 0.0
        %5288 = vmatprep.subr.mxu0 0.0
        %5289 = vmatpush1.msra.mxu0 0.0
        %5290 = vmatprep.subr.mxu0 0.0
        %5291 = vmatpush1.msra.mxu0 0.0
        %5292 = vmatprep.subr.mxu0 0.0
        %5293 = vmatpush1.msra.mxu0 0.0
        %5294 = vmatprep.subr.mxu0 0.0
        %5295 = vmatpush1.msra.mxu0 0.0
        %5296 = vmatprep.subr.mxu0 0.0
        %5297 = vmatpush1.msra.mxu0 0.0
        %5298 = vmatprep.subr.mxu0 0.0
        %5299 = vmatpush1.msra.mxu0 0.0
        %5300 = vmatprep.subr.mxu0 0.0
        %5301 = vmatpush1.msra.mxu0 0.0
        %5302 = vmatprep.subr.mxu0 0.0
        %5303 = vmatpush1.msra.mxu0 0.0
        %5304 = vmatprep.subr.mxu0 0.0
        %5305 = vmatpush1.msra.mxu0 0.0
        %5306 = vmatprep.subr.mxu0 0.0
        %5307 = vmatpush1.msra.mxu0 0.0
        %5308 = vmatprep.subr.mxu0 0.0
        %5309 = vmatpush1.msra.mxu0 0.0
        %5310 = vmatprep.subr.mxu0 0.0
        %5311 = vmatpush1.msra.mxu0 0.0
        %5312 = vmatprep.subr.mxu0 0.0
        %5313 = vmatpush1.msra.mxu0 0.0
        %5314 = vmatprep.subr.mxu0 0.0
        %5315 = vmatpush1.msra.mxu0 0.0
        %5316 = vmatprep.subr.mxu0 0.0
        %5317 = vmatpush1.msra.mxu0 0.0
        %5318 = vmatprep.subr.mxu0 0.0
        %5319 = vmatpush1.msra.mxu0 0.0
        %5320 = vmatprep.subr.mxu0 0.0
        %5321 = vmatpush1.msra.mxu0 0.0
        %5322 = vmatprep.subr.mxu0 0.0
        %5323 = vmatpush1.msra.mxu0 0.0
        %5324 = vmatprep.subr.mxu0 0.0
        %5325 = vmatpush1.msra.mxu0 0.0
        %5326 = vmatprep.subr.mxu0 0.0
        %5327 = vmatpush1.msra.mxu0 0.0
        %5328 = vmatprep.subr.mxu0 0.0
        %5329 = vmatpush1.msra.mxu0 0.0
        %5330 = vmatprep.subr.mxu0 0.0
        %5331 = vmatpush1.msra.mxu0 0.0
        %5332 = vmatprep.subr.mxu0 0.0
        %5333 = vmatpush1.msra.mxu0 0.0
        %5334 = vmatprep.subr.mxu0 0.0
        %5335 = vmatpush1.msra.mxu0 0.0
        %5336 = vmatprep.subr.mxu0 0.0
        %5337 = vmatpush1.msra.mxu0 0.0
        %5338 = vmatprep.mubr.f32.mxu0 0.0
        %5339 = vmatmul.mubr.f32.gmra.mrb[0].mxu0 %v4999
        %v5340 = vpop.f32.mrb[0].mxu0
        %v5341 = vadd.f32 0.0, %v5340
        %v5342 = vpop.f32.mrb[0].mxu0
        %v5343 = vadd.f32 0.0, %v5342
        %5344 = vmatprep.mubr.f32.mxu0 0.0
        %5345 = vmatmul.mubr.f32.gmra.mrb[0].mxu0 %v5001
        %v5346 = vpop.f32.mrb[0].mxu0
        %v5347 = vadd.f32 0.0, %v5346
        %v5348 = vpop.f32.mrb[0].mxu0
        %v5349 = vadd.f32 0.0, %v5348
        %5350 = vmatprep.mubr.f32.mxu0 0.0
        %5351 = vmatmul.mubr.f32.gmra.mrb[0].mxu0 %v5003
        %v5352 = vpop.f32.mrb[0].mxu0
        %v5353 = vadd.f32 0.0, %v5352
        %v5354 = vpop.f32.mrb[0].mxu0
        %v5355 = vadd.f32 0.0, %v5354
        %5356 = vmatprep.mubr.f32.mxu0 0.0
        %5357 = vmatmul.mubr.f32.gmra.mrb[0].mxu0 %v5005
        %v5358 = vpop.f32.mrb[0].mxu0
        %v5359 = vadd.f32 0.0, %v5358
        %v5360 = vpop.f32.mrb[0].mxu0
        %v5361 = vadd.f32 0.0, %v5360
        %5362 = vdwg.mxu0
        %5363 = vset.pattern.permute.xlu0 96
        %5364 = vperm.xlu0 %5363, %v394
        %v5365 = vpop.permute.xlu0 %5364
        %5367 = vset.pattern.permute.xlu0 96
        %5368 = vperm.xlu0 %5367, %v395
        %v5369 = vpop.permute.xlu0 %5368
        %5371 = vset.pattern.permute.xlu0 96
        %5372 = vperm.xlu0 %5371, %v396
        %v5373 = vpop.permute.xlu0 %5372
        %5375 = vset.pattern.permute.xlu0 96
        %5376 = vperm.xlu0 %5375, %v397
        %v5377 = vpop.permute.xlu0 %5376
        %v5379 = vmul.f32 %v5074, %v5365
        %v5380 = vmul.f32 %v5080, %v5369
        %v5381 = vmul.f32 %v5086, %v5373
        %v5382 = vmul.f32 %v5092, %v5377
        %5383 = vset.pattern.permute.xlu0 97
        %5384 = vperm.xlu0 %5383, %v394
        %v5385 = vpop.permute.xlu0 %5384
        %5387 = vset.pattern.permute.xlu0 97
        %5388 = vperm.xlu0 %5387, %v395
        %v5389 = vpop.permute.xlu0 %5388
        %5391 = vset.pattern.permute.xlu0 97
        %5392 = vperm.xlu0 %5391, %v396
        %v5393 = vpop.permute.xlu0 %5392
        %5395 = vset.pattern.permute.xlu0 97
        %5396 = vperm.xlu0 %5395, %v397
        %v5397 = vpop.permute.xlu0 %5396
        %v5399 = vmul.f32 %v5074, %v5385
        %v5400 = vmul.f32 %v5080, %v5389
        %v5401 = vmul.f32 %v5086, %v5393
        %v5402 = vmul.f32 %v5092, %v5397
        %5407 = vrot.lane.b32.xlu0 %v5399, 96
        %v5408 = vpop.permute.xlu0 %5407
        %5409 = vrot.lane.b32.xlu0 %v5400, 96
        %v5410 = vpop.permute.xlu0 %5409
        %5411 = vrot.lane.b32.xlu0 %v5401, 96
        %v5412 = vpop.permute.xlu0 %5411
        %5413 = vrot.lane.b32.xlu0 %v5402, 96
        %v5414 = vpop.permute.xlu0 %5413
        %v5419 = vadd.f32 %v5379, %v5408
        %v5420 = vadd.f32 %v5380, %v5410
        %v5421 = vadd.f32 %v5381, %v5412
        %v5422 = vadd.f32 %v5382, %v5414
        %5423 = vset.pattern.permute.xlu0 98
        %5424 = vperm.xlu0 %5423, %v394
        %v5425 = vpop.permute.xlu0 %5424
        %5427 = vset.pattern.permute.xlu0 98
        %5428 = vperm.xlu0 %5427, %v395
        %v5429 = vpop.permute.xlu0 %5428
        %5431 = vset.pattern.permute.xlu0 98
        %5432 = vperm.xlu0 %5431, %v396
        %v5433 = vpop.permute.xlu0 %5432
        %5435 = vset.pattern.permute.xlu0 98
        %5436 = vperm.xlu0 %5435, %v397
        %v5437 = vpop.permute.xlu0 %5436
        %v5439 = vmul.f32 %v5074, %v5425
        %v5440 = vmul.f32 %v5080, %v5429
        %v5441 = vmul.f32 %v5086, %v5433
        %v5442 = vmul.f32 %v5092, %v5437
        %5447 = vrot.lane.b32.xlu0 %v5439, 64
        %v5448 = vpop.permute.xlu0 %5447
        %5449 = vrot.lane.b32.xlu0 %v5440, 64
        %v5450 = vpop.permute.xlu0 %5449
        %5451 = vrot.lane.b32.xlu0 %v5441, 64
        %v5452 = vpop.permute.xlu0 %5451
        %5453 = vrot.lane.b32.xlu0 %v5442, 64
        %v5454 = vpop.permute.xlu0 %5453
        %v5459 = vadd.f32 %v5419, %v5448
        %v5460 = vadd.f32 %v5420, %v5450
        %v5461 = vadd.f32 %v5421, %v5452
        %v5462 = vadd.f32 %v5422, %v5454
        %5463 = vset.pattern.permute.xlu0 99
        %5464 = vperm.xlu0 %5463, %v394
        %v5465 = vpop.permute.xlu0 %5464
        %5467 = vset.pattern.permute.xlu0 99
        %5468 = vperm.xlu0 %5467, %v395
        %v5469 = vpop.permute.xlu0 %5468
        %5471 = vset.pattern.permute.xlu0 99
        %5472 = vperm.xlu0 %5471, %v396
        %v5473 = vpop.permute.xlu0 %5472
        %5475 = vset.pattern.permute.xlu0 99
        %5476 = vperm.xlu0 %5475, %v397
        %v5477 = vpop.permute.xlu0 %5476
        %v5479 = vmul.f32 %v5074, %v5465
        %v5480 = vmul.f32 %v5080, %v5469
        %v5481 = vmul.f32 %v5086, %v5473
        %v5482 = vmul.f32 %v5092, %v5477
        %5487 = vrot.lane.b32.xlu0 %v5479, 32
        %v5488 = vpop.permute.xlu0 %5487
        %5489 = vrot.lane.b32.xlu0 %v5480, 32
        %v5490 = vpop.permute.xlu0 %5489
        %5491 = vrot.lane.b32.xlu0 %v5481, 32
        %v5492 = vpop.permute.xlu0 %5491
        %5493 = vrot.lane.b32.xlu0 %v5482, 32
        %v5494 = vpop.permute.xlu0 %5493
        %v5499 = vadd.f32 %v5459, %v5488
        %v5500 = vadd.f32 %v5460, %v5490
        %v5501 = vadd.f32 %v5461, %v5492
        %v5502 = vadd.f32 %v5462, %v5494
        %5503 = vset.pattern.permute.xlu0 100
        %5504 = vperm.xlu0 %5503, %v394
        %v5505 = vpop.permute.xlu0 %5504
        %5507 = vset.pattern.permute.xlu0 100
        %5508 = vperm.xlu0 %5507, %v395
        %v5509 = vpop.permute.xlu0 %5508
        %5511 = vset.pattern.permute.xlu0 100
        %5512 = vperm.xlu0 %5511, %v396
        %v5513 = vpop.permute.xlu0 %5512
        %5515 = vset.pattern.permute.xlu0 100
        %5516 = vperm.xlu0 %5515, %v397
        %v5517 = vpop.permute.xlu0 %5516
        %v5519 = vmul.f32 %v5076, %v5505
        %v5520 = vmul.f32 %v5082, %v5509
        %v5521 = vmul.f32 %v5088, %v5513
        %v5522 = vmul.f32 %v5094, %v5517
        %v5523 = vadd.f32 %v5499, %v5519
        %v5524 = vadd.f32 %v5500, %v5520
        %v5525 = vadd.f32 %v5501, %v5521
        %v5526 = vadd.f32 %v5502, %v5522
        %5527 = vset.pattern.permute.xlu0 101
        %5528 = vperm.xlu0 %5527, %v394
        %v5529 = vpop.permute.xlu0 %5528
        %5531 = vset.pattern.permute.xlu0 101
        %5532 = vperm.xlu0 %5531, %v395
        %v5533 = vpop.permute.xlu0 %5532
        %5535 = vset.pattern.permute.xlu0 101
        %5536 = vperm.xlu0 %5535, %v396
        %v5537 = vpop.permute.xlu0 %5536
        %5539 = vset.pattern.permute.xlu0 101
        %5540 = vperm.xlu0 %5539, %v397
        %v5541 = vpop.permute.xlu0 %5540
        %v5543 = vmul.f32 %v5076, %v5529
        %v5544 = vmul.f32 %v5082, %v5533
        %v5545 = vmul.f32 %v5088, %v5537
        %v5546 = vmul.f32 %v5094, %v5541
        %5551 = vrot.lane.b32.xlu0 %v5543, 96
        %v5552 = vpop.permute.xlu0 %5551
        %5553 = vrot.lane.b32.xlu0 %v5544, 96
        %v5554 = vpop.permute.xlu0 %5553
        %5555 = vrot.lane.b32.xlu0 %v5545, 96
        %v5556 = vpop.permute.xlu0 %5555
        %5557 = vrot.lane.b32.xlu0 %v5546, 96
        %v5558 = vpop.permute.xlu0 %5557
        %v5563 = vadd.f32 %v5523, %v5552
        %v5564 = vadd.f32 %v5524, %v5554
        %v5565 = vadd.f32 %v5525, %v5556
        %v5566 = vadd.f32 %v5526, %v5558
        %5567 = vset.pattern.permute.xlu0 102
        %5568 = vperm.xlu0 %5567, %v394
        %v5569 = vpop.permute.xlu0 %5568
        %5571 = vset.pattern.permute.xlu0 102
        %5572 = vperm.xlu0 %5571, %v395
        %v5573 = vpop.permute.xlu0 %5572
        %5575 = vset.pattern.permute.xlu0 102
        %5576 = vperm.xlu0 %5575, %v396
        %v5577 = vpop.permute.xlu0 %5576
        %5579 = vset.pattern.permute.xlu0 102
        %5580 = vperm.xlu0 %5579, %v397
        %v5581 = vpop.permute.xlu0 %5580
        %v5583 = vmul.f32 %v5076, %v5569
        %v5584 = vmul.f32 %v5082, %v5573
        %v5585 = vmul.f32 %v5088, %v5577
        %v5586 = vmul.f32 %v5094, %v5581
        %5591 = vrot.lane.b32.xlu0 %v5583, 64
        %v5592 = vpop.permute.xlu0 %5591
        %5593 = vrot.lane.b32.xlu0 %v5584, 64
        %v5594 = vpop.permute.xlu0 %5593
        %5595 = vrot.lane.b32.xlu0 %v5585, 64
        %v5596 = vpop.permute.xlu0 %5595
        %5597 = vrot.lane.b32.xlu0 %v5586, 64
        %v5598 = vpop.permute.xlu0 %5597
        %v5603 = vadd.f32 %v5563, %v5592
        %v5604 = vadd.f32 %v5564, %v5594
        %v5605 = vadd.f32 %v5565, %v5596
        %v5606 = vadd.f32 %v5566, %v5598
        %5607 = vset.pattern.permute.xlu0 103
        %5608 = vperm.xlu0 %5607, %v394
        %v5609 = vpop.permute.xlu0 %5608
        %5611 = vset.pattern.permute.xlu0 103
        %5612 = vperm.xlu0 %5611, %v395
        %v5613 = vpop.permute.xlu0 %5612
        %5615 = vset.pattern.permute.xlu0 103
        %5616 = vperm.xlu0 %5615, %v396
        %v5617 = vpop.permute.xlu0 %5616
        %5619 = vset.pattern.permute.xlu0 103
        %5620 = vperm.xlu0 %5619, %v397
        %v5621 = vpop.permute.xlu0 %5620
        %v5623 = vmul.f32 %v5076, %v5609
        %v5624 = vmul.f32 %v5082, %v5613
        %v5625 = vmul.f32 %v5088, %v5617
        %v5626 = vmul.f32 %v5094, %v5621
        %5631 = vrot.lane.b32.xlu0 %v5623, 32
        %v5632 = vpop.permute.xlu0 %5631
        %5633 = vrot.lane.b32.xlu0 %v5624, 32
        %v5634 = vpop.permute.xlu0 %5633
        %5635 = vrot.lane.b32.xlu0 %v5625, 32
        %v5636 = vpop.permute.xlu0 %5635
        %5637 = vrot.lane.b32.xlu0 %v5626, 32
        %v5638 = vpop.permute.xlu0 %5637
        %v5643 = vadd.f32 %v5603, %v5632
        %v5644 = vadd.f32 %v5604, %v5634
        %v5645 = vadd.f32 %v5605, %v5636
        %v5646 = vadd.f32 %v5606, %v5638
        %5647 = vset.pattern.permute.xlu0 104
        %5648 = vperm.xlu0 %5647, %v394
        %v5649 = vpop.permute.xlu0 %5648
        %5651 = vset.pattern.permute.xlu0 104
        %5652 = vperm.xlu0 %5651, %v395
        %v5653 = vpop.permute.xlu0 %5652
        %5655 = vset.pattern.permute.xlu0 104
        %5656 = vperm.xlu0 %5655, %v396
        %v5657 = vpop.permute.xlu0 %5656
        %5659 = vset.pattern.permute.xlu0 104
        %5660 = vperm.xlu0 %5659, %v397
        %v5661 = vpop.permute.xlu0 %5660
        %v5663 = vmul.f32 %v5163, %v5649
        %v5664 = vmul.f32 %v5169, %v5653
        %v5665 = vmul.f32 %v5175, %v5657
        %v5666 = vmul.f32 %v5181, %v5661
        %v5667 = vadd.f32 %v5643, %v5663
        %v5668 = vadd.f32 %v5644, %v5664
        %v5669 = vadd.f32 %v5645, %v5665
        %v5670 = vadd.f32 %v5646, %v5666
        %5671 = vset.pattern.permute.xlu0 105
        %5672 = vperm.xlu0 %5671, %v394
        %v5673 = vpop.permute.xlu0 %5672
        %5675 = vset.pattern.permute.xlu0 105
        %5676 = vperm.xlu0 %5675, %v395
        %v5677 = vpop.permute.xlu0 %5676
        %5679 = vset.pattern.permute.xlu0 105
        %5680 = vperm.xlu0 %5679, %v396
        %v5681 = vpop.permute.xlu0 %5680
        %5683 = vset.pattern.permute.xlu0 105
        %5684 = vperm.xlu0 %5683, %v397
        %v5685 = vpop.permute.xlu0 %5684
        %v5687 = vmul.f32 %v5163, %v5673
        %v5688 = vmul.f32 %v5169, %v5677
        %v5689 = vmul.f32 %v5175, %v5681
        %v5690 = vmul.f32 %v5181, %v5685
        %5695 = vrot.lane.b32.xlu0 %v5687, 96
        %v5696 = vpop.permute.xlu0 %5695
        %5697 = vrot.lane.b32.xlu0 %v5688, 96
        %v5698 = vpop.permute.xlu0 %5697
        %5699 = vrot.lane.b32.xlu0 %v5689, 96
        %v5700 = vpop.permute.xlu0 %5699
        %5701 = vrot.lane.b32.xlu0 %v5690, 96
        %v5702 = vpop.permute.xlu0 %5701
        %v5707 = vadd.f32 %v5667, %v5696
        %v5708 = vadd.f32 %v5668, %v5698
        %v5709 = vadd.f32 %v5669, %v5700
        %v5710 = vadd.f32 %v5670, %v5702
        %5711 = vset.pattern.permute.xlu0 106
        %5712 = vperm.xlu0 %5711, %v394
        %v5713 = vpop.permute.xlu0 %5712
        %5715 = vset.pattern.permute.xlu0 106
        %5716 = vperm.xlu0 %5715, %v395
        %v5717 = vpop.permute.xlu0 %5716
        %5719 = vset.pattern.permute.xlu0 106
        %5720 = vperm.xlu0 %5719, %v396
        %v5721 = vpop.permute.xlu0 %5720
        %5723 = vset.pattern.permute.xlu0 106
        %5724 = vperm.xlu0 %5723, %v397
        %v5725 = vpop.permute.xlu0 %5724
        %v5727 = vmul.f32 %v5163, %v5713
        %v5728 = vmul.f32 %v5169, %v5717
        %v5729 = vmul.f32 %v5175, %v5721
        %v5730 = vmul.f32 %v5181, %v5725
        %5735 = vrot.lane.b32.xlu0 %v5727, 64
        %v5736 = vpop.permute.xlu0 %5735
        %5737 = vrot.lane.b32.xlu0 %v5728, 64
        %v5738 = vpop.permute.xlu0 %5737
        %5739 = vrot.lane.b32.xlu0 %v5729, 64
        %v5740 = vpop.permute.xlu0 %5739
        %5741 = vrot.lane.b32.xlu0 %v5730, 64
        %v5742 = vpop.permute.xlu0 %5741
        %v5747 = vadd.f32 %v5707, %v5736
        %v5748 = vadd.f32 %v5708, %v5738
        %v5749 = vadd.f32 %v5709, %v5740
        %v5750 = vadd.f32 %v5710, %v5742
        %5751 = vset.pattern.permute.xlu0 107
        %5752 = vperm.xlu0 %5751, %v394
        %v5753 = vpop.permute.xlu0 %5752
        %5755 = vset.pattern.permute.xlu0 107
        %5756 = vperm.xlu0 %5755, %v395
        %v5757 = vpop.permute.xlu0 %5756
        %5759 = vset.pattern.permute.xlu0 107
        %5760 = vperm.xlu0 %5759, %v396
        %v5761 = vpop.permute.xlu0 %5760
        %5763 = vset.pattern.permute.xlu0 107
        %5764 = vperm.xlu0 %5763, %v397
        %v5765 = vpop.permute.xlu0 %5764
        %v5767 = vmul.f32 %v5163, %v5753
        %v5768 = vmul.f32 %v5169, %v5757
        %v5769 = vmul.f32 %v5175, %v5761
        %v5770 = vmul.f32 %v5181, %v5765
        %5775 = vrot.lane.b32.xlu0 %v5767, 32
        %v5776 = vpop.permute.xlu0 %5775
        %5777 = vrot.lane.b32.xlu0 %v5768, 32
        %v5778 = vpop.permute.xlu0 %5777
        %5779 = vrot.lane.b32.xlu0 %v5769, 32
        %v5780 = vpop.permute.xlu0 %5779
        %5781 = vrot.lane.b32.xlu0 %v5770, 32
        %v5782 = vpop.permute.xlu0 %5781
        %v5787 = vadd.f32 %v5747, %v5776
        %v5788 = vadd.f32 %v5748, %v5778
        %v5789 = vadd.f32 %v5749, %v5780
        %v5790 = vadd.f32 %v5750, %v5782
        %5791 = vset.pattern.permute.xlu0 108
        %5792 = vperm.xlu0 %5791, %v394
        %v5793 = vpop.permute.xlu0 %5792
        %5795 = vset.pattern.permute.xlu0 108
        %5796 = vperm.xlu0 %5795, %v395
        %v5797 = vpop.permute.xlu0 %5796
        %5799 = vset.pattern.permute.xlu0 108
        %5800 = vperm.xlu0 %5799, %v396
        %v5801 = vpop.permute.xlu0 %5800
        %5803 = vset.pattern.permute.xlu0 108
        %5804 = vperm.xlu0 %5803, %v397
        %v5805 = vpop.permute.xlu0 %5804
        %v5807 = vmul.f32 %v5165, %v5793
        %v5808 = vmul.f32 %v5171, %v5797
        %v5809 = vmul.f32 %v5177, %v5801
        %v5810 = vmul.f32 %v5183, %v5805
        %v5811 = vadd.f32 %v5787, %v5807
        %v5812 = vadd.f32 %v5788, %v5808
        %v5813 = vadd.f32 %v5789, %v5809
        %v5814 = vadd.f32 %v5790, %v5810
        %5815 = vset.pattern.permute.xlu0 109
        %5816 = vperm.xlu0 %5815, %v394
        %v5817 = vpop.permute.xlu0 %5816
        %5819 = vset.pattern.permute.xlu0 109
        %5820 = vperm.xlu0 %5819, %v395
        %v5821 = vpop.permute.xlu0 %5820
        %5823 = vset.pattern.permute.xlu0 109
        %5824 = vperm.xlu0 %5823, %v396
        %v5825 = vpop.permute.xlu0 %5824
        %5827 = vset.pattern.permute.xlu0 109
        %5828 = vperm.xlu0 %5827, %v397
        %v5829 = vpop.permute.xlu0 %5828
        %v5831 = vmul.f32 %v5165, %v5817
        %v5832 = vmul.f32 %v5171, %v5821
        %v5833 = vmul.f32 %v5177, %v5825
        %v5834 = vmul.f32 %v5183, %v5829
        %5839 = vrot.lane.b32.xlu0 %v5831, 96
        %v5840 = vpop.permute.xlu0 %5839
        %5841 = vrot.lane.b32.xlu0 %v5832, 96
        %v5842 = vpop.permute.xlu0 %5841
        %5843 = vrot.lane.b32.xlu0 %v5833, 96
        %v5844 = vpop.permute.xlu0 %5843
        %5845 = vrot.lane.b32.xlu0 %v5834, 96
        %v5846 = vpop.permute.xlu0 %5845
        %v5851 = vadd.f32 %v5811, %v5840
        %v5852 = vadd.f32 %v5812, %v5842
        %v5853 = vadd.f32 %v5813, %v5844
        %v5854 = vadd.f32 %v5814, %v5846
        %5855 = vset.pattern.permute.xlu0 110
        %5856 = vperm.xlu0 %5855, %v394
        %v5857 = vpop.permute.xlu0 %5856
        %5859 = vset.pattern.permute.xlu0 110
        %5860 = vperm.xlu0 %5859, %v395
        %v5861 = vpop.permute.xlu0 %5860
        %5863 = vset.pattern.permute.xlu0 110
        %5864 = vperm.xlu0 %5863, %v396
        %v5865 = vpop.permute.xlu0 %5864
        %5867 = vset.pattern.permute.xlu0 110
        %5868 = vperm.xlu0 %5867, %v397
        %v5869 = vpop.permute.xlu0 %5868
        %v5871 = vmul.f32 %v5165, %v5857
        %v5872 = vmul.f32 %v5171, %v5861
        %v5873 = vmul.f32 %v5177, %v5865
        %v5874 = vmul.f32 %v5183, %v5869
        %5879 = vrot.lane.b32.xlu0 %v5871, 64
        %v5880 = vpop.permute.xlu0 %5879
        %5881 = vrot.lane.b32.xlu0 %v5872, 64
        %v5882 = vpop.permute.xlu0 %5881
        %5883 = vrot.lane.b32.xlu0 %v5873, 64
        %v5884 = vpop.permute.xlu0 %5883
        %5885 = vrot.lane.b32.xlu0 %v5874, 64
        %v5886 = vpop.permute.xlu0 %5885
        %v5891 = vadd.f32 %v5851, %v5880
        %v5892 = vadd.f32 %v5852, %v5882
        %v5893 = vadd.f32 %v5853, %v5884
        %v5894 = vadd.f32 %v5854, %v5886
        %5895 = vset.pattern.permute.xlu0 111
        %5896 = vperm.xlu0 %5895, %v394
        %v5897 = vpop.permute.xlu0 %5896
        %5899 = vset.pattern.permute.xlu0 111
        %5900 = vperm.xlu0 %5899, %v395
        %v5901 = vpop.permute.xlu0 %5900
        %5903 = vset.pattern.permute.xlu0 111
        %5904 = vperm.xlu0 %5903, %v396
        %v5905 = vpop.permute.xlu0 %5904
        %5907 = vset.pattern.permute.xlu0 111
        %5908 = vperm.xlu0 %5907, %v397
        %v5909 = vpop.permute.xlu0 %5908
        %v5911 = vmul.f32 %v5165, %v5897
        %v5912 = vmul.f32 %v5171, %v5901
        %v5913 = vmul.f32 %v5177, %v5905
        %v5914 = vmul.f32 %v5183, %v5909
        %5919 = vrot.lane.b32.xlu0 %v5911, 32
        %v5920 = vpop.permute.xlu0 %5919
        %5921 = vrot.lane.b32.xlu0 %v5912, 32
        %v5922 = vpop.permute.xlu0 %5921
        %5923 = vrot.lane.b32.xlu0 %v5913, 32
        %v5924 = vpop.permute.xlu0 %5923
        %5925 = vrot.lane.b32.xlu0 %v5914, 32
        %v5926 = vpop.permute.xlu0 %5925
        %v5931 = vadd.f32 %v5891, %v5920
        %v5932 = vadd.f32 %v5892, %v5922
        %v5933 = vadd.f32 %v5893, %v5924
        %v5934 = vadd.f32 %v5894, %v5926
        %5935 = vset.pattern.permute.xlu0 112
        %5936 = vperm.xlu0 %5935, %v394
        %v5937 = vpop.permute.xlu0 %5936
        %5939 = vset.pattern.permute.xlu0 112
        %5940 = vperm.xlu0 %5939, %v395
        %v5941 = vpop.permute.xlu0 %5940
        %5943 = vset.pattern.permute.xlu0 112
        %5944 = vperm.xlu0 %5943, %v396
        %v5945 = vpop.permute.xlu0 %5944
        %5947 = vset.pattern.permute.xlu0 112
        %5948 = vperm.xlu0 %5947, %v397
        %v5949 = vpop.permute.xlu0 %5948
        %v5951 = vmul.f32 %v5252, %v5937
        %v5952 = vmul.f32 %v5258, %v5941
        %v5953 = vmul.f32 %v5264, %v5945
        %v5954 = vmul.f32 %v5270, %v5949
        %v5955 = vadd.f32 %v5931, %v5951
        %v5956 = vadd.f32 %v5932, %v5952
        %v5957 = vadd.f32 %v5933, %v5953
        %v5958 = vadd.f32 %v5934, %v5954
        %5959 = vset.pattern.permute.xlu0 113
        %5960 = vperm.xlu0 %5959, %v394
        %v5961 = vpop.permute.xlu0 %5960
        %5963 = vset.pattern.permute.xlu0 113
        %5964 = vperm.xlu0 %5963, %v395
        %v5965 = vpop.permute.xlu0 %5964
        %5967 = vset.pattern.permute.xlu0 113
        %5968 = vperm.xlu0 %5967, %v396
        %v5969 = vpop.permute.xlu0 %5968
        %5971 = vset.pattern.permute.xlu0 113
        %5972 = vperm.xlu0 %5971, %v397
        %v5973 = vpop.permute.xlu0 %5972
        %v5975 = vmul.f32 %v5252, %v5961
        %v5976 = vmul.f32 %v5258, %v5965
        %v5977 = vmul.f32 %v5264, %v5969
        %v5978 = vmul.f32 %v5270, %v5973
        %5983 = vrot.lane.b32.xlu0 %v5975, 96
        %v5984 = vpop.permute.xlu0 %5983
        %5985 = vrot.lane.b32.xlu0 %v5976, 96
        %v5986 = vpop.permute.xlu0 %5985
        %5987 = vrot.lane.b32.xlu0 %v5977, 96
        %v5988 = vpop.permute.xlu0 %5987
        %5989 = vrot.lane.b32.xlu0 %v5978, 96
        %v5990 = vpop.permute.xlu0 %5989
        %v5995 = vadd.f32 %v5955, %v5984
        %v5996 = vadd.f32 %v5956, %v5986
        %v5997 = vadd.f32 %v5957, %v5988
        %v5998 = vadd.f32 %v5958, %v5990
        %5999 = vset.pattern.permute.xlu0 114
        %6000 = vperm.xlu0 %5999, %v394
        %v6001 = vpop.permute.xlu0 %6000
        %6003 = vset.pattern.permute.xlu0 114
        %6004 = vperm.xlu0 %6003, %v395
        %v6005 = vpop.permute.xlu0 %6004
        %6007 = vset.pattern.permute.xlu0 114
        %6008 = vperm.xlu0 %6007, %v396
        %v6009 = vpop.permute.xlu0 %6008
        %6011 = vset.pattern.permute.xlu0 114
        %6012 = vperm.xlu0 %6011, %v397
        %v6013 = vpop.permute.xlu0 %6012
        %v6015 = vmul.f32 %v5252, %v6001
        %v6016 = vmul.f32 %v5258, %v6005
        %v6017 = vmul.f32 %v5264, %v6009
        %v6018 = vmul.f32 %v5270, %v6013
        %6023 = vrot.lane.b32.xlu0 %v6015, 64
        %v6024 = vpop.permute.xlu0 %6023
        %6025 = vrot.lane.b32.xlu0 %v6016, 64
        %v6026 = vpop.permute.xlu0 %6025
        %6027 = vrot.lane.b32.xlu0 %v6017, 64
        %v6028 = vpop.permute.xlu0 %6027
        %6029 = vrot.lane.b32.xlu0 %v6018, 64
        %v6030 = vpop.permute.xlu0 %6029
        %v6035 = vadd.f32 %v5995, %v6024
        %v6036 = vadd.f32 %v5996, %v6026
        %v6037 = vadd.f32 %v5997, %v6028
        %v6038 = vadd.f32 %v5998, %v6030
        %6039 = vset.pattern.permute.xlu0 115
        %6040 = vperm.xlu0 %6039, %v394
        %v6041 = vpop.permute.xlu0 %6040
        %6043 = vset.pattern.permute.xlu0 115
        %6044 = vperm.xlu0 %6043, %v395
        %v6045 = vpop.permute.xlu0 %6044
        %6047 = vset.pattern.permute.xlu0 115
        %6048 = vperm.xlu0 %6047, %v396
        %v6049 = vpop.permute.xlu0 %6048
        %6051 = vset.pattern.permute.xlu0 115
        %6052 = vperm.xlu0 %6051, %v397
        %v6053 = vpop.permute.xlu0 %6052
        %v6055 = vmul.f32 %v5252, %v6041
        %v6056 = vmul.f32 %v5258, %v6045
        %v6057 = vmul.f32 %v5264, %v6049
        %v6058 = vmul.f32 %v5270, %v6053
        %6063 = vrot.lane.b32.xlu0 %v6055, 32
        %v6064 = vpop.permute.xlu0 %6063
        %6065 = vrot.lane.b32.xlu0 %v6056, 32
        %v6066 = vpop.permute.xlu0 %6065
        %6067 = vrot.lane.b32.xlu0 %v6057, 32
        %v6068 = vpop.permute.xlu0 %6067
        %6069 = vrot.lane.b32.xlu0 %v6058, 32
        %v6070 = vpop.permute.xlu0 %6069
        %v6075 = vadd.f32 %v6035, %v6064
        %v6076 = vadd.f32 %v6036, %v6066
        %v6077 = vadd.f32 %v6037, %v6068
        %v6078 = vadd.f32 %v6038, %v6070
        %6079 = vset.pattern.permute.xlu0 116
        %6080 = vperm.xlu0 %6079, %v394
        %v6081 = vpop.permute.xlu0 %6080
        %6083 = vset.pattern.permute.xlu0 116
        %6084 = vperm.xlu0 %6083, %v395
        %v6085 = vpop.permute.xlu0 %6084
        %6087 = vset.pattern.permute.xlu0 116
        %6088 = vperm.xlu0 %6087, %v396
        %v6089 = vpop.permute.xlu0 %6088
        %6091 = vset.pattern.permute.xlu0 116
        %6092 = vperm.xlu0 %6091, %v397
        %v6093 = vpop.permute.xlu0 %6092
        %v6095 = vmul.f32 %v5254, %v6081
        %v6096 = vmul.f32 %v5260, %v6085
        %v6097 = vmul.f32 %v5266, %v6089
        %v6098 = vmul.f32 %v5272, %v6093
        %v6099 = vadd.f32 %v6075, %v6095
        %v6100 = vadd.f32 %v6076, %v6096
        %v6101 = vadd.f32 %v6077, %v6097
        %v6102 = vadd.f32 %v6078, %v6098
        %6103 = vset.pattern.permute.xlu0 117
        %6104 = vperm.xlu0 %6103, %v394
        %v6105 = vpop.permute.xlu0 %6104
        %6107 = vset.pattern.permute.xlu0 117
        %6108 = vperm.xlu0 %6107, %v395
        %v6109 = vpop.permute.xlu0 %6108
        %6111 = vset.pattern.permute.xlu0 117
        %6112 = vperm.xlu0 %6111, %v396
        %v6113 = vpop.permute.xlu0 %6112
        %6115 = vset.pattern.permute.xlu0 117
        %6116 = vperm.xlu0 %6115, %v397
        %v6117 = vpop.permute.xlu0 %6116
        %v6119 = vmul.f32 %v5254, %v6105
        %v6120 = vmul.f32 %v5260, %v6109
        %v6121 = vmul.f32 %v5266, %v6113
        %v6122 = vmul.f32 %v5272, %v6117
        %6127 = vrot.lane.b32.xlu0 %v6119, 96
        %v6128 = vpop.permute.xlu0 %6127
        %6129 = vrot.lane.b32.xlu0 %v6120, 96
        %v6130 = vpop.permute.xlu0 %6129
        %6131 = vrot.lane.b32.xlu0 %v6121, 96
        %v6132 = vpop.permute.xlu0 %6131
        %6133 = vrot.lane.b32.xlu0 %v6122, 96
        %v6134 = vpop.permute.xlu0 %6133
        %v6139 = vadd.f32 %v6099, %v6128
        %v6140 = vadd.f32 %v6100, %v6130
        %v6141 = vadd.f32 %v6101, %v6132
        %v6142 = vadd.f32 %v6102, %v6134
        %6143 = vset.pattern.permute.xlu0 118
        %6144 = vperm.xlu0 %6143, %v394
        %v6145 = vpop.permute.xlu0 %6144
        %6147 = vset.pattern.permute.xlu0 118
        %6148 = vperm.xlu0 %6147, %v395
        %v6149 = vpop.permute.xlu0 %6148
        %6151 = vset.pattern.permute.xlu0 118
        %6152 = vperm.xlu0 %6151, %v396
        %v6153 = vpop.permute.xlu0 %6152
        %6155 = vset.pattern.permute.xlu0 118
        %6156 = vperm.xlu0 %6155, %v397
        %v6157 = vpop.permute.xlu0 %6156
        %v6159 = vmul.f32 %v5254, %v6145
        %v6160 = vmul.f32 %v5260, %v6149
        %v6161 = vmul.f32 %v5266, %v6153
        %v6162 = vmul.f32 %v5272, %v6157
        %6167 = vrot.lane.b32.xlu0 %v6159, 64
        %v6168 = vpop.permute.xlu0 %6167
        %6169 = vrot.lane.b32.xlu0 %v6160, 64
        %v6170 = vpop.permute.xlu0 %6169
        %6171 = vrot.lane.b32.xlu0 %v6161, 64
        %v6172 = vpop.permute.xlu0 %6171
        %6173 = vrot.lane.b32.xlu0 %v6162, 64
        %v6174 = vpop.permute.xlu0 %6173
        %v6179 = vadd.f32 %v6139, %v6168
        %v6180 = vadd.f32 %v6140, %v6170
        %v6181 = vadd.f32 %v6141, %v6172
        %v6182 = vadd.f32 %v6142, %v6174
        %6183 = vset.pattern.permute.xlu0 119
        %6184 = vperm.xlu0 %6183, %v394
        %v6185 = vpop.permute.xlu0 %6184
        %6187 = vset.pattern.permute.xlu0 119
        %6188 = vperm.xlu0 %6187, %v395
        %v6189 = vpop.permute.xlu0 %6188
        %6191 = vset.pattern.permute.xlu0 119
        %6192 = vperm.xlu0 %6191, %v396
        %v6193 = vpop.permute.xlu0 %6192
        %6195 = vset.pattern.permute.xlu0 119
        %6196 = vperm.xlu0 %6195, %v397
        %v6197 = vpop.permute.xlu0 %6196
        %v6199 = vmul.f32 %v5254, %v6185
        %v6200 = vmul.f32 %v5260, %v6189
        %v6201 = vmul.f32 %v5266, %v6193
        %v6202 = vmul.f32 %v5272, %v6197
        %6207 = vrot.lane.b32.xlu0 %v6199, 32
        %v6208 = vpop.permute.xlu0 %6207
        %6209 = vrot.lane.b32.xlu0 %v6200, 32
        %v6210 = vpop.permute.xlu0 %6209
        %6211 = vrot.lane.b32.xlu0 %v6201, 32
        %v6212 = vpop.permute.xlu0 %6211
        %6213 = vrot.lane.b32.xlu0 %v6202, 32
        %v6214 = vpop.permute.xlu0 %6213
        %v6219 = vadd.f32 %v6179, %v6208
        %v6220 = vadd.f32 %v6180, %v6210
        %v6221 = vadd.f32 %v6181, %v6212
        %v6222 = vadd.f32 %v6182, %v6214
        %6223 = vset.pattern.permute.xlu0 120
        %6224 = vperm.xlu0 %6223, %v394
        %v6225 = vpop.permute.xlu0 %6224
        %6227 = vset.pattern.permute.xlu0 120
        %6228 = vperm.xlu0 %6227, %v395
        %v6229 = vpop.permute.xlu0 %6228
        %6231 = vset.pattern.permute.xlu0 120
        %6232 = vperm.xlu0 %6231, %v396
        %v6233 = vpop.permute.xlu0 %6232
        %6235 = vset.pattern.permute.xlu0 120
        %6236 = vperm.xlu0 %6235, %v397
        %v6237 = vpop.permute.xlu0 %6236
        %v6239 = vmul.f32 %v5341, %v6225
        %v6240 = vmul.f32 %v5347, %v6229
        %v6241 = vmul.f32 %v5353, %v6233
        %v6242 = vmul.f32 %v5359, %v6237
        %v6243 = vadd.f32 %v6219, %v6239
        %v6244 = vadd.f32 %v6220, %v6240
        %v6245 = vadd.f32 %v6221, %v6241
        %v6246 = vadd.f32 %v6222, %v6242
        %6247 = vset.pattern.permute.xlu0 121
        %6248 = vperm.xlu0 %6247, %v394
        %v6249 = vpop.permute.xlu0 %6248
        %6251 = vset.pattern.permute.xlu0 121
        %6252 = vperm.xlu0 %6251, %v395
        %v6253 = vpop.permute.xlu0 %6252
        %6255 = vset.pattern.permute.xlu0 121
        %6256 = vperm.xlu0 %6255, %v396
        %v6257 = vpop.permute.xlu0 %6256
        %6259 = vset.pattern.permute.xlu0 121
        %6260 = vperm.xlu0 %6259, %v397
        %v6261 = vpop.permute.xlu0 %6260
        %v6263 = vmul.f32 %v5341, %v6249
        %v6264 = vmul.f32 %v5347, %v6253
        %v6265 = vmul.f32 %v5353, %v6257
        %v6266 = vmul.f32 %v5359, %v6261
        %6271 = vrot.lane.b32.xlu0 %v6263, 96
        %v6272 = vpop.permute.xlu0 %6271
        %6273 = vrot.lane.b32.xlu0 %v6264, 96
        %v6274 = vpop.permute.xlu0 %6273
        %6275 = vrot.lane.b32.xlu0 %v6265, 96
        %v6276 = vpop.permute.xlu0 %6275
        %6277 = vrot.lane.b32.xlu0 %v6266, 96
        %v6278 = vpop.permute.xlu0 %6277
        %v6283 = vadd.f32 %v6243, %v6272
        %v6284 = vadd.f32 %v6244, %v6274
        %v6285 = vadd.f32 %v6245, %v6276
        %v6286 = vadd.f32 %v6246, %v6278
        %6287 = vset.pattern.permute.xlu0 122
        %6288 = vperm.xlu0 %6287, %v394
        %v6289 = vpop.permute.xlu0 %6288
        %6291 = vset.pattern.permute.xlu0 122
        %6292 = vperm.xlu0 %6291, %v395
        %v6293 = vpop.permute.xlu0 %6292
        %6295 = vset.pattern.permute.xlu0 122
        %6296 = vperm.xlu0 %6295, %v396
        %v6297 = vpop.permute.xlu0 %6296
        %6299 = vset.pattern.permute.xlu0 122
        %6300 = vperm.xlu0 %6299, %v397
        %v6301 = vpop.permute.xlu0 %6300
        %v6303 = vmul.f32 %v5341, %v6289
        %v6304 = vmul.f32 %v5347, %v6293
        %v6305 = vmul.f32 %v5353, %v6297
        %v6306 = vmul.f32 %v5359, %v6301
        %6311 = vrot.lane.b32.xlu0 %v6303, 64
        %v6312 = vpop.permute.xlu0 %6311
        %6313 = vrot.lane.b32.xlu0 %v6304, 64
        %v6314 = vpop.permute.xlu0 %6313
        %6315 = vrot.lane.b32.xlu0 %v6305, 64
        %v6316 = vpop.permute.xlu0 %6315
        %6317 = vrot.lane.b32.xlu0 %v6306, 64
        %v6318 = vpop.permute.xlu0 %6317
        %v6323 = vadd.f32 %v6283, %v6312
        %v6324 = vadd.f32 %v6284, %v6314
        %v6325 = vadd.f32 %v6285, %v6316
        %v6326 = vadd.f32 %v6286, %v6318
        %6327 = vset.pattern.permute.xlu0 123
        %6328 = vperm.xlu0 %6327, %v394
        %v6329 = vpop.permute.xlu0 %6328
        %6331 = vset.pattern.permute.xlu0 123
        %6332 = vperm.xlu0 %6331, %v395
        %v6333 = vpop.permute.xlu0 %6332
        %6335 = vset.pattern.permute.xlu0 123
        %6336 = vperm.xlu0 %6335, %v396
        %v6337 = vpop.permute.xlu0 %6336
        %6339 = vset.pattern.permute.xlu0 123
        %6340 = vperm.xlu0 %6339, %v397
        %v6341 = vpop.permute.xlu0 %6340
        %v6343 = vmul.f32 %v5341, %v6329
        %v6344 = vmul.f32 %v5347, %v6333
        %v6345 = vmul.f32 %v5353, %v6337
        %v6346 = vmul.f32 %v5359, %v6341
        %6351 = vrot.lane.b32.xlu0 %v6343, 32
        %v6352 = vpop.permute.xlu0 %6351
        %6353 = vrot.lane.b32.xlu0 %v6344, 32
        %v6354 = vpop.permute.xlu0 %6353
        %6355 = vrot.lane.b32.xlu0 %v6345, 32
        %v6356 = vpop.permute.xlu0 %6355
        %6357 = vrot.lane.b32.xlu0 %v6346, 32
        %v6358 = vpop.permute.xlu0 %6357
        %v6363 = vadd.f32 %v6323, %v6352
        %v6364 = vadd.f32 %v6324, %v6354
        %v6365 = vadd.f32 %v6325, %v6356
        %v6366 = vadd.f32 %v6326, %v6358
        %6367 = vset.pattern.permute.xlu0 124
        %6368 = vperm.xlu0 %6367, %v394
        %v6369 = vpop.permute.xlu0 %6368
        %6371 = vset.pattern.permute.xlu0 124
        %6372 = vperm.xlu0 %6371, %v395
        %v6373 = vpop.permute.xlu0 %6372
        %6375 = vset.pattern.permute.xlu0 124
        %6376 = vperm.xlu0 %6375, %v396
        %v6377 = vpop.permute.xlu0 %6376
        %6379 = vset.pattern.permute.xlu0 124
        %6380 = vperm.xlu0 %6379, %v397
        %v6381 = vpop.permute.xlu0 %6380
        %v6383 = vmul.f32 %v5343, %v6369
        %v6384 = vmul.f32 %v5349, %v6373
        %v6385 = vmul.f32 %v5355, %v6377
        %v6386 = vmul.f32 %v5361, %v6381
        %v6387 = vadd.f32 %v6363, %v6383
        %v6388 = vadd.f32 %v6364, %v6384
        %v6389 = vadd.f32 %v6365, %v6385
        %v6390 = vadd.f32 %v6366, %v6386
        %6391 = vset.pattern.permute.xlu0 125
        %6392 = vperm.xlu0 %6391, %v394
        %v6393 = vpop.permute.xlu0 %6392
        %6395 = vset.pattern.permute.xlu0 125
        %6396 = vperm.xlu0 %6395, %v395
        %v6397 = vpop.permute.xlu0 %6396
        %6399 = vset.pattern.permute.xlu0 125
        %6400 = vperm.xlu0 %6399, %v396
        %v6401 = vpop.permute.xlu0 %6400
        %6403 = vset.pattern.permute.xlu0 125
        %6404 = vperm.xlu0 %6403, %v397
        %v6405 = vpop.permute.xlu0 %6404
        %v6407 = vmul.f32 %v5343, %v6393
        %v6408 = vmul.f32 %v5349, %v6397
        %v6409 = vmul.f32 %v5355, %v6401
        %v6410 = vmul.f32 %v5361, %v6405
        %6415 = vrot.lane.b32.xlu0 %v6407, 96
        %v6416 = vpop.permute.xlu0 %6415
        %6417 = vrot.lane.b32.xlu0 %v6408, 96
        %v6418 = vpop.permute.xlu0 %6417
        %6419 = vrot.lane.b32.xlu0 %v6409, 96
        %v6420 = vpop.permute.xlu0 %6419
        %6421 = vrot.lane.b32.xlu0 %v6410, 96
        %v6422 = vpop.permute.xlu0 %6421
        %v6427 = vadd.f32 %v6387, %v6416
        %v6428 = vadd.f32 %v6388, %v6418
        %v6429 = vadd.f32 %v6389, %v6420
        %v6430 = vadd.f32 %v6390, %v6422
        %6431 = vset.pattern.permute.xlu0 126
        %6432 = vperm.xlu0 %6431, %v394
        %v6433 = vpop.permute.xlu0 %6432
        %6435 = vset.pattern.permute.xlu0 126
        %6436 = vperm.xlu0 %6435, %v395
        %v6437 = vpop.permute.xlu0 %6436
        %6439 = vset.pattern.permute.xlu0 126
        %6440 = vperm.xlu0 %6439, %v396
        %v6441 = vpop.permute.xlu0 %6440
        %6443 = vset.pattern.permute.xlu0 126
        %6444 = vperm.xlu0 %6443, %v397
        %v6445 = vpop.permute.xlu0 %6444
        %v6447 = vmul.f32 %v5343, %v6433
        %v6448 = vmul.f32 %v5349, %v6437
        %v6449 = vmul.f32 %v5355, %v6441
        %v6450 = vmul.f32 %v5361, %v6445
        %6455 = vrot.lane.b32.xlu0 %v6447, 64
        %v6456 = vpop.permute.xlu0 %6455
        %6457 = vrot.lane.b32.xlu0 %v6448, 64
        %v6458 = vpop.permute.xlu0 %6457
        %6459 = vrot.lane.b32.xlu0 %v6449, 64
        %v6460 = vpop.permute.xlu0 %6459
        %6461 = vrot.lane.b32.xlu0 %v6450, 64
        %v6462 = vpop.permute.xlu0 %6461
        %v6467 = vadd.f32 %v6427, %v6456
        %v6468 = vadd.f32 %v6428, %v6458
        %v6469 = vadd.f32 %v6429, %v6460
        %v6470 = vadd.f32 %v6430, %v6462
        %6471 = vset.pattern.permute.xlu0 127
        %6472 = vperm.xlu0 %6471, %v394
        %v6473 = vpop.permute.xlu0 %6472
        %6475 = vset.pattern.permute.xlu0 127
        %6476 = vperm.xlu0 %6475, %v395
        %v6477 = vpop.permute.xlu0 %6476
        %6479 = vset.pattern.permute.xlu0 127
        %6480 = vperm.xlu0 %6479, %v396
        %v6481 = vpop.permute.xlu0 %6480
        %6483 = vset.pattern.permute.xlu0 127
        %6484 = vperm.xlu0 %6483, %v397
        %v6485 = vpop.permute.xlu0 %6484
        %v6487 = vmul.f32 %v5343, %v6473
        %v6488 = vmul.f32 %v5349, %v6477
        %v6489 = vmul.f32 %v5355, %v6481
        %v6490 = vmul.f32 %v5361, %v6485
        %6495 = vrot.lane.b32.xlu0 %v6487, 32
        %v6496 = vpop.permute.xlu0 %6495
        %6497 = vrot.lane.b32.xlu0 %v6488, 32
        %v6498 = vpop.permute.xlu0 %6497
        %6499 = vrot.lane.b32.xlu0 %v6489, 32
        %v6500 = vpop.permute.xlu0 %6499
        %6501 = vrot.lane.b32.xlu0 %v6490, 32
        %v6502 = vpop.permute.xlu0 %6501
        %v6507 = vadd.f32 %v6467, %v6496
        %v6508 = vadd.f32 %v6468, %v6498
        %v6509 = vadd.f32 %v6469, %v6500
        %v6510 = vadd.f32 %v6470, %v6502
        %6515 = vrot.lane.b32.xlu0 %v3467, 32
        %v6516 = vpop.permute.xlu0 %6515
        %6517 = vrot.lane.b32.xlu0 %v3468, 32
        %v6518 = vpop.permute.xlu0 %6517
        %6519 = vrot.lane.b32.xlu0 %v3469, 32
        %v6520 = vpop.permute.xlu0 %6519
        %6521 = vrot.lane.b32.xlu0 %v3470, 32
        %v6522 = vpop.permute.xlu0 %6521
        %6531 = vrot.lane.b32.xlu0 %v4987, 64
        %v6532 = vpop.permute.xlu0 %6531
        %6533 = vrot.lane.b32.xlu0 %v4988, 64
        %v6534 = vpop.permute.xlu0 %6533
        %6535 = vrot.lane.b32.xlu0 %v4989, 64
        %v6536 = vpop.permute.xlu0 %6535
        %6537 = vrot.lane.b32.xlu0 %v4990, 64
        %v6538 = vpop.permute.xlu0 %6537
        %6547 = vrot.lane.b32.xlu0 %v6507, 96
        %v6548 = vpop.permute.xlu0 %6547
        %6549 = vrot.lane.b32.xlu0 %v6508, 96
        %v6550 = vpop.permute.xlu0 %6549
        %6551 = vrot.lane.b32.xlu0 %v6509, 96
        %v6552 = vpop.permute.xlu0 %6551
        %6553 = vrot.lane.b32.xlu0 %v6510, 96
        %v6554 = vpop.permute.xlu0 %6553
        %v6559 = vsel %vm430, %v1947, %v6516
        %v6560 = vsel %vm430, %v1948, %v6518
        %v6561 = vsel %vm430, %v1949, %v6520
        %v6562 = vsel %vm430, %v1950, %v6522
        %vm6563 = vcmask 523264
        %v6564 = vsel %vm6563, %v6559, %v6532
        %v6565 = vsel %vm6563, %v6560, %v6534
        %v6566 = vsel %vm6563, %v6561, %v6536
        %v6567 = vsel %vm6563, %v6562, %v6538
        %vm6568 = vcmask 785408
        %v6569 = vsel %vm6568, %v6564, %v6548
        %v6570 = vsel %vm6568, %v6565, %v6550
        %v6571 = vsel %vm6568, %v6566, %v6552
        %v6572 = vsel %vm6568, %v6567, %v6554
        %v6573 = vmul.f32 %v356, %v6569
        %v6574 = vmul.f32 %v361, %v6570
        %v6575 = vmul.f32 %v366, %v6571
        %v6576 = vmul.f32 %v371, %v6572
        %v6577 = vadd.f32 %v6573, %v6574
        %v6578 = vadd.f32 %v6577, %v6575
        %v6579 = vadd.f32 %v6578, %v6576
        %v6580 = vrot.slane %v6579, 4
        %v6581 = vadd.f32 %v6579, %v6580
        %v6582 = vrot.slane %v6581, 2
        %v6583 = vadd.f32 %v6581, %v6582
        %v6584 = vrot.slane %v6583, 1
        %v6585 = vadd.f32 %v6583, %v6584
        %vm6586 = vcmp.gt.f32.partialorder %v6585, 0.0
        %v6587 = vmul.f32 %v6585, 0.2
        %v6588 = vsel %vm6586, %v6585, %v6587
        %v6589 = vld [vmem:[%s3] sm:$0x1]
        %v6590 = vmul.f32 %v6588, %v6589
        %v6591 = vld [vmem:[%s3 + $0x1] sm:$0x1]
        %v6592 = vadd.f32 %v6590, %v6591
        %v6593 = vsub.f32 0.0, %v6592
        %v6594 = vmul.f32 %v6593, 1.442695
        %v6595 = vpow.pop %v6594
        %v6596 = vadd.f32 %v6595, 1.0
        %v6597 = vrcp.pop %v6596
        %v6598 = vmul.f32 1.0, %v6597
        %6599 = vst [vmem:[%s242] sm:$0x1] %v6598
        %s6600 = sand.u32 %s119, 1
        %s6601 = scalar_lea.sflag [#allocation4], %s6600
        %s6602 = sand.u32 %s119, 1
        %s6603 = scalar_lea.vmem [#allocation8], %s6602
        // Predicated region
        $region49: #{tpu_custom_call.1} parent=35 // pred_check
          %p6604 = pneg %p129
        $region50: #{tpu_custom_call.1} parent=35 // pred_check_branch
          %6606 = sbr.rel (%p6604) target = $region52
        $region51: #{tpu_custom_call.1} parent=35 // pred_region
          %s6608 = ssub.s32 16, 16
          %6609 = vsyncadd %s6601, %s6608
          %s6610 = smul.addr %s22, 16
          %s6611 = scalar_lea.hbm %s4, %s6610
          %s6613 = sshll.u32 %s6603, 4
          %s6614 = int_to_ptr.vmem [resolvable:$true] %s6613
          %6616 = dma.vmem_to_hbm [thread:$0]  %s6614, 16, %s6611, %s6601
        $region52: #{tpu_custom_call.1} parent=35 // pred_fallthru
          _
      $region36: #{tpu_custom_call.1} parent=5 // pred_fallthru
        _
      %p6617 = scmp.le.s32.totalorder 2, %s17
      // Predicated region
      $region53: #{tpu_custom_call.1} parent=5 // pred_check
        %p6618 = pneg %p6617
      $region54: #{tpu_custom_call.1} parent=5 // pred_check_branch
        %6620 = sbr.rel (%p6618) target = $region56
      $region55: #{tpu_custom_call.1} parent=5 // pred_region
        %s6621 = ssub.s32 %s17, 2
        // Predicated region
        $region57: #{tpu_custom_call.1} parent=55 // pred_check
          %p6622 = pneg %p135
        $region58: #{tpu_custom_call.1} parent=55 // pred_check_branch
          %6624 = sbr.rel (%p6622) target = $region60
        $region59: #{tpu_custom_call.1} parent=55 // pred_region
          %s6625 = sand.u32 %s120, 1
          %s6626 = scalar_lea.sflag [#allocation4], %s6625
          %s6627 = sand.u32 %s120, 1
          %s6628 = scalar_lea.vmem [#allocation8], %s6627
          %6629 = dma.done %s6626, 16
        $region60: #{tpu_custom_call.1} parent=55 // pred_fallthru
          _
      $region56: #{tpu_custom_call.1} parent=5 // pred_fallthru
        _
    $region6: #{tpu_custom_call.1} parent=1 // loop_footer
      %s21 = sadd.s32 1, %s17
    $region7: #{tpu_custom_call.1} parent=1 // loop_footer_branch
      %16 = sbr.rel target = $region3
    $region8: #{tpu_custom_call.1} parent=1 // loop_exit
      _
    %6630 = vsyncpa [#allocation3], 1
    %s6631 = scalar_lea.sflag [#allocation3], 1
    %6632 = vsyncpa %s6631, 1
    %6633 = vsyncpa [#allocation6], 1
    %6634 = vsyncpa [#allocation4], 1
    %s6635 = scalar_lea.sflag [#allocation4], 1
    %6636 = vsyncpa %s6635, 1

</llo_original>
